<compile_context>
chip_gen: v7x
topology: tpu7x:2x2x1
jax: 0.10.0
libtpu: 0.0.40
codegen_flags: <defaults>
</compile_context>

<pallas_src>
from functools import partial

import numpy as np
import jax
import jax.numpy as jnp
from jax.experimental import pallas as pl
from jax.experimental.pallas import tpu as pltpu

N_CLASSES = 10
FC2_PAD = 128          # fc2 padded to 128 outputs so the only HBM store is lane-dense
B_TILE_DEFAULT = 64    # v7x-safe; v5e/v6e can use 128+


# ----------------------------------------------------------------------------
# In-kernel helpers (values are f32, GEMM operands bf16, packed-(w,c) layout)
# ----------------------------------------------------------------------------
def _banded_conv_relu(padp_ref, wb_ref, b_row, H):
    """3x3 'same' conv + bias + ReLU via 3 banded GEMMs (one per kh).

    padp_ref: (B, H+2, (W+2)*Cin) bf16 scratch, zero borders, interior filled,
              lane index = w_in*Cin + cin.
    wb_ref:   (3, (W+2)*Cin, W*Cout) bf16 banded weights (built in wrapper);
              output columns ordered (w-parity, w//2, c).
    Returns (B*H, W*Cout) f32.
    """
    B = padp_ref.shape[0]
    k_in = padp_ref.shape[2]
    n_out = wb_ref.shape[2]
    acc = jnp.zeros((B * H, n_out), jnp.float32)
    for kh in range(3):
        lhs = padp_ref[:, kh:kh + H, :].reshape(B * H, k_in)
        acc = acc + jnp.dot(lhs, wb_ref[kh], preferred_element_type=jnp.float32)
    return jnp.maximum(acc + b_row, 0.0)


def _pool2x2_packed(h, B, H):
    """2x2 stride-2 max-pool on packed activations h: (B*H, W*C) f32.

    Columns are ordered (w-parity, w//2, c), so the W-pair reduction is a
    single max over two contiguous lane halves; H-pairs are adjacent rows.
    Returns (B, H//2, (W//2)*C) f32 (standard (w, c) packing for next layer).
    """
    half = h.shape[1] // 2
    hw = jnp.maximum(h[:, :half], h[:, half:])          # W-pairs (lane halves)
    a = hw.reshape(B, H // 2, 2, half)
    return jnp.maximum(a[:, :, 0, :], a[:, :, 1, :])    # H-pairs (row pairs)


# ----------------------------------------------------------------------------
# Single fused kernel: conv1..conv4 (+ReLU +pool) + fc1 (+ReLU) + fc2
# ----------------------------------------------------------------------------
def cnn_fused_kernel(x_ref, w1b_ref, b1_ref, w2b_ref, b2_ref, w3b_ref, b3_ref,
                     w4b_ref, b4_ref, fw1_ref, fb1_ref, fw2_ref, fb2_ref,
                     o_ref,
                     pad1, lhs1, pad2, pad3, pad4):
    B = o_ref.shape[0]
    f32, bf16 = jnp.float32, jnp.bfloat16

    # Re-zero the padded-activation scratches every step (cheap: ~2 MiB bf16).
    # A once-only init keyed on program_id==0 would be wrong when the
    # "parallel" batch axis is sharded across TensorCores (each core has its
    # own scratch and may never execute step 0).
    pad1[...] = jnp.zeros(pad1.shape, bf16)
    pad2[...] = jnp.zeros(pad2.shape, bf16)
    pad3[...] = jnp.zeros(pad3.shape, bf16)
    pad4[...] = jnp.zeros(pad4.shape, bf16)

    # ---- conv1 (Cin=1): pad the raw 16x16 image in VMEM, gather the three
    #      kh-shifted row blocks side by side (K = 3*18 = 54) and run ONE
    #      banded GEMM -> (B*16, 16*32) with (w, c) packed in lanes.
    pad1[:, 1:17, 1:17] = x_ref[...]
    for kh in range(3):
        lhs1[:, :, kh * 18:(kh + 1) * 18] = pad1[:, kh:kh + 16, :]
    h = jnp.dot(lhs1[...].reshape(B * 16, 3 * 18), w1b_ref[...],
                preferred_element_type=f32)
    h = jnp.maximum(h + b1_ref[...], 0.0)               # (B*16, 512)
    a = _pool2x2_packed(h, B, 16)                       # (B, 8, 8*32)
    pad2[:, 1:9, 32:288] = a.astype(bf16)

    # ---- conv2 / conv3 / conv4: banded GEMMs + bias + ReLU + 2x2 pool
    h = _banded_conv_relu(pad2, w2b_ref, b2_ref[...], 8)    # (B*8, 8*64)
    a = _pool2x2_packed(h, B, 8)                            # (B, 4, 4*64)
    pad3[:, 1:5, 64:320] = a.astype(bf16)

    h = _banded_conv_relu(pad3, w3b_ref, b3_ref[...], 4)    # (B*4, 4*128)
    a = _pool2x2_packed(h, B, 4)                            # (B, 2, 2*128)
    pad4[:, 1:3, 128:384] = a.astype(bf16)

    h = _banded_conv_relu(pad4, w4b_ref, b4_ref[...], 2)    # (B*2, 2*256)
    a = _pool2x2_packed(h, B, 2)                            # (B, 1, 256)
    x = a.reshape(B, 256)          # 1x1 spatial: channel order == NCHW flatten

    # ---- fc1 + ReLU ; dropout ; fc2 (padded to 128 lane-dense outputs)
    h = jnp.dot(x.astype(bf16), fw1_ref[...], preferred_element_type=f32)
    h = jnp.maximum(h + fb1_ref[...], 0.0)
    # TODO(synk): Dropout(p=0.5) is treated as identity (eval/inference mode).
    o = jnp.dot(h.astype(bf16), fw2_ref[...], preferred_element_type=f32)
    o_ref[...] = (o + fb2_ref[...]).astype(o_ref.dtype)


# ----------------------------------------------------------------------------
# Parameter init (PyTorch layouts) and packing into kernel layouts
# ----------------------------------------------------------------------------
def init_params(key):
    """Deterministic init in PyTorch layouts: conv (Cout, Cin, 3, 3)/(Cout,),
    fc (out, in)/(out,) with U(-1/sqrt(fan_in), 1/sqrt(fan_in))."""
    ks = jax.random.split(key, 12)

    def conv(kw_, kb_, cin, cout):
        bound = 1.0 / (cin * 9) ** 0.5
        return (jax.random.uniform(kw_, (cout, cin, 3, 3), jnp.float32, -bound, bound),
                jax.random.uniform(kb_, (cout,), jnp.float32, -bound, bound))

    def fc(kw_, kb_, din, dout):
        bound = 1.0 / din ** 0.5
        return (jax.random.uniform(kw_, (dout, din), jnp.float32, -bound, bound),
                jax.random.uniform(kb_, (dout,), jnp.float32, -bound, bound))

    p = {}
    p["conv1_w"], p["conv1_b"] = conv(ks[0], ks[1], 1, 32)
    p["conv2_w"], p["conv2_b"] = conv(ks[2], ks[3], 32, 64)
    p["conv3_w"], p["conv3_b"] = conv(ks[4], ks[5], 64, 128)
    p["conv4_w"], p["conv4_b"] = conv(ks[6], ks[7], 128, 256)
    p["fc1_w"], p["fc1_b"] = fc(ks[8], ks[9], 256, 1024)
    p["fc2_w"], p["fc2_b"] = fc(ks[10], ks[11], 1024, N_CLASSES)
    return p


def _banded_conv_weight(w, W):
    """PyTorch conv weight (Cout, Cin, 3, 3) -> banded GEMM weight
    (3, (W+2)*Cin, W*Cout) for spatial width W.

    Row index    = w_in*Cin + cin           (matches the packed padded input)
    Column index = p*(W//2)*Cout + w2*Cout + cout   with w_out = 2*w2 + p,
    so the 2x2 pool's W reduction is a max over two contiguous lane halves.
    Built on host in numpy (one-time layout plumbing)."""
    w = np.asarray(w, np.float32)
    Co, Ci = w.shape[0], w.shape[1]
    out = np.zeros((3, W + 2, Ci, 2, W // 2, Co), np.float32)
    for kw in range(3):
        wk = np.transpose(w[:, :, :, kw], (2, 1, 0))     # (kh, Ci, Co)
        for wo in range(W):
            out[:, wo + kw, :, wo % 2, wo // 2, :] = wk
    return jnp.asarray(out.reshape(3, (W + 2) * Ci, W * Co))


def pack_params(p):
    """PyTorch-layout params -> kernel layouts (bf16 GEMM weights, f32 biases).
    fc2 weight/bias are zero-padded to 128 outputs (only first 10 are real)."""
    bf16 = jnp.bfloat16

    def bias_row(b, w):
        return jnp.tile(b, w).reshape(1, -1).astype(jnp.float32)

    return {
        "w1b": _banded_conv_weight(p["conv1_w"], 16).reshape(3 * 18, 16 * 32).astype(bf16),
        "b1": bias_row(p["conv1_b"], 16),
        "w2b": _banded_conv_weight(p["conv2_w"], 8).astype(bf16),
        "b2": bias_row(p["conv2_b"], 8),
        "w3b": _banded_conv_weight(p["conv3_w"], 4).astype(bf16),
        "b3": bias_row(p["conv3_b"], 4),
        "w4b": _banded_conv_weight(p["conv4_w"], 2).astype(bf16),
        "b4": bias_row(p["conv4_b"], 2),
        "fw1": p["fc1_w"].T.astype(bf16),
        "fb1": p["fc1_b"].reshape(1, -1).astype(jnp.float32),
        "fw2": jnp.pad(p["fc2_w"].T, ((0, 0), (0, FC2_PAD - N_CLASSES))).astype(bf16),
        "fb2": jnp.pad(p["fc2_b"], (0, FC2_PAD - N_CLASSES)).reshape(1, -1).astype(jnp.float32),
    }


def _resident(shape):
    """Full-array BlockSpec with a constant index map: stays VMEM-resident."""
    idx = {2: lambda i: (0, 0), 3: lambda i: (0, 0, 0)}[len(shape)]
    return pl.BlockSpec(shape, idx)


# ----------------------------------------------------------------------------
# Forward: layout plumbing in the wrapper, all compute in ONE pallas_call
# ----------------------------------------------------------------------------
@partial(jax.jit, static_argnames=("b_tile",))
def cnn_forward(x_nchw, kp, b_tile=B_TILE_DEFAULT):
    """x_nchw: (B, 1, 16, 16) f32 -> (B, 10) f32 logits."""
    B = x_nchw.shape[0]
    bt = min(b_tile, B)
    n_tiles = pl.cdiv(B, bt)
    Bp = n_tiles * bt

    # Raw image tile is the only per-step input DMA (cast to bf16: conv1's
    # GEMM operands are bf16 anyway).
    x_img = x_nchw[:, 0, :, :].astype(jnp.bfloat16)           # (B, 16, 16)
    if Bp != B:
        x_img = jnp.pad(x_img, ((0, Bp - B), (0, 0), (0, 0)))

    weight_order = ("w1b", "b1", "w2b", "b2", "w3b", "b3", "w4b", "b4",
                    "fw1", "fb1", "fw2", "fb2")
    in_specs = [pl.BlockSpec((bt, 16, 16), lambda i: (i, 0, 0))]
    in_specs += [_resident(kp[k].shape) for k in weight_order]

    out = pl.pallas_call(
        cnn_fused_kernel,
        out_shape=jax.ShapeDtypeStruct((Bp, FC2_PAD), jnp.float32),
        grid_spec=pltpu.PrefetchScalarGridSpec(
            num_scalar_prefetch=0,
            grid=(n_tiles,),
            in_specs=in_specs,
            out_specs=pl.BlockSpec((bt, FC2_PAD), lambda i: (i, 0)),
            scratch_shapes=[
                pltpu.VMEM((bt, 18, 18), jnp.bfloat16),        # padded image
                pltpu.VMEM((bt, 16, 3 * 18), jnp.bfloat16),    # conv1 fused-K LHS
                pltpu.VMEM((bt, 10, 10 * 32), jnp.bfloat16),   # conv2 padded in
                pltpu.VMEM((bt, 6, 6 * 64), jnp.bfloat16),     # conv3 padded in
                pltpu.VMEM((bt, 4, 4 * 128), jnp.bfloat16),    # conv4 padded in
            ]),
        compiler_params=pltpu.CompilerParams(
            dimension_semantics=("parallel",),
            vmem_limit_bytes=48 * 1024 * 1024),
    )(x_img, *[kp[k] for k in weight_order])

    return out[:B, :N_CLASSES]


if __name__ == "__main__":
    key = jax.random.PRNGKey(0)
    k_x, k_p = jax.random.split(key)
    # Input matches the PyTorch module: NCHW, 1 channel, 16x16 spatial
    # (16x16 -> four pool(2,2) stages -> 1x1, so flatten gives 256 features).
    x = jax.random.normal(k_x, (2, 1, 16, 16), dtype=jnp.float32)
    params = init_params(k_p)
    kparams = pack_params(params)

    out = cnn_forward(x, kparams)
    out = jax.block_until_ready(out)
    assert out.shape == (2, N_CLASSES) and out.dtype == jnp.float32
    print("KERNEL_OK")
</pallas_src>

<mosaic_0001>
module attributes {stable_mosaic.version = 11 : i64} {
  func.func @cnn_fused_kernel(%arg0: i32, %arg1: memref<2x16x16xbf16, #tpu.memory_space<vmem>>, %arg2: memref<54x512xbf16, #tpu.memory_space<vmem>>, %arg3: memref<1x512xf32, #tpu.memory_space<vmem>>, %arg4: memref<3x320x512xbf16, #tpu.memory_space<vmem>>, %arg5: memref<1x512xf32, #tpu.memory_space<vmem>>, %arg6: memref<3x384x512xbf16, #tpu.memory_space<vmem>>, %arg7: memref<1x512xf32, #tpu.memory_space<vmem>>, %arg8: memref<3x512x512xbf16, #tpu.memory_space<vmem>>, %arg9: memref<1x512xf32, #tpu.memory_space<vmem>>, %arg10: memref<256x1024xbf16, #tpu.memory_space<vmem>>, %arg11: memref<1x1024xf32, #tpu.memory_space<vmem>>, %arg12: memref<1024x128xbf16, #tpu.memory_space<vmem>>, %arg13: memref<1x128xf32, #tpu.memory_space<vmem>>, %arg14: memref<2x128xf32, #tpu.memory_space<vmem>>, %arg15: memref<2x18x18xbf16, #tpu.memory_space<vmem>>, %arg16: memref<2x16x54xbf16, #tpu.memory_space<vmem>>, %arg17: memref<2x10x320xbf16, #tpu.memory_space<vmem>>, %arg18: memref<2x6x384xbf16, #tpu.memory_space<vmem>>, %arg19: memref<2x4x512xbf16, #tpu.memory_space<vmem>>) attributes {dimension_semantics = [#tpu.dimension_semantics<parallel>], iteration_bounds = array<i64: 1>, scalar_prefetch = 0 : i64, scratch_operands = 5 : i64, tpu.core_type = #tpu.core_type<tc>, window_params = [{transform_indices = @transform_0, window_bounds = array<i64: 2, 16, 16>}, {pipeline_mode = #tpu.pipeline_mode<synchronous>, transform_indices = @transform_1, window_bounds = array<i64: 54, 512>}, {pipeline_mode = #tpu.pipeline_mode<synchronous>, transform_indices = @transform_2, window_bounds = array<i64: 1, 512>}, {pipeline_mode = #tpu.pipeline_mode<synchronous>, transform_indices = @transform_3, window_bounds = array<i64: 3, 320, 512>}, {pipeline_mode = #tpu.pipeline_mode<synchronous>, transform_indices = @transform_4, window_bounds = array<i64: 1, 512>}, {pipeline_mode = #tpu.pipeline_mode<synchronous>, transform_indices = @transform_5, window_bounds = array<i64: 3, 384, 512>}, {pipeline_mode = #tpu.pipeline_mode<synchronous>, transform_indices = @transform_6, window_bounds = array<i64: 1, 512>}, {pipeline_mode = #tpu.pipeline_mode<synchronous>, transform_indices = @transform_7, window_bounds = array<i64: 3, 512, 512>}, {pipeline_mode = #tpu.pipeline_mode<synchronous>, transform_indices = @transform_8, window_bounds = array<i64: 1, 512>}, {pipeline_mode = #tpu.pipeline_mode<synchronous>, transform_indices = @transform_9, window_bounds = array<i64: 256, 1024>}, {pipeline_mode = #tpu.pipeline_mode<synchronous>, transform_indices = @transform_10, window_bounds = array<i64: 1, 1024>}, {pipeline_mode = #tpu.pipeline_mode<synchronous>, transform_indices = @transform_11, window_bounds = array<i64: 1024, 128>}, {pipeline_mode = #tpu.pipeline_mode<synchronous>, transform_indices = @transform_12, window_bounds = array<i64: 1, 128>}, {transform_indices = @transform_13, window_bounds = array<i64: 2, 128>}]} {
    %cst = arith.constant 0.000000e+00 : bf16
    %0 = vector.broadcast %cst : bf16 to vector<2x18x18xbf16>
    %c0 = arith.constant 0 : index
    %c0_0 = arith.constant 0 : index
    %c0_1 = arith.constant 0 : index
    %1 = vector.load %arg15[%c0, %c0_0, %c0_1] : memref<2x18x18xbf16, #tpu.memory_space<vmem>>, vector<2x18x18xbf16>
    tpu.vector_store %arg15[%c0, %c0_0, %c0_1], %0 {strides = array<i32>} : memref<2x18x18xbf16, #tpu.memory_space<vmem>>, vector<2x18x18xbf16>,
    %cst_2 = arith.constant 0.000000e+00 : bf16
    %2 = vector.broadcast %cst_2 : bf16 to vector<2x10x320xbf16>
    %c0_3 = arith.constant 0 : index
    %c0_4 = arith.constant 0 : index
    %c0_5 = arith.constant 0 : index
    %3 = vector.load %arg17[%c0_3, %c0_4, %c0_5] : memref<2x10x320xbf16, #tpu.memory_space<vmem>>, vector<2x10x320xbf16>
    tpu.vector_store %arg17[%c0_3, %c0_4, %c0_5], %2 {strides = array<i32>} : memref<2x10x320xbf16, #tpu.memory_space<vmem>>, vector<2x10x320xbf16>,
    %cst_6 = arith.constant 0.000000e+00 : bf16
    %4 = vector.broadcast %cst_6 : bf16 to vector<2x6x384xbf16>
    %c0_7 = arith.constant 0 : index
    %c0_8 = arith.constant 0 : index
    %c0_9 = arith.constant 0 : index
    %5 = vector.load %arg18[%c0_7, %c0_8, %c0_9] : memref<2x6x384xbf16, #tpu.memory_space<vmem>>, vector<2x6x384xbf16>
    tpu.vector_store %arg18[%c0_7, %c0_8, %c0_9], %4 {strides = array<i32>} : memref<2x6x384xbf16, #tpu.memory_space<vmem>>, vector<2x6x384xbf16>,
    %cst_10 = arith.constant 0.000000e+00 : bf16
    %6 = vector.broadcast %cst_10 : bf16 to vector<2x4x512xbf16>
    %c0_11 = arith.constant 0 : index
    %c0_12 = arith.constant 0 : index
    %c0_13 = arith.constant 0 : index
    %7 = vector.load %arg19[%c0_11, %c0_12, %c0_13] : memref<2x4x512xbf16, #tpu.memory_space<vmem>>, vector<2x4x512xbf16>
    tpu.vector_store %arg19[%c0_11, %c0_12, %c0_13], %6 {strides = array<i32>} : memref<2x4x512xbf16, #tpu.memory_space<vmem>>, vector<2x4x512xbf16>,
    %c0_14 = arith.constant 0 : index
    %c0_15 = arith.constant 0 : index
    %c0_16 = arith.constant 0 : index
    %8 = vector.load %arg1[%c0_14, %c0_15, %c0_16] : memref<2x16x16xbf16, #tpu.memory_space<vmem>>, vector<2x16x16xbf16>
    %c0_17 = arith.constant 0 : index
    %c1 = arith.constant 1 : index
    %c1_18 = arith.constant 1 : index
    %9 = vector.load %arg15[%c0_17, %c1, %c1_18] : memref<2x18x18xbf16, #tpu.memory_space<vmem>>, vector<2x16x16xbf16>
    tpu.vector_store %arg15[%c0_17, %c1, %c1_18], %8 {strides = array<i32>} : memref<2x18x18xbf16, #tpu.memory_space<vmem>>, vector<2x16x16xbf16>,
    %c0_19 = arith.constant 0 : index
    %c0_20 = arith.constant 0 : index
    %c0_21 = arith.constant 0 : index
    %10 = vector.load %arg15[%c0_19, %c0_20, %c0_21] : memref<2x18x18xbf16, #tpu.memory_space<vmem>>, vector<2x16x18xbf16>
    %c0_22 = arith.constant 0 : index
    %c0_23 = arith.constant 0 : index
    %c0_24 = arith.constant 0 : index
    %11 = vector.load %arg16[%c0_22, %c0_23, %c0_24] : memref<2x16x54xbf16, #tpu.memory_space<vmem>>, vector<2x16x18xbf16>
    tpu.vector_store %arg16[%c0_22, %c0_23, %c0_24], %10 {strides = array<i32>} : memref<2x16x54xbf16, #tpu.memory_space<vmem>>, vector<2x16x18xbf16>,
    %c0_25 = arith.constant 0 : index
    %c1_26 = arith.constant 1 : index
    %c0_27 = arith.constant 0 : index
    %12 = vector.load %arg15[%c0_25, %c1_26, %c0_27] : memref<2x18x18xbf16, #tpu.memory_space<vmem>>, vector<2x16x18xbf16>
    %c0_28 = arith.constant 0 : index
    %c0_29 = arith.constant 0 : index
    %c18 = arith.constant 18 : index
    %13 = vector.load %arg16[%c0_28, %c0_29, %c18] : memref<2x16x54xbf16, #tpu.memory_space<vmem>>, vector<2x16x18xbf16>
    tpu.vector_store %arg16[%c0_28, %c0_29, %c18], %12 {strides = array<i32>} : memref<2x16x54xbf16, #tpu.memory_space<vmem>>, vector<2x16x18xbf16>,
    %c0_30 = arith.constant 0 : index
    %c2 = arith.constant 2 : index
    %c0_31 = arith.constant 0 : index
    %14 = vector.load %arg15[%c0_30, %c2, %c0_31] : memref<2x18x18xbf16, #tpu.memory_space<vmem>>, vector<2x16x18xbf16>
    %c0_32 = arith.constant 0 : index
    %c0_33 = arith.constant 0 : index
    %c36 = arith.constant 36 : index
    %15 = vector.load %arg16[%c0_32, %c0_33, %c36] : memref<2x16x54xbf16, #tpu.memory_space<vmem>>, vector<2x16x18xbf16>
    tpu.vector_store %arg16[%c0_32, %c0_33, %c36], %14 {strides = array<i32>} : memref<2x16x54xbf16, #tpu.memory_space<vmem>>, vector<2x16x18xbf16>,
    %c0_34 = arith.constant 0 : index
    %c0_35 = arith.constant 0 : index
    %c0_36 = arith.constant 0 : index
    %16 = vector.load %arg16[%c0_34, %c0_35, %c0_36] : memref<2x16x54xbf16, #tpu.memory_space<vmem>>, vector<2x16x54xbf16>
    %17 = vector.shape_cast %16 : vector<2x16x54xbf16> to vector<32x54xbf16>
    %c0_37 = arith.constant 0 : index
    %c0_38 = arith.constant 0 : index
    %18 = vector.load %arg2[%c0_37, %c0_38] : memref<54x512xbf16, #tpu.memory_space<vmem>>, vector<54x512xbf16>
    %cst_39 = arith.constant dense<0.000000e+00> : vector<32x512xf32>
    %19 = tpu.matmul %17, %18, %cst_39 {dimension_numbers = #tpu.dot_dimension_numbers<[1], [0], [0], [1], [0, 0, 1, 1], [], []>} : vector<32x54xbf16>, vector<54x512xbf16>, vector<32x512xf32> -> vector<32x512xf32>
    %c0_40 = arith.constant 0 : index
    %c0_41 = arith.constant 0 : index
    %20 = vector.load %arg3[%c0_40, %c0_41] : memref<1x512xf32, #tpu.memory_space<vmem>>, vector<1x512xf32>
    %21 = vector.broadcast %20 : vector<1x512xf32> to vector<32x512xf32>
    %22 = arith.addf %19, %21 : vector<32x512xf32>
    %cst_42 = arith.constant 0.000000e+00 : f32
    %23 = vector.broadcast %cst_42 : f32 to vector<32x512xf32>
    %24 = arith.maximumf %22, %23 : vector<32x512xf32>
    %25 = vector.extract_strided_slice %24 {offsets = [0, 0], sizes = [32, 256], strides = [1, 1]} : vector<32x512xf32> to vector<32x256xf32>
    %26 = vector.extract_strided_slice %24 {offsets = [0, 256], sizes = [32, 256], strides = [1, 1]} : vector<32x512xf32> to vector<32x256xf32>
    %27 = arith.maximumf %25, %26 : vector<32x256xf32>
    %28 = vector.shape_cast %27 : vector<32x256xf32> to vector<2x8x2x256xf32>
    %29 = vector.extract_strided_slice %28 {offsets = [0, 0, 0, 0], sizes = [2, 8, 1, 256], strides = [1, 1, 1, 1]} : vector<2x8x2x256xf32> to vector<2x8x1x256xf32>
    %30 = vector.shape_cast %29 : vector<2x8x1x256xf32> to vector<2x8x256xf32>
    %31 = vector.extract_strided_slice %28 {offsets = [0, 0, 1, 0], sizes = [2, 8, 1, 256], strides = [1, 1, 1, 1]} : vector<2x8x2x256xf32> to vector<2x8x1x256xf32>
    %32 = vector.shape_cast %31 : vector<2x8x1x256xf32> to vector<2x8x256xf32>
    %33 = arith.maximumf %30, %32 : vector<2x8x256xf32>
    %34 = arith.truncf %33 : vector<2x8x256xf32> to vector<2x8x256xbf16>
    %c0_43 = arith.constant 0 : index
    %c1_44 = arith.constant 1 : index
    %c32 = arith.constant 32 : index
    %35 = vector.load %arg17[%c0_43, %c1_44, %c32] : memref<2x10x320xbf16, #tpu.memory_space<vmem>>, vector<2x8x256xbf16>
    tpu.vector_store %arg17[%c0_43, %c1_44, %c32], %34 {strides = array<i32>} : memref<2x10x320xbf16, #tpu.memory_space<vmem>>, vector<2x8x256xbf16>,
    %c0_45 = arith.constant 0 : index
    %c0_46 = arith.constant 0 : index
    %36 = vector.load %arg5[%c0_45, %c0_46] : memref<1x512xf32, #tpu.memory_space<vmem>>, vector<1x512xf32>
    %cst_47 = arith.constant 0.000000e+00 : f32
    %37 = vector.broadcast %cst_47 : f32 to vector<16x512xf32>
    %c0_48 = arith.constant 0 : index
    %c0_49 = arith.constant 0 : index
    %c0_50 = arith.constant 0 : index
    %38 = vector.load %arg17[%c0_48, %c0_49, %c0_50] : memref<2x10x320xbf16, #tpu.memory_space<vmem>>, vector<2x8x320xbf16>
    %39 = vector.shape_cast %38 : vector<2x8x320xbf16> to vector<16x320xbf16>
    %c0_51 = arith.constant 0 : index
    %c0_52 = arith.constant 0 : index
    %c0_53 = arith.constant 0 : index
    %40 = vector.load %arg4[%c0_51, %c0_52, %c0_53] : memref<3x320x512xbf16, #tpu.memory_space<vmem>>, vector<1x320x512xbf16>
    %41 = vector.shape_cast %40 : vector<1x320x512xbf16> to vector<320x512xbf16>
    %cst_54 = arith.constant dense<0.000000e+00> : vector<16x512xf32>
    %42 = tpu.matmul %39, %41, %cst_54 {dimension_numbers = #tpu.dot_dimension_numbers<[1], [0], [0], [1], [0, 0, 1, 1], [], []>} : vector<16x320xbf16>, vector<320x512xbf16>, vector<16x512xf32> -> vector<16x512xf32>
    %43 = arith.addf %37, %42 : vector<16x512xf32>
    %c0_55 = arith.constant 0 : index
    %c1_56 = arith.constant 1 : index
    %c0_57 = arith.constant 0 : index
    %44 = vector.load %arg17[%c0_55, %c1_56, %c0_57] : memref<2x10x320xbf16, #tpu.memory_space<vmem>>, vector<2x8x320xbf16>
    %45 = vector.shape_cast %44 : vector<2x8x320xbf16> to vector<16x320xbf16>
    %c1_58 = arith.constant 1 : index
    %c0_59 = arith.constant 0 : index
    %c0_60 = arith.constant 0 : index
    %46 = vector.load %arg4[%c1_58, %c0_59, %c0_60] : memref<3x320x512xbf16, #tpu.memory_space<vmem>>, vector<1x320x512xbf16>
    %47 = vector.shape_cast %46 : vector<1x320x512xbf16> to vector<320x512xbf16>
    %cst_61 = arith.constant dense<0.000000e+00> : vector<16x512xf32>
    %48 = tpu.matmul %45, %47, %cst_61 {dimension_numbers = #tpu.dot_dimension_numbers<[1], [0], [0], [1], [0, 0, 1, 1], [], []>} : vector<16x320xbf16>, vector<320x512xbf16>, vector<16x512xf32> -> vector<16x512xf32>
    %49 = arith.addf %43, %48 : vector<16x512xf32>
    %c0_62 = arith.constant 0 : index
    %c2_63 = arith.constant 2 : index
    %c0_64 = arith.constant 0 : index
    %50 = vector.load %arg17[%c0_62, %c2_63, %c0_64] : memref<2x10x320xbf16, #tpu.memory_space<vmem>>, vector<2x8x320xbf16>
    %51 = vector.shape_cast %50 : vector<2x8x320xbf16> to vector<16x320xbf16>
    %c2_65 = arith.constant 2 : index
    %c0_66 = arith.constant 0 : index
    %c0_67 = arith.constant 0 : index
    %52 = vector.load %arg4[%c2_65, %c0_66, %c0_67] : memref<3x320x512xbf16, #tpu.memory_space<vmem>>, vector<1x320x512xbf16>
    %53 = vector.shape_cast %52 : vector<1x320x512xbf16> to vector<320x512xbf16>
    %cst_68 = arith.constant dense<0.000000e+00> : vector<16x512xf32>
    %54 = tpu.matmul %51, %53, %cst_68 {dimension_numbers = #tpu.dot_dimension_numbers<[1], [0], [0], [1], [0, 0, 1, 1], [], []>} : vector<16x320xbf16>, vector<320x512xbf16>, vector<16x512xf32> -> vector<16x512xf32>
    %55 = arith.addf %49, %54 : vector<16x512xf32>
    %56 = vector.broadcast %36 : vector<1x512xf32> to vector<16x512xf32>
    %57 = arith.addf %55, %56 : vector<16x512xf32>
    %cst_69 = arith.constant 0.000000e+00 : f32
    %58 = vector.broadcast %cst_69 : f32 to vector<16x512xf32>
    %59 = arith.maximumf %57, %58 : vector<16x512xf32>
    %60 = vector.extract_strided_slice %59 {offsets = [0, 0], sizes = [16, 256], strides = [1, 1]} : vector<16x512xf32> to vector<16x256xf32>
    %61 = vector.extract_strided_slice %59 {offsets = [0, 256], sizes = [16, 256], strides = [1, 1]} : vector<16x512xf32> to vector<16x256xf32>
    %62 = arith.maximumf %60, %61 : vector<16x256xf32>
    %63 = vector.shape_cast %62 : vector<16x256xf32> to vector<2x4x2x256xf32>
    %64 = vector.extract_strided_slice %63 {offsets = [0, 0, 0, 0], sizes = [2, 4, 1, 256], strides = [1, 1, 1, 1]} : vector<2x4x2x256xf32> to vector<2x4x1x256xf32>
    %65 = vector.shape_cast %64 : vector<2x4x1x256xf32> to vector<2x4x256xf32>
    %66 = vector.extract_strided_slice %63 {offsets = [0, 0, 1, 0], sizes = [2, 4, 1, 256], strides = [1, 1, 1, 1]} : vector<2x4x2x256xf32> to vector<2x4x1x256xf32>
    %67 = vector.shape_cast %66 : vector<2x4x1x256xf32> to vector<2x4x256xf32>
    %68 = arith.maximumf %65, %67 : vector<2x4x256xf32>
    %69 = arith.truncf %68 : vector<2x4x256xf32> to vector<2x4x256xbf16>
    %c0_70 = arith.constant 0 : index
    %c1_71 = arith.constant 1 : index
    %c64 = arith.constant 64 : index
    %70 = vector.load %arg18[%c0_70, %c1_71, %c64] : memref<2x6x384xbf16, #tpu.memory_space<vmem>>, vector<2x4x256xbf16>
    tpu.vector_store %arg18[%c0_70, %c1_71, %c64], %69 {strides = array<i32>} : memref<2x6x384xbf16, #tpu.memory_space<vmem>>, vector<2x4x256xbf16>,
    %c0_72 = arith.constant 0 : index
    %c0_73 = arith.constant 0 : index
    %71 = vector.load %arg7[%c0_72, %c0_73] : memref<1x512xf32, #tpu.memory_space<vmem>>, vector<1x512xf32>
    %cst_74 = arith.constant 0.000000e+00 : f32
    %72 = vector.broadcast %cst_74 : f32 to vector<8x512xf32>
    %c0_75 = arith.constant 0 : index
    %c0_76 = arith.constant 0 : index
    %c0_77 = arith.constant 0 : index
    %73 = vector.load %arg18[%c0_75, %c0_76, %c0_77] : memref<2x6x384xbf16, #tpu.memory_space<vmem>>, vector<2x4x384xbf16>
    %74 = vector.shape_cast %73 : vector<2x4x384xbf16> to vector<8x384xbf16>
    %c0_78 = arith.constant 0 : index
    %c0_79 = arith.constant 0 : index
    %c0_80 = arith.constant 0 : index
    %75 = vector.load %arg6[%c0_78, %c0_79, %c0_80] : memref<3x384x512xbf16, #tpu.memory_space<vmem>>, vector<1x384x512xbf16>
    %76 = vector.shape_cast %75 : vector<1x384x512xbf16> to vector<384x512xbf16>
    %cst_81 = arith.constant dense<0.000000e+00> : vector<8x512xf32>
    %77 = tpu.matmul %74, %76, %cst_81 {dimension_numbers = #tpu.dot_dimension_numbers<[1], [0], [0], [1], [0, 0, 1, 1], [], []>} : vector<8x384xbf16>, vector<384x512xbf16>, vector<8x512xf32> -> vector<8x512xf32>
    %78 = arith.addf %72, %77 : vector<8x512xf32>
    %c0_82 = arith.constant 0 : index
    %c1_83 = arith.constant 1 : index
    %c0_84 = arith.constant 0 : index
    %79 = vector.load %arg18[%c0_82, %c1_83, %c0_84] : memref<2x6x384xbf16, #tpu.memory_space<vmem>>, vector<2x4x384xbf16>
    %80 = vector.shape_cast %79 : vector<2x4x384xbf16> to vector<8x384xbf16>
    %c1_85 = arith.constant 1 : index
    %c0_86 = arith.constant 0 : index
    %c0_87 = arith.constant 0 : index
    %81 = vector.load %arg6[%c1_85, %c0_86, %c0_87] : memref<3x384x512xbf16, #tpu.memory_space<vmem>>, vector<1x384x512xbf16>
    %82 = vector.shape_cast %81 : vector<1x384x512xbf16> to vector<384x512xbf16>
    %cst_88 = arith.constant dense<0.000000e+00> : vector<8x512xf32>
    %83 = tpu.matmul %80, %82, %cst_88 {dimension_numbers = #tpu.dot_dimension_numbers<[1], [0], [0], [1], [0, 0, 1, 1], [], []>} : vector<8x384xbf16>, vector<384x512xbf16>, vector<8x512xf32> -> vector<8x512xf32>
    %84 = arith.addf %78, %83 : vector<8x512xf32>
    %c0_89 = arith.constant 0 : index
    %c2_90 = arith.constant 2 : index
    %c0_91 = arith.constant 0 : index
    %85 = vector.load %arg18[%c0_89, %c2_90, %c0_91] : memref<2x6x384xbf16, #tpu.memory_space<vmem>>, vector<2x4x384xbf16>
    %86 = vector.shape_cast %85 : vector<2x4x384xbf16> to vector<8x384xbf16>
    %c2_92 = arith.constant 2 : index
    %c0_93 = arith.constant 0 : index
    %c0_94 = arith.constant 0 : index
    %87 = vector.load %arg6[%c2_92, %c0_93, %c0_94] : memref<3x384x512xbf16, #tpu.memory_space<vmem>>, vector<1x384x512xbf16>
    %88 = vector.shape_cast %87 : vector<1x384x512xbf16> to vector<384x512xbf16>
    %cst_95 = arith.constant dense<0.000000e+00> : vector<8x512xf32>
    %89 = tpu.matmul %86, %88, %cst_95 {dimension_numbers = #tpu.dot_dimension_numbers<[1], [0], [0], [1], [0, 0, 1, 1], [], []>} : vector<8x384xbf16>, vector<384x512xbf16>, vector<8x512xf32> -> vector<8x512xf32>
    %90 = arith.addf %84, %89 : vector<8x512xf32>
    %91 = vector.broadcast %71 : vector<1x512xf32> to vector<8x512xf32>
    %92 = arith.addf %90, %91 : vector<8x512xf32>
    %cst_96 = arith.constant 0.000000e+00 : f32
    %93 = vector.broadcast %cst_96 : f32 to vector<8x512xf32>
    %94 = arith.maximumf %92, %93 : vector<8x512xf32>
    %95 = vector.extract_strided_slice %94 {offsets = [0, 0], sizes = [8, 256], strides = [1, 1]} : vector<8x512xf32> to vector<8x256xf32>
    %96 = vector.extract_strided_slice %94 {offsets = [0, 256], sizes = [8, 256], strides = [1, 1]} : vector<8x512xf32> to vector<8x256xf32>
    %97 = arith.maximumf %95, %96 : vector<8x256xf32>
    %98 = vector.shape_cast %97 : vector<8x256xf32> to vector<2x2x2x256xf32>
    %99 = vector.extract_strided_slice %98 {offsets = [0, 0, 0, 0], sizes = [2, 2, 1, 256], strides = [1, 1, 1, 1]} : vector<2x2x2x256xf32> to vector<2x2x1x256xf32>
    %100 = vector.shape_cast %99 : vector<2x2x1x256xf32> to vector<2x2x256xf32>
    %101 = vector.extract_strided_slice %98 {offsets = [0, 0, 1, 0], sizes = [2, 2, 1, 256], strides = [1, 1, 1, 1]} : vector<2x2x2x256xf32> to vector<2x2x1x256xf32>
    %102 = vector.shape_cast %101 : vector<2x2x1x256xf32> to vector<2x2x256xf32>
    %103 = arith.maximumf %100, %102 : vector<2x2x256xf32>
    %104 = arith.truncf %103 : vector<2x2x256xf32> to vector<2x2x256xbf16>
    %c0_97 = arith.constant 0 : index
    %c1_98 = arith.constant 1 : index
    %c128 = arith.constant 128 : index
    %105 = vector.load %arg19[%c0_97, %c1_98, %c128] : memref<2x4x512xbf16, #tpu.memory_space<vmem>>, vector<2x2x256xbf16>
    tpu.vector_store %arg19[%c0_97, %c1_98, %c128], %104 {strides = array<i32>} : memref<2x4x512xbf16, #tpu.memory_space<vmem>>, vector<2x2x256xbf16>,
    %c0_99 = arith.constant 0 : index
    %c0_100 = arith.constant 0 : index
    %106 = vector.load %arg9[%c0_99, %c0_100] : memref<1x512xf32, #tpu.memory_space<vmem>>, vector<1x512xf32>
    %cst_101 = arith.constant 0.000000e+00 : f32
    %107 = vector.broadcast %cst_101 : f32 to vector<4x512xf32>
    %c0_102 = arith.constant 0 : index
    %c0_103 = arith.constant 0 : index
    %c0_104 = arith.constant 0 : index
    %108 = vector.load %arg19[%c0_102, %c0_103, %c0_104] : memref<2x4x512xbf16, #tpu.memory_space<vmem>>, vector<2x2x512xbf16>
    %109 = vector.shape_cast %108 : vector<2x2x512xbf16> to vector<4x512xbf16>
    %c0_105 = arith.constant 0 : index
    %c0_106 = arith.constant 0 : index
    %c0_107 = arith.constant 0 : index
    %110 = vector.load %arg8[%c0_105, %c0_106, %c0_107] : memref<3x512x512xbf16, #tpu.memory_space<vmem>>, vector<1x512x512xbf16>
    %111 = vector.shape_cast %110 : vector<1x512x512xbf16> to vector<512x512xbf16>
    %cst_108 = arith.constant dense<0.000000e+00> : vector<4x512xf32>
    %112 = tpu.matmul %109, %111, %cst_108 {dimension_numbers = #tpu.dot_dimension_numbers<[1], [0], [0], [1], [0, 0, 1, 1], [], []>} : vector<4x512xbf16>, vector<512x512xbf16>, vector<4x512xf32> -> vector<4x512xf32>
    %113 = arith.addf %107, %112 : vector<4x512xf32>
    %c0_109 = arith.constant 0 : index
    %c1_110 = arith.constant 1 : index
    %c0_111 = arith.constant 0 : index
    %114 = vector.load %arg19[%c0_109, %c1_110, %c0_111] : memref<2x4x512xbf16, #tpu.memory_space<vmem>>, vector<2x2x512xbf16>
    %115 = vector.shape_cast %114 : vector<2x2x512xbf16> to vector<4x512xbf16>
    %c1_112 = arith.constant 1 : index
    %c0_113 = arith.constant 0 : index
    %c0_114 = arith.constant 0 : index
    %116 = vector.load %arg8[%c1_112, %c0_113, %c0_114] : memref<3x512x512xbf16, #tpu.memory_space<vmem>>, vector<1x512x512xbf16>
    %117 = vector.shape_cast %116 : vector<1x512x512xbf16> to vector<512x512xbf16>
    %cst_115 = arith.constant dense<0.000000e+00> : vector<4x512xf32>
    %118 = tpu.matmul %115, %117, %cst_115 {dimension_numbers = #tpu.dot_dimension_numbers<[1], [0], [0], [1], [0, 0, 1, 1], [], []>} : vector<4x512xbf16>, vector<512x512xbf16>, vector<4x512xf32> -> vector<4x512xf32>
    %119 = arith.addf %113, %118 : vector<4x512xf32>
    %c0_116 = arith.constant 0 : index
    %c2_117 = arith.constant 2 : index
    %c0_118 = arith.constant 0 : index
    %120 = vector.load %arg19[%c0_116, %c2_117, %c0_118] : memref<2x4x512xbf16, #tpu.memory_space<vmem>>, vector<2x2x512xbf16>
    %121 = vector.shape_cast %120 : vector<2x2x512xbf16> to vector<4x512xbf16>
    %c2_119 = arith.constant 2 : index
    %c0_120 = arith.constant 0 : index
    %c0_121 = arith.constant 0 : index
    %122 = vector.load %arg8[%c2_119, %c0_120, %c0_121] : memref<3x512x512xbf16, #tpu.memory_space<vmem>>, vector<1x512x512xbf16>
    %123 = vector.shape_cast %122 : vector<1x512x512xbf16> to vector<512x512xbf16>
    %cst_122 = arith.constant dense<0.000000e+00> : vector<4x512xf32>
    %124 = tpu.matmul %121, %123, %cst_122 {dimension_numbers = #tpu.dot_dimension_numbers<[1], [0], [0], [1], [0, 0, 1, 1], [], []>} : vector<4x512xbf16>, vector<512x512xbf16>, vector<4x512xf32> -> vector<4x512xf32>
    %125 = arith.addf %119, %124 : vector<4x512xf32>
    %126 = vector.broadcast %106 : vector<1x512xf32> to vector<4x512xf32>
    %127 = arith.addf %125, %126 : vector<4x512xf32>
    %cst_123 = arith.constant 0.000000e+00 : f32
    %128 = vector.broadcast %cst_123 : f32 to vector<4x512xf32>
    %129 = arith.maximumf %127, %128 : vector<4x512xf32>
    %130 = vector.extract_strided_slice %129 {offsets = [0, 0], sizes = [4, 256], strides = [1, 1]} : vector<4x512xf32> to vector<4x256xf32>
    %131 = vector.extract_strided_slice %129 {offsets = [0, 256], sizes = [4, 256], strides = [1, 1]} : vector<4x512xf32> to vector<4x256xf32>
    %132 = arith.maximumf %130, %131 : vector<4x256xf32>
    %133 = vector.shape_cast %132 : vector<4x256xf32> to vector<2x1x2x256xf32>
    %134 = vector.extract_strided_slice %133 {offsets = [0, 0, 0, 0], sizes = [2, 1, 1, 256], strides = [1, 1, 1, 1]} : vector<2x1x2x256xf32> to vector<2x1x1x256xf32>
    %135 = vector.shape_cast %134 : vector<2x1x1x256xf32> to vector<2x1x256xf32>
    %136 = vector.extract_strided_slice %133 {offsets = [0, 0, 1, 0], sizes = [2, 1, 1, 256], strides = [1, 1, 1, 1]} : vector<2x1x2x256xf32> to vector<2x1x1x256xf32>
    %137 = vector.shape_cast %136 : vector<2x1x1x256xf32> to vector<2x1x256xf32>
    %138 = arith.maximumf %135, %137 : vector<2x1x256xf32>
    %139 = vector.shape_cast %138 : vector<2x1x256xf32> to vector<2x256xf32>
    %140 = arith.truncf %139 : vector<2x256xf32> to vector<2x256xbf16>
    %c0_124 = arith.constant 0 : index
    %c0_125 = arith.constant 0 : index
    %141 = vector.load %arg10[%c0_124, %c0_125] : memref<256x1024xbf16, #tpu.memory_space<vmem>>, vector<256x1024xbf16>
    %cst_126 = arith.constant dense<0.000000e+00> : vector<2x1024xf32>
    %142 = tpu.matmul %140, %141, %cst_126 {dimension_numbers = #tpu.dot_dimension_numbers<[1], [0], [0], [1], [0, 0, 1, 1], [], []>} : vector<2x256xbf16>, vector<256x1024xbf16>, vector<2x1024xf32> -> vector<2x1024xf32>
    %c0_127 = arith.constant 0 : index
    %c0_128 = arith.constant 0 : index
    %143 = vector.load %arg11[%c0_127, %c0_128] : memref<1x1024xf32, #tpu.memory_space<vmem>>, vector<1x1024xf32>
    %144 = vector.broadcast %143 : vector<1x1024xf32> to vector<2x1024xf32>
    %145 = arith.addf %142, %144 : vector<2x1024xf32>
    %cst_129 = arith.constant 0.000000e+00 : f32
    %146 = vector.broadcast %cst_129 : f32 to vector<2x1024xf32>
    %147 = arith.maximumf %145, %146 : vector<2x1024xf32>
    %148 = arith.truncf %147 : vector<2x1024xf32> to vector<2x1024xbf16>
    %c0_130 = arith.constant 0 : index
    %c0_131 = arith.constant 0 : index
    %149 = vector.load %arg12[%c0_130, %c0_131] : memref<1024x128xbf16, #tpu.memory_space<vmem>>, vector<1024x128xbf16>
    %cst_132 = arith.constant dense<0.000000e+00> : vector<2x128xf32>
    %150 = tpu.matmul %148, %149, %cst_132 {dimension_numbers = #tpu.dot_dimension_numbers<[1], [0], [0], [1], [0, 0, 1, 1], [], []>} : vector<2x1024xbf16>, vector<1024x128xbf16>, vector<2x128xf32> -> vector<2x128xf32>
    %c0_133 = arith.constant 0 : index
    %c0_134 = arith.constant 0 : index
    %151 = vector.load %arg13[%c0_133, %c0_134] : memref<1x128xf32, #tpu.memory_space<vmem>>, vector<1x128xf32>
    %152 = vector.broadcast %151 : vector<1x128xf32> to vector<2x128xf32>
    %153 = arith.addf %150, %152 : vector<2x128xf32>
    %c0_135 = arith.constant 0 : index
    %c0_136 = arith.constant 0 : index
    %154 = vector.load %arg14[%c0_135, %c0_136] : memref<2x128xf32, #tpu.memory_space<vmem>>, vector<2x128xf32>
    tpu.vector_store %arg14[%c0_135, %c0_136], %153 {strides = array<i32>} : memref<2x128xf32, #tpu.memory_space<vmem>>, vector<2x128xf32>,
    return
  }
  func.func @transform_0(%arg0: i32) -> (i32, i32, i32) {
    %c0_i32 = arith.constant 0 : i32
    %c0_i32_0 = arith.constant 0 : i32
    %c0_i32_1 = arith.constant 0 : i32
    return %arg0, %c0_i32, %c0_i32_0 : i32, i32, i32
  }
  func.func @transform_1(%arg0: i32) -> (i32, i32) {
    %c0_i32 = arith.constant 0 : i32
    %c0_i32_0 = arith.constant 0 : i32
    %c0_i32_1 = arith.constant 0 : i32
    return %c0_i32, %c0_i32_0 : i32, i32
  }
  func.func @transform_2(%arg0: i32) -> (i32, i32) {
    %c0_i32 = arith.constant 0 : i32
    %c0_i32_0 = arith.constant 0 : i32
    %c0_i32_1 = arith.constant 0 : i32
    return %c0_i32, %c0_i32_0 : i32, i32
  }
  func.func @transform_3(%arg0: i32) -> (i32, i32, i32) {
    %c0_i32 = arith.constant 0 : i32
    %c0_i32_0 = arith.constant 0 : i32
    %c0_i32_1 = arith.constant 0 : i32
    %c0_i32_2 = arith.constant 0 : i32
    return %c0_i32, %c0_i32_0, %c0_i32_1 : i32, i32, i32
  }
  func.func @transform_4(%arg0: i32) -> (i32, i32) {
    %c0_i32 = arith.constant 0 : i32
    %c0_i32_0 = arith.constant 0 : i32
    %c0_i32_1 = arith.constant 0 : i32
    return %c0_i32, %c0_i32_0 : i32, i32
  }
  func.func @transform_5(%arg0: i32) -> (i32, i32, i32) {
    %c0_i32 = arith.constant 0 : i32
    %c0_i32_0 = arith.constant 0 : i32
    %c0_i32_1 = arith.constant 0 : i32
    %c0_i32_2 = arith.constant 0 : i32
    return %c0_i32, %c0_i32_0, %c0_i32_1 : i32, i32, i32
  }
  func.func @transform_6(%arg0: i32) -> (i32, i32) {
    %c0_i32 = arith.constant 0 : i32
    %c0_i32_0 = arith.constant 0 : i32
    %c0_i32_1 = arith.constant 0 : i32
    return %c0_i32, %c0_i32_0 : i32, i32
  }
  func.func @transform_7(%arg0: i32) -> (i32, i32, i32) {
    %c0_i32 = arith.constant 0 : i32
    %c0_i32_0 = arith.constant 0 : i32
    %c0_i32_1 = arith.constant 0 : i32
    %c0_i32_2 = arith.constant 0 : i32
    return %c0_i32, %c0_i32_0, %c0_i32_1 : i32, i32, i32
  }
  func.func @transform_8(%arg0: i32) -> (i32, i32) {
    %c0_i32 = arith.constant 0 : i32
    %c0_i32_0 = arith.constant 0 : i32
    %c0_i32_1 = arith.constant 0 : i32
    return %c0_i32, %c0_i32_0 : i32, i32
  }
  func.func @transform_9(%arg0: i32) -> (i32, i32) {
    %c0_i32 = arith.constant 0 : i32
    %c0_i32_0 = arith.constant 0 : i32
    %c0_i32_1 = arith.constant 0 : i32
    return %c0_i32, %c0_i32_0 : i32, i32
  }
  func.func @transform_10(%arg0: i32) -> (i32, i32) {
    %c0_i32 = arith.constant 0 : i32
    %c0_i32_0 = arith.constant 0 : i32
    %c0_i32_1 = arith.constant 0 : i32
    return %c0_i32, %c0_i32_0 : i32, i32
  }
  func.func @transform_11(%arg0: i32) -> (i32, i32) {
    %c0_i32 = arith.constant 0 : i32
    %c0_i32_0 = arith.constant 0 : i32
    %c0_i32_1 = arith.constant 0 : i32
    return %c0_i32, %c0_i32_0 : i32, i32
  }
  func.func @transform_12(%arg0: i32) -> (i32, i32) {
    %c0_i32 = arith.constant 0 : i32
    %c0_i32_0 = arith.constant 0 : i32
    %c0_i32_1 = arith.constant 0 : i32
    return %c0_i32, %c0_i32_0 : i32, i32
  }
  func.func @transform_13(%arg0: i32) -> (i32, i32) {
    %c0_i32 = arith.constant 0 : i32
    %c0_i32_0 = arith.constant 0 : i32
    return %arg0, %c0_i32 : i32, i32
  }
}

</mosaic_0001>

<llo_original>
// kernel: cnn_forward.1
$region0: #{cnn_forward.1}
  #allocation0 [shape = 'u32[]', space=smem, size = 0x4, offset = 0x4, fixed_abs, tag = 'smem constant byte address 0x4 - core index']
  #allocation1 [shape = 'u32[144,128]{1,0:T(1,128)}', space=vmem, size = 0x12000, scoped, tag = 'internal scratch']
  #allocation2 [shape = 'bf16[2,18,18]{2,1,0:T(8,128)(2,1)}', space=vmem, size = 0x3000, scoped, tag = 'scratch operand']
  #allocation3 [shape = 'bf16[2,16,54]{2,1,0:T(16,128)(2,1)}', space=vmem, size = 0x2000, scoped, tag = 'scratch operand']
  #allocation4 [shape = 'bf16[2,10,320]{2,1,0:T(8,128)(2,1)}', space=vmem, size = 0x6000, scoped, tag = 'scratch operand']
  #allocation5 [shape = 'bf16[2,6,384]{2,1,0:T(8,128)(2,1)}', space=vmem, size = 0x3000, scoped, tag = 'scratch operand']
  #allocation6 [shape = 'bf16[2,4,512]{2,1,0:T(4,128)(2,1)}', space=vmem, size = 0x2000, scoped, tag = 'scratch operand']
  %s0 = inlined_call_operand.vmem [shape: bf16[2,16,16], index: 0, kind: input, shape index: {}]
  %s1 = inlined_call_operand.hbm [shape: bf16[54,512], index: 1, kind: input, shape index: {}]
  %s2 = inlined_call_operand.hbm [shape: f32[1,512], index: 2, kind: input, shape index: {}]
  %s3 = inlined_call_operand.hbm [shape: bf16[3,320,512], index: 3, kind: input, shape index: {}]
  %s4 = inlined_call_operand.hbm [shape: f32[1,512], index: 4, kind: input, shape index: {}]
  %s5 = inlined_call_operand.hbm [shape: bf16[3,384,512], index: 5, kind: input, shape index: {}]
  %s6 = inlined_call_operand.hbm [shape: f32[1,512], index: 6, kind: input, shape index: {}]
  %s7 = inlined_call_operand.hbm [shape: bf16[3,512,512], index: 7, kind: input, shape index: {}]
  %s8 = inlined_call_operand.hbm [shape: f32[1,512], index: 8, kind: input, shape index: {}]
  %s9 = inlined_call_operand.hbm [shape: bf16[256,1024], index: 9, kind: input, shape index: {}]
  %s10 = inlined_call_operand.hbm [shape: f32[1,1024], index: 10, kind: input, shape index: {}]
  %s11 = inlined_call_operand.hbm [shape: bf16[1024,128], index: 11, kind: input, shape index: {}]
  %s12 = inlined_call_operand.hbm [shape: f32[1,128], index: 12, kind: input, shape index: {}]
  %s13 = inlined_call_operand.hbm [shape: f32[2,128], index: 13, kind: output, shape index: {}]
  %s14 = sld [smem:[#allocation0]]
  $region110: #{cnn_forward.1} parent=0
    _
  %s16 = ssub.s32 1, %s14
  %s17 = scalar_select 0, %s16, %s14
  $region1: #{cnn_forward.1} parent=0
    #allocation7 [shape = 'u8[57344]{0}', space=vmem, size = 0xe000, scoped, tag = 'input window, operand 1, single buffered']
    #allocation8 [shape = 's32[1]{0}', space=sflag, size = 0x4, scoped, tag = 'scoped memory for cnn_forward.1']
    #allocation9 [shape = 's32[1]{0}', space=sflag, size = 0x4, scoped, tag = 'scoped memory for cnn_forward.1']
    #allocation10 [shape = 'u8[2048]{0}', space=vmem, size = 0x800, scoped, tag = 'input window, operand 2, single buffered']
    #allocation11 [shape = 's32[1]{0}', space=sflag, size = 0x4, scoped, tag = 'scoped memory for cnn_forward.1']
    #allocation12 [shape = 'u8[983040]{0}', space=vmem, size = 0xf0000, scoped, tag = 'input window, operand 3, single buffered']
    #allocation13 [shape = 'u8[2048]{0}', space=vmem, size = 0x800, scoped, tag = 'input window, operand 4, single buffered']
    #allocation14 [shape = 's32[1]{0}', space=sflag, size = 0x4, scoped, tag = 'scoped memory for cnn_forward.1']
    #allocation15 [shape = 'u8[1179648]{0}', space=vmem, size = 0x120000, scoped, tag = 'input window, operand 5, single buffered']
    #allocation16 [shape = 'u8[2048]{0}', space=vmem, size = 0x800, scoped, tag = 'input window, operand 6, single buffered']
    #allocation17 [shape = 's32[1]{0}', space=sflag, size = 0x4, scoped, tag = 'scoped memory for cnn_forward.1']
    #allocation18 [shape = 'u8[1572864]{0}', space=vmem, size = 0x180000, scoped, tag = 'input window, operand 7, single buffered']
    #allocation19 [shape = 'u8[2048]{0}', space=vmem, size = 0x800, scoped, tag = 'input window, operand 8, single buffered']
    #allocation20 [shape = 's32[1]{0}', space=sflag, size = 0x4, scoped, tag = 'scoped memory for cnn_forward.1']
    #allocation21 [shape = 'u8[524288]{0}', space=vmem, size = 0x80000, scoped, tag = 'input window, operand 9, single buffered']
    #allocation22 [shape = 'u8[4096]{0}', space=vmem, size = 0x1000, scoped, tag = 'input window, operand 10, single buffered']
    #allocation23 [shape = 's32[1]{0}', space=sflag, size = 0x4, scoped, tag = 'scoped memory for cnn_forward.1']
    #allocation24 [shape = 'u8[262144]{0}', space=vmem, size = 0x40000, scoped, tag = 'input window, operand 11, single buffered']
    #allocation25 [shape = 'u8[512]{0}', space=vmem, size = 0x400, scoped, tag = 'input window, operand 12, single buffered']
    #allocation26 [shape = 's32[1]{0}', space=sflag, size = 0x4, scoped, tag = 'scoped memory for cnn_forward.1']
    #allocation27 [shape = 'u8[1024]{0}', space=vmem, size = 0x400, scoped, tag = 'output window, operand 0, single buffered']
    %18 = vsyncpa [#allocation8], 0
    %19 = vsyncpa [#allocation11], 0
    %20 = vsyncpa [#allocation14], 0
    %21 = vsyncpa [#allocation17], 0
    %22 = vsyncpa [#allocation20], 0
    %23 = vsyncpa [#allocation23], 0
    %24 = vsyncpa [#allocation26], 0
    %25 = vsyncpa [#allocation9], 0
    // Predicated region
    $region2: #{cnn_forward.1} parent=1 // pred_check
      _
    $region3: #{cnn_forward.1} parent=1 // pred_check_branch
      %27 = sbr.rel (0) target = $region5
    $region4: #{cnn_forward.1} parent=1 // pred_region
      _
    $region5: #{cnn_forward.1} parent=1 // pred_fallthru
      _
    // Predicated region
    $region6: #{cnn_forward.1} parent=1 // pred_check
      _
    $region7: #{cnn_forward.1} parent=1 // pred_check_branch
      %29 = sbr.rel (0) target = $region9
    $region8: #{cnn_forward.1} parent=1 // pred_region
      %s31 = ssub.s32 1792, 1792
      %32 = vsyncadd [#allocation8], %s31
      %s33 = sshll.u32 [#allocation7], 4
      %s34 = int_to_ptr.vmem [resolvable:$true] %s33
      %39 = dma.hbm_to_vmem [thread:$0]  %s1, 1792, %s34, [#allocation8], 256, 256, 16
    $region9: #{cnn_forward.1} parent=1 // pred_fallthru
      _
    // Predicated region
    $region10: #{cnn_forward.1} parent=1 // pred_check
      _
    $region11: #{cnn_forward.1} parent=1 // pred_check_branch
      %41 = sbr.rel (0) target = $region13
    $region12: #{cnn_forward.1} parent=1 // pred_region
      %s43 = ssub.s32 64, 64
      %44 = vsyncadd [#allocation11], %s43
      %s46 = sshll.u32 [#allocation10], 4
      %s47 = int_to_ptr.vmem [resolvable:$true] %s46
      %49 = dma.hbm_to_vmem [thread:$0]  %s2, 64, %s47, [#allocation11]
    $region13: #{cnn_forward.1} parent=1 // pred_fallthru
      _
    // Predicated region
    $region14: #{cnn_forward.1} parent=1 // pred_check
      _
    $region15: #{cnn_forward.1} parent=1 // pred_check_branch
      %51 = sbr.rel (0) target = $region17
    $region16: #{cnn_forward.1} parent=1 // pred_region
      %s53 = ssub.s32 30720, 30720
      %54 = vsyncadd [#allocation11], %s53
      %s55 = sshll.u32 [#allocation12], 4
      %s56 = int_to_ptr.vmem [resolvable:$true] %s55
      %61 = dma.hbm_to_vmem [thread:$0]  %s3, 30720, %s56, [#allocation11], 256, 256, 16
    $region17: #{cnn_forward.1} parent=1 // pred_fallthru
      _
    // Predicated region
    $region18: #{cnn_forward.1} parent=1 // pred_check
      _
    $region19: #{cnn_forward.1} parent=1 // pred_check_branch
      %63 = sbr.rel (0) target = $region21
    $region20: #{cnn_forward.1} parent=1 // pred_region
      %s65 = ssub.s32 64, 64
      %66 = vsyncadd [#allocation14], %s65
      %s68 = sshll.u32 [#allocation13], 4
      %s69 = int_to_ptr.vmem [resolvable:$true] %s68
      %71 = dma.hbm_to_vmem [thread:$0]  %s4, 64, %s69, [#allocation14]
    $region21: #{cnn_forward.1} parent=1 // pred_fallthru
      _
    // Predicated region
    $region22: #{cnn_forward.1} parent=1 // pred_check
      _
    $region23: #{cnn_forward.1} parent=1 // pred_check_branch
      %73 = sbr.rel (0) target = $region25
    $region24: #{cnn_forward.1} parent=1 // pred_region
      %s75 = ssub.s32 36864, 36864
      %76 = vsyncadd [#allocation14], %s75
      %s77 = sshll.u32 [#allocation15], 4
      %s78 = int_to_ptr.vmem [resolvable:$true] %s77
      %83 = dma.hbm_to_vmem [thread:$0]  %s5, 36864, %s78, [#allocation14], 256, 256, 16
    $region25: #{cnn_forward.1} parent=1 // pred_fallthru
      _
    // Predicated region
    $region26: #{cnn_forward.1} parent=1 // pred_check
      _
    $region27: #{cnn_forward.1} parent=1 // pred_check_branch
      %85 = sbr.rel (0) target = $region29
    $region28: #{cnn_forward.1} parent=1 // pred_region
      %s87 = ssub.s32 64, 64
      %88 = vsyncadd [#allocation17], %s87
      %s90 = sshll.u32 [#allocation16], 4
      %s91 = int_to_ptr.vmem [resolvable:$true] %s90
      %93 = dma.hbm_to_vmem [thread:$0]  %s6, 64, %s91, [#allocation17]
    $region29: #{cnn_forward.1} parent=1 // pred_fallthru
      _
    // Predicated region
    $region30: #{cnn_forward.1} parent=1 // pred_check
      _
    $region31: #{cnn_forward.1} parent=1 // pred_check_branch
      %95 = sbr.rel (0) target = $region33
    $region32: #{cnn_forward.1} parent=1 // pred_region
      %s97 = ssub.s32 49152, 49152
      %98 = vsyncadd [#allocation17], %s97
      %s99 = sshll.u32 [#allocation18], 4
      %s100 = int_to_ptr.vmem [resolvable:$true] %s99
      %105 = dma.hbm_to_vmem [thread:$0]  %s7, 49152, %s100, [#allocation17], 256, 256, 16
    $region33: #{cnn_forward.1} parent=1 // pred_fallthru
      _
    // Predicated region
    $region34: #{cnn_forward.1} parent=1 // pred_check
      _
    $region35: #{cnn_forward.1} parent=1 // pred_check_branch
      %107 = sbr.rel (0) target = $region37
    $region36: #{cnn_forward.1} parent=1 // pred_region
      %s109 = ssub.s32 64, 64
      %110 = vsyncadd [#allocation20], %s109
      %s112 = sshll.u32 [#allocation19], 4
      %s113 = int_to_ptr.vmem [resolvable:$true] %s112
      %115 = dma.hbm_to_vmem [thread:$0]  %s8, 64, %s113, [#allocation20]
    $region37: #{cnn_forward.1} parent=1 // pred_fallthru
      _
    // Predicated region
    $region38: #{cnn_forward.1} parent=1 // pred_check
      _
    $region39: #{cnn_forward.1} parent=1 // pred_check_branch
      %117 = sbr.rel (0) target = $region41
    $region40: #{cnn_forward.1} parent=1 // pred_region
      %s119 = ssub.s32 16384, 16384
      %120 = vsyncadd [#allocation20], %s119
      %s121 = sshll.u32 [#allocation21], 4
      %s122 = int_to_ptr.vmem [resolvable:$true] %s121
      %127 = dma.hbm_to_vmem [thread:$0]  %s9, 16384, %s122, [#allocation20], 512, 512, 32
    $region41: #{cnn_forward.1} parent=1 // pred_fallthru
      _
    // Predicated region
    $region42: #{cnn_forward.1} parent=1 // pred_check
      _
    $region43: #{cnn_forward.1} parent=1 // pred_check_branch
      %129 = sbr.rel (0) target = $region45
    $region44: #{cnn_forward.1} parent=1 // pred_region
      %s131 = ssub.s32 128, 128
      %132 = vsyncadd [#allocation23], %s131
      %s134 = sshll.u32 [#allocation22], 4
      %s135 = int_to_ptr.vmem [resolvable:$true] %s134
      %137 = dma.hbm_to_vmem [thread:$0]  %s10, 128, %s135, [#allocation23]
    $region45: #{cnn_forward.1} parent=1 // pred_fallthru
      _
    // Predicated region
    $region46: #{cnn_forward.1} parent=1 // pred_check
      _
    $region47: #{cnn_forward.1} parent=1 // pred_check_branch
      %139 = sbr.rel (0) target = $region49
    $region48: #{cnn_forward.1} parent=1 // pred_region
      %s141 = ssub.s32 8192, 8192
      %142 = vsyncadd [#allocation23], %s141
      %s143 = sshll.u32 [#allocation24], 4
      %s144 = int_to_ptr.vmem [resolvable:$true] %s143
      %149 = dma.hbm_to_vmem [thread:$0]  %s11, 8192, %s144, [#allocation23], 64, 64, 4
    $region49: #{cnn_forward.1} parent=1 // pred_fallthru
      _
    // Predicated region
    $region50: #{cnn_forward.1} parent=1 // pred_check
      _
    $region51: #{cnn_forward.1} parent=1 // pred_check_branch
      %151 = sbr.rel (0) target = $region53
    $region52: #{cnn_forward.1} parent=1 // pred_region
      %s153 = ssub.s32 16, 16
      %154 = vsyncadd [#allocation26], %s153
      %s156 = sshll.u32 [#allocation25], 4
      %s157 = int_to_ptr.vmem [resolvable:$true] %s156
      %159 = dma.hbm_to_vmem [thread:$0]  %s12, 16, %s157, [#allocation26]
    $region53: #{cnn_forward.1} parent=1 // pred_fallthru
      _
    // Predicated region
    $region54: #{cnn_forward.1} parent=1 // pred_check
      _
    $region55: #{cnn_forward.1} parent=1 // pred_check_branch
      %161 = sbr.rel (0) target = $region57
    $region56: #{cnn_forward.1} parent=1 // pred_region
      %162 = dma.done [#allocation8], 1792
    $region57: #{cnn_forward.1} parent=1 // pred_fallthru
      _
    // Predicated region
    $region58: #{cnn_forward.1} parent=1 // pred_check
      _
    $region59: #{cnn_forward.1} parent=1 // pred_check_branch
      %164 = sbr.rel (0) target = $region61
    $region60: #{cnn_forward.1} parent=1 // pred_region
      %165 = dma.done [#allocation11], 64
    $region61: #{cnn_forward.1} parent=1 // pred_fallthru
      _
    // Predicated region
    $region62: #{cnn_forward.1} parent=1 // pred_check
      _
    $region63: #{cnn_forward.1} parent=1 // pred_check_branch
      %167 = sbr.rel (0) target = $region65
    $region64: #{cnn_forward.1} parent=1 // pred_region
      %168 = dma.done [#allocation11], 30720
    $region65: #{cnn_forward.1} parent=1 // pred_fallthru
      _
    // Predicated region
    $region66: #{cnn_forward.1} parent=1 // pred_check
      _
    $region67: #{cnn_forward.1} parent=1 // pred_check_branch
      %170 = sbr.rel (0) target = $region69
    $region68: #{cnn_forward.1} parent=1 // pred_region
      %171 = dma.done [#allocation14], 64
    $region69: #{cnn_forward.1} parent=1 // pred_fallthru
      _
    // Predicated region
    $region70: #{cnn_forward.1} parent=1 // pred_check
      _
    $region71: #{cnn_forward.1} parent=1 // pred_check_branch
      %173 = sbr.rel (0) target = $region73
    $region72: #{cnn_forward.1} parent=1 // pred_region
      %174 = dma.done [#allocation14], 36864
    $region73: #{cnn_forward.1} parent=1 // pred_fallthru
      _
    // Predicated region
    $region74: #{cnn_forward.1} parent=1 // pred_check
      _
    $region75: #{cnn_forward.1} parent=1 // pred_check_branch
      %176 = sbr.rel (0) target = $region77
    $region76: #{cnn_forward.1} parent=1 // pred_region
      %177 = dma.done [#allocation17], 64
    $region77: #{cnn_forward.1} parent=1 // pred_fallthru
      _
    // Predicated region
    $region78: #{cnn_forward.1} parent=1 // pred_check
      _
    $region79: #{cnn_forward.1} parent=1 // pred_check_branch
      %179 = sbr.rel (0) target = $region81
    $region80: #{cnn_forward.1} parent=1 // pred_region
      %180 = dma.done [#allocation17], 49152
    $region81: #{cnn_forward.1} parent=1 // pred_fallthru
      _
    // Predicated region
    $region82: #{cnn_forward.1} parent=1 // pred_check
      _
    $region83: #{cnn_forward.1} parent=1 // pred_check_branch
      %182 = sbr.rel (0) target = $region85
    $region84: #{cnn_forward.1} parent=1 // pred_region
      %183 = dma.done [#allocation20], 64
    $region85: #{cnn_forward.1} parent=1 // pred_fallthru
      _
    // Predicated region
    $region86: #{cnn_forward.1} parent=1 // pred_check
      _
    $region87: #{cnn_forward.1} parent=1 // pred_check_branch
      %185 = sbr.rel (0) target = $region89
    $region88: #{cnn_forward.1} parent=1 // pred_region
      %186 = dma.done [#allocation20], 16384
    $region89: #{cnn_forward.1} parent=1 // pred_fallthru
      _
    // Predicated region
    $region90: #{cnn_forward.1} parent=1 // pred_check
      _
    $region91: #{cnn_forward.1} parent=1 // pred_check_branch
      %188 = sbr.rel (0) target = $region93
    $region92: #{cnn_forward.1} parent=1 // pred_region
      %189 = dma.done [#allocation23], 128
    $region93: #{cnn_forward.1} parent=1 // pred_fallthru
      _
    // Predicated region
    $region94: #{cnn_forward.1} parent=1 // pred_check
      _
    $region95: #{cnn_forward.1} parent=1 // pred_check_branch
      %191 = sbr.rel (0) target = $region97
    $region96: #{cnn_forward.1} parent=1 // pred_region
      %192 = dma.done [#allocation23], 8192
    $region97: #{cnn_forward.1} parent=1 // pred_fallthru
      _
    // Predicated region
    $region98: #{cnn_forward.1} parent=1 // pred_check
      _
    $region99: #{cnn_forward.1} parent=1 // pred_check_branch
      %194 = sbr.rel (0) target = $region101
    $region100: #{cnn_forward.1} parent=1 // pred_region
      %195 = dma.done [#allocation26], 16
    $region101: #{cnn_forward.1} parent=1 // pred_fallthru
      _
    %vm197 = vcmask 142336
    %198 = vst.msk [vmem:[#allocation2] sm:$0xf] %vm197, 0
    %199 = vst.msk [vmem:[#allocation2 + $0x4] sm:$0xf] %vm197, 0
    %vm200 = vcmask 139264
    %201 = vst.msk [vmem:[#allocation2 + $0x8] sm:$0x1] %vm200, 0
    %202 = vst.msk [vmem:[#allocation2 + $0xc] sm:$0xf] %vm197, 0
    %203 = vst.msk [vmem:[#allocation2 + $0x10] sm:$0xf] %vm197, 0
    %204 = vst.msk [vmem:[#allocation2 + $0x14] sm:$0x1] %vm200, 0
    %205 = vst [vmem:[#allocation4] sm:$0xff] 0
    %vm206 = vcmask 519168
    %207 = vst.msk [vmem:[#allocation4 + $0x8] sm:$0xf] %vm206, 0
    %208 = vst [vmem:[#allocation4 + $0xc] sm:$0x11] 0
    %vm209 = vcmask 516096
    %210 = vst.msk [vmem:[#allocation4 + $0x14] sm:$0x1] %vm209, 0
    %211 = vst [vmem:[#allocation4 + $0x18] sm:$0xff] 0
    %212 = vst.msk [vmem:[#allocation4 + $0x20] sm:$0xf] %vm206, 0
    %213 = vst [vmem:[#allocation4 + $0x24] sm:$0x11] 0
    %214 = vst.msk [vmem:[#allocation4 + $0x2c] sm:$0x1] %vm209, 0
    %215 = vst [vmem:[#allocation5] sm:$0x77] 0
    %216 = vst [vmem:[#allocation5 + $0x8] sm:$0x7] 0
    %217 = vst [vmem:[#allocation5 + $0xc] sm:$0x77] 0
    %218 = vst [vmem:[#allocation5 + $0x14] sm:$0x7] 0
    %219 = vst [vmem:[#allocation6] sm:$0xff] 0
    %220 = vst [vmem:[#allocation6 + $0x8] sm:$0xff] 0
    %v221 = vld [vmem:[%s0] sm:$0xf]
    %v222 = vld [vmem:[%s0 + $0x4] sm:$0xf]
    %v223 = vld [vmem:[%s0 + $0x8] sm:$0xf]
    %v224 = vld [vmem:[%s0 + $0xc] sm:$0xf]
    %vm225 = vsmask.f32 256
    %vm226 = vsmask.f32 4368
    %vm227 = vmor %vm225, %vm226
    %v229 = vshrl.u32 %v221, 16
    %v231 = vrot.slane %v229, 7
    %v232 = vshll.u32 %v221, 16
    %v234 = vor.u32 %v231, %v232
    %v235 = vrot.slane %v231, 4
    %v237 = vshrl.u32 %v222, 16
    %v239 = vrot.slane %v237, 7
    %v240 = vshll.u32 %v222, 16
    %v242 = vor.u32 %v239, %v240
    %v243 = vsel %vm227, %v235, %v242
    %v244 = vrot.slane %v239, 4
    %v246 = vshrl.u32 %v223, 16
    %v248 = vrot.slane %v246, 7
    %v249 = vshll.u32 %v223, 16
    %v251 = vor.u32 %v248, %v249
    %v252 = vrot.slane %v248, 4
    %v254 = vshrl.u32 %v224, 16
    %v256 = vrot.slane %v254, 7
    %v257 = vshll.u32 %v224, 16
    %v259 = vor.u32 %v256, %v257
    %v260 = vsel %vm227, %v252, %v259
    %v261 = vrot.slane %v256, 4
    %262 = vrot.lane.b32.xlu0 %v234, 1
    %v263 = vpop.permute.xlu0 %262
    %264 = vrot.lane.b32.xlu0 %v243, 1
    %v265 = vpop.permute.xlu0 %264
    %266 = vrot.lane.b32.xlu0 %v244, 1
    %v267 = vpop.permute.xlu0 %266
    %268 = vrot.lane.b32.xlu0 %v251, 1
    %v269 = vpop.permute.xlu0 %268
    %270 = vrot.lane.b32.xlu0 %v260, 1
    %v271 = vpop.permute.xlu0 %270
    %272 = vrot.lane.b32.xlu0 %v261, 1
    %v273 = vpop.permute.xlu0 %272
    %vm280 = vcmask 134152
    %vm281 = vsmask.f32 7938
    %vm282 = vmand %vm280, %vm281
    %v283 = vld [vmem:[#allocation2] sm:$0xf]
    %v284 = vsel %vm282, %v263, %v283
    %285 = vst [vmem:[#allocation2] sm:$0xf] %v284
    %vm286 = vcmask 134152
    %287 = vst.msk [vmem:[#allocation2 + $0x4] sm:$0xf] %vm286, %v265
    %vm288 = vcmask 131080
    %vm289 = vmand %vm288, %vm225
    %v290 = vld [vmem:[#allocation2 + $0x8] sm:$0x1]
    %v291 = vsel %vm289, %v267, %v290
    %292 = vst [vmem:[#allocation2 + $0x8] sm:$0x1] %v291
    %v293 = vld [vmem:[#allocation2 + $0xc] sm:$0xf]
    %v294 = vsel %vm282, %v269, %v293
    %295 = vst [vmem:[#allocation2 + $0xc] sm:$0xf] %v294
    %296 = vst.msk [vmem:[#allocation2 + $0x10] sm:$0xf] %vm286, %v271
    %v297 = vld [vmem:[#allocation2 + $0x14] sm:$0x1]
    %v298 = vsel %vm289, %v273, %v297
    %299 = vst [vmem:[#allocation2 + $0x14] sm:$0x1] %v298
    %v300 = vld [vmem:[#allocation2] sm:$0xf]
    %v301 = vld [vmem:[#allocation2 + $0x4] sm:$0xf]
    %v302 = vld [vmem:[#allocation2 + $0xc] sm:$0xf]
    %v303 = vld [vmem:[#allocation2 + $0x10] sm:$0xf]
    %v308 = vunpack.c.l.b16 %v300
    %v309 = vunpack.c.l.b16 %v301
    %v310 = vunpack.c.l.b16 %v302
    %v311 = vunpack.c.l.b16 %v303
    %v312 = vpack.c.b16 %v309, %v308
    %v313 = vpack.c.b16 %v311, %v310
    %vm316 = vcmask 146432
    %317 = vst.msk [vmem:[#allocation3] sm:$0xff] %vm316, %v312
    %318 = vst.msk [vmem:[#allocation3 + $0x8] sm:$0xff] %vm316, %v313
    %v319 = vld [vmem:[#allocation2] sm:$0xf]
    %v320 = vld [vmem:[#allocation2 + $0x4] sm:$0xf]
    %v321 = vld [vmem:[#allocation2 + $0x8] sm:$0x1]
    %v322 = vld [vmem:[#allocation2 + $0xc] sm:$0xf]
    %v323 = vld [vmem:[#allocation2 + $0x10] sm:$0xf]
    %v324 = vld [vmem:[#allocation2 + $0x14] sm:$0x1]
    %v331 = vunpack.c.l.b16 %v319
    %v332 = vunpack.c.l.b16 %v320
    %v333 = vunpack.c.l.b16 %v321
    %v334 = vunpack.c.l.b16 %v322
    %v335 = vunpack.c.l.b16 %v323
    %v336 = vunpack.c.l.b16 %v324
    %v337 = vpack.c.b16 %v332, %v331
    %v338 = vpack.c.b16 %v333, %v333
    %v339 = vpack.c.b16 %v335, %v334
    %v340 = vpack.c.b16 %v336, %v336
    %vm341 = vsmask.f32 7424
    %v343 = vshrl.u32 %v337, 16
    %v345 = vshll.u32 %v337, 16
    %v347 = vrot.slane %v345, 1
    %v348 = vor.u32 %v343, %v347
    %v350 = vshll.u32 %v338, 16
    %v352 = vrot.slane %v350, 1
    %v353 = vsel %vm341, %v348, %v352
    %v355 = vshrl.u32 %v339, 16
    %v357 = vshll.u32 %v339, 16
    %v359 = vrot.slane %v357, 1
    %v360 = vor.u32 %v355, %v359
    %v362 = vshll.u32 %v340, 16
    %v364 = vrot.slane %v362, 1
    %v365 = vsel %vm341, %v360, %v364
    %366 = vrot.lane.b32.xlu0 %v353, 18
    %v367 = vpop.permute.xlu0 %366
    %368 = vrot.lane.b32.xlu0 %v365, 18
    %v369 = vpop.permute.xlu0 %368
    %vm372 = vcmask 294032
    %373 = vst.msk [vmem:[#allocation3] sm:$0xff] %vm372, %v367
    %374 = vst.msk [vmem:[#allocation3 + $0x8] sm:$0xff] %vm372, %v369
    %v375 = vld [vmem:[#allocation2] sm:$0xe]
    %v376 = vld [vmem:[#allocation2 + $0x4] sm:$0xf]
    %v377 = vld [vmem:[#allocation2 + $0x8] sm:$0x1]
    %v378 = vld [vmem:[#allocation2 + $0xc] sm:$0xe]
    %v379 = vld [vmem:[#allocation2 + $0x10] sm:$0xf]
    %v380 = vld [vmem:[#allocation2 + $0x14] sm:$0x1]
    %v387 = vunpack.c.l.b16 %v375
    %v388 = vunpack.c.l.b16 %v376
    %v389 = vunpack.c.l.b16 %v377
    %v390 = vunpack.c.l.b16 %v378
    %v391 = vunpack.c.l.b16 %v379
    %v392 = vunpack.c.l.b16 %v380
    %v393 = vpack.c.b16 %v388, %v387
    %v394 = vpack.c.b16 %v389, %v389
    %v395 = vpack.c.b16 %v391, %v390
    %v396 = vpack.c.b16 %v392, %v392
    %vm397 = vcmask 1046528
    %v398 = vrot.slane %v393, 1
    %v399 = vrot.slane %v394, 1
    %v400 = vsel %vm397, %v398, %v399
    %v401 = vrot.slane %v395, 1
    %v402 = vrot.slane %v396, 1
    %v403 = vsel %vm397, %v401, %v402
    %404 = vrot.lane.b32.xlu0 %v400, 36
    %v405 = vpop.permute.xlu0 %404
    %406 = vrot.lane.b32.xlu0 %v403, 36
    %v407 = vpop.permute.xlu0 %406
    %vm410 = vcmask 441632
    %411 = vst.msk [vmem:[#allocation3] sm:$0xff] %vm410, %v405
    %412 = vst.msk [vmem:[#allocation3 + $0x8] sm:$0xff] %vm410, %v407
    %v413 = vld [vmem:[#allocation3] sm:$0xff]
    %v414 = vld [vmem:[#allocation3 + $0x8] sm:$0xff]
    %v415 = vld [vmem:[#allocation7] sm:$0xff]
    %v416 = vld [vmem:[#allocation7 + $0x8] sm:$0xff]
    %v417 = vld [vmem:[#allocation7 + $0x10] sm:$0xff]
    %v418 = vld [vmem:[#allocation7 + $0x18] sm:$0xff]
    %v419 = vld [vmem:[#allocation7 + $0x20] sm:$0xff]
    %v420 = vld [vmem:[#allocation7 + $0x28] sm:$0xff]
    %v421 = vld [vmem:[#allocation7 + $0x30] sm:$0xff]
    %v422 = vld [vmem:[#allocation7 + $0x38] sm:$0xff]
    %v423 = vld [vmem:[#allocation7 + $0x40] sm:$0xff]
    %v424 = vld [vmem:[#allocation7 + $0x48] sm:$0xff]
    %v425 = vld [vmem:[#allocation7 + $0x50] sm:$0xff]
    %v426 = vld [vmem:[#allocation7 + $0x58] sm:$0xff]
    %v427 = vld [vmem:[#allocation7 + $0x60] sm:$0x77]
    %v428 = vld [vmem:[#allocation7 + $0x68] sm:$0x77]
    %v429 = vld [vmem:[#allocation10] sm:$0xf]
    %v431 = vlaneseq
    %v432 = vshrl.u32 %v431, 7
    %v433 = vsub.s32 0, %v432
    %v434 = vrot.slane %v429, %v433
    %v435 = vlaneseq
    %v436 = vshrl.u32 %v435, 7
    %v437 = vsub.s32 1, %v436
    %v438 = vrot.slane %v429, %v437
    %v439 = vlaneseq
    %v440 = vshrl.u32 %v439, 7
    %v441 = vsub.s32 2, %v440
    %v442 = vrot.slane %v429, %v441
    %v443 = vlaneseq
    %v444 = vshrl.u32 %v443, 7
    %v445 = vsub.s32 3, %v444
    %v446 = vrot.slane %v429, %v445
    %v465 = vunpack.c.l.b16 %v415
    %v466 = vunpack.c.h.b16 %v415
    %v467 = vunpack.c.l.b16 %v416
    %v468 = vunpack.c.h.b16 %v416
    %v469 = vunpack.c.l.b16 %v417
    %v470 = vunpack.c.h.b16 %v417
    %v471 = vunpack.c.l.b16 %v418
    %v472 = vunpack.c.h.b16 %v418
    %v473 = vunpack.c.l.b16 %v419
    %v474 = vunpack.c.h.b16 %v419
    %v475 = vunpack.c.l.b16 %v420
    %v476 = vunpack.c.h.b16 %v420
    %v477 = vunpack.c.l.b16 %v421
    %v478 = vunpack.c.h.b16 %v421
    %v479 = vunpack.c.l.b16 %v422
    %v480 = vunpack.c.h.b16 %v422
    %v481 = vunpack.c.l.b16 %v423
    %v482 = vunpack.c.h.b16 %v423
    %v483 = vunpack.c.l.b16 %v424
    %v484 = vunpack.c.h.b16 %v424
    %v485 = vunpack.c.l.b16 %v425
    %v486 = vunpack.c.h.b16 %v425
    %v487 = vunpack.c.l.b16 %v426
    %v488 = vunpack.c.h.b16 %v426
    %v489 = vunpack.c.l.b16 %v427
    %v490 = vunpack.c.h.b16 %v427
    %v491 = vunpack.c.l.b16 %v428
    %v492 = vunpack.c.h.b16 %v428
    %v493 = vpack.c.b16 %v469, %v465
    %v494 = vpack.c.b16 %v470, %v466
    %v495 = vpack.c.b16 %v471, %v467
    %v496 = vpack.c.b16 %v472, %v468
    %v497 = vpack.c.b16 %v477, %v473
    %v498 = vpack.c.b16 %v478, %v474
    %v499 = vpack.c.b16 %v479, %v475
    %v500 = vpack.c.b16 %v480, %v476
    %v501 = vpack.c.b16 %v485, %v481
    %v502 = vpack.c.b16 %v486, %v482
    %v503 = vpack.c.b16 %v487, %v483
    %v504 = vpack.c.b16 %v488, %v484
    %v505 = vpack.c.b16 %v489, %v489
    %v506 = vpack.c.b16 %v490, %v490
    %v507 = vpack.c.b16 %v491, %v491
    %v508 = vpack.c.b16 %v492, %v492
    %vm521 = vcmask 441344
    %v523 = vsel %vm521, %v413, 0
    %v526 = vsel %vm521, %v414, 0
    %vm528 = vcmask 1042432
    %v530 = vsel %vm528, %v505, 0
    %v533 = vsel %vm528, %v506, 0
    %v536 = vsel %vm528, %v507, 0
    %v539 = vsel %vm528, %v508, 0
    %541 = vmatprep.subr.bf16.mxu0 %v494
    %542 = vmatpush1.bf16.msra.mxu0 %v493
    %543 = vmatprep.subr.bf16.mxu0 %v498
    %544 = vmatpush1.bf16.msra.mxu0 %v497
    %545 = vmatprep.subr.bf16.mxu0 %v502
    %546 = vmatpush1.bf16.msra.mxu0 %v501
    %547 = vmatprep.subr.bf16.mxu0 %v533
    %548 = vmatpush1.bf16.msra.mxu0 %v530
    %549 = vmatprep.subr.bf16.mxu0 0
    %550 = vmatpush1.bf16.msra.mxu0 0
    %551 = vmatprep.subr.bf16.mxu0 0
    %552 = vmatpush1.bf16.msra.mxu0 0
    %553 = vmatprep.subr.bf16.mxu0 0
    %554 = vmatpush1.bf16.msra.mxu0 0
    %555 = vmatprep.subr.bf16.mxu0 0
    %556 = vmatpush1.bf16.msra.mxu0 0
    %557 = vmatprep.subr.bf16.mxu0 0
    %558 = vmatpush1.bf16.msra.mxu0 0
    %559 = vmatprep.subr.bf16.mxu0 0
    %560 = vmatpush1.bf16.msra.mxu0 0
    %561 = vmatprep.subr.bf16.mxu0 0
    %562 = vmatpush1.bf16.msra.mxu0 0
    %563 = vmatprep.subr.bf16.mxu0 0
    %564 = vmatpush1.bf16.msra.mxu0 0
    %565 = vmatprep.subr.bf16.mxu0 0
    %566 = vmatpush1.bf16.msra.mxu0 0
    %567 = vmatprep.subr.bf16.mxu0 0
    %568 = vmatpush1.bf16.msra.mxu0 0
    %569 = vmatprep.subr.bf16.mxu0 0
    %570 = vmatpush1.bf16.msra.mxu0 0
    %571 = vmatprep.subr.bf16.mxu0 0
    %572 = vmatpush1.bf16.msra.mxu0 0
    %573 = vmatprep.mubr.bf16.mxu0 0
    %574 = vmatmul.mubr.bf16.gmra.mrb[0].mxu0 %v523
    %v575 = vpop.f32.mrb[0].mxu0
    %v576 = vadd.f32 %v434, %v575
    %v577 = vpop.f32.mrb[0].mxu0
    %v578 = vadd.f32 %v438, %v577
    %v579 = vpop.f32.mrb[0].mxu0
    %v580 = vadd.f32 %v434, %v579
    %v581 = vpop.f32.mrb[0].mxu0
    %v582 = vadd.f32 %v438, %v581
    %583 = vmatprep.mubr.bf16.mxu0 0
    %584 = vmatmul.mubr.bf16.gmra.mrb[0].mxu0 %v526
    %v585 = vpop.f32.mrb[0].mxu0
    %v586 = vadd.f32 %v434, %v585
    %v587 = vpop.f32.mrb[0].mxu0
    %v588 = vadd.f32 %v438, %v587
    %v589 = vpop.f32.mrb[0].mxu0
    %v590 = vadd.f32 %v434, %v589
    %v591 = vpop.f32.mrb[0].mxu0
    %v592 = vadd.f32 %v438, %v591
    %593 = vdwg.mxu0
    %594 = vmatprep.subr.bf16.mxu0 %v496
    %595 = vmatpush1.bf16.msra.mxu0 %v495
    %596 = vmatprep.subr.bf16.mxu0 %v500
    %597 = vmatpush1.bf16.msra.mxu0 %v499
    %598 = vmatprep.subr.bf16.mxu0 %v504
    %599 = vmatpush1.bf16.msra.mxu0 %v503
    %600 = vmatprep.subr.bf16.mxu0 %v539
    %601 = vmatpush1.bf16.msra.mxu0 %v536
    %602 = vmatprep.subr.bf16.mxu0 0
    %603 = vmatpush1.bf16.msra.mxu0 0
    %604 = vmatprep.subr.bf16.mxu0 0
    %605 = vmatpush1.bf16.msra.mxu0 0
    %606 = vmatprep.subr.bf16.mxu0 0
    %607 = vmatpush1.bf16.msra.mxu0 0
    %608 = vmatprep.subr.bf16.mxu0 0
    %609 = vmatpush1.bf16.msra.mxu0 0
    %610 = vmatprep.subr.bf16.mxu0 0
    %611 = vmatpush1.bf16.msra.mxu0 0
    %612 = vmatprep.subr.bf16.mxu0 0
    %613 = vmatpush1.bf16.msra.mxu0 0
    %614 = vmatprep.subr.bf16.mxu0 0
    %615 = vmatpush1.bf16.msra.mxu0 0
    %616 = vmatprep.subr.bf16.mxu0 0
    %617 = vmatpush1.bf16.msra.mxu0 0
    %618 = vmatprep.subr.bf16.mxu0 0
    %619 = vmatpush1.bf16.msra.mxu0 0
    %620 = vmatprep.subr.bf16.mxu0 0
    %621 = vmatpush1.bf16.msra.mxu0 0
    %622 = vmatprep.subr.bf16.mxu0 0
    %623 = vmatpush1.bf16.msra.mxu0 0
    %624 = vmatprep.subr.bf16.mxu0 0
    %625 = vmatpush1.bf16.msra.mxu0 0
    %626 = vmatprep.mubr.bf16.mxu0 0
    %627 = vmatmul.mubr.bf16.gmra.mrb[0].mxu0 %v523
    %v628 = vpop.f32.mrb[0].mxu0
    %v629 = vadd.f32 %v442, %v628
    %v630 = vpop.f32.mrb[0].mxu0
    %v631 = vadd.f32 %v446, %v630
    %v632 = vpop.f32.mrb[0].mxu0
    %v633 = vadd.f32 %v442, %v632
    %v634 = vpop.f32.mrb[0].mxu0
    %v635 = vadd.f32 %v446, %v634
    %636 = vmatprep.mubr.bf16.mxu0 0
    %637 = vmatmul.mubr.bf16.gmra.mrb[0].mxu0 %v526
    %v638 = vpop.f32.mrb[0].mxu0
    %v639 = vadd.f32 %v442, %v638
    %v640 = vpop.f32.mrb[0].mxu0
    %v641 = vadd.f32 %v446, %v640
    %v642 = vpop.f32.mrb[0].mxu0
    %v643 = vadd.f32 %v442, %v642
    %v644 = vpop.f32.mrb[0].mxu0
    %v645 = vadd.f32 %v446, %v644
    %646 = vdwg.mxu0
    %v647 = vmax.f32 %v576, 0.0
    %v648 = vmax.f32 %v578, 0.0
    %v649 = vmax.f32 %v629, 0.0
    %v650 = vmax.f32 %v631, 0.0
    %v651 = vmax.f32 %v580, 0.0
    %v652 = vmax.f32 %v582, 0.0
    %v653 = vmax.f32 %v633, 0.0
    %v654 = vmax.f32 %v635, 0.0
    %v655 = vmax.f32 %v586, 0.0
    %v656 = vmax.f32 %v588, 0.0
    %v657 = vmax.f32 %v639, 0.0
    %v658 = vmax.f32 %v641, 0.0
    %v659 = vmax.f32 %v590, 0.0
    %v660 = vmax.f32 %v592, 0.0
    %v661 = vmax.f32 %v643, 0.0
    %v662 = vmax.f32 %v645, 0.0
    %v663 = vmax.f32 %v647, %v649
    %v664 = vmax.f32 %v648, %v650
    %v665 = vmax.f32 %v651, %v653
    %v666 = vmax.f32 %v652, %v654
    %v667 = vmax.f32 %v655, %v657
    %v668 = vmax.f32 %v656, %v658
    %v669 = vmax.f32 %v659, %v661
    %v670 = vmax.f32 %v660, %v662
    %v679 = vcombine.low %v663, %v664
    %v680 = vcombine.high %v663, %v664
    %v682 = vunpack.c.l.s4 1983009808
    %v683 = vunpack.c.0.s8 %v682
    %v684 = vlaneseq
    %v685 = vshrl.u32 %v684, 7
    %v686 = vsub.s32 %v683, %v685
    %v687 = vrot.slane %v679, %v686
    %v689 = vunpack.c.l.s4 1983009808
    %v690 = vunpack.c.0.s8 %v689
    %v691 = vlaneseq
    %v692 = vshrl.u32 %v691, 7
    %v693 = vsub.s32 %v690, %v692
    %v694 = vrot.slane %v680, %v693
    %v695 = vcombine.high %v687, %v687
    %v696 = vcombine.high %v694, %v694
    %v697 = vcombine.low %v665, %v666
    %v698 = vcombine.high %v665, %v666
    %v700 = vunpack.c.l.s4 1983009808
    %v701 = vunpack.c.0.s8 %v700
    %v702 = vlaneseq
    %v703 = vshrl.u32 %v702, 7
    %v704 = vsub.s32 %v701, %v703
    %v705 = vrot.slane %v697, %v704
    %v707 = vunpack.c.l.s4 1983009808
    %v708 = vunpack.c.0.s8 %v707
    %v709 = vlaneseq
    %v710 = vshrl.u32 %v709, 7
    %v711 = vsub.s32 %v708, %v710
    %v712 = vrot.slane %v698, %v711
    %v713 = vcombine.high %v705, %v705
    %v714 = vcombine.high %v712, %v712
    %v715 = vcombine.low %v667, %v668
    %v716 = vcombine.high %v667, %v668
    %v718 = vunpack.c.l.s4 1983009808
    %v719 = vunpack.c.0.s8 %v718
    %v720 = vlaneseq
    %v721 = vshrl.u32 %v720, 7
    %v722 = vsub.s32 %v719, %v721
    %v723 = vrot.slane %v715, %v722
    %v725 = vunpack.c.l.s4 1983009808
    %v726 = vunpack.c.0.s8 %v725
    %v727 = vlaneseq
    %v728 = vshrl.u32 %v727, 7
    %v729 = vsub.s32 %v726, %v728
    %v730 = vrot.slane %v716, %v729
    %v731 = vcombine.high %v723, %v723
    %v732 = vcombine.high %v730, %v730
    %v733 = vcombine.low %v669, %v670
    %v734 = vcombine.high %v669, %v670
    %v736 = vunpack.c.l.s4 1983009808
    %v737 = vunpack.c.0.s8 %v736
    %v738 = vlaneseq
    %v739 = vshrl.u32 %v738, 7
    %v740 = vsub.s32 %v737, %v739
    %v741 = vrot.slane %v733, %v740
    %v743 = vunpack.c.l.s4 1983009808
    %v744 = vunpack.c.0.s8 %v743
    %v745 = vlaneseq
    %v746 = vshrl.u32 %v745, 7
    %v747 = vsub.s32 %v744, %v746
    %v748 = vrot.slane %v734, %v747
    %v749 = vcombine.high %v741, %v741
    %v750 = vcombine.high %v748, %v748
    %v767 = vrot.slane %v687, 7
    %v768 = vrot.slane %v767, 2
    %v769 = vrot.slane %v695, 7
    %v770 = vrot.slane %v769, 2
    %v771 = vrot.slane %v694, 7
    %v772 = vrot.slane %v771, 2
    %v773 = vrot.slane %v696, 7
    %v774 = vrot.slane %v773, 2
    %v775 = vrot.slane %v705, 7
    %v776 = vrot.slane %v775, 2
    %v777 = vrot.slane %v713, 7
    %v778 = vrot.slane %v777, 2
    %v779 = vrot.slane %v712, 7
    %v780 = vrot.slane %v779, 2
    %v781 = vrot.slane %v714, 7
    %v782 = vrot.slane %v781, 2
    %v783 = vrot.slane %v723, 7
    %v784 = vrot.slane %v783, 2
    %v785 = vrot.slane %v731, 7
    %v786 = vrot.slane %v785, 2
    %v787 = vrot.slane %v730, 7
    %v788 = vrot.slane %v787, 2
    %v789 = vrot.slane %v732, 7
    %v790 = vrot.slane %v789, 2
    %v791 = vrot.slane %v741, 7
    %v792 = vrot.slane %v791, 2
    %v793 = vrot.slane %v749, 7
    %v794 = vrot.slane %v793, 2
    %v795 = vrot.slane %v748, 7
    %v796 = vrot.slane %v795, 2
    %v797 = vrot.slane %v750, 7
    %v798 = vrot.slane %v797, 2
    %v815 = vmax.f32 %v687, %v768
    %v816 = vmax.f32 %v695, %v770
    %v817 = vmax.f32 %v694, %v772
    %v818 = vmax.f32 %v696, %v774
    %v819 = vmax.f32 %v705, %v776
    %v820 = vmax.f32 %v713, %v778
    %v821 = vmax.f32 %v712, %v780
    %v822 = vmax.f32 %v714, %v782
    %v823 = vmax.f32 %v723, %v784
    %v824 = vmax.f32 %v731, %v786
    %v825 = vmax.f32 %v730, %v788
    %v826 = vmax.f32 %v732, %v790
    %v827 = vmax.f32 %v741, %v792
    %v828 = vmax.f32 %v749, %v794
    %v829 = vmax.f32 %v748, %v796
    %v830 = vmax.f32 %v750, %v798
    %v847 = vlaneseq
    %v848 = vshrl.u32 %v847, 7
    %v849 = vsub.s32 0, %v848
    %v850 = vrot.slane %v815, %v849
    %v851 = vlaneseq
    %v852 = vshrl.u32 %v851, 7
    %v853 = vsub.s32 2, %v852
    %v854 = vrot.slane %v815, %v853
    %v855 = vlaneseq
    %v856 = vshrl.u32 %v855, 7
    %v857 = vsub.s32 0, %v856
    %v858 = vrot.slane %v816, %v857
    %v859 = vlaneseq
    %v860 = vshrl.u32 %v859, 7
    %v861 = vsub.s32 2, %v860
    %v862 = vrot.slane %v816, %v861
    %v863 = vlaneseq
    %v864 = vshrl.u32 %v863, 7
    %v865 = vsub.s32 0, %v864
    %v866 = vrot.slane %v817, %v865
    %v867 = vlaneseq
    %v868 = vshrl.u32 %v867, 7
    %v869 = vsub.s32 2, %v868
    %v870 = vrot.slane %v817, %v869
    %v871 = vlaneseq
    %v872 = vshrl.u32 %v871, 7
    %v873 = vsub.s32 0, %v872
    %v874 = vrot.slane %v818, %v873
    %v875 = vlaneseq
    %v876 = vshrl.u32 %v875, 7
    %v877 = vsub.s32 2, %v876
    %v878 = vrot.slane %v818, %v877
    %v879 = vlaneseq
    %v880 = vshrl.u32 %v879, 7
    %v881 = vsub.s32 0, %v880
    %v882 = vrot.slane %v819, %v881
    %v883 = vlaneseq
    %v884 = vshrl.u32 %v883, 7
    %v885 = vsub.s32 2, %v884
    %v886 = vrot.slane %v819, %v885
    %v887 = vlaneseq
    %v888 = vshrl.u32 %v887, 7
    %v889 = vsub.s32 0, %v888
    %v890 = vrot.slane %v820, %v889
    %v891 = vlaneseq
    %v892 = vshrl.u32 %v891, 7
    %v893 = vsub.s32 2, %v892
    %v894 = vrot.slane %v820, %v893
    %v895 = vlaneseq
    %v896 = vshrl.u32 %v895, 7
    %v897 = vsub.s32 0, %v896
    %v898 = vrot.slane %v821, %v897
    %v899 = vlaneseq
    %v900 = vshrl.u32 %v899, 7
    %v901 = vsub.s32 2, %v900
    %v902 = vrot.slane %v821, %v901
    %v903 = vlaneseq
    %v904 = vshrl.u32 %v903, 7
    %v905 = vsub.s32 0, %v904
    %v906 = vrot.slane %v822, %v905
    %v907 = vlaneseq
    %v908 = vshrl.u32 %v907, 7
    %v909 = vsub.s32 2, %v908
    %v910 = vrot.slane %v822, %v909
    %v911 = vlaneseq
    %v912 = vshrl.u32 %v911, 7
    %v913 = vsub.s32 0, %v912
    %v914 = vrot.slane %v823, %v913
    %v915 = vlaneseq
    %v916 = vshrl.u32 %v915, 7
    %v917 = vsub.s32 2, %v916
    %v918 = vrot.slane %v823, %v917
    %v919 = vlaneseq
    %v920 = vshrl.u32 %v919, 7
    %v921 = vsub.s32 0, %v920
    %v922 = vrot.slane %v824, %v921
    %v923 = vlaneseq
    %v924 = vshrl.u32 %v923, 7
    %v925 = vsub.s32 2, %v924
    %v926 = vrot.slane %v824, %v925
    %v927 = vlaneseq
    %v928 = vshrl.u32 %v927, 7
    %v929 = vsub.s32 0, %v928
    %v930 = vrot.slane %v825, %v929
    %v931 = vlaneseq
    %v932 = vshrl.u32 %v931, 7
    %v933 = vsub.s32 2, %v932
    %v934 = vrot.slane %v825, %v933
    %v935 = vlaneseq
    %v936 = vshrl.u32 %v935, 7
    %v937 = vsub.s32 0, %v936
    %v938 = vrot.slane %v826, %v937
    %v939 = vlaneseq
    %v940 = vshrl.u32 %v939, 7
    %v941 = vsub.s32 2, %v940
    %v942 = vrot.slane %v826, %v941
    %v943 = vlaneseq
    %v944 = vshrl.u32 %v943, 7
    %v945 = vsub.s32 0, %v944
    %v946 = vrot.slane %v827, %v945
    %v947 = vlaneseq
    %v948 = vshrl.u32 %v947, 7
    %v949 = vsub.s32 2, %v948
    %v950 = vrot.slane %v827, %v949
    %v951 = vlaneseq
    %v952 = vshrl.u32 %v951, 7
    %v953 = vsub.s32 0, %v952
    %v954 = vrot.slane %v828, %v953
    %v955 = vlaneseq
    %v956 = vshrl.u32 %v955, 7
    %v957 = vsub.s32 2, %v956
    %v958 = vrot.slane %v828, %v957
    %v959 = vlaneseq
    %v960 = vshrl.u32 %v959, 7
    %v961 = vsub.s32 0, %v960
    %v962 = vrot.slane %v829, %v961
    %v963 = vlaneseq
    %v964 = vshrl.u32 %v963, 7
    %v965 = vsub.s32 2, %v964
    %v966 = vrot.slane %v829, %v965
    %v967 = vlaneseq
    %v968 = vshrl.u32 %v967, 7
    %v969 = vsub.s32 0, %v968
    %v970 = vrot.slane %v830, %v969
    %v971 = vlaneseq
    %v972 = vshrl.u32 %v971, 7
    %v973 = vsub.s32 2, %v972
    %v974 = vrot.slane %v830, %v973
    %v1007 = vpack.c.bf16 %v850, %v850
    %v1008 = vpack.c.bf16 %v854, %v854
    %v1009 = vpack.c.bf16 %v858, %v858
    %v1010 = vpack.c.bf16 %v862, %v862
    %v1011 = vpack.c.bf16 %v866, %v866
    %v1012 = vpack.c.bf16 %v870, %v870
    %v1013 = vpack.c.bf16 %v874, %v874
    %v1014 = vpack.c.bf16 %v878, %v878
    %v1015 = vpack.c.bf16 %v882, %v882
    %v1016 = vpack.c.bf16 %v886, %v886
    %v1017 = vpack.c.bf16 %v890, %v890
    %v1018 = vpack.c.bf16 %v894, %v894
    %v1019 = vpack.c.bf16 %v898, %v898
    %v1020 = vpack.c.bf16 %v902, %v902
    %v1021 = vpack.c.bf16 %v906, %v906
    %v1022 = vpack.c.bf16 %v910, %v910
    %v1023 = vpack.c.bf16 %v914, %v914
    %v1024 = vpack.c.bf16 %v918, %v918
    %v1025 = vpack.c.bf16 %v922, %v922
    %v1026 = vpack.c.bf16 %v926, %v926
    %v1027 = vpack.c.bf16 %v930, %v930
    %v1028 = vpack.c.bf16 %v934, %v934
    %v1029 = vpack.c.bf16 %v938, %v938
    %v1030 = vpack.c.bf16 %v942, %v942
    %v1031 = vpack.c.bf16 %v946, %v946
    %v1032 = vpack.c.bf16 %v950, %v950
    %v1033 = vpack.c.bf16 %v954, %v954
    %v1034 = vpack.c.bf16 %v958, %v958
    %v1035 = vpack.c.bf16 %v962, %v962
    %v1036 = vpack.c.bf16 %v966, %v966
    %v1037 = vpack.c.bf16 %v970, %v970
    %v1038 = vpack.c.bf16 %v974, %v974
    %v1071 = vunpack.c.l.b16 %v1007
    %v1072 = vunpack.c.l.b16 %v1008
    %v1073 = vunpack.c.l.b16 %v1009
    %v1074 = vunpack.c.l.b16 %v1010
    %v1075 = vunpack.c.l.b16 %v1011
    %v1076 = vunpack.c.l.b16 %v1012
    %v1077 = vunpack.c.l.b16 %v1013
    %v1078 = vunpack.c.l.b16 %v1014
    %v1079 = vunpack.c.l.b16 %v1015
    %v1080 = vunpack.c.l.b16 %v1016
    %v1081 = vunpack.c.l.b16 %v1017
    %v1082 = vunpack.c.l.b16 %v1018
    %v1083 = vunpack.c.l.b16 %v1019
    %v1084 = vunpack.c.l.b16 %v1020
    %v1085 = vunpack.c.l.b16 %v1021
    %v1086 = vunpack.c.l.b16 %v1022
    %v1087 = vunpack.c.l.b16 %v1023
    %v1088 = vunpack.c.l.b16 %v1024
    %v1089 = vunpack.c.l.b16 %v1025
    %v1090 = vunpack.c.l.b16 %v1026
    %v1091 = vunpack.c.l.b16 %v1027
    %v1092 = vunpack.c.l.b16 %v1028
    %v1093 = vunpack.c.l.b16 %v1029
    %v1094 = vunpack.c.l.b16 %v1030
    %v1095 = vunpack.c.l.b16 %v1031
    %v1096 = vunpack.c.l.b16 %v1032
    %v1097 = vunpack.c.l.b16 %v1033
    %v1098 = vunpack.c.l.b16 %v1034
    %v1099 = vunpack.c.l.b16 %v1035
    %v1100 = vunpack.c.l.b16 %v1036
    %v1101 = vunpack.c.l.b16 %v1037
    %v1102 = vunpack.c.l.b16 %v1038
    %v1103 = vpack.c.b16 %v1072, %v1071
    %v1104 = vpack.c.b16 %v1074, %v1073
    %v1105 = vpack.c.b16 %v1076, %v1075
    %v1106 = vpack.c.b16 %v1078, %v1077
    %v1107 = vpack.c.b16 %v1080, %v1079
    %v1108 = vpack.c.b16 %v1082, %v1081
    %v1109 = vpack.c.b16 %v1084, %v1083
    %v1110 = vpack.c.b16 %v1086, %v1085
    %v1111 = vpack.c.b16 %v1088, %v1087
    %v1112 = vpack.c.b16 %v1090, %v1089
    %v1113 = vpack.c.b16 %v1092, %v1091
    %v1114 = vpack.c.b16 %v1094, %v1093
    %v1115 = vpack.c.b16 %v1096, %v1095
    %v1116 = vpack.c.b16 %v1098, %v1097
    %v1117 = vpack.c.b16 %v1100, %v1099
    %v1118 = vpack.c.b16 %v1102, %v1101
    %v1119 = vunpack.c.l.b16 %v1103
    %v1120 = vunpack.c.h.b16 %v1103
    %v1121 = vunpack.c.l.b16 %v1104
    %v1122 = vunpack.c.h.b16 %v1104
    %v1123 = vunpack.c.l.b16 %v1105
    %v1124 = vunpack.c.h.b16 %v1105
    %v1125 = vunpack.c.l.b16 %v1106
    %v1126 = vunpack.c.h.b16 %v1106
    %v1127 = vunpack.c.l.b16 %v1107
    %v1128 = vunpack.c.h.b16 %v1107
    %v1129 = vunpack.c.l.b16 %v1108
    %v1130 = vunpack.c.h.b16 %v1108
    %v1131 = vunpack.c.l.b16 %v1109
    %v1132 = vunpack.c.h.b16 %v1109
    %v1133 = vunpack.c.l.b16 %v1110
    %v1134 = vunpack.c.h.b16 %v1110
    %v1135 = vunpack.c.l.b16 %v1111
    %v1136 = vunpack.c.h.b16 %v1111
    %v1137 = vunpack.c.l.b16 %v1112
    %v1138 = vunpack.c.h.b16 %v1112
    %v1139 = vunpack.c.l.b16 %v1113
    %v1140 = vunpack.c.h.b16 %v1113
    %v1141 = vunpack.c.l.b16 %v1114
    %v1142 = vunpack.c.h.b16 %v1114
    %v1143 = vunpack.c.l.b16 %v1115
    %v1144 = vunpack.c.h.b16 %v1115
    %v1145 = vunpack.c.l.b16 %v1116
    %v1146 = vunpack.c.h.b16 %v1116
    %v1147 = vunpack.c.l.b16 %v1117
    %v1148 = vunpack.c.h.b16 %v1117
    %v1149 = vunpack.c.l.b16 %v1118
    %v1150 = vunpack.c.h.b16 %v1118
    %v1151 = vrot.slane %v1119, 7
    %v1152 = vrot.slane %v1121, 6
    %vm1153 = vcmask 1042434
    %v1154 = vsel %vm1153, %v1152, %v1151
    %v1155 = vrot.slane %v1123, 5
    %vm1156 = vcmask 1043459
    %v1157 = vsel %vm1156, %v1155, %v1154
    %v1158 = vrot.slane %v1125, 4
    %vm1159 = vcmask 1044484
    %v1160 = vsel %vm1159, %v1158, %v1157
    %v1161 = vrot.slane %v1127, 3
    %vm1162 = vcmask 1045509
    %v1163 = vsel %vm1162, %v1161, %v1160
    %v1164 = vrot.slane %v1129, 2
    %vm1165 = vcmask 1046534
    %v1166 = vsel %vm1165, %v1164, %v1163
    %v1167 = vrot.slane %v1131, 1
    %vm1168 = vcmask 1047559
    %v1169 = vsel %vm1168, %v1167, %v1166
    %v1170 = vrot.slane %v1120, 7
    %v1171 = vrot.slane %v1122, 6
    %v1172 = vsel %vm1153, %v1171, %v1170
    %v1173 = vrot.slane %v1124, 5
    %v1174 = vsel %vm1156, %v1173, %v1172
    %v1175 = vrot.slane %v1126, 4
    %v1176 = vsel %vm1159, %v1175, %v1174
    %v1177 = vrot.slane %v1128, 3
    %v1178 = vsel %vm1162, %v1177, %v1176
    %v1179 = vrot.slane %v1130, 2
    %v1180 = vsel %vm1165, %v1179, %v1178
    %v1181 = vrot.slane %v1132, 1
    %v1182 = vsel %vm1168, %v1181, %v1180
    %v1183 = vrot.slane %v1135, 7
    %v1184 = vrot.slane %v1137, 6
    %v1185 = vsel %vm1153, %v1184, %v1183
    %v1186 = vrot.slane %v1139, 5
    %v1187 = vsel %vm1156, %v1186, %v1185
    %v1188 = vrot.slane %v1141, 4
    %v1189 = vsel %vm1159, %v1188, %v1187
    %v1190 = vrot.slane %v1143, 3
    %v1191 = vsel %vm1162, %v1190, %v1189
    %v1192 = vrot.slane %v1145, 2
    %v1193 = vsel %vm1165, %v1192, %v1191
    %v1194 = vrot.slane %v1147, 1
    %v1195 = vsel %vm1168, %v1194, %v1193
    %v1196 = vrot.slane %v1136, 7
    %v1197 = vrot.slane %v1138, 6
    %v1198 = vsel %vm1153, %v1197, %v1196
    %v1199 = vrot.slane %v1140, 5
    %v1200 = vsel %vm1156, %v1199, %v1198
    %v1201 = vrot.slane %v1142, 4
    %v1202 = vsel %vm1159, %v1201, %v1200
    %v1203 = vrot.slane %v1144, 3
    %v1204 = vsel %vm1162, %v1203, %v1202
    %v1205 = vrot.slane %v1146, 2
    %v1206 = vsel %vm1165, %v1205, %v1204
    %v1207 = vrot.slane %v1148, 1
    %v1208 = vsel %vm1168, %v1207, %v1206
    %v1209 = vpack.c.b16 %v1182, %v1169
    %v1210 = vpack.c.b16 %v1134, %v1133
    %v1211 = vpack.c.b16 %v1208, %v1195
    %v1212 = vpack.c.b16 %v1150, %v1149
    %1213 = vrot.lane.b32.xlu0 %v1209, 32
    %v1214 = vpop.permute.xlu0 %1213
    %1215 = vrot.lane.b32.xlu0 %v1210, 32
    %v1216 = vpop.permute.xlu0 %1215
    %1217 = vrot.lane.b32.xlu0 %v1211, 32
    %v1218 = vpop.permute.xlu0 %1217
    %1219 = vrot.lane.b32.xlu0 %v1212, 32
    %v1220 = vpop.permute.xlu0 %1219
    %v1221 = vrot.slane %v1214, 4
    %v1222 = vrot.slane %v1216, 4
    %v1223 = vrot.slane %v1218, 4
    %v1224 = vrot.slane %v1220, 4
    %vm1225 = vcmask 261120
    %v1226 = vsel %vm1225, %v1221, %v1214
    %v1227 = vsel %vm1225, %v1222, %v1216
    %v1228 = vsel %vm1225, %v1223, %v1218
    %v1229 = vsel %vm1225, %v1224, %v1220
    %vm1238 = vcmask 1043712
    %vm1239 = vmand %vm1238, %vm281
    %vm1240 = vcmask 1047556
    %vm1241 = vsmask.f32 7954
    %vm1242 = vmand %vm1240, %vm1241
    %vm1243 = vmor %vm1242, %vm1239
    %v1244 = vld [vmem:[#allocation4] sm:$0xff]
    %v1245 = vsel %vm1243, %v1226, %v1244
    %1246 = vst [vmem:[#allocation4] sm:$0xff] %v1245
    %vm1247 = vcmask 257024
    %vm1248 = vmand %vm1247, %vm281
    %v1249 = vld [vmem:[#allocation4 + $0x8] sm:$0xf]
    %v1250 = vsel %vm1248, %v1221, %v1249
    %1251 = vst [vmem:[#allocation4 + $0x8] sm:$0xf] %v1250
    %vm1252 = vcmask 1040640
    %vm1253 = vmand %vm1252, %vm225
    %vm1254 = vcmask 1044484
    %vm1255 = vsmask.f32 4352
    %vm1256 = vmand %vm1254, %vm1255
    %vm1257 = vmor %vm1256, %vm1253
    %v1258 = vld [vmem:[#allocation4 + $0xc] sm:$0x11]
    %v1259 = vsel %vm1257, %v1227, %v1258
    %1260 = vst [vmem:[#allocation4 + $0xc] sm:$0x11] %v1259
    %vm1261 = vcmask 253952
    %vm1262 = vmand %vm1261, %vm225
    %v1263 = vld [vmem:[#allocation4 + $0x14] sm:$0x1]
    %v1264 = vsel %vm1262, %v1222, %v1263
    %1265 = vst [vmem:[#allocation4 + $0x14] sm:$0x1] %v1264
    %v1266 = vld [vmem:[#allocation4 + $0x18] sm:$0xff]
    %v1267 = vsel %vm1243, %v1228, %v1266
    %1268 = vst [vmem:[#allocation4 + $0x18] sm:$0xff] %v1267
    %v1269 = vld [vmem:[#allocation4 + $0x20] sm:$0xf]
    %v1270 = vsel %vm1248, %v1223, %v1269
    %1271 = vst [vmem:[#allocation4 + $0x20] sm:$0xf] %v1270
    %v1272 = vld [vmem:[#allocation4 + $0x24] sm:$0x11]
    %v1273 = vsel %vm1257, %v1229, %v1272
    %1274 = vst [vmem:[#allocation4 + $0x24] sm:$0x11] %v1273
    %v1275 = vld [vmem:[#allocation4 + $0x2c] sm:$0x1]
    %v1276 = vsel %vm1262, %v1224, %v1275
    %1277 = vst [vmem:[#allocation4 + $0x2c] sm:$0x1] %v1276
    %v1278 = vld [vmem:[#allocation13] sm:$0xf]
    %v1279 = vld [vmem:[#allocation4] sm:$0xff]
    %v1280 = vld [vmem:[#allocation4 + $0x8] sm:$0xf]
    %v1281 = vld [vmem:[#allocation4 + $0x18] sm:$0xff]
    %v1282 = vld [vmem:[#allocation4 + $0x20] sm:$0xf]
    %v1283 = vld [vmem:[#allocation12] sm:$0xff]
    %v1284 = vld [vmem:[#allocation12 + $0x8] sm:$0xff]
    %v1285 = vld [vmem:[#allocation12 + $0x10] sm:$0xff]
    %v1286 = vld [vmem:[#allocation12 + $0x18] sm:$0xff]
    %v1287 = vld [vmem:[#allocation12 + $0x20] sm:$0xff]
    %v1288 = vld [vmem:[#allocation12 + $0x28] sm:$0xff]
    %v1289 = vld [vmem:[#allocation12 + $0x30] sm:$0xff]
    %v1290 = vld [vmem:[#allocation12 + $0x38] sm:$0xff]
    %v1291 = vld [vmem:[#allocation12 + $0x40] sm:$0xff]
    %v1292 = vld [vmem:[#allocation12 + $0x48] sm:$0xff]
    %v1293 = vld [vmem:[#allocation12 + $0x50] sm:$0xff]
    %v1294 = vld [vmem:[#allocation12 + $0x58] sm:$0xff]
    %v1295 = vld [vmem:[#allocation12 + $0x60] sm:$0xff]
    %v1296 = vld [vmem:[#allocation12 + $0x68] sm:$0xff]
    %v1297 = vld [vmem:[#allocation12 + $0x70] sm:$0xff]
    %v1298 = vld [vmem:[#allocation12 + $0x78] sm:$0xff]
    %v1299 = vld [vmem:[#allocation12 + $0x80] sm:$0xff]
    %v1300 = vld [vmem:[#allocation12 + $0x88] sm:$0xff]
    %v1301 = vld [vmem:[#allocation12 + $0x90] sm:$0xff]
    %v1302 = vld [vmem:[#allocation12 + $0x98] sm:$0xff]
    %v1303 = vld [vmem:[#allocation12 + $0xa0] sm:$0xff]
    %v1304 = vld [vmem:[#allocation12 + $0xa8] sm:$0xff]
    %v1305 = vld [vmem:[#allocation12 + $0xb0] sm:$0xff]
    %v1306 = vld [vmem:[#allocation12 + $0xb8] sm:$0xff]
    %v1307 = vld [vmem:[#allocation12 + $0xc0] sm:$0xff]
    %v1308 = vld [vmem:[#allocation12 + $0xc8] sm:$0xff]
    %v1309 = vld [vmem:[#allocation12 + $0xd0] sm:$0xff]
    %v1310 = vld [vmem:[#allocation12 + $0xd8] sm:$0xff]
    %v1311 = vld [vmem:[#allocation12 + $0xe0] sm:$0xff]
    %v1312 = vld [vmem:[#allocation12 + $0xe8] sm:$0xff]
    %v1313 = vld [vmem:[#allocation12 + $0xf0] sm:$0xff]
    %v1314 = vld [vmem:[#allocation12 + $0xf8] sm:$0xff]
    %v1315 = vld [vmem:[#allocation12 + $0x100] sm:$0xff]
    %v1316 = vld [vmem:[#allocation12 + $0x108] sm:$0xff]
    %v1317 = vld [vmem:[#allocation12 + $0x110] sm:$0xff]
    %v1318 = vld [vmem:[#allocation12 + $0x118] sm:$0xff]
    %v1319 = vld [vmem:[#allocation12 + $0x120] sm:$0xff]
    %v1320 = vld [vmem:[#allocation12 + $0x128] sm:$0xff]
    %v1321 = vld [vmem:[#allocation12 + $0x130] sm:$0xff]
    %v1322 = vld [vmem:[#allocation12 + $0x138] sm:$0xff]
    %v1323 = vld [vmem:[#allocation12 + $0x140] sm:$0xff]
    %v1324 = vld [vmem:[#allocation12 + $0x148] sm:$0xff]
    %v1325 = vld [vmem:[#allocation12 + $0x150] sm:$0xff]
    %v1326 = vld [vmem:[#allocation12 + $0x158] sm:$0xff]
    %v1327 = vld [vmem:[#allocation12 + $0x160] sm:$0xff]
    %v1328 = vld [vmem:[#allocation12 + $0x168] sm:$0xff]
    %v1329 = vld [vmem:[#allocation12 + $0x170] sm:$0xff]
    %v1330 = vld [vmem:[#allocation12 + $0x178] sm:$0xff]
    %v1331 = vld [vmem:[#allocation12 + $0x180] sm:$0xff]
    %v1332 = vld [vmem:[#allocation12 + $0x188] sm:$0xff]
    %v1333 = vld [vmem:[#allocation12 + $0x190] sm:$0xff]
    %v1334 = vld [vmem:[#allocation12 + $0x198] sm:$0xff]
    %v1335 = vld [vmem:[#allocation12 + $0x1a0] sm:$0xff]
    %v1336 = vld [vmem:[#allocation12 + $0x1a8] sm:$0xff]
    %v1337 = vld [vmem:[#allocation12 + $0x1b0] sm:$0xff]
    %v1338 = vld [vmem:[#allocation12 + $0x1b8] sm:$0xff]
    %v1339 = vld [vmem:[#allocation12 + $0x1c0] sm:$0xff]
    %v1340 = vld [vmem:[#allocation12 + $0x1c8] sm:$0xff]
    %v1341 = vld [vmem:[#allocation12 + $0x1d0] sm:$0xff]
    %v1342 = vld [vmem:[#allocation12 + $0x1d8] sm:$0xff]
    %v1343 = vld [vmem:[#allocation12 + $0x1e0] sm:$0xff]
    %v1344 = vld [vmem:[#allocation12 + $0x1e8] sm:$0xff]
    %v1345 = vld [vmem:[#allocation12 + $0x1f0] sm:$0xff]
    %v1346 = vld [vmem:[#allocation12 + $0x1f8] sm:$0xff]
    %v1347 = vld [vmem:[#allocation12 + $0x200] sm:$0xff]
    %v1348 = vld [vmem:[#allocation12 + $0x208] sm:$0xff]
    %v1349 = vld [vmem:[#allocation12 + $0x210] sm:$0xff]
    %v1350 = vld [vmem:[#allocation12 + $0x218] sm:$0xff]
    %v1351 = vld [vmem:[#allocation12 + $0x220] sm:$0xff]
    %v1352 = vld [vmem:[#allocation12 + $0x228] sm:$0xff]
    %v1353 = vld [vmem:[#allocation12 + $0x230] sm:$0xff]
    %v1354 = vld [vmem:[#allocation12 + $0x238] sm:$0xff]
    %v1355 = vld [vmem:[#allocation12 + $0x240] sm:$0xff]
    %v1356 = vld [vmem:[#allocation12 + $0x248] sm:$0xff]
    %v1357 = vld [vmem:[#allocation12 + $0x250] sm:$0xff]
    %v1358 = vld [vmem:[#allocation12 + $0x258] sm:$0xff]
    %v1359 = vld [vmem:[#allocation12 + $0x260] sm:$0xff]
    %v1360 = vld [vmem:[#allocation12 + $0x268] sm:$0xff]
    %v1361 = vld [vmem:[#allocation12 + $0x270] sm:$0xff]
    %v1362 = vld [vmem:[#allocation12 + $0x278] sm:$0xff]
    %v1363 = vld [vmem:[#allocation4 + $0xc] sm:$0x11]
    %v1364 = vld [vmem:[#allocation4 + $0x14] sm:$0x1]
    %v1365 = vld [vmem:[#allocation4 + $0x24] sm:$0x11]
    %v1366 = vld [vmem:[#allocation4 + $0x2c] sm:$0x1]
    %vm1367 = vsmask.f32 3328
    %vm1368 = vsmask.f32 7440
    %vm1369 = vmor %vm1367, %vm1368
    %v1371 = vshrl.u32 %v1279, 16
    %v1373 = vrot.slane %v1371, 4
    %v1374 = vshll.u32 %v1279, 16
    %v1376 = vrot.slane %v1374, 5
    %v1377 = vor.u32 %v1373, %v1376
    %v1378 = vrot.slane %v1377, 4
    %v1380 = vshll.u32 %v1363, 16
    %v1382 = vrot.slane %v1380, 5
    %v1383 = vsel %vm1369, %v1378, %v1382
    %v1385 = vshrl.u32 %v1280, 16
    %v1387 = vrot.slane %v1385, 4
    %v1388 = vshll.u32 %v1280, 16
    %v1390 = vrot.slane %v1388, 5
    %v1391 = vor.u32 %v1387, %v1390
    %v1392 = vrot.slane %v1391, 4
    %v1394 = vshll.u32 %v1364, 16
    %v1396 = vrot.slane %v1394, 5
    %v1397 = vsel %vm1369, %v1392, %v1396
    %v1399 = vshrl.u32 %v1281, 16
    %v1401 = vrot.slane %v1399, 4
    %v1402 = vshll.u32 %v1281, 16
    %v1404 = vrot.slane %v1402, 5
    %v1405 = vor.u32 %v1401, %v1404
    %v1406 = vrot.slane %v1405, 4
    %v1408 = vshll.u32 %v1365, 16
    %v1410 = vrot.slane %v1408, 5
    %v1411 = vsel %vm1369, %v1406, %v1410
    %v1413 = vshrl.u32 %v1282, 16
    %v1415 = vrot.slane %v1413, 4
    %v1416 = vshll.u32 %v1282, 16
    %v1418 = vrot.slane %v1416, 5
    %v1419 = vor.u32 %v1415, %v1418
    %v1420 = vrot.slane %v1419, 4
    %v1422 = vshll.u32 %v1366, 16
    %v1424 = vrot.slane %v1422, 5
    %v1425 = vsel %vm1369, %v1420, %v1424
    %s1426 = scalar_lea.vmem [#allocation12], 640
    %v1427 = vld [vmem:[%s1426] sm:$0xff]
    %v1428 = vld [vmem:[%s1426 + $0x8] sm:$0xff]
    %v1429 = vld [vmem:[%s1426 + $0x10] sm:$0xff]
    %v1430 = vld [vmem:[%s1426 + $0x18] sm:$0xff]
    %v1431 = vld [vmem:[%s1426 + $0x20] sm:$0xff]
    %v1432 = vld [vmem:[%s1426 + $0x28] sm:$0xff]
    %v1433 = vld [vmem:[%s1426 + $0x30] sm:$0xff]
    %v1434 = vld [vmem:[%s1426 + $0x38] sm:$0xff]
    %v1435 = vld [vmem:[%s1426 + $0x40] sm:$0xff]
    %v1436 = vld [vmem:[%s1426 + $0x48] sm:$0xff]
    %v1437 = vld [vmem:[%s1426 + $0x50] sm:$0xff]
    %v1438 = vld [vmem:[%s1426 + $0x58] sm:$0xff]
    %v1439 = vld [vmem:[%s1426 + $0x60] sm:$0xff]
    %v1440 = vld [vmem:[%s1426 + $0x68] sm:$0xff]
    %v1441 = vld [vmem:[%s1426 + $0x70] sm:$0xff]
    %v1442 = vld [vmem:[%s1426 + $0x78] sm:$0xff]
    %v1443 = vld [vmem:[%s1426 + $0x80] sm:$0xff]
    %v1444 = vld [vmem:[%s1426 + $0x88] sm:$0xff]
    %v1445 = vld [vmem:[%s1426 + $0x90] sm:$0xff]
    %v1446 = vld [vmem:[%s1426 + $0x98] sm:$0xff]
    %v1447 = vld [vmem:[%s1426 + $0xa0] sm:$0xff]
    %v1448 = vld [vmem:[%s1426 + $0xa8] sm:$0xff]
    %v1449 = vld [vmem:[%s1426 + $0xb0] sm:$0xff]
    %v1450 = vld [vmem:[%s1426 + $0xb8] sm:$0xff]
    %v1451 = vld [vmem:[%s1426 + $0xc0] sm:$0xff]
    %v1452 = vld [vmem:[%s1426 + $0xc8] sm:$0xff]
    %v1453 = vld [vmem:[%s1426 + $0xd0] sm:$0xff]
    %v1454 = vld [vmem:[%s1426 + $0xd8] sm:$0xff]
    %v1455 = vld [vmem:[%s1426 + $0xe0] sm:$0xff]
    %v1456 = vld [vmem:[%s1426 + $0xe8] sm:$0xff]
    %v1457 = vld [vmem:[%s1426 + $0xf0] sm:$0xff]
    %v1458 = vld [vmem:[%s1426 + $0xf8] sm:$0xff]
    %v1459 = vld [vmem:[%s1426 + $0x100] sm:$0xff]
    %v1460 = vld [vmem:[%s1426 + $0x108] sm:$0xff]
    %v1461 = vld [vmem:[%s1426 + $0x110] sm:$0xff]
    %v1462 = vld [vmem:[%s1426 + $0x118] sm:$0xff]
    %v1463 = vld [vmem:[%s1426 + $0x120] sm:$0xff]
    %v1464 = vld [vmem:[%s1426 + $0x128] sm:$0xff]
    %v1465 = vld [vmem:[%s1426 + $0x130] sm:$0xff]
    %v1466 = vld [vmem:[%s1426 + $0x138] sm:$0xff]
    %v1467 = vld [vmem:[%s1426 + $0x140] sm:$0xff]
    %v1468 = vld [vmem:[%s1426 + $0x148] sm:$0xff]
    %v1469 = vld [vmem:[%s1426 + $0x150] sm:$0xff]
    %v1470 = vld [vmem:[%s1426 + $0x158] sm:$0xff]
    %v1471 = vld [vmem:[%s1426 + $0x160] sm:$0xff]
    %v1472 = vld [vmem:[%s1426 + $0x168] sm:$0xff]
    %v1473 = vld [vmem:[%s1426 + $0x170] sm:$0xff]
    %v1474 = vld [vmem:[%s1426 + $0x178] sm:$0xff]
    %v1475 = vld [vmem:[%s1426 + $0x180] sm:$0xff]
    %v1476 = vld [vmem:[%s1426 + $0x188] sm:$0xff]
    %v1477 = vld [vmem:[%s1426 + $0x190] sm:$0xff]
    %v1478 = vld [vmem:[%s1426 + $0x198] sm:$0xff]
    %v1479 = vld [vmem:[%s1426 + $0x1a0] sm:$0xff]
    %v1480 = vld [vmem:[%s1426 + $0x1a8] sm:$0xff]
    %v1481 = vld [vmem:[%s1426 + $0x1b0] sm:$0xff]
    %v1482 = vld [vmem:[%s1426 + $0x1b8] sm:$0xff]
    %v1483 = vld [vmem:[%s1426 + $0x1c0] sm:$0xff]
    %v1484 = vld [vmem:[%s1426 + $0x1c8] sm:$0xff]
    %v1485 = vld [vmem:[%s1426 + $0x1d0] sm:$0xff]
    %v1486 = vld [vmem:[%s1426 + $0x1d8] sm:$0xff]
    %v1487 = vld [vmem:[%s1426 + $0x1e0] sm:$0xff]
    %v1488 = vld [vmem:[%s1426 + $0x1e8] sm:$0xff]
    %v1489 = vld [vmem:[%s1426 + $0x1f0] sm:$0xff]
    %v1490 = vld [vmem:[%s1426 + $0x1f8] sm:$0xff]
    %v1491 = vld [vmem:[%s1426 + $0x200] sm:$0xff]
    %v1492 = vld [vmem:[%s1426 + $0x208] sm:$0xff]
    %v1493 = vld [vmem:[%s1426 + $0x210] sm:$0xff]
    %v1494 = vld [vmem:[%s1426 + $0x218] sm:$0xff]
    %v1495 = vld [vmem:[%s1426 + $0x220] sm:$0xff]
    %v1496 = vld [vmem:[%s1426 + $0x228] sm:$0xff]
    %v1497 = vld [vmem:[%s1426 + $0x230] sm:$0xff]
    %v1498 = vld [vmem:[%s1426 + $0x238] sm:$0xff]
    %v1499 = vld [vmem:[%s1426 + $0x240] sm:$0xff]
    %v1500 = vld [vmem:[%s1426 + $0x248] sm:$0xff]
    %v1501 = vld [vmem:[%s1426 + $0x250] sm:$0xff]
    %v1502 = vld [vmem:[%s1426 + $0x258] sm:$0xff]
    %v1503 = vld [vmem:[%s1426 + $0x260] sm:$0xff]
    %v1504 = vld [vmem:[%s1426 + $0x268] sm:$0xff]
    %v1505 = vld [vmem:[%s1426 + $0x270] sm:$0xff]
    %v1506 = vld [vmem:[%s1426 + $0x278] sm:$0xff]
    %v1507 = vunpack.c.l.b16 %v1383
    %v1508 = vunpack.c.h.b16 %v1383
    %v1509 = vunpack.c.l.b16 %v1397
    %v1510 = vunpack.c.l.b16 %v1411
    %v1511 = vunpack.c.h.b16 %v1411
    %v1512 = vunpack.c.l.b16 %v1425
    %v1513 = vpack.c.b16 %v1510, %v1507
    %v1514 = vpack.c.b16 %v1511, %v1508
    %v1515 = vpack.c.b16 %v1512, %v1509
    %v1598 = vunpack.c.l.b16 %v1427
    %v1599 = vunpack.c.h.b16 %v1427
    %v1600 = vunpack.c.l.b16 %v1428
    %v1601 = vunpack.c.h.b16 %v1428
    %v1602 = vunpack.c.l.b16 %v1429
    %v1603 = vunpack.c.h.b16 %v1429
    %v1604 = vunpack.c.l.b16 %v1430
    %v1605 = vunpack.c.h.b16 %v1430
    %v1606 = vunpack.c.l.b16 %v1431
    %v1607 = vunpack.c.h.b16 %v1431
    %v1608 = vunpack.c.l.b16 %v1432
    %v1609 = vunpack.c.h.b16 %v1432
    %v1610 = vunpack.c.l.b16 %v1433
    %v1611 = vunpack.c.h.b16 %v1433
    %v1612 = vunpack.c.l.b16 %v1434
    %v1613 = vunpack.c.h.b16 %v1434
    %v1614 = vunpack.c.l.b16 %v1435
    %v1615 = vunpack.c.h.b16 %v1435
    %v1616 = vunpack.c.l.b16 %v1436
    %v1617 = vunpack.c.h.b16 %v1436
    %v1618 = vunpack.c.l.b16 %v1437
    %v1619 = vunpack.c.h.b16 %v1437
    %v1620 = vunpack.c.l.b16 %v1438
    %v1621 = vunpack.c.h.b16 %v1438
    %v1622 = vunpack.c.l.b16 %v1439
    %v1623 = vunpack.c.h.b16 %v1439
    %v1624 = vunpack.c.l.b16 %v1440
    %v1625 = vunpack.c.h.b16 %v1440
    %v1626 = vunpack.c.l.b16 %v1441
    %v1627 = vunpack.c.h.b16 %v1441
    %v1628 = vunpack.c.l.b16 %v1442
    %v1629 = vunpack.c.h.b16 %v1442
    %v1630 = vunpack.c.l.b16 %v1443
    %v1631 = vunpack.c.h.b16 %v1443
    %v1632 = vunpack.c.l.b16 %v1444
    %v1633 = vunpack.c.h.b16 %v1444
    %v1634 = vunpack.c.l.b16 %v1445
    %v1635 = vunpack.c.h.b16 %v1445
    %v1636 = vunpack.c.l.b16 %v1446
    %v1637 = vunpack.c.h.b16 %v1446
    %v1638 = vunpack.c.l.b16 %v1447
    %v1639 = vunpack.c.h.b16 %v1447
    %v1640 = vunpack.c.l.b16 %v1448
    %v1641 = vunpack.c.h.b16 %v1448
    %v1642 = vunpack.c.l.b16 %v1449
    %v1643 = vunpack.c.h.b16 %v1449
    %v1644 = vunpack.c.l.b16 %v1450
    %v1645 = vunpack.c.h.b16 %v1450
    %v1646 = vunpack.c.l.b16 %v1451
    %v1647 = vunpack.c.h.b16 %v1451
    %v1648 = vunpack.c.l.b16 %v1452
    %v1649 = vunpack.c.h.b16 %v1452
    %v1650 = vunpack.c.l.b16 %v1453
    %v1651 = vunpack.c.h.b16 %v1453
    %v1652 = vunpack.c.l.b16 %v1454
    %v1653 = vunpack.c.h.b16 %v1454
    %v1654 = vunpack.c.l.b16 %v1455
    %v1655 = vunpack.c.h.b16 %v1455
    %v1656 = vunpack.c.l.b16 %v1456
    %v1657 = vunpack.c.h.b16 %v1456
    %v1658 = vunpack.c.l.b16 %v1457
    %v1659 = vunpack.c.h.b16 %v1457
    %v1660 = vunpack.c.l.b16 %v1458
    %v1661 = vunpack.c.h.b16 %v1458
    %v1662 = vunpack.c.l.b16 %v1459
    %v1663 = vunpack.c.h.b16 %v1459
    %v1664 = vunpack.c.l.b16 %v1460
    %v1665 = vunpack.c.h.b16 %v1460
    %v1666 = vunpack.c.l.b16 %v1461
    %v1667 = vunpack.c.h.b16 %v1461
    %v1668 = vunpack.c.l.b16 %v1462
    %v1669 = vunpack.c.h.b16 %v1462
    %v1670 = vunpack.c.l.b16 %v1463
    %v1671 = vunpack.c.h.b16 %v1463
    %v1672 = vunpack.c.l.b16 %v1464
    %v1673 = vunpack.c.h.b16 %v1464
    %v1674 = vunpack.c.l.b16 %v1465
    %v1675 = vunpack.c.h.b16 %v1465
    %v1676 = vunpack.c.l.b16 %v1466
    %v1677 = vunpack.c.h.b16 %v1466
    %v1678 = vunpack.c.l.b16 %v1467
    %v1679 = vunpack.c.h.b16 %v1467
    %v1680 = vunpack.c.l.b16 %v1468
    %v1681 = vunpack.c.h.b16 %v1468
    %v1682 = vunpack.c.l.b16 %v1469
    %v1683 = vunpack.c.h.b16 %v1469
    %v1684 = vunpack.c.l.b16 %v1470
    %v1685 = vunpack.c.h.b16 %v1470
    %v1686 = vunpack.c.l.b16 %v1471
    %v1687 = vunpack.c.h.b16 %v1471
    %v1688 = vunpack.c.l.b16 %v1472
    %v1689 = vunpack.c.h.b16 %v1472
    %v1690 = vunpack.c.l.b16 %v1473
    %v1691 = vunpack.c.h.b16 %v1473
    %v1692 = vunpack.c.l.b16 %v1474
    %v1693 = vunpack.c.h.b16 %v1474
    %v1694 = vunpack.c.l.b16 %v1475
    %v1695 = vunpack.c.h.b16 %v1475
    %v1696 = vunpack.c.l.b16 %v1476
    %v1697 = vunpack.c.h.b16 %v1476
    %v1698 = vunpack.c.l.b16 %v1477
    %v1699 = vunpack.c.h.b16 %v1477
    %v1700 = vunpack.c.l.b16 %v1478
    %v1701 = vunpack.c.h.b16 %v1478
    %v1702 = vunpack.c.l.b16 %v1479
    %v1703 = vunpack.c.h.b16 %v1479
    %v1704 = vunpack.c.l.b16 %v1480
    %v1705 = vunpack.c.h.b16 %v1480
    %v1706 = vunpack.c.l.b16 %v1481
    %v1707 = vunpack.c.h.b16 %v1481
    %v1708 = vunpack.c.l.b16 %v1482
    %v1709 = vunpack.c.h.b16 %v1482
    %v1710 = vunpack.c.l.b16 %v1483
    %v1711 = vunpack.c.h.b16 %v1483
    %v1712 = vunpack.c.l.b16 %v1484
    %v1713 = vunpack.c.h.b16 %v1484
    %v1714 = vunpack.c.l.b16 %v1485
    %v1715 = vunpack.c.h.b16 %v1485
    %v1716 = vunpack.c.l.b16 %v1486
    %v1717 = vunpack.c.h.b16 %v1486
    %v1718 = vunpack.c.l.b16 %v1487
    %v1719 = vunpack.c.h.b16 %v1487
    %v1720 = vunpack.c.l.b16 %v1488
    %v1721 = vunpack.c.h.b16 %v1488
    %v1722 = vunpack.c.l.b16 %v1489
    %v1723 = vunpack.c.h.b16 %v1489
    %v1724 = vunpack.c.l.b16 %v1490
    %v1725 = vunpack.c.h.b16 %v1490
    %v1726 = vunpack.c.l.b16 %v1491
    %v1727 = vunpack.c.h.b16 %v1491
    %v1728 = vunpack.c.l.b16 %v1492
    %v1729 = vunpack.c.h.b16 %v1492
    %v1730 = vunpack.c.l.b16 %v1493
    %v1731 = vunpack.c.h.b16 %v1493
    %v1732 = vunpack.c.l.b16 %v1494
    %v1733 = vunpack.c.h.b16 %v1494
    %v1734 = vunpack.c.l.b16 %v1495
    %v1735 = vunpack.c.h.b16 %v1495
    %v1736 = vunpack.c.l.b16 %v1496
    %v1737 = vunpack.c.h.b16 %v1496
    %v1738 = vunpack.c.l.b16 %v1497
    %v1739 = vunpack.c.h.b16 %v1497
    %v1740 = vunpack.c.l.b16 %v1498
    %v1741 = vunpack.c.h.b16 %v1498
    %v1742 = vunpack.c.l.b16 %v1499
    %v1743 = vunpack.c.h.b16 %v1499
    %v1744 = vunpack.c.l.b16 %v1500
    %v1745 = vunpack.c.h.b16 %v1500
    %v1746 = vunpack.c.l.b16 %v1501
    %v1747 = vunpack.c.h.b16 %v1501
    %v1748 = vunpack.c.l.b16 %v1502
    %v1749 = vunpack.c.h.b16 %v1502
    %v1750 = vunpack.c.l.b16 %v1503
    %v1751 = vunpack.c.h.b16 %v1503
    %v1752 = vunpack.c.l.b16 %v1504
    %v1753 = vunpack.c.h.b16 %v1504
    %v1754 = vunpack.c.l.b16 %v1505
    %v1755 = vunpack.c.h.b16 %v1505
    %v1756 = vunpack.c.l.b16 %v1506
    %v1757 = vunpack.c.h.b16 %v1506
    %v1758 = vpack.c.b16 %v1602, %v1598
    %v1759 = vpack.c.b16 %v1603, %v1599
    %v1760 = vpack.c.b16 %v1604, %v1600
    %v1761 = vpack.c.b16 %v1605, %v1601
    %v1762 = vpack.c.b16 %v1610, %v1606
    %v1763 = vpack.c.b16 %v1611, %v1607
    %v1764 = vpack.c.b16 %v1612, %v1608
    %v1765 = vpack.c.b16 %v1613, %v1609
    %v1766 = vpack.c.b16 %v1618, %v1614
    %v1767 = vpack.c.b16 %v1619, %v1615
    %v1768 = vpack.c.b16 %v1620, %v1616
    %v1769 = vpack.c.b16 %v1621, %v1617
    %v1770 = vpack.c.b16 %v1626, %v1622
    %v1771 = vpack.c.b16 %v1627, %v1623
    %v1772 = vpack.c.b16 %v1628, %v1624
    %v1773 = vpack.c.b16 %v1629, %v1625
    %v1774 = vpack.c.b16 %v1634, %v1630
    %v1775 = vpack.c.b16 %v1635, %v1631
    %v1776 = vpack.c.b16 %v1636, %v1632
    %v1777 = vpack.c.b16 %v1637, %v1633
    %v1778 = vpack.c.b16 %v1642, %v1638
    %v1779 = vpack.c.b16 %v1643, %v1639
    %v1780 = vpack.c.b16 %v1644, %v1640
    %v1781 = vpack.c.b16 %v1645, %v1641
    %v1782 = vpack.c.b16 %v1650, %v1646
    %v1783 = vpack.c.b16 %v1651, %v1647
    %v1784 = vpack.c.b16 %v1652, %v1648
    %v1785 = vpack.c.b16 %v1653, %v1649
    %v1786 = vpack.c.b16 %v1658, %v1654
    %v1787 = vpack.c.b16 %v1659, %v1655
    %v1788 = vpack.c.b16 %v1660, %v1656
    %v1789 = vpack.c.b16 %v1661, %v1657
    %v1790 = vpack.c.b16 %v1666, %v1662
    %v1791 = vpack.c.b16 %v1667, %v1663
    %v1792 = vpack.c.b16 %v1668, %v1664
    %v1793 = vpack.c.b16 %v1669, %v1665
    %v1794 = vpack.c.b16 %v1674, %v1670
    %v1795 = vpack.c.b16 %v1675, %v1671
    %v1796 = vpack.c.b16 %v1676, %v1672
    %v1797 = vpack.c.b16 %v1677, %v1673
    %v1798 = vpack.c.b16 %v1682, %v1678
    %v1799 = vpack.c.b16 %v1683, %v1679
    %v1800 = vpack.c.b16 %v1684, %v1680
    %v1801 = vpack.c.b16 %v1685, %v1681
    %v1802 = vpack.c.b16 %v1690, %v1686
    %v1803 = vpack.c.b16 %v1691, %v1687
    %v1804 = vpack.c.b16 %v1692, %v1688
    %v1805 = vpack.c.b16 %v1693, %v1689
    %v1806 = vpack.c.b16 %v1698, %v1694
    %v1807 = vpack.c.b16 %v1699, %v1695
    %v1808 = vpack.c.b16 %v1700, %v1696
    %v1809 = vpack.c.b16 %v1701, %v1697
    %v1810 = vpack.c.b16 %v1706, %v1702
    %v1811 = vpack.c.b16 %v1707, %v1703
    %v1812 = vpack.c.b16 %v1708, %v1704
    %v1813 = vpack.c.b16 %v1709, %v1705
    %v1814 = vpack.c.b16 %v1714, %v1710
    %v1815 = vpack.c.b16 %v1715, %v1711
    %v1816 = vpack.c.b16 %v1716, %v1712
    %v1817 = vpack.c.b16 %v1717, %v1713
    %v1818 = vpack.c.b16 %v1722, %v1718
    %v1819 = vpack.c.b16 %v1723, %v1719
    %v1820 = vpack.c.b16 %v1724, %v1720
    %v1821 = vpack.c.b16 %v1725, %v1721
    %v1822 = vpack.c.b16 %v1730, %v1726
    %v1823 = vpack.c.b16 %v1731, %v1727
    %v1824 = vpack.c.b16 %v1732, %v1728
    %v1825 = vpack.c.b16 %v1733, %v1729
    %v1826 = vpack.c.b16 %v1738, %v1734
    %v1827 = vpack.c.b16 %v1739, %v1735
    %v1828 = vpack.c.b16 %v1740, %v1736
    %v1829 = vpack.c.b16 %v1741, %v1737
    %v1830 = vpack.c.b16 %v1746, %v1742
    %v1831 = vpack.c.b16 %v1747, %v1743
    %v1832 = vpack.c.b16 %v1748, %v1744
    %v1833 = vpack.c.b16 %v1749, %v1745
    %v1834 = vpack.c.b16 %v1754, %v1750
    %v1835 = vpack.c.b16 %v1755, %v1751
    %v1836 = vpack.c.b16 %v1756, %v1752
    %v1837 = vpack.c.b16 %v1757, %v1753
    %vm1918 = vcmask 523264
    %v1920 = vsel %vm1918, %v1515, 0
    %1922 = vmatprep.subr.bf16.mxu0 %v1759
    %1923 = vmatpush1.bf16.msra.mxu0 %v1758
    %1924 = vmatprep.subr.bf16.mxu0 %v1763
    %1925 = vmatpush1.bf16.msra.mxu0 %v1762
    %1926 = vmatprep.subr.bf16.mxu0 %v1767
    %1927 = vmatpush1.bf16.msra.mxu0 %v1766
    %1928 = vmatprep.subr.bf16.mxu0 %v1771
    %1929 = vmatpush1.bf16.msra.mxu0 %v1770
    %1930 = vmatprep.subr.bf16.mxu0 %v1775
    %1931 = vmatpush1.bf16.msra.mxu0 %v1774
    %1932 = vmatprep.subr.bf16.mxu0 %v1779
    %1933 = vmatpush1.bf16.msra.mxu0 %v1778
    %1934 = vmatprep.subr.bf16.mxu0 %v1783
    %1935 = vmatpush1.bf16.msra.mxu0 %v1782
    %1936 = vmatprep.subr.bf16.mxu0 %v1787
    %1937 = vmatpush1.bf16.msra.mxu0 %v1786
    %1938 = vmatprep.subr.bf16.mxu0 %v1791
    %1939 = vmatpush1.bf16.msra.mxu0 %v1790
    %1940 = vmatprep.subr.bf16.mxu0 %v1795
    %1941 = vmatpush1.bf16.msra.mxu0 %v1794
    %1942 = vmatprep.subr.bf16.mxu0 %v1799
    %1943 = vmatpush1.bf16.msra.mxu0 %v1798
    %1944 = vmatprep.subr.bf16.mxu0 %v1803
    %1945 = vmatpush1.bf16.msra.mxu0 %v1802
    %1946 = vmatprep.subr.bf16.mxu0 %v1807
    %1947 = vmatpush1.bf16.msra.mxu0 %v1806
    %1948 = vmatprep.subr.bf16.mxu0 %v1811
    %1949 = vmatpush1.bf16.msra.mxu0 %v1810
    %1950 = vmatprep.subr.bf16.mxu0 %v1815
    %1951 = vmatpush1.bf16.msra.mxu0 %v1814
    %1952 = vmatprep.subr.bf16.mxu0 %v1819
    %1953 = vmatpush1.bf16.msra.mxu0 %v1818
    %1954 = vmatprep.mubr.bf16.mxu0 %v1514
    %1955 = vmatmul.mubr.bf16.gmra.mrb[0].mxu0 %v1513
    %v1956 = vpop.f32.mrb[0].mxu0
    %v1957 = vadd.f32 0.0, %v1956
    %v1958 = vpop.f32.mrb[0].mxu0
    %v1959 = vadd.f32 0.0, %v1958
    %v1960 = vpop.f32.mrb[0].mxu0
    %v1961 = vadd.f32 0.0, %v1960
    %v1962 = vpop.f32.mrb[0].mxu0
    %v1963 = vadd.f32 0.0, %v1962
    %1964 = vdwg.mxu0
    %1965 = vmatprep.subr.bf16.mxu0 %v1823
    %1966 = vmatpush1.bf16.msra.mxu0 %v1822
    %1967 = vmatprep.subr.bf16.mxu0 %v1827
    %1968 = vmatpush1.bf16.msra.mxu0 %v1826
    %1969 = vmatprep.subr.bf16.mxu0 %v1831
    %1970 = vmatpush1.bf16.msra.mxu0 %v1830
    %1971 = vmatprep.subr.bf16.mxu0 %v1835
    %1972 = vmatpush1.bf16.msra.mxu0 %v1834
    %1973 = vmatprep.subr.bf16.mxu0 0
    %1974 = vmatpush1.bf16.msra.mxu0 0
    %1975 = vmatprep.subr.bf16.mxu0 0
    %1976 = vmatpush1.bf16.msra.mxu0 0
    %1977 = vmatprep.subr.bf16.mxu0 0
    %1978 = vmatpush1.bf16.msra.mxu0 0
    %1979 = vmatprep.subr.bf16.mxu0 0
    %1980 = vmatpush1.bf16.msra.mxu0 0
    %1981 = vmatprep.subr.bf16.mxu0 0
    %1982 = vmatpush1.bf16.msra.mxu0 0
    %1983 = vmatprep.subr.bf16.mxu0 0
    %1984 = vmatpush1.bf16.msra.mxu0 0
    %1985 = vmatprep.subr.bf16.mxu0 0
    %1986 = vmatpush1.bf16.msra.mxu0 0
    %1987 = vmatprep.subr.bf16.mxu0 0
    %1988 = vmatpush1.bf16.msra.mxu0 0
    %1989 = vmatprep.subr.bf16.mxu0 0
    %1990 = vmatpush1.bf16.msra.mxu0 0
    %1991 = vmatprep.subr.bf16.mxu0 0
    %1992 = vmatpush1.bf16.msra.mxu0 0
    %1993 = vmatprep.subr.bf16.mxu0 0
    %1994 = vmatpush1.bf16.msra.mxu0 0
    %1995 = vmatprep.subr.bf16.mxu0 0
    %1996 = vmatpush1.bf16.msra.mxu0 0
    %1997 = vmatprep.mubr.bf16.mxu0 0
    %1998 = vmatmul.mubr.bf16.gmra.mrb[0].mxu0 %v1920
    %v1999 = vpop.f32.mrb[0].mxu0
    %v2000 = vadd.f32 %v1957, %v1999
    %v2001 = vpop.f32.mrb[0].mxu0
    %v2002 = vadd.f32 %v1959, %v2001
    %v2003 = vpop.f32.mrb[0].mxu0
    %v2004 = vadd.f32 %v1961, %v2003
    %v2005 = vpop.f32.mrb[0].mxu0
    %v2006 = vadd.f32 %v1963, %v2005
    %2007 = vdwg.mxu0
    %2008 = vmatprep.subr.bf16.mxu0 %v1761
    %2009 = vmatpush1.bf16.msra.mxu0 %v1760
    %2010 = vmatprep.subr.bf16.mxu0 %v1765
    %2011 = vmatpush1.bf16.msra.mxu0 %v1764
    %2012 = vmatprep.subr.bf16.mxu0 %v1769
    %2013 = vmatpush1.bf16.msra.mxu0 %v1768
    %2014 = vmatprep.subr.bf16.mxu0 %v1773
    %2015 = vmatpush1.bf16.msra.mxu0 %v1772
    %2016 = vmatprep.subr.bf16.mxu0 %v1777
    %2017 = vmatpush1.bf16.msra.mxu0 %v1776
    %2018 = vmatprep.subr.bf16.mxu0 %v1781
    %2019 = vmatpush1.bf16.msra.mxu0 %v1780
    %2020 = vmatprep.subr.bf16.mxu0 %v1785
    %2021 = vmatpush1.bf16.msra.mxu0 %v1784
    %2022 = vmatprep.subr.bf16.mxu0 %v1789
    %2023 = vmatpush1.bf16.msra.mxu0 %v1788
    %2024 = vmatprep.subr.bf16.mxu0 %v1793
    %2025 = vmatpush1.bf16.msra.mxu0 %v1792
    %2026 = vmatprep.subr.bf16.mxu0 %v1797
    %2027 = vmatpush1.bf16.msra.mxu0 %v1796
    %2028 = vmatprep.subr.bf16.mxu0 %v1801
    %2029 = vmatpush1.bf16.msra.mxu0 %v1800
    %2030 = vmatprep.subr.bf16.mxu0 %v1805
    %2031 = vmatpush1.bf16.msra.mxu0 %v1804
    %2032 = vmatprep.subr.bf16.mxu0 %v1809
    %2033 = vmatpush1.bf16.msra.mxu0 %v1808
    %2034 = vmatprep.subr.bf16.mxu0 %v1813
    %2035 = vmatpush1.bf16.msra.mxu0 %v1812
    %2036 = vmatprep.subr.bf16.mxu0 %v1817
    %2037 = vmatpush1.bf16.msra.mxu0 %v1816
    %2038 = vmatprep.subr.bf16.mxu0 %v1821
    %2039 = vmatpush1.bf16.msra.mxu0 %v1820
    %2040 = vmatprep.mubr.bf16.mxu0 %v1514
    %2041 = vmatmul.mubr.bf16.gmra.mrb[0].mxu0 %v1513
    %v2042 = vpop.f32.mrb[0].mxu0
    %v2043 = vadd.f32 0.0, %v2042
    %v2044 = vpop.f32.mrb[0].mxu0
    %v2045 = vadd.f32 0.0, %v2044
    %v2046 = vpop.f32.mrb[0].mxu0
    %v2047 = vadd.f32 0.0, %v2046
    %v2048 = vpop.f32.mrb[0].mxu0
    %v2049 = vadd.f32 0.0, %v2048
    %2050 = vdwg.mxu0
    %2051 = vmatprep.subr.bf16.mxu0 %v1825
    %2052 = vmatpush1.bf16.msra.mxu0 %v1824
    %2053 = vmatprep.subr.bf16.mxu0 %v1829
    %2054 = vmatpush1.bf16.msra.mxu0 %v1828
    %2055 = vmatprep.subr.bf16.mxu0 %v1833
    %2056 = vmatpush1.bf16.msra.mxu0 %v1832
    %2057 = vmatprep.subr.bf16.mxu0 %v1837
    %2058 = vmatpush1.bf16.msra.mxu0 %v1836
    %2059 = vmatprep.subr.bf16.mxu0 0
    %2060 = vmatpush1.bf16.msra.mxu0 0
    %2061 = vmatprep.subr.bf16.mxu0 0
    %2062 = vmatpush1.bf16.msra.mxu0 0
    %2063 = vmatprep.subr.bf16.mxu0 0
    %2064 = vmatpush1.bf16.msra.mxu0 0
    %2065 = vmatprep.subr.bf16.mxu0 0
    %2066 = vmatpush1.bf16.msra.mxu0 0
    %2067 = vmatprep.subr.bf16.mxu0 0
    %2068 = vmatpush1.bf16.msra.mxu0 0
    %2069 = vmatprep.subr.bf16.mxu0 0
    %2070 = vmatpush1.bf16.msra.mxu0 0
    %2071 = vmatprep.subr.bf16.mxu0 0
    %2072 = vmatpush1.bf16.msra.mxu0 0
    %2073 = vmatprep.subr.bf16.mxu0 0
    %2074 = vmatpush1.bf16.msra.mxu0 0
    %2075 = vmatprep.subr.bf16.mxu0 0
    %2076 = vmatpush1.bf16.msra.mxu0 0
    %2077 = vmatprep.subr.bf16.mxu0 0
    %2078 = vmatpush1.bf16.msra.mxu0 0
    %2079 = vmatprep.subr.bf16.mxu0 0
    %2080 = vmatpush1.bf16.msra.mxu0 0
    %2081 = vmatprep.subr.bf16.mxu0 0
    %2082 = vmatpush1.bf16.msra.mxu0 0
    %2083 = vmatprep.mubr.bf16.mxu0 0
    %2084 = vmatmul.mubr.bf16.gmra.mrb[0].mxu0 %v1920
    %v2085 = vpop.f32.mrb[0].mxu0
    %v2086 = vadd.f32 %v2043, %v2085
    %v2087 = vpop.f32.mrb[0].mxu0
    %v2088 = vadd.f32 %v2045, %v2087
    %v2089 = vpop.f32.mrb[0].mxu0
    %v2090 = vadd.f32 %v2047, %v2089
    %v2091 = vpop.f32.mrb[0].mxu0
    %v2092 = vadd.f32 %v2049, %v2091
    %2093 = vdwg.mxu0
    %v2098 = vunpack.c.l.b16 %v1279
    %v2099 = vunpack.c.h.b16 %v1279
    %v2100 = vunpack.c.l.b16 %v1280
    %v2101 = vunpack.c.l.b16 %v1281
    %v2102 = vunpack.c.h.b16 %v1281
    %v2103 = vunpack.c.l.b16 %v1282
    %v2104 = vpack.c.b16 %v2101, %v2098
    %v2105 = vpack.c.b16 %v2102, %v2099
    %v2106 = vpack.c.b16 %v2103, %v2100
    %v2189 = vunpack.c.l.b16 %v1283
    %v2190 = vunpack.c.h.b16 %v1283
    %v2191 = vunpack.c.l.b16 %v1284
    %v2192 = vunpack.c.h.b16 %v1284
    %v2193 = vunpack.c.l.b16 %v1285
    %v2194 = vunpack.c.h.b16 %v1285
    %v2195 = vunpack.c.l.b16 %v1286
    %v2196 = vunpack.c.h.b16 %v1286
    %v2197 = vunpack.c.l.b16 %v1287
    %v2198 = vunpack.c.h.b16 %v1287
    %v2199 = vunpack.c.l.b16 %v1288
    %v2200 = vunpack.c.h.b16 %v1288
    %v2201 = vunpack.c.l.b16 %v1289
    %v2202 = vunpack.c.h.b16 %v1289
    %v2203 = vunpack.c.l.b16 %v1290
    %v2204 = vunpack.c.h.b16 %v1290
    %v2205 = vunpack.c.l.b16 %v1291
    %v2206 = vunpack.c.h.b16 %v1291
    %v2207 = vunpack.c.l.b16 %v1292
    %v2208 = vunpack.c.h.b16 %v1292
    %v2209 = vunpack.c.l.b16 %v1293
    %v2210 = vunpack.c.h.b16 %v1293
    %v2211 = vunpack.c.l.b16 %v1294
    %v2212 = vunpack.c.h.b16 %v1294
    %v2213 = vunpack.c.l.b16 %v1295
    %v2214 = vunpack.c.h.b16 %v1295
    %v2215 = vunpack.c.l.b16 %v1296
    %v2216 = vunpack.c.h.b16 %v1296
    %v2217 = vunpack.c.l.b16 %v1297
    %v2218 = vunpack.c.h.b16 %v1297
    %v2219 = vunpack.c.l.b16 %v1298
    %v2220 = vunpack.c.h.b16 %v1298
    %v2221 = vunpack.c.l.b16 %v1299
    %v2222 = vunpack.c.h.b16 %v1299
    %v2223 = vunpack.c.l.b16 %v1300
    %v2224 = vunpack.c.h.b16 %v1300
    %v2225 = vunpack.c.l.b16 %v1301
    %v2226 = vunpack.c.h.b16 %v1301
    %v2227 = vunpack.c.l.b16 %v1302
    %v2228 = vunpack.c.h.b16 %v1302
    %v2229 = vunpack.c.l.b16 %v1303
    %v2230 = vunpack.c.h.b16 %v1303
    %v2231 = vunpack.c.l.b16 %v1304
    %v2232 = vunpack.c.h.b16 %v1304
    %v2233 = vunpack.c.l.b16 %v1305
    %v2234 = vunpack.c.h.b16 %v1305
    %v2235 = vunpack.c.l.b16 %v1306
    %v2236 = vunpack.c.h.b16 %v1306
    %v2237 = vunpack.c.l.b16 %v1307
    %v2238 = vunpack.c.h.b16 %v1307
    %v2239 = vunpack.c.l.b16 %v1308
    %v2240 = vunpack.c.h.b16 %v1308
    %v2241 = vunpack.c.l.b16 %v1309
    %v2242 = vunpack.c.h.b16 %v1309
    %v2243 = vunpack.c.l.b16 %v1310
    %v2244 = vunpack.c.h.b16 %v1310
    %v2245 = vunpack.c.l.b16 %v1311
    %v2246 = vunpack.c.h.b16 %v1311
    %v2247 = vunpack.c.l.b16 %v1312
    %v2248 = vunpack.c.h.b16 %v1312
    %v2249 = vunpack.c.l.b16 %v1313
    %v2250 = vunpack.c.h.b16 %v1313
    %v2251 = vunpack.c.l.b16 %v1314
    %v2252 = vunpack.c.h.b16 %v1314
    %v2253 = vunpack.c.l.b16 %v1315
    %v2254 = vunpack.c.h.b16 %v1315
    %v2255 = vunpack.c.l.b16 %v1316
    %v2256 = vunpack.c.h.b16 %v1316
    %v2257 = vunpack.c.l.b16 %v1317
    %v2258 = vunpack.c.h.b16 %v1317
    %v2259 = vunpack.c.l.b16 %v1318
    %v2260 = vunpack.c.h.b16 %v1318
    %v2261 = vunpack.c.l.b16 %v1319
    %v2262 = vunpack.c.h.b16 %v1319
    %v2263 = vunpack.c.l.b16 %v1320
    %v2264 = vunpack.c.h.b16 %v1320
    %v2265 = vunpack.c.l.b16 %v1321
    %v2266 = vunpack.c.h.b16 %v1321
    %v2267 = vunpack.c.l.b16 %v1322
    %v2268 = vunpack.c.h.b16 %v1322
    %v2269 = vunpack.c.l.b16 %v1323
    %v2270 = vunpack.c.h.b16 %v1323
    %v2271 = vunpack.c.l.b16 %v1324
    %v2272 = vunpack.c.h.b16 %v1324
    %v2273 = vunpack.c.l.b16 %v1325
    %v2274 = vunpack.c.h.b16 %v1325
    %v2275 = vunpack.c.l.b16 %v1326
    %v2276 = vunpack.c.h.b16 %v1326
    %v2277 = vunpack.c.l.b16 %v1327
    %v2278 = vunpack.c.h.b16 %v1327
    %v2279 = vunpack.c.l.b16 %v1328
    %v2280 = vunpack.c.h.b16 %v1328
    %v2281 = vunpack.c.l.b16 %v1329
    %v2282 = vunpack.c.h.b16 %v1329
    %v2283 = vunpack.c.l.b16 %v1330
    %v2284 = vunpack.c.h.b16 %v1330
    %v2285 = vunpack.c.l.b16 %v1331
    %v2286 = vunpack.c.h.b16 %v1331
    %v2287 = vunpack.c.l.b16 %v1332
    %v2288 = vunpack.c.h.b16 %v1332
    %v2289 = vunpack.c.l.b16 %v1333
    %v2290 = vunpack.c.h.b16 %v1333
    %v2291 = vunpack.c.l.b16 %v1334
    %v2292 = vunpack.c.h.b16 %v1334
    %v2293 = vunpack.c.l.b16 %v1335
    %v2294 = vunpack.c.h.b16 %v1335
    %v2295 = vunpack.c.l.b16 %v1336
    %v2296 = vunpack.c.h.b16 %v1336
    %v2297 = vunpack.c.l.b16 %v1337
    %v2298 = vunpack.c.h.b16 %v1337
    %v2299 = vunpack.c.l.b16 %v1338
    %v2300 = vunpack.c.h.b16 %v1338
    %v2301 = vunpack.c.l.b16 %v1339
    %v2302 = vunpack.c.h.b16 %v1339
    %v2303 = vunpack.c.l.b16 %v1340
    %v2304 = vunpack.c.h.b16 %v1340
    %v2305 = vunpack.c.l.b16 %v1341
    %v2306 = vunpack.c.h.b16 %v1341
    %v2307 = vunpack.c.l.b16 %v1342
    %v2308 = vunpack.c.h.b16 %v1342
    %v2309 = vunpack.c.l.b16 %v1343
    %v2310 = vunpack.c.h.b16 %v1343
    %v2311 = vunpack.c.l.b16 %v1344
    %v2312 = vunpack.c.h.b16 %v1344
    %v2313 = vunpack.c.l.b16 %v1345
    %v2314 = vunpack.c.h.b16 %v1345
    %v2315 = vunpack.c.l.b16 %v1346
    %v2316 = vunpack.c.h.b16 %v1346
    %v2317 = vunpack.c.l.b16 %v1347
    %v2318 = vunpack.c.h.b16 %v1347
    %v2319 = vunpack.c.l.b16 %v1348
    %v2320 = vunpack.c.h.b16 %v1348
    %v2321 = vunpack.c.l.b16 %v1349
    %v2322 = vunpack.c.h.b16 %v1349
    %v2323 = vunpack.c.l.b16 %v1350
    %v2324 = vunpack.c.h.b16 %v1350
    %v2325 = vunpack.c.l.b16 %v1351
    %v2326 = vunpack.c.h.b16 %v1351
    %v2327 = vunpack.c.l.b16 %v1352
    %v2328 = vunpack.c.h.b16 %v1352
    %v2329 = vunpack.c.l.b16 %v1353
    %v2330 = vunpack.c.h.b16 %v1353
    %v2331 = vunpack.c.l.b16 %v1354
    %v2332 = vunpack.c.h.b16 %v1354
    %v2333 = vunpack.c.l.b16 %v1355
    %v2334 = vunpack.c.h.b16 %v1355
    %v2335 = vunpack.c.l.b16 %v1356
    %v2336 = vunpack.c.h.b16 %v1356
    %v2337 = vunpack.c.l.b16 %v1357
    %v2338 = vunpack.c.h.b16 %v1357
    %v2339 = vunpack.c.l.b16 %v1358
    %v2340 = vunpack.c.h.b16 %v1358
    %v2341 = vunpack.c.l.b16 %v1359
    %v2342 = vunpack.c.h.b16 %v1359
    %v2343 = vunpack.c.l.b16 %v1360
    %v2344 = vunpack.c.h.b16 %v1360
    %v2345 = vunpack.c.l.b16 %v1361
    %v2346 = vunpack.c.h.b16 %v1361
    %v2347 = vunpack.c.l.b16 %v1362
    %v2348 = vunpack.c.h.b16 %v1362
    %v2349 = vpack.c.b16 %v2193, %v2189
    %v2350 = vpack.c.b16 %v2194, %v2190
    %v2351 = vpack.c.b16 %v2195, %v2191
    %v2352 = vpack.c.b16 %v2196, %v2192
    %v2353 = vpack.c.b16 %v2201, %v2197
    %v2354 = vpack.c.b16 %v2202, %v2198
    %v2355 = vpack.c.b16 %v2203, %v2199
    %v2356 = vpack.c.b16 %v2204, %v2200
    %v2357 = vpack.c.b16 %v2209, %v2205
    %v2358 = vpack.c.b16 %v2210, %v2206
    %v2359 = vpack.c.b16 %v2211, %v2207
    %v2360 = vpack.c.b16 %v2212, %v2208
    %v2361 = vpack.c.b16 %v2217, %v2213
    %v2362 = vpack.c.b16 %v2218, %v2214
    %v2363 = vpack.c.b16 %v2219, %v2215
    %v2364 = vpack.c.b16 %v2220, %v2216
    %v2365 = vpack.c.b16 %v2225, %v2221
    %v2366 = vpack.c.b16 %v2226, %v2222
    %v2367 = vpack.c.b16 %v2227, %v2223
    %v2368 = vpack.c.b16 %v2228, %v2224
    %v2369 = vpack.c.b16 %v2233, %v2229
    %v2370 = vpack.c.b16 %v2234, %v2230
    %v2371 = vpack.c.b16 %v2235, %v2231
    %v2372 = vpack.c.b16 %v2236, %v2232
    %v2373 = vpack.c.b16 %v2241, %v2237
    %v2374 = vpack.c.b16 %v2242, %v2238
    %v2375 = vpack.c.b16 %v2243, %v2239
    %v2376 = vpack.c.b16 %v2244, %v2240
    %v2377 = vpack.c.b16 %v2249, %v2245
    %v2378 = vpack.c.b16 %v2250, %v2246
    %v2379 = vpack.c.b16 %v2251, %v2247
    %v2380 = vpack.c.b16 %v2252, %v2248
    %v2381 = vpack.c.b16 %v2257, %v2253
    %v2382 = vpack.c.b16 %v2258, %v2254
    %v2383 = vpack.c.b16 %v2259, %v2255
    %v2384 = vpack.c.b16 %v2260, %v2256
    %v2385 = vpack.c.b16 %v2265, %v2261
    %v2386 = vpack.c.b16 %v2266, %v2262
    %v2387 = vpack.c.b16 %v2267, %v2263
    %v2388 = vpack.c.b16 %v2268, %v2264
    %v2389 = vpack.c.b16 %v2273, %v2269
    %v2390 = vpack.c.b16 %v2274, %v2270
    %v2391 = vpack.c.b16 %v2275, %v2271
    %v2392 = vpack.c.b16 %v2276, %v2272
    %v2393 = vpack.c.b16 %v2281, %v2277
    %v2394 = vpack.c.b16 %v2282, %v2278
    %v2395 = vpack.c.b16 %v2283, %v2279
    %v2396 = vpack.c.b16 %v2284, %v2280
    %v2397 = vpack.c.b16 %v2289, %v2285
    %v2398 = vpack.c.b16 %v2290, %v2286
    %v2399 = vpack.c.b16 %v2291, %v2287
    %v2400 = vpack.c.b16 %v2292, %v2288
    %v2401 = vpack.c.b16 %v2297, %v2293
    %v2402 = vpack.c.b16 %v2298, %v2294
    %v2403 = vpack.c.b16 %v2299, %v2295
    %v2404 = vpack.c.b16 %v2300, %v2296
    %v2405 = vpack.c.b16 %v2305, %v2301
    %v2406 = vpack.c.b16 %v2306, %v2302
    %v2407 = vpack.c.b16 %v2307, %v2303
    %v2408 = vpack.c.b16 %v2308, %v2304
    %v2409 = vpack.c.b16 %v2313, %v2309
    %v2410 = vpack.c.b16 %v2314, %v2310
    %v2411 = vpack.c.b16 %v2315, %v2311
    %v2412 = vpack.c.b16 %v2316, %v2312
    %v2413 = vpack.c.b16 %v2321, %v2317
    %v2414 = vpack.c.b16 %v2322, %v2318
    %v2415 = vpack.c.b16 %v2323, %v2319
    %v2416 = vpack.c.b16 %v2324, %v2320
    %v2417 = vpack.c.b16 %v2329, %v2325
    %v2418 = vpack.c.b16 %v2330, %v2326
    %v2419 = vpack.c.b16 %v2331, %v2327
    %v2420 = vpack.c.b16 %v2332, %v2328
    %v2421 = vpack.c.b16 %v2337, %v2333
    %v2422 = vpack.c.b16 %v2338, %v2334
    %v2423 = vpack.c.b16 %v2339, %v2335
    %v2424 = vpack.c.b16 %v2340, %v2336
    %v2425 = vpack.c.b16 %v2345, %v2341
    %v2426 = vpack.c.b16 %v2346, %v2342
    %v2427 = vpack.c.b16 %v2347, %v2343
    %v2428 = vpack.c.b16 %v2348, %v2344
    %v2510 = vsel %vm1918, %v2106, 0
    %2512 = vmatprep.subr.bf16.mxu0 %v2350
    %2513 = vmatpush1.bf16.msra.mxu0 %v2349
    %2514 = vmatprep.subr.bf16.mxu0 %v2354
    %2515 = vmatpush1.bf16.msra.mxu0 %v2353
    %2516 = vmatprep.subr.bf16.mxu0 %v2358
    %2517 = vmatpush1.bf16.msra.mxu0 %v2357
    %2518 = vmatprep.subr.bf16.mxu0 %v2362
    %2519 = vmatpush1.bf16.msra.mxu0 %v2361
    %2520 = vmatprep.subr.bf16.mxu0 %v2366
    %2521 = vmatpush1.bf16.msra.mxu0 %v2365
    %2522 = vmatprep.subr.bf16.mxu0 %v2370
    %2523 = vmatpush1.bf16.msra.mxu0 %v2369
    %2524 = vmatprep.subr.bf16.mxu0 %v2374
    %2525 = vmatpush1.bf16.msra.mxu0 %v2373
    %2526 = vmatprep.subr.bf16.mxu0 %v2378
    %2527 = vmatpush1.bf16.msra.mxu0 %v2377
    %2528 = vmatprep.subr.bf16.mxu0 %v2382
    %2529 = vmatpush1.bf16.msra.mxu0 %v2381
    %2530 = vmatprep.subr.bf16.mxu0 %v2386
    %2531 = vmatpush1.bf16.msra.mxu0 %v2385
    %2532 = vmatprep.subr.bf16.mxu0 %v2390
    %2533 = vmatpush1.bf16.msra.mxu0 %v2389
    %2534 = vmatprep.subr.bf16.mxu0 %v2394
    %2535 = vmatpush1.bf16.msra.mxu0 %v2393
    %2536 = vmatprep.subr.bf16.mxu0 %v2398
    %2537 = vmatpush1.bf16.msra.mxu0 %v2397
    %2538 = vmatprep.subr.bf16.mxu0 %v2402
    %2539 = vmatpush1.bf16.msra.mxu0 %v2401
    %2540 = vmatprep.subr.bf16.mxu0 %v2406
    %2541 = vmatpush1.bf16.msra.mxu0 %v2405
    %2542 = vmatprep.subr.bf16.mxu0 %v2410
    %2543 = vmatpush1.bf16.msra.mxu0 %v2409
    %2544 = vmatprep.mubr.bf16.mxu0 %v2105
    %2545 = vmatmul.mubr.bf16.gmra.mrb[0].mxu0 %v2104
    %v2546 = vpop.f32.mrb[0].mxu0
    %v2547 = vadd.f32 %v2000, %v2546
    %v2548 = vpop.f32.mrb[0].mxu0
    %v2549 = vadd.f32 %v2002, %v2548
    %v2550 = vpop.f32.mrb[0].mxu0
    %v2551 = vadd.f32 %v2004, %v2550
    %v2552 = vpop.f32.mrb[0].mxu0
    %v2553 = vadd.f32 %v2006, %v2552
    %2554 = vdwg.mxu0
    %2555 = vmatprep.subr.bf16.mxu0 %v2414
    %2556 = vmatpush1.bf16.msra.mxu0 %v2413
    %2557 = vmatprep.subr.bf16.mxu0 %v2418
    %2558 = vmatpush1.bf16.msra.mxu0 %v2417
    %2559 = vmatprep.subr.bf16.mxu0 %v2422
    %2560 = vmatpush1.bf16.msra.mxu0 %v2421
    %2561 = vmatprep.subr.bf16.mxu0 %v2426
    %2562 = vmatpush1.bf16.msra.mxu0 %v2425
    %2563 = vmatprep.subr.bf16.mxu0 0
    %2564 = vmatpush1.bf16.msra.mxu0 0
    %2565 = vmatprep.subr.bf16.mxu0 0
    %2566 = vmatpush1.bf16.msra.mxu0 0
    %2567 = vmatprep.subr.bf16.mxu0 0
    %2568 = vmatpush1.bf16.msra.mxu0 0
    %2569 = vmatprep.subr.bf16.mxu0 0
    %2570 = vmatpush1.bf16.msra.mxu0 0
    %2571 = vmatprep.subr.bf16.mxu0 0
    %2572 = vmatpush1.bf16.msra.mxu0 0
    %2573 = vmatprep.subr.bf16.mxu0 0
    %2574 = vmatpush1.bf16.msra.mxu0 0
    %2575 = vmatprep.subr.bf16.mxu0 0
    %2576 = vmatpush1.bf16.msra.mxu0 0
    %2577 = vmatprep.subr.bf16.mxu0 0
    %2578 = vmatpush1.bf16.msra.mxu0 0
    %2579 = vmatprep.subr.bf16.mxu0 0
    %2580 = vmatpush1.bf16.msra.mxu0 0
    %2581 = vmatprep.subr.bf16.mxu0 0
    %2582 = vmatpush1.bf16.msra.mxu0 0
    %2583 = vmatprep.subr.bf16.mxu0 0
    %2584 = vmatpush1.bf16.msra.mxu0 0
    %2585 = vmatprep.subr.bf16.mxu0 0
    %2586 = vmatpush1.bf16.msra.mxu0 0
    %2587 = vmatprep.mubr.bf16.mxu0 0
    %2588 = vmatmul.mubr.bf16.gmra.mrb[0].mxu0 %v2510
    %v2589 = vpop.f32.mrb[0].mxu0
    %v2590 = vadd.f32 %v2547, %v2589
    %v2591 = vpop.f32.mrb[0].mxu0
    %v2592 = vadd.f32 %v2549, %v2591
    %v2593 = vpop.f32.mrb[0].mxu0
    %v2594 = vadd.f32 %v2551, %v2593
    %v2595 = vpop.f32.mrb[0].mxu0
    %v2596 = vadd.f32 %v2553, %v2595
    %2597 = vdwg.mxu0
    %2598 = vmatprep.subr.bf16.mxu0 %v2352
    %2599 = vmatpush1.bf16.msra.mxu0 %v2351
    %2600 = vmatprep.subr.bf16.mxu0 %v2356
    %2601 = vmatpush1.bf16.msra.mxu0 %v2355
    %2602 = vmatprep.subr.bf16.mxu0 %v2360
    %2603 = vmatpush1.bf16.msra.mxu0 %v2359
    %2604 = vmatprep.subr.bf16.mxu0 %v2364
    %2605 = vmatpush1.bf16.msra.mxu0 %v2363
    %2606 = vmatprep.subr.bf16.mxu0 %v2368
    %2607 = vmatpush1.bf16.msra.mxu0 %v2367
    %2608 = vmatprep.subr.bf16.mxu0 %v2372
    %2609 = vmatpush1.bf16.msra.mxu0 %v2371
    %2610 = vmatprep.subr.bf16.mxu0 %v2376
    %2611 = vmatpush1.bf16.msra.mxu0 %v2375
    %2612 = vmatprep.subr.bf16.mxu0 %v2380
    %2613 = vmatpush1.bf16.msra.mxu0 %v2379
    %2614 = vmatprep.subr.bf16.mxu0 %v2384
    %2615 = vmatpush1.bf16.msra.mxu0 %v2383
    %2616 = vmatprep.subr.bf16.mxu0 %v2388
    %2617 = vmatpush1.bf16.msra.mxu0 %v2387
    %2618 = vmatprep.subr.bf16.mxu0 %v2392
    %2619 = vmatpush1.bf16.msra.mxu0 %v2391
    %2620 = vmatprep.subr.bf16.mxu0 %v2396
    %2621 = vmatpush1.bf16.msra.mxu0 %v2395
    %2622 = vmatprep.subr.bf16.mxu0 %v2400
    %2623 = vmatpush1.bf16.msra.mxu0 %v2399
    %2624 = vmatprep.subr.bf16.mxu0 %v2404
    %2625 = vmatpush1.bf16.msra.mxu0 %v2403
    %2626 = vmatprep.subr.bf16.mxu0 %v2408
    %2627 = vmatpush1.bf16.msra.mxu0 %v2407
    %2628 = vmatprep.subr.bf16.mxu0 %v2412
    %2629 = vmatpush1.bf16.msra.mxu0 %v2411
    %2630 = vmatprep.mubr.bf16.mxu0 %v2105
    %2631 = vmatmul.mubr.bf16.gmra.mrb[0].mxu0 %v2104
    %v2632 = vpop.f32.mrb[0].mxu0
    %v2633 = vadd.f32 %v2086, %v2632
    %v2634 = vpop.f32.mrb[0].mxu0
    %v2635 = vadd.f32 %v2088, %v2634
    %v2636 = vpop.f32.mrb[0].mxu0
    %v2637 = vadd.f32 %v2090, %v2636
    %v2638 = vpop.f32.mrb[0].mxu0
    %v2639 = vadd.f32 %v2092, %v2638
    %2640 = vdwg.mxu0
    %2641 = vmatprep.subr.bf16.mxu0 %v2416
    %2642 = vmatpush1.bf16.msra.mxu0 %v2415
    %2643 = vmatprep.subr.bf16.mxu0 %v2420
    %2644 = vmatpush1.bf16.msra.mxu0 %v2419
    %2645 = vmatprep.subr.bf16.mxu0 %v2424
    %2646 = vmatpush1.bf16.msra.mxu0 %v2423
    %2647 = vmatprep.subr.bf16.mxu0 %v2428
    %2648 = vmatpush1.bf16.msra.mxu0 %v2427
    %2649 = vmatprep.subr.bf16.mxu0 0
    %2650 = vmatpush1.bf16.msra.mxu0 0
    %2651 = vmatprep.subr.bf16.mxu0 0
    %2652 = vmatpush1.bf16.msra.mxu0 0
    %2653 = vmatprep.subr.bf16.mxu0 0
    %2654 = vmatpush1.bf16.msra.mxu0 0
    %2655 = vmatprep.subr.bf16.mxu0 0
    %2656 = vmatpush1.bf16.msra.mxu0 0
    %2657 = vmatprep.subr.bf16.mxu0 0
    %2658 = vmatpush1.bf16.msra.mxu0 0
    %2659 = vmatprep.subr.bf16.mxu0 0
    %2660 = vmatpush1.bf16.msra.mxu0 0
    %2661 = vmatprep.subr.bf16.mxu0 0
    %2662 = vmatpush1.bf16.msra.mxu0 0
    %2663 = vmatprep.subr.bf16.mxu0 0
    %2664 = vmatpush1.bf16.msra.mxu0 0
    %2665 = vmatprep.subr.bf16.mxu0 0
    %2666 = vmatpush1.bf16.msra.mxu0 0
    %2667 = vmatprep.subr.bf16.mxu0 0
    %2668 = vmatpush1.bf16.msra.mxu0 0
    %2669 = vmatprep.subr.bf16.mxu0 0
    %2670 = vmatpush1.bf16.msra.mxu0 0
    %2671 = vmatprep.subr.bf16.mxu0 0
    %2672 = vmatpush1.bf16.msra.mxu0 0
    %2673 = vmatprep.mubr.bf16.mxu0 0
    %2674 = vmatmul.mubr.bf16.gmra.mrb[0].mxu0 %v2510
    %v2675 = vpop.f32.mrb[0].mxu0
    %v2676 = vadd.f32 %v2633, %v2675
    %v2677 = vpop.f32.mrb[0].mxu0
    %v2678 = vadd.f32 %v2635, %v2677
    %v2679 = vpop.f32.mrb[0].mxu0
    %v2680 = vadd.f32 %v2637, %v2679
    %v2681 = vpop.f32.mrb[0].mxu0
    %v2682 = vadd.f32 %v2639, %v2681
    %2683 = vdwg.mxu0
    %v2684 = vld [vmem:[#allocation4] sm:$0xee]
    %v2685 = vld [vmem:[#allocation4 + $0x8] sm:$0xe]
    %v2686 = vld [vmem:[#allocation4 + $0x18] sm:$0xee]
    %v2687 = vld [vmem:[#allocation4 + $0x20] sm:$0xe]
    %vm2696 = vcmask 1042432
    %vm2697 = vcmask 1046532
    %vm2698 = vmor %vm2696, %vm2697
    %v2699 = vrot.slane %v2684, 5
    %v2700 = vrot.slane %v2699, 4
    %v2701 = vrot.slane %v1363, 5
    %v2702 = vsel %vm2698, %v2700, %v2701
    %v2703 = vrot.slane %v2685, 5
    %v2704 = vrot.slane %v2703, 4
    %v2705 = vrot.slane %v1364, 5
    %v2706 = vsel %vm2698, %v2704, %v2705
    %v2707 = vrot.slane %v2686, 5
    %v2708 = vrot.slane %v2707, 4
    %v2709 = vrot.slane %v1365, 5
    %v2710 = vsel %vm2698, %v2708, %v2709
    %v2711 = vrot.slane %v2687, 5
    %v2712 = vrot.slane %v2711, 4
    %v2713 = vrot.slane %v1366, 5
    %v2714 = vsel %vm2698, %v2712, %v2713
    %s2715 = scalar_lea.vmem [#allocation12], 1280
    %v2716 = vld [vmem:[%s2715] sm:$0xff]
    %v2717 = vld [vmem:[%s2715 + $0x8] sm:$0xff]
    %v2718 = vld [vmem:[%s2715 + $0x10] sm:$0xff]
    %v2719 = vld [vmem:[%s2715 + $0x18] sm:$0xff]
    %v2720 = vld [vmem:[%s2715 + $0x20] sm:$0xff]
    %v2721 = vld [vmem:[%s2715 + $0x28] sm:$0xff]
    %v2722 = vld [vmem:[%s2715 + $0x30] sm:$0xff]
    %v2723 = vld [vmem:[%s2715 + $0x38] sm:$0xff]
    %v2724 = vld [vmem:[%s2715 + $0x40] sm:$0xff]
    %v2725 = vld [vmem:[%s2715 + $0x48] sm:$0xff]
    %v2726 = vld [vmem:[%s2715 + $0x50] sm:$0xff]
    %v2727 = vld [vmem:[%s2715 + $0x58] sm:$0xff]
    %v2728 = vld [vmem:[%s2715 + $0x60] sm:$0xff]
    %v2729 = vld [vmem:[%s2715 + $0x68] sm:$0xff]
    %v2730 = vld [vmem:[%s2715 + $0x70] sm:$0xff]
    %v2731 = vld [vmem:[%s2715 + $0x78] sm:$0xff]
    %v2732 = vld [vmem:[%s2715 + $0x80] sm:$0xff]
    %v2733 = vld [vmem:[%s2715 + $0x88] sm:$0xff]
    %v2734 = vld [vmem:[%s2715 + $0x90] sm:$0xff]
    %v2735 = vld [vmem:[%s2715 + $0x98] sm:$0xff]
    %v2736 = vld [vmem:[%s2715 + $0xa0] sm:$0xff]
    %v2737 = vld [vmem:[%s2715 + $0xa8] sm:$0xff]
    %v2738 = vld [vmem:[%s2715 + $0xb0] sm:$0xff]
    %v2739 = vld [vmem:[%s2715 + $0xb8] sm:$0xff]
    %v2740 = vld [vmem:[%s2715 + $0xc0] sm:$0xff]
    %v2741 = vld [vmem:[%s2715 + $0xc8] sm:$0xff]
    %v2742 = vld [vmem:[%s2715 + $0xd0] sm:$0xff]
    %v2743 = vld [vmem:[%s2715 + $0xd8] sm:$0xff]
    %v2744 = vld [vmem:[%s2715 + $0xe0] sm:$0xff]
    %v2745 = vld [vmem:[%s2715 + $0xe8] sm:$0xff]
    %v2746 = vld [vmem:[%s2715 + $0xf0] sm:$0xff]
    %v2747 = vld [vmem:[%s2715 + $0xf8] sm:$0xff]
    %v2748 = vld [vmem:[%s2715 + $0x100] sm:$0xff]
    %v2749 = vld [vmem:[%s2715 + $0x108] sm:$0xff]
    %v2750 = vld [vmem:[%s2715 + $0x110] sm:$0xff]
    %v2751 = vld [vmem:[%s2715 + $0x118] sm:$0xff]
    %v2752 = vld [vmem:[%s2715 + $0x120] sm:$0xff]
    %v2753 = vld [vmem:[%s2715 + $0x128] sm:$0xff]
    %v2754 = vld [vmem:[%s2715 + $0x130] sm:$0xff]
    %v2755 = vld [vmem:[%s2715 + $0x138] sm:$0xff]
    %v2756 = vld [vmem:[%s2715 + $0x140] sm:$0xff]
    %v2757 = vld [vmem:[%s2715 + $0x148] sm:$0xff]
    %v2758 = vld [vmem:[%s2715 + $0x150] sm:$0xff]
    %v2759 = vld [vmem:[%s2715 + $0x158] sm:$0xff]
    %v2760 = vld [vmem:[%s2715 + $0x160] sm:$0xff]
    %v2761 = vld [vmem:[%s2715 + $0x168] sm:$0xff]
    %v2762 = vld [vmem:[%s2715 + $0x170] sm:$0xff]
    %v2763 = vld [vmem:[%s2715 + $0x178] sm:$0xff]
    %v2764 = vld [vmem:[%s2715 + $0x180] sm:$0xff]
    %v2765 = vld [vmem:[%s2715 + $0x188] sm:$0xff]
    %v2766 = vld [vmem:[%s2715 + $0x190] sm:$0xff]
    %v2767 = vld [vmem:[%s2715 + $0x198] sm:$0xff]
    %v2768 = vld [vmem:[%s2715 + $0x1a0] sm:$0xff]
    %v2769 = vld [vmem:[%s2715 + $0x1a8] sm:$0xff]
    %v2770 = vld [vmem:[%s2715 + $0x1b0] sm:$0xff]
    %v2771 = vld [vmem:[%s2715 + $0x1b8] sm:$0xff]
    %v2772 = vld [vmem:[%s2715 + $0x1c0] sm:$0xff]
    %v2773 = vld [vmem:[%s2715 + $0x1c8] sm:$0xff]
    %v2774 = vld [vmem:[%s2715 + $0x1d0] sm:$0xff]
    %v2775 = vld [vmem:[%s2715 + $0x1d8] sm:$0xff]
    %v2776 = vld [vmem:[%s2715 + $0x1e0] sm:$0xff]
    %v2777 = vld [vmem:[%s2715 + $0x1e8] sm:$0xff]
    %v2778 = vld [vmem:[%s2715 + $0x1f0] sm:$0xff]
    %v2779 = vld [vmem:[%s2715 + $0x1f8] sm:$0xff]
    %v2780 = vld [vmem:[%s2715 + $0x200] sm:$0xff]
    %v2781 = vld [vmem:[%s2715 + $0x208] sm:$0xff]
    %v2782 = vld [vmem:[%s2715 + $0x210] sm:$0xff]
    %v2783 = vld [vmem:[%s2715 + $0x218] sm:$0xff]
    %v2784 = vld [vmem:[%s2715 + $0x220] sm:$0xff]
    %v2785 = vld [vmem:[%s2715 + $0x228] sm:$0xff]
    %v2786 = vld [vmem:[%s2715 + $0x230] sm:$0xff]
    %v2787 = vld [vmem:[%s2715 + $0x238] sm:$0xff]
    %v2788 = vld [vmem:[%s2715 + $0x240] sm:$0xff]
    %v2789 = vld [vmem:[%s2715 + $0x248] sm:$0xff]
    %v2790 = vld [vmem:[%s2715 + $0x250] sm:$0xff]
    %v2791 = vld [vmem:[%s2715 + $0x258] sm:$0xff]
    %v2792 = vld [vmem:[%s2715 + $0x260] sm:$0xff]
    %v2793 = vld [vmem:[%s2715 + $0x268] sm:$0xff]
    %v2794 = vld [vmem:[%s2715 + $0x270] sm:$0xff]
    %v2795 = vld [vmem:[%s2715 + $0x278] sm:$0xff]
    %v2796 = vunpack.c.l.b16 %v2702
    %v2797 = vunpack.c.h.b16 %v2702
    %v2798 = vunpack.c.l.b16 %v2706
    %v2799 = vunpack.c.l.b16 %v2710
    %v2800 = vunpack.c.h.b16 %v2710
    %v2801 = vunpack.c.l.b16 %v2714
    %v2802 = vpack.c.b16 %v2799, %v2796
    %v2803 = vpack.c.b16 %v2800, %v2797
    %v2804 = vpack.c.b16 %v2801, %v2798
    %v2887 = vunpack.c.l.b16 %v2716
    %v2888 = vunpack.c.h.b16 %v2716
    %v2889 = vunpack.c.l.b16 %v2717
    %v2890 = vunpack.c.h.b16 %v2717
    %v2891 = vunpack.c.l.b16 %v2718
    %v2892 = vunpack.c.h.b16 %v2718
    %v2893 = vunpack.c.l.b16 %v2719
    %v2894 = vunpack.c.h.b16 %v2719
    %v2895 = vunpack.c.l.b16 %v2720
    %v2896 = vunpack.c.h.b16 %v2720
    %v2897 = vunpack.c.l.b16 %v2721
    %v2898 = vunpack.c.h.b16 %v2721
    %v2899 = vunpack.c.l.b16 %v2722
    %v2900 = vunpack.c.h.b16 %v2722
    %v2901 = vunpack.c.l.b16 %v2723
    %v2902 = vunpack.c.h.b16 %v2723
    %v2903 = vunpack.c.l.b16 %v2724
    %v2904 = vunpack.c.h.b16 %v2724
    %v2905 = vunpack.c.l.b16 %v2725
    %v2906 = vunpack.c.h.b16 %v2725
    %v2907 = vunpack.c.l.b16 %v2726
    %v2908 = vunpack.c.h.b16 %v2726
    %v2909 = vunpack.c.l.b16 %v2727
    %v2910 = vunpack.c.h.b16 %v2727
    %v2911 = vunpack.c.l.b16 %v2728
    %v2912 = vunpack.c.h.b16 %v2728
    %v2913 = vunpack.c.l.b16 %v2729
    %v2914 = vunpack.c.h.b16 %v2729
    %v2915 = vunpack.c.l.b16 %v2730
    %v2916 = vunpack.c.h.b16 %v2730
    %v2917 = vunpack.c.l.b16 %v2731
    %v2918 = vunpack.c.h.b16 %v2731
    %v2919 = vunpack.c.l.b16 %v2732
    %v2920 = vunpack.c.h.b16 %v2732
    %v2921 = vunpack.c.l.b16 %v2733
    %v2922 = vunpack.c.h.b16 %v2733
    %v2923 = vunpack.c.l.b16 %v2734
    %v2924 = vunpack.c.h.b16 %v2734
    %v2925 = vunpack.c.l.b16 %v2735
    %v2926 = vunpack.c.h.b16 %v2735
    %v2927 = vunpack.c.l.b16 %v2736
    %v2928 = vunpack.c.h.b16 %v2736
    %v2929 = vunpack.c.l.b16 %v2737
    %v2930 = vunpack.c.h.b16 %v2737
    %v2931 = vunpack.c.l.b16 %v2738
    %v2932 = vunpack.c.h.b16 %v2738
    %v2933 = vunpack.c.l.b16 %v2739
    %v2934 = vunpack.c.h.b16 %v2739
    %v2935 = vunpack.c.l.b16 %v2740
    %v2936 = vunpack.c.h.b16 %v2740
    %v2937 = vunpack.c.l.b16 %v2741
    %v2938 = vunpack.c.h.b16 %v2741
    %v2939 = vunpack.c.l.b16 %v2742
    %v2940 = vunpack.c.h.b16 %v2742
    %v2941 = vunpack.c.l.b16 %v2743
    %v2942 = vunpack.c.h.b16 %v2743
    %v2943 = vunpack.c.l.b16 %v2744
    %v2944 = vunpack.c.h.b16 %v2744
    %v2945 = vunpack.c.l.b16 %v2745
    %v2946 = vunpack.c.h.b16 %v2745
    %v2947 = vunpack.c.l.b16 %v2746
    %v2948 = vunpack.c.h.b16 %v2746
    %v2949 = vunpack.c.l.b16 %v2747
    %v2950 = vunpack.c.h.b16 %v2747
    %v2951 = vunpack.c.l.b16 %v2748
    %v2952 = vunpack.c.h.b16 %v2748
    %v2953 = vunpack.c.l.b16 %v2749
    %v2954 = vunpack.c.h.b16 %v2749
    %v2955 = vunpack.c.l.b16 %v2750
    %v2956 = vunpack.c.h.b16 %v2750
    %v2957 = vunpack.c.l.b16 %v2751
    %v2958 = vunpack.c.h.b16 %v2751
    %v2959 = vunpack.c.l.b16 %v2752
    %v2960 = vunpack.c.h.b16 %v2752
    %v2961 = vunpack.c.l.b16 %v2753
    %v2962 = vunpack.c.h.b16 %v2753
    %v2963 = vunpack.c.l.b16 %v2754
    %v2964 = vunpack.c.h.b16 %v2754
    %v2965 = vunpack.c.l.b16 %v2755
    %v2966 = vunpack.c.h.b16 %v2755
    %v2967 = vunpack.c.l.b16 %v2756
    %v2968 = vunpack.c.h.b16 %v2756
    %v2969 = vunpack.c.l.b16 %v2757
    %v2970 = vunpack.c.h.b16 %v2757
    %v2971 = vunpack.c.l.b16 %v2758
    %v2972 = vunpack.c.h.b16 %v2758
    %v2973 = vunpack.c.l.b16 %v2759
    %v2974 = vunpack.c.h.b16 %v2759
    %v2975 = vunpack.c.l.b16 %v2760
    %v2976 = vunpack.c.h.b16 %v2760
    %v2977 = vunpack.c.l.b16 %v2761
    %v2978 = vunpack.c.h.b16 %v2761
    %v2979 = vunpack.c.l.b16 %v2762
    %v2980 = vunpack.c.h.b16 %v2762
    %v2981 = vunpack.c.l.b16 %v2763
    %v2982 = vunpack.c.h.b16 %v2763
    %v2983 = vunpack.c.l.b16 %v2764
    %v2984 = vunpack.c.h.b16 %v2764
    %v2985 = vunpack.c.l.b16 %v2765
    %v2986 = vunpack.c.h.b16 %v2765
    %v2987 = vunpack.c.l.b16 %v2766
    %v2988 = vunpack.c.h.b16 %v2766
    %v2989 = vunpack.c.l.b16 %v2767
    %v2990 = vunpack.c.h.b16 %v2767
    %v2991 = vunpack.c.l.b16 %v2768
    %v2992 = vunpack.c.h.b16 %v2768
    %v2993 = vunpack.c.l.b16 %v2769
    %v2994 = vunpack.c.h.b16 %v2769
    %v2995 = vunpack.c.l.b16 %v2770
    %v2996 = vunpack.c.h.b16 %v2770
    %v2997 = vunpack.c.l.b16 %v2771
    %v2998 = vunpack.c.h.b16 %v2771
    %v2999 = vunpack.c.l.b16 %v2772
    %v3000 = vunpack.c.h.b16 %v2772
    %v3001 = vunpack.c.l.b16 %v2773
    %v3002 = vunpack.c.h.b16 %v2773
    %v3003 = vunpack.c.l.b16 %v2774
    %v3004 = vunpack.c.h.b16 %v2774
    %v3005 = vunpack.c.l.b16 %v2775
    %v3006 = vunpack.c.h.b16 %v2775
    %v3007 = vunpack.c.l.b16 %v2776
    %v3008 = vunpack.c.h.b16 %v2776
    %v3009 = vunpack.c.l.b16 %v2777
    %v3010 = vunpack.c.h.b16 %v2777
    %v3011 = vunpack.c.l.b16 %v2778
    %v3012 = vunpack.c.h.b16 %v2778
    %v3013 = vunpack.c.l.b16 %v2779
    %v3014 = vunpack.c.h.b16 %v2779
    %v3015 = vunpack.c.l.b16 %v2780
    %v3016 = vunpack.c.h.b16 %v2780
    %v3017 = vunpack.c.l.b16 %v2781
    %v3018 = vunpack.c.h.b16 %v2781
    %v3019 = vunpack.c.l.b16 %v2782
    %v3020 = vunpack.c.h.b16 %v2782
    %v3021 = vunpack.c.l.b16 %v2783
    %v3022 = vunpack.c.h.b16 %v2783
    %v3023 = vunpack.c.l.b16 %v2784
    %v3024 = vunpack.c.h.b16 %v2784
    %v3025 = vunpack.c.l.b16 %v2785
    %v3026 = vunpack.c.h.b16 %v2785
    %v3027 = vunpack.c.l.b16 %v2786
    %v3028 = vunpack.c.h.b16 %v2786
    %v3029 = vunpack.c.l.b16 %v2787
    %v3030 = vunpack.c.h.b16 %v2787
    %v3031 = vunpack.c.l.b16 %v2788
    %v3032 = vunpack.c.h.b16 %v2788
    %v3033 = vunpack.c.l.b16 %v2789
    %v3034 = vunpack.c.h.b16 %v2789
    %v3035 = vunpack.c.l.b16 %v2790
    %v3036 = vunpack.c.h.b16 %v2790
    %v3037 = vunpack.c.l.b16 %v2791
    %v3038 = vunpack.c.h.b16 %v2791
    %v3039 = vunpack.c.l.b16 %v2792
    %v3040 = vunpack.c.h.b16 %v2792
    %v3041 = vunpack.c.l.b16 %v2793
    %v3042 = vunpack.c.h.b16 %v2793
    %v3043 = vunpack.c.l.b16 %v2794
    %v3044 = vunpack.c.h.b16 %v2794
    %v3045 = vunpack.c.l.b16 %v2795
    %v3046 = vunpack.c.h.b16 %v2795
    %v3047 = vpack.c.b16 %v2891, %v2887
    %v3048 = vpack.c.b16 %v2892, %v2888
    %v3049 = vpack.c.b16 %v2893, %v2889
    %v3050 = vpack.c.b16 %v2894, %v2890
    %v3051 = vpack.c.b16 %v2899, %v2895
    %v3052 = vpack.c.b16 %v2900, %v2896
    %v3053 = vpack.c.b16 %v2901, %v2897
    %v3054 = vpack.c.b16 %v2902, %v2898
    %v3055 = vpack.c.b16 %v2907, %v2903
    %v3056 = vpack.c.b16 %v2908, %v2904
    %v3057 = vpack.c.b16 %v2909, %v2905
    %v3058 = vpack.c.b16 %v2910, %v2906
    %v3059 = vpack.c.b16 %v2915, %v2911
    %v3060 = vpack.c.b16 %v2916, %v2912
    %v3061 = vpack.c.b16 %v2917, %v2913
    %v3062 = vpack.c.b16 %v2918, %v2914
    %v3063 = vpack.c.b16 %v2923, %v2919
    %v3064 = vpack.c.b16 %v2924, %v2920
    %v3065 = vpack.c.b16 %v2925, %v2921
    %v3066 = vpack.c.b16 %v2926, %v2922
    %v3067 = vpack.c.b16 %v2931, %v2927
    %v3068 = vpack.c.b16 %v2932, %v2928
    %v3069 = vpack.c.b16 %v2933, %v2929
    %v3070 = vpack.c.b16 %v2934, %v2930
    %v3071 = vpack.c.b16 %v2939, %v2935
    %v3072 = vpack.c.b16 %v2940, %v2936
    %v3073 = vpack.c.b16 %v2941, %v2937
    %v3074 = vpack.c.b16 %v2942, %v2938
    %v3075 = vpack.c.b16 %v2947, %v2943
    %v3076 = vpack.c.b16 %v2948, %v2944
    %v3077 = vpack.c.b16 %v2949, %v2945
    %v3078 = vpack.c.b16 %v2950, %v2946
    %v3079 = vpack.c.b16 %v2955, %v2951
    %v3080 = vpack.c.b16 %v2956, %v2952
    %v3081 = vpack.c.b16 %v2957, %v2953
    %v3082 = vpack.c.b16 %v2958, %v2954
    %v3083 = vpack.c.b16 %v2963, %v2959
    %v3084 = vpack.c.b16 %v2964, %v2960
    %v3085 = vpack.c.b16 %v2965, %v2961
    %v3086 = vpack.c.b16 %v2966, %v2962
    %v3087 = vpack.c.b16 %v2971, %v2967
    %v3088 = vpack.c.b16 %v2972, %v2968
    %v3089 = vpack.c.b16 %v2973, %v2969
    %v3090 = vpack.c.b16 %v2974, %v2970
    %v3091 = vpack.c.b16 %v2979, %v2975
    %v3092 = vpack.c.b16 %v2980, %v2976
    %v3093 = vpack.c.b16 %v2981, %v2977
    %v3094 = vpack.c.b16 %v2982, %v2978
    %v3095 = vpack.c.b16 %v2987, %v2983
    %v3096 = vpack.c.b16 %v2988, %v2984
    %v3097 = vpack.c.b16 %v2989, %v2985
    %v3098 = vpack.c.b16 %v2990, %v2986
    %v3099 = vpack.c.b16 %v2995, %v2991
    %v3100 = vpack.c.b16 %v2996, %v2992
    %v3101 = vpack.c.b16 %v2997, %v2993
    %v3102 = vpack.c.b16 %v2998, %v2994
    %v3103 = vpack.c.b16 %v3003, %v2999
    %v3104 = vpack.c.b16 %v3004, %v3000
    %v3105 = vpack.c.b16 %v3005, %v3001
    %v3106 = vpack.c.b16 %v3006, %v3002
    %v3107 = vpack.c.b16 %v3011, %v3007
    %v3108 = vpack.c.b16 %v3012, %v3008
    %v3109 = vpack.c.b16 %v3013, %v3009
    %v3110 = vpack.c.b16 %v3014, %v3010
    %v3111 = vpack.c.b16 %v3019, %v3015
    %v3112 = vpack.c.b16 %v3020, %v3016
    %v3113 = vpack.c.b16 %v3021, %v3017
    %v3114 = vpack.c.b16 %v3022, %v3018
    %v3115 = vpack.c.b16 %v3027, %v3023
    %v3116 = vpack.c.b16 %v3028, %v3024
    %v3117 = vpack.c.b16 %v3029, %v3025
    %v3118 = vpack.c.b16 %v3030, %v3026
    %v3119 = vpack.c.b16 %v3035, %v3031
    %v3120 = vpack.c.b16 %v3036, %v3032
    %v3121 = vpack.c.b16 %v3037, %v3033
    %v3122 = vpack.c.b16 %v3038, %v3034
    %v3123 = vpack.c.b16 %v3043, %v3039
    %v3124 = vpack.c.b16 %v3044, %v3040
    %v3125 = vpack.c.b16 %v3045, %v3041
    %v3126 = vpack.c.b16 %v3046, %v3042
    %v3208 = vsel %vm1918, %v2804, 0
    %3210 = vmatprep.subr.bf16.mxu0 %v3048
    %3211 = vmatpush1.bf16.msra.mxu0 %v3047
    %3212 = vmatprep.subr.bf16.mxu0 %v3052
    %3213 = vmatpush1.bf16.msra.mxu0 %v3051
    %3214 = vmatprep.subr.bf16.mxu0 %v3056
    %3215 = vmatpush1.bf16.msra.mxu0 %v3055
    %3216 = vmatprep.subr.bf16.mxu0 %v3060
    %3217 = vmatpush1.bf16.msra.mxu0 %v3059
    %3218 = vmatprep.subr.bf16.mxu0 %v3064
    %3219 = vmatpush1.bf16.msra.mxu0 %v3063
    %3220 = vmatprep.subr.bf16.mxu0 %v3068
    %3221 = vmatpush1.bf16.msra.mxu0 %v3067
    %3222 = vmatprep.subr.bf16.mxu0 %v3072
    %3223 = vmatpush1.bf16.msra.mxu0 %v3071
    %3224 = vmatprep.subr.bf16.mxu0 %v3076
    %3225 = vmatpush1.bf16.msra.mxu0 %v3075
    %3226 = vmatprep.subr.bf16.mxu0 %v3080
    %3227 = vmatpush1.bf16.msra.mxu0 %v3079
    %3228 = vmatprep.subr.bf16.mxu0 %v3084
    %3229 = vmatpush1.bf16.msra.mxu0 %v3083
    %3230 = vmatprep.subr.bf16.mxu0 %v3088
    %3231 = vmatpush1.bf16.msra.mxu0 %v3087
    %3232 = vmatprep.subr.bf16.mxu0 %v3092
    %3233 = vmatpush1.bf16.msra.mxu0 %v3091
    %3234 = vmatprep.subr.bf16.mxu0 %v3096
    %3235 = vmatpush1.bf16.msra.mxu0 %v3095
    %3236 = vmatprep.subr.bf16.mxu0 %v3100
    %3237 = vmatpush1.bf16.msra.mxu0 %v3099
    %3238 = vmatprep.subr.bf16.mxu0 %v3104
    %3239 = vmatpush1.bf16.msra.mxu0 %v3103
    %3240 = vmatprep.subr.bf16.mxu0 %v3108
    %3241 = vmatpush1.bf16.msra.mxu0 %v3107
    %3242 = vmatprep.mubr.bf16.mxu0 %v2803
    %3243 = vmatmul.mubr.bf16.gmra.mrb[0].mxu0 %v2802
    %v3244 = vpop.f32.mrb[0].mxu0
    %v3245 = vadd.f32 0.0, %v3244
    %v3246 = vpop.f32.mrb[0].mxu0
    %v3247 = vadd.f32 0.0, %v3246
    %v3248 = vpop.f32.mrb[0].mxu0
    %v3249 = vadd.f32 0.0, %v3248
    %v3250 = vpop.f32.mrb[0].mxu0
    %v3251 = vadd.f32 0.0, %v3250
    %3252 = vdwg.mxu0
    %3253 = vmatprep.subr.bf16.mxu0 %v3112
    %3254 = vmatpush1.bf16.msra.mxu0 %v3111
    %3255 = vmatprep.subr.bf16.mxu0 %v3116
    %3256 = vmatpush1.bf16.msra.mxu0 %v3115
    %3257 = vmatprep.subr.bf16.mxu0 %v3120
    %3258 = vmatpush1.bf16.msra.mxu0 %v3119
    %3259 = vmatprep.subr.bf16.mxu0 %v3124
    %3260 = vmatpush1.bf16.msra.mxu0 %v3123
    %3261 = vmatprep.subr.bf16.mxu0 0
    %3262 = vmatpush1.bf16.msra.mxu0 0
    %3263 = vmatprep.subr.bf16.mxu0 0
    %3264 = vmatpush1.bf16.msra.mxu0 0
    %3265 = vmatprep.subr.bf16.mxu0 0
    %3266 = vmatpush1.bf16.msra.mxu0 0
    %3267 = vmatprep.subr.bf16.mxu0 0
    %3268 = vmatpush1.bf16.msra.mxu0 0
    %3269 = vmatprep.subr.bf16.mxu0 0
    %3270 = vmatpush1.bf16.msra.mxu0 0
    %3271 = vmatprep.subr.bf16.mxu0 0
    %3272 = vmatpush1.bf16.msra.mxu0 0
    %3273 = vmatprep.subr.bf16.mxu0 0
    %3274 = vmatpush1.bf16.msra.mxu0 0
    %3275 = vmatprep.subr.bf16.mxu0 0
    %3276 = vmatpush1.bf16.msra.mxu0 0
    %3277 = vmatprep.subr.bf16.mxu0 0
    %3278 = vmatpush1.bf16.msra.mxu0 0
    %3279 = vmatprep.subr.bf16.mxu0 0
    %3280 = vmatpush1.bf16.msra.mxu0 0
    %3281 = vmatprep.subr.bf16.mxu0 0
    %3282 = vmatpush1.bf16.msra.mxu0 0
    %3283 = vmatprep.subr.bf16.mxu0 0
    %3284 = vmatpush1.bf16.msra.mxu0 0
    %3285 = vmatprep.mubr.bf16.mxu0 0
    %3286 = vmatmul.mubr.bf16.gmra.mrb[0].mxu0 %v3208
    %v3287 = vpop.f32.mrb[0].mxu0
    %v3288 = vadd.f32 %v3245, %v3287
    %v3289 = vpop.f32.mrb[0].mxu0
    %v3290 = vadd.f32 %v3247, %v3289
    %v3291 = vpop.f32.mrb[0].mxu0
    %v3292 = vadd.f32 %v3249, %v3291
    %v3293 = vpop.f32.mrb[0].mxu0
    %v3294 = vadd.f32 %v3251, %v3293
    %3295 = vdwg.mxu0
    %3296 = vmatprep.subr.bf16.mxu0 %v3050
    %3297 = vmatpush1.bf16.msra.mxu0 %v3049
    %3298 = vmatprep.subr.bf16.mxu0 %v3054
    %3299 = vmatpush1.bf16.msra.mxu0 %v3053
    %3300 = vmatprep.subr.bf16.mxu0 %v3058
    %3301 = vmatpush1.bf16.msra.mxu0 %v3057
    %3302 = vmatprep.subr.bf16.mxu0 %v3062
    %3303 = vmatpush1.bf16.msra.mxu0 %v3061
    %3304 = vmatprep.subr.bf16.mxu0 %v3066
    %3305 = vmatpush1.bf16.msra.mxu0 %v3065
    %3306 = vmatprep.subr.bf16.mxu0 %v3070
    %3307 = vmatpush1.bf16.msra.mxu0 %v3069
    %3308 = vmatprep.subr.bf16.mxu0 %v3074
    %3309 = vmatpush1.bf16.msra.mxu0 %v3073
    %3310 = vmatprep.subr.bf16.mxu0 %v3078
    %3311 = vmatpush1.bf16.msra.mxu0 %v3077
    %3312 = vmatprep.subr.bf16.mxu0 %v3082
    %3313 = vmatpush1.bf16.msra.mxu0 %v3081
    %3314 = vmatprep.subr.bf16.mxu0 %v3086
    %3315 = vmatpush1.bf16.msra.mxu0 %v3085
    %3316 = vmatprep.subr.bf16.mxu0 %v3090
    %3317 = vmatpush1.bf16.msra.mxu0 %v3089
    %3318 = vmatprep.subr.bf16.mxu0 %v3094
    %3319 = vmatpush1.bf16.msra.mxu0 %v3093
    %3320 = vmatprep.subr.bf16.mxu0 %v3098
    %3321 = vmatpush1.bf16.msra.mxu0 %v3097
    %3322 = vmatprep.subr.bf16.mxu0 %v3102
    %3323 = vmatpush1.bf16.msra.mxu0 %v3101
    %3324 = vmatprep.subr.bf16.mxu0 %v3106
    %3325 = vmatpush1.bf16.msra.mxu0 %v3105
    %3326 = vmatprep.subr.bf16.mxu0 %v3110
    %3327 = vmatpush1.bf16.msra.mxu0 %v3109
    %3328 = vmatprep.mubr.bf16.mxu0 %v2803
    %3329 = vmatmul.mubr.bf16.gmra.mrb[0].mxu0 %v2802
    %v3330 = vpop.f32.mrb[0].mxu0
    %v3331 = vadd.f32 0.0, %v3330
    %v3332 = vpop.f32.mrb[0].mxu0
    %v3333 = vadd.f32 0.0, %v3332
    %v3334 = vpop.f32.mrb[0].mxu0
    %v3335 = vadd.f32 0.0, %v3334
    %v3336 = vpop.f32.mrb[0].mxu0
    %v3337 = vadd.f32 0.0, %v3336
    %3338 = vdwg.mxu0
    %3339 = vmatprep.subr.bf16.mxu0 %v3114
    %3340 = vmatpush1.bf16.msra.mxu0 %v3113
    %3341 = vmatprep.subr.bf16.mxu0 %v3118
    %3342 = vmatpush1.bf16.msra.mxu0 %v3117
    %3343 = vmatprep.subr.bf16.mxu0 %v3122
    %3344 = vmatpush1.bf16.msra.mxu0 %v3121
    %3345 = vmatprep.subr.bf16.mxu0 %v3126
    %3346 = vmatpush1.bf16.msra.mxu0 %v3125
    %3347 = vmatprep.subr.bf16.mxu0 0
    %3348 = vmatpush1.bf16.msra.mxu0 0
    %3349 = vmatprep.subr.bf16.mxu0 0
    %3350 = vmatpush1.bf16.msra.mxu0 0
    %3351 = vmatprep.subr.bf16.mxu0 0
    %3352 = vmatpush1.bf16.msra.mxu0 0
    %3353 = vmatprep.subr.bf16.mxu0 0
    %3354 = vmatpush1.bf16.msra.mxu0 0
    %3355 = vmatprep.subr.bf16.mxu0 0
    %3356 = vmatpush1.bf16.msra.mxu0 0
    %3357 = vmatprep.subr.bf16.mxu0 0
    %3358 = vmatpush1.bf16.msra.mxu0 0
    %3359 = vmatprep.subr.bf16.mxu0 0
    %3360 = vmatpush1.bf16.msra.mxu0 0
    %3361 = vmatprep.subr.bf16.mxu0 0
    %3362 = vmatpush1.bf16.msra.mxu0 0
    %3363 = vmatprep.subr.bf16.mxu0 0
    %3364 = vmatpush1.bf16.msra.mxu0 0
    %3365 = vmatprep.subr.bf16.mxu0 0
    %3366 = vmatpush1.bf16.msra.mxu0 0
    %3367 = vmatprep.subr.bf16.mxu0 0
    %3368 = vmatpush1.bf16.msra.mxu0 0
    %3369 = vmatprep.subr.bf16.mxu0 0
    %3370 = vmatpush1.bf16.msra.mxu0 0
    %3371 = vmatprep.mubr.bf16.mxu0 0
    %3372 = vmatmul.mubr.bf16.gmra.mrb[0].mxu0 %v3208
    %v3373 = vpop.f32.mrb[0].mxu0
    %v3374 = vadd.f32 %v3331, %v3373
    %v3375 = vpop.f32.mrb[0].mxu0
    %v3376 = vadd.f32 %v3333, %v3375
    %v3377 = vpop.f32.mrb[0].mxu0
    %v3378 = vadd.f32 %v3335, %v3377
    %v3379 = vpop.f32.mrb[0].mxu0
    %v3380 = vadd.f32 %v3337, %v3379
    %3381 = vdwg.mxu0
    %v3382 = vadd.f32 %v2590, %v3288
    %v3383 = vadd.f32 %v2592, %v3290
    %v3384 = vadd.f32 %v2676, %v3374
    %v3385 = vadd.f32 %v2678, %v3376
    %v3386 = vadd.f32 %v2594, %v3292
    %v3387 = vadd.f32 %v2596, %v3294
    %v3388 = vadd.f32 %v2680, %v3378
    %v3389 = vadd.f32 %v2682, %v3380
    %v3391 = vlaneseq
    %v3392 = vshrl.u32 %v3391, 7
    %v3393 = vsub.s32 0, %v3392
    %v3394 = vrot.slane %v1278, %v3393
    %v3395 = vlaneseq
    %v3396 = vshrl.u32 %v3395, 7
    %v3397 = vsub.s32 1, %v3396
    %v3398 = vrot.slane %v1278, %v3397
    %v3399 = vlaneseq
    %v3400 = vshrl.u32 %v3399, 7
    %v3401 = vsub.s32 2, %v3400
    %v3402 = vrot.slane %v1278, %v3401
    %v3403 = vlaneseq
    %v3404 = vshrl.u32 %v3403, 7
    %v3405 = vsub.s32 3, %v3404
    %v3406 = vrot.slane %v1278, %v3405
    %v3411 = vadd.f32 %v3382, %v3394
    %v3412 = vadd.f32 %v3383, %v3398
    %v3413 = vadd.f32 %v3384, %v3402
    %v3414 = vadd.f32 %v3385, %v3406
    %v3415 = vadd.f32 %v3386, %v3394
    %v3416 = vadd.f32 %v3387, %v3398
    %v3417 = vadd.f32 %v3388, %v3402
    %v3418 = vadd.f32 %v3389, %v3406
    %v3419 = vmax.f32 %v3411, 0.0
    %v3420 = vmax.f32 %v3412, 0.0
    %v3421 = vmax.f32 %v3413, 0.0
    %v3422 = vmax.f32 %v3414, 0.0
    %v3423 = vmax.f32 %v3415, 0.0
    %v3424 = vmax.f32 %v3416, 0.0
    %v3425 = vmax.f32 %v3417, 0.0
    %v3426 = vmax.f32 %v3418, 0.0
    %v3427 = vmax.f32 %v3419, %v3421
    %v3428 = vmax.f32 %v3420, %v3422
    %v3429 = vmax.f32 %v3423, %v3425
    %v3430 = vmax.f32 %v3424, %v3426
    %v3435 = vcombine.low %v3427, %v3428
    %v3436 = vcombine.high %v3427, %v3428
    %v3438 = vunpack.c.l.s4 1983009808
    %v3439 = vunpack.c.0.s8 %v3438
    %v3440 = vlaneseq
    %v3441 = vshrl.u32 %v3440, 7
    %v3442 = vsub.s32 %v3439, %v3441
    %v3443 = vrot.slane %v3435, %v3442
    %v3445 = vunpack.c.l.s4 1983009808
    %v3446 = vunpack.c.0.s8 %v3445
    %v3447 = vlaneseq
    %v3448 = vshrl.u32 %v3447, 7
    %v3449 = vsub.s32 %v3446, %v3448
    %v3450 = vrot.slane %v3436, %v3449
    %v3451 = vcombine.high %v3443, %v3443
    %v3452 = vcombine.high %v3450, %v3450
    %v3453 = vcombine.low %v3429, %v3430
    %v3454 = vcombine.high %v3429, %v3430
    %v3456 = vunpack.c.l.s4 1983009808
    %v3457 = vunpack.c.0.s8 %v3456
    %v3458 = vlaneseq
    %v3459 = vshrl.u32 %v3458, 7
    %v3460 = vsub.s32 %v3457, %v3459
    %v3461 = vrot.slane %v3453, %v3460
    %v3463 = vunpack.c.l.s4 1983009808
    %v3464 = vunpack.c.0.s8 %v3463
    %v3465 = vlaneseq
    %v3466 = vshrl.u32 %v3465, 7
    %v3467 = vsub.s32 %v3464, %v3466
    %v3468 = vrot.slane %v3454, %v3467
    %v3469 = vcombine.high %v3461, %v3461
    %v3470 = vcombine.high %v3468, %v3468
    %v3479 = vrot.slane %v3443, 7
    %v3480 = vrot.slane %v3479, 2
    %v3481 = vrot.slane %v3451, 7
    %v3482 = vrot.slane %v3481, 2
    %v3483 = vrot.slane %v3450, 7
    %v3484 = vrot.slane %v3483, 2
    %v3485 = vrot.slane %v3452, 7
    %v3486 = vrot.slane %v3485, 2
    %v3487 = vrot.slane %v3461, 7
    %v3488 = vrot.slane %v3487, 2
    %v3489 = vrot.slane %v3469, 7
    %v3490 = vrot.slane %v3489, 2
    %v3491 = vrot.slane %v3468, 7
    %v3492 = vrot.slane %v3491, 2
    %v3493 = vrot.slane %v3470, 7
    %v3494 = vrot.slane %v3493, 2
    %v3503 = vmax.f32 %v3443, %v3480
    %v3504 = vmax.f32 %v3451, %v3482
    %v3505 = vmax.f32 %v3450, %v3484
    %v3506 = vmax.f32 %v3452, %v3486
    %v3507 = vmax.f32 %v3461, %v3488
    %v3508 = vmax.f32 %v3469, %v3490
    %v3509 = vmax.f32 %v3468, %v3492
    %v3510 = vmax.f32 %v3470, %v3494
    %v3519 = vlaneseq
    %v3520 = vshrl.u32 %v3519, 7
    %v3521 = vsub.s32 0, %v3520
    %v3522 = vrot.slane %v3503, %v3521
    %v3523 = vlaneseq
    %v3524 = vshrl.u32 %v3523, 7
    %v3525 = vsub.s32 2, %v3524
    %v3526 = vrot.slane %v3503, %v3525
    %v3527 = vlaneseq
    %v3528 = vshrl.u32 %v3527, 7
    %v3529 = vsub.s32 0, %v3528
    %v3530 = vrot.slane %v3504, %v3529
    %v3531 = vlaneseq
    %v3532 = vshrl.u32 %v3531, 7
    %v3533 = vsub.s32 2, %v3532
    %v3534 = vrot.slane %v3504, %v3533
    %v3535 = vlaneseq
    %v3536 = vshrl.u32 %v3535, 7
    %v3537 = vsub.s32 0, %v3536
    %v3538 = vrot.slane %v3505, %v3537
    %v3539 = vlaneseq
    %v3540 = vshrl.u32 %v3539, 7
    %v3541 = vsub.s32 2, %v3540
    %v3542 = vrot.slane %v3505, %v3541
    %v3543 = vlaneseq
    %v3544 = vshrl.u32 %v3543, 7
    %v3545 = vsub.s32 0, %v3544
    %v3546 = vrot.slane %v3506, %v3545
    %v3547 = vlaneseq
    %v3548 = vshrl.u32 %v3547, 7
    %v3549 = vsub.s32 2, %v3548
    %v3550 = vrot.slane %v3506, %v3549
    %v3551 = vlaneseq
    %v3552 = vshrl.u32 %v3551, 7
    %v3553 = vsub.s32 0, %v3552
    %v3554 = vrot.slane %v3507, %v3553
    %v3555 = vlaneseq
    %v3556 = vshrl.u32 %v3555, 7
    %v3557 = vsub.s32 2, %v3556
    %v3558 = vrot.slane %v3507, %v3557
    %v3559 = vlaneseq
    %v3560 = vshrl.u32 %v3559, 7
    %v3561 = vsub.s32 0, %v3560
    %v3562 = vrot.slane %v3508, %v3561
    %v3563 = vlaneseq
    %v3564 = vshrl.u32 %v3563, 7
    %v3565 = vsub.s32 2, %v3564
    %v3566 = vrot.slane %v3508, %v3565
    %v3567 = vlaneseq
    %v3568 = vshrl.u32 %v3567, 7
    %v3569 = vsub.s32 0, %v3568
    %v3570 = vrot.slane %v3509, %v3569
    %v3571 = vlaneseq
    %v3572 = vshrl.u32 %v3571, 7
    %v3573 = vsub.s32 2, %v3572
    %v3574 = vrot.slane %v3509, %v3573
    %v3575 = vlaneseq
    %v3576 = vshrl.u32 %v3575, 7
    %v3577 = vsub.s32 0, %v3576
    %v3578 = vrot.slane %v3510, %v3577
    %v3579 = vlaneseq
    %v3580 = vshrl.u32 %v3579, 7
    %v3581 = vsub.s32 2, %v3580
    %v3582 = vrot.slane %v3510, %v3581
    %v3599 = vpack.c.bf16 %v3522, %v3522
    %v3600 = vpack.c.bf16 %v3526, %v3526
    %v3601 = vpack.c.bf16 %v3530, %v3530
    %v3602 = vpack.c.bf16 %v3534, %v3534
    %v3603 = vpack.c.bf16 %v3538, %v3538
    %v3604 = vpack.c.bf16 %v3542, %v3542
    %v3605 = vpack.c.bf16 %v3546, %v3546
    %v3606 = vpack.c.bf16 %v3550, %v3550
    %v3607 = vpack.c.bf16 %v3554, %v3554
    %v3608 = vpack.c.bf16 %v3558, %v3558
    %v3609 = vpack.c.bf16 %v3562, %v3562
    %v3610 = vpack.c.bf16 %v3566, %v3566
    %v3611 = vpack.c.bf16 %v3570, %v3570
    %v3612 = vpack.c.bf16 %v3574, %v3574
    %v3613 = vpack.c.bf16 %v3578, %v3578
    %v3614 = vpack.c.bf16 %v3582, %v3582
    %v3631 = vunpack.c.l.b16 %v3599
    %v3632 = vunpack.c.l.b16 %v3600
    %v3633 = vunpack.c.l.b16 %v3601
    %v3634 = vunpack.c.l.b16 %v3602
    %v3635 = vunpack.c.l.b16 %v3603
    %v3636 = vunpack.c.l.b16 %v3604
    %v3637 = vunpack.c.l.b16 %v3605
    %v3638 = vunpack.c.l.b16 %v3606
    %v3639 = vunpack.c.l.b16 %v3607
    %v3640 = vunpack.c.l.b16 %v3608
    %v3641 = vunpack.c.l.b16 %v3609
    %v3642 = vunpack.c.l.b16 %v3610
    %v3643 = vunpack.c.l.b16 %v3611
    %v3644 = vunpack.c.l.b16 %v3612
    %v3645 = vunpack.c.l.b16 %v3613
    %v3646 = vunpack.c.l.b16 %v3614
    %v3647 = vpack.c.b16 %v3632, %v3631
    %v3648 = vpack.c.b16 %v3634, %v3633
    %v3649 = vpack.c.b16 %v3636, %v3635
    %v3650 = vpack.c.b16 %v3638, %v3637
    %v3651 = vpack.c.b16 %v3640, %v3639
    %v3652 = vpack.c.b16 %v3642, %v3641
    %v3653 = vpack.c.b16 %v3644, %v3643
    %v3654 = vpack.c.b16 %v3646, %v3645
    %v3655 = vunpack.c.l.b16 %v3647
    %v3656 = vunpack.c.h.b16 %v3647
    %v3657 = vunpack.c.l.b16 %v3648
    %v3658 = vunpack.c.h.b16 %v3648
    %v3659 = vunpack.c.l.b16 %v3649
    %v3660 = vunpack.c.h.b16 %v3649
    %v3661 = vunpack.c.l.b16 %v3650
    %v3662 = vunpack.c.h.b16 %v3650
    %v3663 = vunpack.c.l.b16 %v3651
    %v3664 = vunpack.c.h.b16 %v3651
    %v3665 = vunpack.c.l.b16 %v3652
    %v3666 = vunpack.c.h.b16 %v3652
    %v3667 = vunpack.c.l.b16 %v3653
    %v3668 = vunpack.c.h.b16 %v3653
    %v3669 = vunpack.c.l.b16 %v3654
    %v3670 = vunpack.c.h.b16 %v3654
    %v3671 = vrot.slane %v3655, 7
    %v3672 = vrot.slane %v3657, 6
    %v3673 = vsel %vm1153, %v3672, %v3671
    %v3674 = vrot.slane %v3659, 5
    %v3675 = vsel %vm1156, %v3674, %v3673
    %v3676 = vrot.slane %v3661, 4
    %v3677 = vsel %vm1159, %v3676, %v3675
    %v3678 = vrot.slane %v3656, 7
    %v3679 = vrot.slane %v3658, 6
    %v3680 = vsel %vm1153, %v3679, %v3678
    %v3681 = vrot.slane %v3660, 5
    %v3682 = vsel %vm1156, %v3681, %v3680
    %v3683 = vrot.slane %v3662, 4
    %v3684 = vsel %vm1159, %v3683, %v3682
    %v3685 = vrot.slane %v3663, 7
    %v3686 = vrot.slane %v3665, 6
    %v3687 = vsel %vm1153, %v3686, %v3685
    %v3688 = vrot.slane %v3667, 5
    %v3689 = vsel %vm1156, %v3688, %v3687
    %v3690 = vrot.slane %v3669, 4
    %v3691 = vsel %vm1159, %v3690, %v3689
    %v3692 = vrot.slane %v3664, 7
    %v3693 = vrot.slane %v3666, 6
    %v3694 = vsel %vm1153, %v3693, %v3692
    %v3695 = vrot.slane %v3668, 5
    %v3696 = vsel %vm1156, %v3695, %v3694
    %v3697 = vrot.slane %v3670, 4
    %v3698 = vsel %vm1159, %v3697, %v3696
    %v3699 = vpack.c.b16 %v3684, %v3677
    %v3700 = vpack.c.b16 %v3698, %v3691
    %3701 = vrot.lane.b32.xlu0 %v3699, 64
    %v3702 = vpop.permute.xlu0 %3701
    %3703 = vrot.lane.b32.xlu0 %v3700, 64
    %v3704 = vpop.permute.xlu0 %3703
    %v3705 = vrot.slane %v3702, 4
    %v3706 = vrot.slane %v3704, 4
    %vm3707 = vcmask 523264
    %v3708 = vsel %vm3707, %v3705, %v3702
    %v3709 = vsel %vm3707, %v3706, %v3704
    %vm3714 = vcmask 1042944
    %vm3715 = vsmask.f32 2306
    %vm3716 = vmand %vm3714, %vm3715
    %vm3717 = vsmask.f32 6418
    %vm3718 = vmand %vm2697, %vm3717
    %vm3719 = vmor %vm3718, %vm3716
    %v3720 = vld [vmem:[#allocation5] sm:$0x77]
    %v3721 = vsel %vm3719, %v3708, %v3720
    %3722 = vst [vmem:[#allocation5] sm:$0x77] %v3721
    %vm3723 = vcmask 518144
    %vm3724 = vmand %vm3723, %vm3715
    %v3725 = vld [vmem:[#allocation5 + $0x8] sm:$0x7]
    %v3726 = vsel %vm3724, %v3705, %v3725
    %3727 = vst [vmem:[#allocation5 + $0x8] sm:$0x7] %v3726
    %v3728 = vld [vmem:[#allocation5 + $0xc] sm:$0x77]
    %v3729 = vsel %vm3719, %v3709, %v3728
    %3730 = vst [vmem:[#allocation5 + $0xc] sm:$0x77] %v3729
    %v3731 = vld [vmem:[#allocation5 + $0x14] sm:$0x7]
    %v3732 = vsel %vm3724, %v3706, %v3731
    %3733 = vst [vmem:[#allocation5 + $0x14] sm:$0x7] %v3732
    %v3734 = vld [vmem:[#allocation16] sm:$0xf]
    %v3735 = vld [vmem:[#allocation5] sm:$0x33]
    %v3736 = vld [vmem:[#allocation5 + $0x8] sm:$0x3]
    %v3737 = vld [vmem:[#allocation5 + $0xc] sm:$0x33]
    %v3738 = vld [vmem:[#allocation5 + $0x14] sm:$0x3]
    %v3744 = vunpack.c.l.s4 1983009808
    %v3745 = vunpack.c.0.s8 %v3744
    %v3746 = vlaneseq
    %v3747 = vshrl.u32 %v3746, 7
    %v3748 = vsub.s32 %v3745, %v3747
    %v3749 = vrot.slane %v3735, %v3748
    %v3751 = vunpack.c.l.s4 1983009808
    %v3752 = vunpack.c.0.s8 %v3751
    %v3753 = vlaneseq
    %v3754 = vshrl.u32 %v3753, 7
    %v3755 = vsub.s32 %v3752, %v3754
    %v3756 = vrot.slane %v3736, %v3755
    %v3757 = vcombine.low %v3749, %v3756
    %v3759 = vunpack.c.l.s4 1983009808
    %v3760 = vunpack.c.0.s8 %v3759
    %v3761 = vlaneseq
    %v3762 = vshrl.u32 %v3761, 7
    %v3763 = vsub.s32 %v3760, %v3762
    %v3764 = vrot.slane %v3737, %v3763
    %v3766 = vunpack.c.l.s4 1983009808
    %v3767 = vunpack.c.0.s8 %v3766
    %v3768 = vlaneseq
    %v3769 = vshrl.u32 %v3768, 7
    %v3770 = vsub.s32 %v3767, %v3769
    %v3771 = vrot.slane %v3738, %v3770
    %v3772 = vcombine.low %v3764, %v3771
    %v3773 = vld [vmem:[#allocation15] sm:$0xff]
    %v3774 = vld [vmem:[#allocation15 + $0x8] sm:$0xff]
    %v3775 = vld [vmem:[#allocation15 + $0x10] sm:$0xff]
    %v3776 = vld [vmem:[#allocation15 + $0x18] sm:$0xff]
    %v3777 = vld [vmem:[#allocation15 + $0x20] sm:$0xff]
    %v3778 = vld [vmem:[#allocation15 + $0x28] sm:$0xff]
    %v3779 = vld [vmem:[#allocation15 + $0x30] sm:$0xff]
    %v3780 = vld [vmem:[#allocation15 + $0x38] sm:$0xff]
    %v3781 = vld [vmem:[#allocation15 + $0x40] sm:$0xff]
    %v3782 = vld [vmem:[#allocation15 + $0x48] sm:$0xff]
    %v3783 = vld [vmem:[#allocation15 + $0x50] sm:$0xff]
    %v3784 = vld [vmem:[#allocation15 + $0x58] sm:$0xff]
    %v3785 = vld [vmem:[#allocation15 + $0x60] sm:$0xff]
    %v3786 = vld [vmem:[#allocation15 + $0x68] sm:$0xff]
    %v3787 = vld [vmem:[#allocation15 + $0x70] sm:$0xff]
    %v3788 = vld [vmem:[#allocation15 + $0x78] sm:$0xff]
    %v3789 = vld [vmem:[#allocation15 + $0x80] sm:$0xff]
    %v3790 = vld [vmem:[#allocation15 + $0x88] sm:$0xff]
    %v3791 = vld [vmem:[#allocation15 + $0x90] sm:$0xff]
    %v3792 = vld [vmem:[#allocation15 + $0x98] sm:$0xff]
    %v3793 = vld [vmem:[#allocation15 + $0xa0] sm:$0xff]
    %v3794 = vld [vmem:[#allocation15 + $0xa8] sm:$0xff]
    %v3795 = vld [vmem:[#allocation15 + $0xb0] sm:$0xff]
    %v3796 = vld [vmem:[#allocation15 + $0xb8] sm:$0xff]
    %v3797 = vld [vmem:[#allocation15 + $0xc0] sm:$0xff]
    %v3798 = vld [vmem:[#allocation15 + $0xc8] sm:$0xff]
    %v3799 = vld [vmem:[#allocation15 + $0xd0] sm:$0xff]
    %v3800 = vld [vmem:[#allocation15 + $0xd8] sm:$0xff]
    %v3801 = vld [vmem:[#allocation15 + $0xe0] sm:$0xff]
    %v3802 = vld [vmem:[#allocation15 + $0xe8] sm:$0xff]
    %v3803 = vld [vmem:[#allocation15 + $0xf0] sm:$0xff]
    %v3804 = vld [vmem:[#allocation15 + $0xf8] sm:$0xff]
    %v3805 = vld [vmem:[#allocation15 + $0x100] sm:$0xff]
    %v3806 = vld [vmem:[#allocation15 + $0x108] sm:$0xff]
    %v3807 = vld [vmem:[#allocation15 + $0x110] sm:$0xff]
    %v3808 = vld [vmem:[#allocation15 + $0x118] sm:$0xff]
    %v3809 = vld [vmem:[#allocation15 + $0x120] sm:$0xff]
    %v3810 = vld [vmem:[#allocation15 + $0x128] sm:$0xff]
    %v3811 = vld [vmem:[#allocation15 + $0x130] sm:$0xff]
    %v3812 = vld [vmem:[#allocation15 + $0x138] sm:$0xff]
    %v3813 = vld [vmem:[#allocation15 + $0x140] sm:$0xff]
    %v3814 = vld [vmem:[#allocation15 + $0x148] sm:$0xff]
    %v3815 = vld [vmem:[#allocation15 + $0x150] sm:$0xff]
    %v3816 = vld [vmem:[#allocation15 + $0x158] sm:$0xff]
    %v3817 = vld [vmem:[#allocation15 + $0x160] sm:$0xff]
    %v3818 = vld [vmem:[#allocation15 + $0x168] sm:$0xff]
    %v3819 = vld [vmem:[#allocation15 + $0x170] sm:$0xff]
    %v3820 = vld [vmem:[#allocation15 + $0x178] sm:$0xff]
    %v3821 = vld [vmem:[#allocation15 + $0x180] sm:$0xff]
    %v3822 = vld [vmem:[#allocation15 + $0x188] sm:$0xff]
    %v3823 = vld [vmem:[#allocation15 + $0x190] sm:$0xff]
    %v3824 = vld [vmem:[#allocation15 + $0x198] sm:$0xff]
    %v3825 = vld [vmem:[#allocation15 + $0x1a0] sm:$0xff]
    %v3826 = vld [vmem:[#allocation15 + $0x1a8] sm:$0xff]
    %v3827 = vld [vmem:[#allocation15 + $0x1b0] sm:$0xff]
    %v3828 = vld [vmem:[#allocation15 + $0x1b8] sm:$0xff]
    %v3829 = vld [vmem:[#allocation15 + $0x1c0] sm:$0xff]
    %v3830 = vld [vmem:[#allocation15 + $0x1c8] sm:$0xff]
    %v3831 = vld [vmem:[#allocation15 + $0x1d0] sm:$0xff]
    %v3832 = vld [vmem:[#allocation15 + $0x1d8] sm:$0xff]
    %v3833 = vld [vmem:[#allocation15 + $0x1e0] sm:$0xff]
    %v3834 = vld [vmem:[#allocation15 + $0x1e8] sm:$0xff]
    %v3835 = vld [vmem:[#allocation15 + $0x1f0] sm:$0xff]
    %v3836 = vld [vmem:[#allocation15 + $0x1f8] sm:$0xff]
    %v3837 = vld [vmem:[#allocation15 + $0x200] sm:$0xff]
    %v3838 = vld [vmem:[#allocation15 + $0x208] sm:$0xff]
    %v3839 = vld [vmem:[#allocation15 + $0x210] sm:$0xff]
    %v3840 = vld [vmem:[#allocation15 + $0x218] sm:$0xff]
    %v3841 = vld [vmem:[#allocation15 + $0x220] sm:$0xff]
    %v3842 = vld [vmem:[#allocation15 + $0x228] sm:$0xff]
    %v3843 = vld [vmem:[#allocation15 + $0x230] sm:$0xff]
    %v3844 = vld [vmem:[#allocation15 + $0x238] sm:$0xff]
    %v3845 = vld [vmem:[#allocation15 + $0x240] sm:$0xff]
    %v3846 = vld [vmem:[#allocation15 + $0x248] sm:$0xff]
    %v3847 = vld [vmem:[#allocation15 + $0x250] sm:$0xff]
    %v3848 = vld [vmem:[#allocation15 + $0x258] sm:$0xff]
    %v3849 = vld [vmem:[#allocation15 + $0x260] sm:$0xff]
    %v3850 = vld [vmem:[#allocation15 + $0x268] sm:$0xff]
    %v3851 = vld [vmem:[#allocation15 + $0x270] sm:$0xff]
    %v3852 = vld [vmem:[#allocation15 + $0x278] sm:$0xff]
    %v3853 = vld [vmem:[#allocation15 + $0x280] sm:$0xff]
    %v3854 = vld [vmem:[#allocation15 + $0x288] sm:$0xff]
    %v3855 = vld [vmem:[#allocation15 + $0x290] sm:$0xff]
    %v3856 = vld [vmem:[#allocation15 + $0x298] sm:$0xff]
    %v3857 = vld [vmem:[#allocation15 + $0x2a0] sm:$0xff]
    %v3858 = vld [vmem:[#allocation15 + $0x2a8] sm:$0xff]
    %v3859 = vld [vmem:[#allocation15 + $0x2b0] sm:$0xff]
    %v3860 = vld [vmem:[#allocation15 + $0x2b8] sm:$0xff]
    %v3861 = vld [vmem:[#allocation15 + $0x2c0] sm:$0xff]
    %v3862 = vld [vmem:[#allocation15 + $0x2c8] sm:$0xff]
    %v3863 = vld [vmem:[#allocation15 + $0x2d0] sm:$0xff]
    %v3864 = vld [vmem:[#allocation15 + $0x2d8] sm:$0xff]
    %v3865 = vld [vmem:[#allocation15 + $0x2e0] sm:$0xff]
    %v3866 = vld [vmem:[#allocation15 + $0x2e8] sm:$0xff]
    %v3867 = vld [vmem:[#allocation15 + $0x2f0] sm:$0xff]
    %v3868 = vld [vmem:[#allocation15 + $0x2f8] sm:$0xff]
    %v3869 = vld [vmem:[#allocation5] sm:$0x77]
    %v3870 = vld [vmem:[#allocation5 + $0x8] sm:$0x7]
    %v3871 = vld [vmem:[#allocation5 + $0xc] sm:$0x77]
    %v3872 = vld [vmem:[#allocation5 + $0x14] sm:$0x7]
    %v3878 = vunpack.c.l.s4 1983009808
    %v3879 = vunpack.c.0.s8 %v3878
    %v3880 = vlaneseq
    %v3881 = vshrl.u32 %v3880, 7
    %v3882 = vsub.s32 %v3879, %v3881
    %v3883 = vrot.slane %v3869, %v3882
    %v3885 = vunpack.c.l.s4 1983009808
    %v3886 = vunpack.c.0.s8 %v3885
    %v3887 = vlaneseq
    %v3888 = vshrl.u32 %v3887, 7
    %v3889 = vsub.s32 %v3886, %v3888
    %v3890 = vrot.slane %v3870, %v3889
    %v3891 = vcombine.low %v3883, %v3890
    %v3892 = vcombine.high %v3883, %v3890
    %v3894 = vunpack.c.l.s4 1983009808
    %v3895 = vunpack.c.0.s8 %v3894
    %v3896 = vlaneseq
    %v3897 = vshrl.u32 %v3896, 7
    %v3898 = vsub.s32 %v3895, %v3897
    %v3899 = vrot.slane %v3871, %v3898
    %v3901 = vunpack.c.l.s4 1983009808
    %v3902 = vunpack.c.0.s8 %v3901
    %v3903 = vlaneseq
    %v3904 = vshrl.u32 %v3903, 7
    %v3905 = vsub.s32 %v3902, %v3904
    %v3906 = vrot.slane %v3872, %v3905
    %v3907 = vcombine.low %v3899, %v3906
    %v3908 = vcombine.high %v3899, %v3906
    %vm3909 = vsmask.f32 1280
    %vm3910 = vsmask.f32 3336
    %vm3911 = vmor %vm3909, %vm3910
    %vm3912 = vsmask.f32 5392
    %vm3913 = vmor %vm3911, %vm3912
    %vm3914 = vsmask.f32 7448
    %vm3915 = vmor %vm3913, %vm3914
    %v3917 = vshrl.u32 %v3891, 16
    %v3919 = vrot.slane %v3917, 6
    %v3920 = vshll.u32 %v3891, 16
    %v3922 = vrot.slane %v3920, 7
    %v3923 = vor.u32 %v3919, %v3922
    %v3924 = vrot.slane %v3923, 2
    %v3926 = vshll.u32 %v3892, 16
    %v3928 = vrot.slane %v3926, 7
    %v3929 = vsel %vm3915, %v3924, %v3928
    %v3931 = vshrl.u32 %v3907, 16
    %v3933 = vrot.slane %v3931, 6
    %v3934 = vshll.u32 %v3907, 16
    %v3936 = vrot.slane %v3934, 7
    %v3937 = vor.u32 %v3933, %v3936
    %v3938 = vrot.slane %v3937, 2
    %v3940 = vshll.u32 %v3908, 16
    %v3942 = vrot.slane %v3940, 7
    %v3943 = vsel %vm3915, %v3938, %v3942
    %s3944 = scalar_lea.vmem [#allocation15], 768
    %v3945 = vld [vmem:[%s3944] sm:$0xff]
    %v3946 = vld [vmem:[%s3944 + $0x8] sm:$0xff]
    %v3947 = vld [vmem:[%s3944 + $0x10] sm:$0xff]
    %v3948 = vld [vmem:[%s3944 + $0x18] sm:$0xff]
    %v3949 = vld [vmem:[%s3944 + $0x20] sm:$0xff]
    %v3950 = vld [vmem:[%s3944 + $0x28] sm:$0xff]
    %v3951 = vld [vmem:[%s3944 + $0x30] sm:$0xff]
    %v3952 = vld [vmem:[%s3944 + $0x38] sm:$0xff]
    %v3953 = vld [vmem:[%s3944 + $0x40] sm:$0xff]
    %v3954 = vld [vmem:[%s3944 + $0x48] sm:$0xff]
    %v3955 = vld [vmem:[%s3944 + $0x50] sm:$0xff]
    %v3956 = vld [vmem:[%s3944 + $0x58] sm:$0xff]
    %v3957 = vld [vmem:[%s3944 + $0x60] sm:$0xff]
    %v3958 = vld [vmem:[%s3944 + $0x68] sm:$0xff]
    %v3959 = vld [vmem:[%s3944 + $0x70] sm:$0xff]
    %v3960 = vld [vmem:[%s3944 + $0x78] sm:$0xff]
    %v3961 = vld [vmem:[%s3944 + $0x80] sm:$0xff]
    %v3962 = vld [vmem:[%s3944 + $0x88] sm:$0xff]
    %v3963 = vld [vmem:[%s3944 + $0x90] sm:$0xff]
    %v3964 = vld [vmem:[%s3944 + $0x98] sm:$0xff]
    %v3965 = vld [vmem:[%s3944 + $0xa0] sm:$0xff]
    %v3966 = vld [vmem:[%s3944 + $0xa8] sm:$0xff]
    %v3967 = vld [vmem:[%s3944 + $0xb0] sm:$0xff]
    %v3968 = vld [vmem:[%s3944 + $0xb8] sm:$0xff]
    %v3969 = vld [vmem:[%s3944 + $0xc0] sm:$0xff]
    %v3970 = vld [vmem:[%s3944 + $0xc8] sm:$0xff]
    %v3971 = vld [vmem:[%s3944 + $0xd0] sm:$0xff]
    %v3972 = vld [vmem:[%s3944 + $0xd8] sm:$0xff]
    %v3973 = vld [vmem:[%s3944 + $0xe0] sm:$0xff]
    %v3974 = vld [vmem:[%s3944 + $0xe8] sm:$0xff]
    %v3975 = vld [vmem:[%s3944 + $0xf0] sm:$0xff]
    %v3976 = vld [vmem:[%s3944 + $0xf8] sm:$0xff]
    %v3977 = vld [vmem:[%s3944 + $0x100] sm:$0xff]
    %v3978 = vld [vmem:[%s3944 + $0x108] sm:$0xff]
    %v3979 = vld [vmem:[%s3944 + $0x110] sm:$0xff]
    %v3980 = vld [vmem:[%s3944 + $0x118] sm:$0xff]
    %v3981 = vld [vmem:[%s3944 + $0x120] sm:$0xff]
    %v3982 = vld [vmem:[%s3944 + $0x128] sm:$0xff]
    %v3983 = vld [vmem:[%s3944 + $0x130] sm:$0xff]
    %v3984 = vld [vmem:[%s3944 + $0x138] sm:$0xff]
    %v3985 = vld [vmem:[%s3944 + $0x140] sm:$0xff]
    %v3986 = vld [vmem:[%s3944 + $0x148] sm:$0xff]
    %v3987 = vld [vmem:[%s3944 + $0x150] sm:$0xff]
    %v3988 = vld [vmem:[%s3944 + $0x158] sm:$0xff]
    %v3989 = vld [vmem:[%s3944 + $0x160] sm:$0xff]
    %v3990 = vld [vmem:[%s3944 + $0x168] sm:$0xff]
    %v3991 = vld [vmem:[%s3944 + $0x170] sm:$0xff]
    %v3992 = vld [vmem:[%s3944 + $0x178] sm:$0xff]
    %v3993 = vld [vmem:[%s3944 + $0x180] sm:$0xff]
    %v3994 = vld [vmem:[%s3944 + $0x188] sm:$0xff]
    %v3995 = vld [vmem:[%s3944 + $0x190] sm:$0xff]
    %v3996 = vld [vmem:[%s3944 + $0x198] sm:$0xff]
    %v3997 = vld [vmem:[%s3944 + $0x1a0] sm:$0xff]
    %v3998 = vld [vmem:[%s3944 + $0x1a8] sm:$0xff]
    %v3999 = vld [vmem:[%s3944 + $0x1b0] sm:$0xff]
    %v4000 = vld [vmem:[%s3944 + $0x1b8] sm:$0xff]
    %v4001 = vld [vmem:[%s3944 + $0x1c0] sm:$0xff]
    %v4002 = vld [vmem:[%s3944 + $0x1c8] sm:$0xff]
    %v4003 = vld [vmem:[%s3944 + $0x1d0] sm:$0xff]
    %v4004 = vld [vmem:[%s3944 + $0x1d8] sm:$0xff]
    %v4005 = vld [vmem:[%s3944 + $0x1e0] sm:$0xff]
    %v4006 = vld [vmem:[%s3944 + $0x1e8] sm:$0xff]
    %v4007 = vld [vmem:[%s3944 + $0x1f0] sm:$0xff]
    %v4008 = vld [vmem:[%s3944 + $0x1f8] sm:$0xff]
    %v4009 = vld [vmem:[%s3944 + $0x200] sm:$0xff]
    %v4010 = vld [vmem:[%s3944 + $0x208] sm:$0xff]
    %v4011 = vld [vmem:[%s3944 + $0x210] sm:$0xff]
    %v4012 = vld [vmem:[%s3944 + $0x218] sm:$0xff]
    %v4013 = vld [vmem:[%s3944 + $0x220] sm:$0xff]
    %v4014 = vld [vmem:[%s3944 + $0x228] sm:$0xff]
    %v4015 = vld [vmem:[%s3944 + $0x230] sm:$0xff]
    %v4016 = vld [vmem:[%s3944 + $0x238] sm:$0xff]
    %v4017 = vld [vmem:[%s3944 + $0x240] sm:$0xff]
    %v4018 = vld [vmem:[%s3944 + $0x248] sm:$0xff]
    %v4019 = vld [vmem:[%s3944 + $0x250] sm:$0xff]
    %v4020 = vld [vmem:[%s3944 + $0x258] sm:$0xff]
    %v4021 = vld [vmem:[%s3944 + $0x260] sm:$0xff]
    %v4022 = vld [vmem:[%s3944 + $0x268] sm:$0xff]
    %v4023 = vld [vmem:[%s3944 + $0x270] sm:$0xff]
    %v4024 = vld [vmem:[%s3944 + $0x278] sm:$0xff]
    %v4025 = vld [vmem:[%s3944 + $0x280] sm:$0xff]
    %v4026 = vld [vmem:[%s3944 + $0x288] sm:$0xff]
    %v4027 = vld [vmem:[%s3944 + $0x290] sm:$0xff]
    %v4028 = vld [vmem:[%s3944 + $0x298] sm:$0xff]
    %v4029 = vld [vmem:[%s3944 + $0x2a0] sm:$0xff]
    %v4030 = vld [vmem:[%s3944 + $0x2a8] sm:$0xff]
    %v4031 = vld [vmem:[%s3944 + $0x2b0] sm:$0xff]
    %v4032 = vld [vmem:[%s3944 + $0x2b8] sm:$0xff]
    %v4033 = vld [vmem:[%s3944 + $0x2c0] sm:$0xff]
    %v4034 = vld [vmem:[%s3944 + $0x2c8] sm:$0xff]
    %v4035 = vld [vmem:[%s3944 + $0x2d0] sm:$0xff]
    %v4036 = vld [vmem:[%s3944 + $0x2d8] sm:$0xff]
    %v4037 = vld [vmem:[%s3944 + $0x2e0] sm:$0xff]
    %v4038 = vld [vmem:[%s3944 + $0x2e8] sm:$0xff]
    %v4039 = vld [vmem:[%s3944 + $0x2f0] sm:$0xff]
    %v4040 = vld [vmem:[%s3944 + $0x2f8] sm:$0xff]
    %v4041 = vcombine.low %v3929, %v3943
    %v4042 = vcombine.high %v3929, %v3943
    %v4044 = vunpack.c.l.s4 1983009808
    %v4045 = vunpack.c.0.s8 %v4044
    %v4046 = vlaneseq
    %v4047 = vshrl.u32 %v4046, 7
    %v4048 = vsub.s32 %v4045, %v4047
    %v4049 = vrot.slane %v4041, %v4048
    %v4051 = vunpack.c.l.s4 1983009808
    %v4052 = vunpack.c.0.s8 %v4051
    %v4053 = vlaneseq
    %v4054 = vshrl.u32 %v4053, 7
    %v4055 = vsub.s32 %v4052, %v4054
    %v4056 = vrot.slane %v4042, %v4055
    %v4057 = vcombine.high %v4049, %v4049
    %v4157 = vunpack.c.l.b16 %v3945
    %v4158 = vunpack.c.h.b16 %v3945
    %v4159 = vunpack.c.l.b16 %v3946
    %v4160 = vunpack.c.h.b16 %v3946
    %v4161 = vunpack.c.l.b16 %v3947
    %v4162 = vunpack.c.h.b16 %v3947
    %v4163 = vunpack.c.l.b16 %v3948
    %v4164 = vunpack.c.h.b16 %v3948
    %v4165 = vunpack.c.l.b16 %v3949
    %v4166 = vunpack.c.h.b16 %v3949
    %v4167 = vunpack.c.l.b16 %v3950
    %v4168 = vunpack.c.h.b16 %v3950
    %v4169 = vunpack.c.l.b16 %v3951
    %v4170 = vunpack.c.h.b16 %v3951
    %v4171 = vunpack.c.l.b16 %v3952
    %v4172 = vunpack.c.h.b16 %v3952
    %v4173 = vunpack.c.l.b16 %v3953
    %v4174 = vunpack.c.h.b16 %v3953
    %v4175 = vunpack.c.l.b16 %v3954
    %v4176 = vunpack.c.h.b16 %v3954
    %v4177 = vunpack.c.l.b16 %v3955
    %v4178 = vunpack.c.h.b16 %v3955
    %v4179 = vunpack.c.l.b16 %v3956
    %v4180 = vunpack.c.h.b16 %v3956
    %v4181 = vunpack.c.l.b16 %v3957
    %v4182 = vunpack.c.h.b16 %v3957
    %v4183 = vunpack.c.l.b16 %v3958
    %v4184 = vunpack.c.h.b16 %v3958
    %v4185 = vunpack.c.l.b16 %v3959
    %v4186 = vunpack.c.h.b16 %v3959
    %v4187 = vunpack.c.l.b16 %v3960
    %v4188 = vunpack.c.h.b16 %v3960
    %v4189 = vunpack.c.l.b16 %v3961
    %v4190 = vunpack.c.h.b16 %v3961
    %v4191 = vunpack.c.l.b16 %v3962
    %v4192 = vunpack.c.h.b16 %v3962
    %v4193 = vunpack.c.l.b16 %v3963
    %v4194 = vunpack.c.h.b16 %v3963
    %v4195 = vunpack.c.l.b16 %v3964
    %v4196 = vunpack.c.h.b16 %v3964
    %v4197 = vunpack.c.l.b16 %v3965
    %v4198 = vunpack.c.h.b16 %v3965
    %v4199 = vunpack.c.l.b16 %v3966
    %v4200 = vunpack.c.h.b16 %v3966
    %v4201 = vunpack.c.l.b16 %v3967
    %v4202 = vunpack.c.h.b16 %v3967
    %v4203 = vunpack.c.l.b16 %v3968
    %v4204 = vunpack.c.h.b16 %v3968
    %v4205 = vunpack.c.l.b16 %v3969
    %v4206 = vunpack.c.h.b16 %v3969
    %v4207 = vunpack.c.l.b16 %v3970
    %v4208 = vunpack.c.h.b16 %v3970
    %v4209 = vunpack.c.l.b16 %v3971
    %v4210 = vunpack.c.h.b16 %v3971
    %v4211 = vunpack.c.l.b16 %v3972
    %v4212 = vunpack.c.h.b16 %v3972
    %v4213 = vunpack.c.l.b16 %v3973
    %v4214 = vunpack.c.h.b16 %v3973
    %v4215 = vunpack.c.l.b16 %v3974
    %v4216 = vunpack.c.h.b16 %v3974
    %v4217 = vunpack.c.l.b16 %v3975
    %v4218 = vunpack.c.h.b16 %v3975
    %v4219 = vunpack.c.l.b16 %v3976
    %v4220 = vunpack.c.h.b16 %v3976
    %v4221 = vunpack.c.l.b16 %v3977
    %v4222 = vunpack.c.h.b16 %v3977
    %v4223 = vunpack.c.l.b16 %v3978
    %v4224 = vunpack.c.h.b16 %v3978
    %v4225 = vunpack.c.l.b16 %v3979
    %v4226 = vunpack.c.h.b16 %v3979
    %v4227 = vunpack.c.l.b16 %v3980
    %v4228 = vunpack.c.h.b16 %v3980
    %v4229 = vunpack.c.l.b16 %v3981
    %v4230 = vunpack.c.h.b16 %v3981
    %v4231 = vunpack.c.l.b16 %v3982
    %v4232 = vunpack.c.h.b16 %v3982
    %v4233 = vunpack.c.l.b16 %v3983
    %v4234 = vunpack.c.h.b16 %v3983
    %v4235 = vunpack.c.l.b16 %v3984
    %v4236 = vunpack.c.h.b16 %v3984
    %v4237 = vunpack.c.l.b16 %v3985
    %v4238 = vunpack.c.h.b16 %v3985
    %v4239 = vunpack.c.l.b16 %v3986
    %v4240 = vunpack.c.h.b16 %v3986
    %v4241 = vunpack.c.l.b16 %v3987
    %v4242 = vunpack.c.h.b16 %v3987
    %v4243 = vunpack.c.l.b16 %v3988
    %v4244 = vunpack.c.h.b16 %v3988
    %v4245 = vunpack.c.l.b16 %v3989
    %v4246 = vunpack.c.h.b16 %v3989
    %v4247 = vunpack.c.l.b16 %v3990
    %v4248 = vunpack.c.h.b16 %v3990
    %v4249 = vunpack.c.l.b16 %v3991
    %v4250 = vunpack.c.h.b16 %v3991
    %v4251 = vunpack.c.l.b16 %v3992
    %v4252 = vunpack.c.h.b16 %v3992
    %v4253 = vunpack.c.l.b16 %v3993
    %v4254 = vunpack.c.h.b16 %v3993
    %v4255 = vunpack.c.l.b16 %v3994
    %v4256 = vunpack.c.h.b16 %v3994
    %v4257 = vunpack.c.l.b16 %v3995
    %v4258 = vunpack.c.h.b16 %v3995
    %v4259 = vunpack.c.l.b16 %v3996
    %v4260 = vunpack.c.h.b16 %v3996
    %v4261 = vunpack.c.l.b16 %v3997
    %v4262 = vunpack.c.h.b16 %v3997
    %v4263 = vunpack.c.l.b16 %v3998
    %v4264 = vunpack.c.h.b16 %v3998
    %v4265 = vunpack.c.l.b16 %v3999
    %v4266 = vunpack.c.h.b16 %v3999
    %v4267 = vunpack.c.l.b16 %v4000
    %v4268 = vunpack.c.h.b16 %v4000
    %v4269 = vunpack.c.l.b16 %v4001
    %v4270 = vunpack.c.h.b16 %v4001
    %v4271 = vunpack.c.l.b16 %v4002
    %v4272 = vunpack.c.h.b16 %v4002
    %v4273 = vunpack.c.l.b16 %v4003
    %v4274 = vunpack.c.h.b16 %v4003
    %v4275 = vunpack.c.l.b16 %v4004
    %v4276 = vunpack.c.h.b16 %v4004
    %v4277 = vunpack.c.l.b16 %v4005
    %v4278 = vunpack.c.h.b16 %v4005
    %v4279 = vunpack.c.l.b16 %v4006
    %v4280 = vunpack.c.h.b16 %v4006
    %v4281 = vunpack.c.l.b16 %v4007
    %v4282 = vunpack.c.h.b16 %v4007
    %v4283 = vunpack.c.l.b16 %v4008
    %v4284 = vunpack.c.h.b16 %v4008
    %v4285 = vunpack.c.l.b16 %v4009
    %v4286 = vunpack.c.h.b16 %v4009
    %v4287 = vunpack.c.l.b16 %v4010
    %v4288 = vunpack.c.h.b16 %v4010
    %v4289 = vunpack.c.l.b16 %v4011
    %v4290 = vunpack.c.h.b16 %v4011
    %v4291 = vunpack.c.l.b16 %v4012
    %v4292 = vunpack.c.h.b16 %v4012
    %v4293 = vunpack.c.l.b16 %v4013
    %v4294 = vunpack.c.h.b16 %v4013
    %v4295 = vunpack.c.l.b16 %v4014
    %v4296 = vunpack.c.h.b16 %v4014
    %v4297 = vunpack.c.l.b16 %v4015
    %v4298 = vunpack.c.h.b16 %v4015
    %v4299 = vunpack.c.l.b16 %v4016
    %v4300 = vunpack.c.h.b16 %v4016
    %v4301 = vunpack.c.l.b16 %v4017
    %v4302 = vunpack.c.h.b16 %v4017
    %v4303 = vunpack.c.l.b16 %v4018
    %v4304 = vunpack.c.h.b16 %v4018
    %v4305 = vunpack.c.l.b16 %v4019
    %v4306 = vunpack.c.h.b16 %v4019
    %v4307 = vunpack.c.l.b16 %v4020
    %v4308 = vunpack.c.h.b16 %v4020
    %v4309 = vunpack.c.l.b16 %v4021
    %v4310 = vunpack.c.h.b16 %v4021
    %v4311 = vunpack.c.l.b16 %v4022
    %v4312 = vunpack.c.h.b16 %v4022
    %v4313 = vunpack.c.l.b16 %v4023
    %v4314 = vunpack.c.h.b16 %v4023
    %v4315 = vunpack.c.l.b16 %v4024
    %v4316 = vunpack.c.h.b16 %v4024
    %v4317 = vunpack.c.l.b16 %v4025
    %v4318 = vunpack.c.h.b16 %v4025
    %v4319 = vunpack.c.l.b16 %v4026
    %v4320 = vunpack.c.h.b16 %v4026
    %v4321 = vunpack.c.l.b16 %v4027
    %v4322 = vunpack.c.h.b16 %v4027
    %v4323 = vunpack.c.l.b16 %v4028
    %v4324 = vunpack.c.h.b16 %v4028
    %v4325 = vunpack.c.l.b16 %v4029
    %v4326 = vunpack.c.h.b16 %v4029
    %v4327 = vunpack.c.l.b16 %v4030
    %v4328 = vunpack.c.h.b16 %v4030
    %v4329 = vunpack.c.l.b16 %v4031
    %v4330 = vunpack.c.h.b16 %v4031
    %v4331 = vunpack.c.l.b16 %v4032
    %v4332 = vunpack.c.h.b16 %v4032
    %v4333 = vunpack.c.l.b16 %v4033
    %v4334 = vunpack.c.h.b16 %v4033
    %v4335 = vunpack.c.l.b16 %v4034
    %v4336 = vunpack.c.h.b16 %v4034
    %v4337 = vunpack.c.l.b16 %v4035
    %v4338 = vunpack.c.h.b16 %v4035
    %v4339 = vunpack.c.l.b16 %v4036
    %v4340 = vunpack.c.h.b16 %v4036
    %v4341 = vunpack.c.l.b16 %v4037
    %v4342 = vunpack.c.h.b16 %v4037
    %v4343 = vunpack.c.l.b16 %v4038
    %v4344 = vunpack.c.h.b16 %v4038
    %v4345 = vunpack.c.l.b16 %v4039
    %v4346 = vunpack.c.h.b16 %v4039
    %v4347 = vunpack.c.l.b16 %v4040
    %v4348 = vunpack.c.h.b16 %v4040
    %v4349 = vpack.c.b16 %v4161, %v4157
    %v4350 = vpack.c.b16 %v4162, %v4158
    %v4351 = vpack.c.b16 %v4163, %v4159
    %v4352 = vpack.c.b16 %v4164, %v4160
    %v4353 = vpack.c.b16 %v4169, %v4165
    %v4354 = vpack.c.b16 %v4170, %v4166
    %v4355 = vpack.c.b16 %v4171, %v4167
    %v4356 = vpack.c.b16 %v4172, %v4168
    %v4357 = vpack.c.b16 %v4177, %v4173
    %v4358 = vpack.c.b16 %v4178, %v4174
    %v4359 = vpack.c.b16 %v4179, %v4175
    %v4360 = vpack.c.b16 %v4180, %v4176
    %v4361 = vpack.c.b16 %v4185, %v4181
    %v4362 = vpack.c.b16 %v4186, %v4182
    %v4363 = vpack.c.b16 %v4187, %v4183
    %v4364 = vpack.c.b16 %v4188, %v4184
    %v4365 = vpack.c.b16 %v4193, %v4189
    %v4366 = vpack.c.b16 %v4194, %v4190
    %v4367 = vpack.c.b16 %v4195, %v4191
    %v4368 = vpack.c.b16 %v4196, %v4192
    %v4369 = vpack.c.b16 %v4201, %v4197
    %v4370 = vpack.c.b16 %v4202, %v4198
    %v4371 = vpack.c.b16 %v4203, %v4199
    %v4372 = vpack.c.b16 %v4204, %v4200
    %v4373 = vpack.c.b16 %v4209, %v4205
    %v4374 = vpack.c.b16 %v4210, %v4206
    %v4375 = vpack.c.b16 %v4211, %v4207
    %v4376 = vpack.c.b16 %v4212, %v4208
    %v4377 = vpack.c.b16 %v4217, %v4213
    %v4378 = vpack.c.b16 %v4218, %v4214
    %v4379 = vpack.c.b16 %v4219, %v4215
    %v4380 = vpack.c.b16 %v4220, %v4216
    %v4381 = vpack.c.b16 %v4225, %v4221
    %v4382 = vpack.c.b16 %v4226, %v4222
    %v4383 = vpack.c.b16 %v4227, %v4223
    %v4384 = vpack.c.b16 %v4228, %v4224
    %v4385 = vpack.c.b16 %v4233, %v4229
    %v4386 = vpack.c.b16 %v4234, %v4230
    %v4387 = vpack.c.b16 %v4235, %v4231
    %v4388 = vpack.c.b16 %v4236, %v4232
    %v4389 = vpack.c.b16 %v4241, %v4237
    %v4390 = vpack.c.b16 %v4242, %v4238
    %v4391 = vpack.c.b16 %v4243, %v4239
    %v4392 = vpack.c.b16 %v4244, %v4240
    %v4393 = vpack.c.b16 %v4249, %v4245
    %v4394 = vpack.c.b16 %v4250, %v4246
    %v4395 = vpack.c.b16 %v4251, %v4247
    %v4396 = vpack.c.b16 %v4252, %v4248
    %v4397 = vpack.c.b16 %v4257, %v4253
    %v4398 = vpack.c.b16 %v4258, %v4254
    %v4399 = vpack.c.b16 %v4259, %v4255
    %v4400 = vpack.c.b16 %v4260, %v4256
    %v4401 = vpack.c.b16 %v4265, %v4261
    %v4402 = vpack.c.b16 %v4266, %v4262
    %v4403 = vpack.c.b16 %v4267, %v4263
    %v4404 = vpack.c.b16 %v4268, %v4264
    %v4405 = vpack.c.b16 %v4273, %v4269
    %v4406 = vpack.c.b16 %v4274, %v4270
    %v4407 = vpack.c.b16 %v4275, %v4271
    %v4408 = vpack.c.b16 %v4276, %v4272
    %v4409 = vpack.c.b16 %v4281, %v4277
    %v4410 = vpack.c.b16 %v4282, %v4278
    %v4411 = vpack.c.b16 %v4283, %v4279
    %v4412 = vpack.c.b16 %v4284, %v4280
    %v4413 = vpack.c.b16 %v4289, %v4285
    %v4414 = vpack.c.b16 %v4290, %v4286
    %v4415 = vpack.c.b16 %v4291, %v4287
    %v4416 = vpack.c.b16 %v4292, %v4288
    %v4417 = vpack.c.b16 %v4297, %v4293
    %v4418 = vpack.c.b16 %v4298, %v4294
    %v4419 = vpack.c.b16 %v4299, %v4295
    %v4420 = vpack.c.b16 %v4300, %v4296
    %v4421 = vpack.c.b16 %v4305, %v4301
    %v4422 = vpack.c.b16 %v4306, %v4302
    %v4423 = vpack.c.b16 %v4307, %v4303
    %v4424 = vpack.c.b16 %v4308, %v4304
    %v4425 = vpack.c.b16 %v4313, %v4309
    %v4426 = vpack.c.b16 %v4314, %v4310
    %v4427 = vpack.c.b16 %v4315, %v4311
    %v4428 = vpack.c.b16 %v4316, %v4312
    %v4429 = vpack.c.b16 %v4321, %v4317
    %v4430 = vpack.c.b16 %v4322, %v4318
    %v4431 = vpack.c.b16 %v4323, %v4319
    %v4432 = vpack.c.b16 %v4324, %v4320
    %v4433 = vpack.c.b16 %v4329, %v4325
    %v4434 = vpack.c.b16 %v4330, %v4326
    %v4435 = vpack.c.b16 %v4331, %v4327
    %v4436 = vpack.c.b16 %v4332, %v4328
    %v4437 = vpack.c.b16 %v4337, %v4333
    %v4438 = vpack.c.b16 %v4338, %v4334
    %v4439 = vpack.c.b16 %v4339, %v4335
    %v4440 = vpack.c.b16 %v4340, %v4336
    %v4441 = vpack.c.b16 %v4345, %v4341
    %v4442 = vpack.c.b16 %v4346, %v4342
    %v4443 = vpack.c.b16 %v4347, %v4343
    %v4444 = vpack.c.b16 %v4348, %v4344
    %4541 = vmatprep.subr.bf16.mxu0 %v4350
    %4542 = vmatpush1.bf16.msra.mxu0 %v4349
    %4543 = vmatprep.subr.bf16.mxu0 %v4354
    %4544 = vmatpush1.bf16.msra.mxu0 %v4353
    %4545 = vmatprep.subr.bf16.mxu0 %v4358
    %4546 = vmatpush1.bf16.msra.mxu0 %v4357
    %4547 = vmatprep.subr.bf16.mxu0 %v4362
    %4548 = vmatpush1.bf16.msra.mxu0 %v4361
    %4549 = vmatprep.subr.bf16.mxu0 %v4366
    %4550 = vmatpush1.bf16.msra.mxu0 %v4365
    %4551 = vmatprep.subr.bf16.mxu0 %v4370
    %4552 = vmatpush1.bf16.msra.mxu0 %v4369
    %4553 = vmatprep.subr.bf16.mxu0 %v4374
    %4554 = vmatpush1.bf16.msra.mxu0 %v4373
    %4555 = vmatprep.subr.bf16.mxu0 %v4378
    %4556 = vmatpush1.bf16.msra.mxu0 %v4377
    %4557 = vmatprep.subr.bf16.mxu0 %v4382
    %4558 = vmatpush1.bf16.msra.mxu0 %v4381
    %4559 = vmatprep.subr.bf16.mxu0 %v4386
    %4560 = vmatpush1.bf16.msra.mxu0 %v4385
    %4561 = vmatprep.subr.bf16.mxu0 %v4390
    %4562 = vmatpush1.bf16.msra.mxu0 %v4389
    %4563 = vmatprep.subr.bf16.mxu0 %v4394
    %4564 = vmatpush1.bf16.msra.mxu0 %v4393
    %4565 = vmatprep.subr.bf16.mxu0 %v4398
    %4566 = vmatpush1.bf16.msra.mxu0 %v4397
    %4567 = vmatprep.subr.bf16.mxu0 %v4402
    %4568 = vmatpush1.bf16.msra.mxu0 %v4401
    %4569 = vmatprep.subr.bf16.mxu0 %v4406
    %4570 = vmatpush1.bf16.msra.mxu0 %v4405
    %4571 = vmatprep.subr.bf16.mxu0 %v4410
    %4572 = vmatpush1.bf16.msra.mxu0 %v4409
    %4573 = vmatprep.mubr.bf16.mxu0 %v4057
    %4574 = vmatmul.mubr.bf16.gmra.mrb[0].mxu0 %v4049
    %v4575 = vpop.f32.mrb[0].mxu0
    %v4576 = vadd.f32 0.0, %v4575
    %v4577 = vpop.f32.mrb[0].mxu0
    %v4578 = vadd.f32 0.0, %v4577
    %v4579 = vpop.f32.mrb[0].mxu0
    %v4580 = vpop.f32.mrb[0].mxu0
    %4581 = vdwg.mxu0
    %4582 = vmatprep.subr.bf16.mxu0 %v4414
    %4583 = vmatpush1.bf16.msra.mxu0 %v4413
    %4584 = vmatprep.subr.bf16.mxu0 %v4418
    %4585 = vmatpush1.bf16.msra.mxu0 %v4417
    %4586 = vmatprep.subr.bf16.mxu0 %v4422
    %4587 = vmatpush1.bf16.msra.mxu0 %v4421
    %4588 = vmatprep.subr.bf16.mxu0 %v4426
    %4589 = vmatpush1.bf16.msra.mxu0 %v4425
    %4590 = vmatprep.subr.bf16.mxu0 %v4430
    %4591 = vmatpush1.bf16.msra.mxu0 %v4429
    %4592 = vmatprep.subr.bf16.mxu0 %v4434
    %4593 = vmatpush1.bf16.msra.mxu0 %v4433
    %4594 = vmatprep.subr.bf16.mxu0 %v4438
    %4595 = vmatpush1.bf16.msra.mxu0 %v4437
    %4596 = vmatprep.subr.bf16.mxu0 %v4442
    %4597 = vmatpush1.bf16.msra.mxu0 %v4441
    %4598 = vmatprep.subr.bf16.mxu0 0
    %4599 = vmatpush1.bf16.msra.mxu0 0
    %4600 = vmatprep.subr.bf16.mxu0 0
    %4601 = vmatpush1.bf16.msra.mxu0 0
    %4602 = vmatprep.subr.bf16.mxu0 0
    %4603 = vmatpush1.bf16.msra.mxu0 0
    %4604 = vmatprep.subr.bf16.mxu0 0
    %4605 = vmatpush1.bf16.msra.mxu0 0
    %4606 = vmatprep.subr.bf16.mxu0 0
    %4607 = vmatpush1.bf16.msra.mxu0 0
    %4608 = vmatprep.subr.bf16.mxu0 0
    %4609 = vmatpush1.bf16.msra.mxu0 0
    %4610 = vmatprep.subr.bf16.mxu0 0
    %4611 = vmatpush1.bf16.msra.mxu0 0
    %4612 = vmatprep.subr.bf16.mxu0 0
    %4613 = vmatpush1.bf16.msra.mxu0 0
    %4614 = vmatprep.mubr.bf16.mxu0 0
    %4615 = vmatmul.mubr.bf16.gmra.mrb[0].mxu0 %v4056
    %v4616 = vpop.f32.mrb[0].mxu0
    %v4617 = vadd.f32 %v4576, %v4616
    %v4618 = vpop.f32.mrb[0].mxu0
    %v4619 = vadd.f32 %v4578, %v4618
    %v4620 = vpop.f32.mrb[0].mxu0
    %v4621 = vpop.f32.mrb[0].mxu0
    %4622 = vdwg.mxu0
    %4623 = vmatprep.subr.bf16.mxu0 %v4352
    %4624 = vmatpush1.bf16.msra.mxu0 %v4351
    %4625 = vmatprep.subr.bf16.mxu0 %v4356
    %4626 = vmatpush1.bf16.msra.mxu0 %v4355
    %4627 = vmatprep.subr.bf16.mxu0 %v4360
    %4628 = vmatpush1.bf16.msra.mxu0 %v4359
    %4629 = vmatprep.subr.bf16.mxu0 %v4364
    %4630 = vmatpush1.bf16.msra.mxu0 %v4363
    %4631 = vmatprep.subr.bf16.mxu0 %v4368
    %4632 = vmatpush1.bf16.msra.mxu0 %v4367
    %4633 = vmatprep.subr.bf16.mxu0 %v4372
    %4634 = vmatpush1.bf16.msra.mxu0 %v4371
    %4635 = vmatprep.subr.bf16.mxu0 %v4376
    %4636 = vmatpush1.bf16.msra.mxu0 %v4375
    %4637 = vmatprep.subr.bf16.mxu0 %v4380
    %4638 = vmatpush1.bf16.msra.mxu0 %v4379
    %4639 = vmatprep.subr.bf16.mxu0 %v4384
    %4640 = vmatpush1.bf16.msra.mxu0 %v4383
    %4641 = vmatprep.subr.bf16.mxu0 %v4388
    %4642 = vmatpush1.bf16.msra.mxu0 %v4387
    %4643 = vmatprep.subr.bf16.mxu0 %v4392
    %4644 = vmatpush1.bf16.msra.mxu0 %v4391
    %4645 = vmatprep.subr.bf16.mxu0 %v4396
    %4646 = vmatpush1.bf16.msra.mxu0 %v4395
    %4647 = vmatprep.subr.bf16.mxu0 %v4400
    %4648 = vmatpush1.bf16.msra.mxu0 %v4399
    %4649 = vmatprep.subr.bf16.mxu0 %v4404
    %4650 = vmatpush1.bf16.msra.mxu0 %v4403
    %4651 = vmatprep.subr.bf16.mxu0 %v4408
    %4652 = vmatpush1.bf16.msra.mxu0 %v4407
    %4653 = vmatprep.subr.bf16.mxu0 %v4412
    %4654 = vmatpush1.bf16.msra.mxu0 %v4411
    %4655 = vmatprep.mubr.bf16.mxu0 %v4057
    %4656 = vmatmul.mubr.bf16.gmra.mrb[0].mxu0 %v4049
    %v4657 = vpop.f32.mrb[0].mxu0
    %v4658 = vadd.f32 0.0, %v4657
    %v4659 = vpop.f32.mrb[0].mxu0
    %v4660 = vadd.f32 0.0, %v4659
    %v4661 = vpop.f32.mrb[0].mxu0
    %v4662 = vpop.f32.mrb[0].mxu0
    %4663 = vdwg.mxu0
    %4664 = vmatprep.subr.bf16.mxu0 %v4416
    %4665 = vmatpush1.bf16.msra.mxu0 %v4415
    %4666 = vmatprep.subr.bf16.mxu0 %v4420
    %4667 = vmatpush1.bf16.msra.mxu0 %v4419
    %4668 = vmatprep.subr.bf16.mxu0 %v4424
    %4669 = vmatpush1.bf16.msra.mxu0 %v4423
    %4670 = vmatprep.subr.bf16.mxu0 %v4428
    %4671 = vmatpush1.bf16.msra.mxu0 %v4427
    %4672 = vmatprep.subr.bf16.mxu0 %v4432
    %4673 = vmatpush1.bf16.msra.mxu0 %v4431
    %4674 = vmatprep.subr.bf16.mxu0 %v4436
    %4675 = vmatpush1.bf16.msra.mxu0 %v4435
    %4676 = vmatprep.subr.bf16.mxu0 %v4440
    %4677 = vmatpush1.bf16.msra.mxu0 %v4439
    %4678 = vmatprep.subr.bf16.mxu0 %v4444
    %4679 = vmatpush1.bf16.msra.mxu0 %v4443
    %4680 = vmatprep.subr.bf16.mxu0 0
    %4681 = vmatpush1.bf16.msra.mxu0 0
    %4682 = vmatprep.subr.bf16.mxu0 0
    %4683 = vmatpush1.bf16.msra.mxu0 0
    %4684 = vmatprep.subr.bf16.mxu0 0
    %4685 = vmatpush1.bf16.msra.mxu0 0
    %4686 = vmatprep.subr.bf16.mxu0 0
    %4687 = vmatpush1.bf16.msra.mxu0 0
    %4688 = vmatprep.subr.bf16.mxu0 0
    %4689 = vmatpush1.bf16.msra.mxu0 0
    %4690 = vmatprep.subr.bf16.mxu0 0
    %4691 = vmatpush1.bf16.msra.mxu0 0
    %4692 = vmatprep.subr.bf16.mxu0 0
    %4693 = vmatpush1.bf16.msra.mxu0 0
    %4694 = vmatprep.subr.bf16.mxu0 0
    %4695 = vmatpush1.bf16.msra.mxu0 0
    %4696 = vmatprep.mubr.bf16.mxu0 0
    %4697 = vmatmul.mubr.bf16.gmra.mrb[0].mxu0 %v4056
    %v4698 = vpop.f32.mrb[0].mxu0
    %v4699 = vadd.f32 %v4658, %v4698
    %v4700 = vpop.f32.mrb[0].mxu0
    %v4701 = vadd.f32 %v4660, %v4700
    %v4702 = vpop.f32.mrb[0].mxu0
    %v4703 = vpop.f32.mrb[0].mxu0
    %4704 = vdwg.mxu0
    %v4705 = vcombine.low %v3757, %v3772
    %v4706 = vcombine.high %v3757, %v3772
    %v4708 = vunpack.c.l.s4 1983009808
    %v4709 = vunpack.c.0.s8 %v4708
    %v4710 = vlaneseq
    %v4711 = vshrl.u32 %v4710, 7
    %v4712 = vsub.s32 %v4709, %v4711
    %v4713 = vrot.slane %v4705, %v4712
    %v4715 = vunpack.c.l.s4 1983009808
    %v4716 = vunpack.c.0.s8 %v4715
    %v4717 = vlaneseq
    %v4718 = vshrl.u32 %v4717, 7
    %v4719 = vsub.s32 %v4716, %v4718
    %v4720 = vrot.slane %v4706, %v4719
    %v4721 = vcombine.high %v4713, %v4713
    %v4821 = vunpack.c.l.b16 %v3773
    %v4822 = vunpack.c.h.b16 %v3773
    %v4823 = vunpack.c.l.b16 %v3774
    %v4824 = vunpack.c.h.b16 %v3774
    %v4825 = vunpack.c.l.b16 %v3775
    %v4826 = vunpack.c.h.b16 %v3775
    %v4827 = vunpack.c.l.b16 %v3776
    %v4828 = vunpack.c.h.b16 %v3776
    %v4829 = vunpack.c.l.b16 %v3777
    %v4830 = vunpack.c.h.b16 %v3777
    %v4831 = vunpack.c.l.b16 %v3778
    %v4832 = vunpack.c.h.b16 %v3778
    %v4833 = vunpack.c.l.b16 %v3779
    %v4834 = vunpack.c.h.b16 %v3779
    %v4835 = vunpack.c.l.b16 %v3780
    %v4836 = vunpack.c.h.b16 %v3780
    %v4837 = vunpack.c.l.b16 %v3781
    %v4838 = vunpack.c.h.b16 %v3781
    %v4839 = vunpack.c.l.b16 %v3782
    %v4840 = vunpack.c.h.b16 %v3782
    %v4841 = vunpack.c.l.b16 %v3783
    %v4842 = vunpack.c.h.b16 %v3783
    %v4843 = vunpack.c.l.b16 %v3784
    %v4844 = vunpack.c.h.b16 %v3784
    %v4845 = vunpack.c.l.b16 %v3785
    %v4846 = vunpack.c.h.b16 %v3785
    %v4847 = vunpack.c.l.b16 %v3786
    %v4848 = vunpack.c.h.b16 %v3786
    %v4849 = vunpack.c.l.b16 %v3787
    %v4850 = vunpack.c.h.b16 %v3787
    %v4851 = vunpack.c.l.b16 %v3788
    %v4852 = vunpack.c.h.b16 %v3788
    %v4853 = vunpack.c.l.b16 %v3789
    %v4854 = vunpack.c.h.b16 %v3789
    %v4855 = vunpack.c.l.b16 %v3790
    %v4856 = vunpack.c.h.b16 %v3790
    %v4857 = vunpack.c.l.b16 %v3791
    %v4858 = vunpack.c.h.b16 %v3791
    %v4859 = vunpack.c.l.b16 %v3792
    %v4860 = vunpack.c.h.b16 %v3792
    %v4861 = vunpack.c.l.b16 %v3793
    %v4862 = vunpack.c.h.b16 %v3793
    %v4863 = vunpack.c.l.b16 %v3794
    %v4864 = vunpack.c.h.b16 %v3794
    %v4865 = vunpack.c.l.b16 %v3795
    %v4866 = vunpack.c.h.b16 %v3795
    %v4867 = vunpack.c.l.b16 %v3796
    %v4868 = vunpack.c.h.b16 %v3796
    %v4869 = vunpack.c.l.b16 %v3797
    %v4870 = vunpack.c.h.b16 %v3797
    %v4871 = vunpack.c.l.b16 %v3798
    %v4872 = vunpack.c.h.b16 %v3798
    %v4873 = vunpack.c.l.b16 %v3799
    %v4874 = vunpack.c.h.b16 %v3799
    %v4875 = vunpack.c.l.b16 %v3800
    %v4876 = vunpack.c.h.b16 %v3800
    %v4877 = vunpack.c.l.b16 %v3801
    %v4878 = vunpack.c.h.b16 %v3801
    %v4879 = vunpack.c.l.b16 %v3802
    %v4880 = vunpack.c.h.b16 %v3802
    %v4881 = vunpack.c.l.b16 %v3803
    %v4882 = vunpack.c.h.b16 %v3803
    %v4883 = vunpack.c.l.b16 %v3804
    %v4884 = vunpack.c.h.b16 %v3804
    %v4885 = vunpack.c.l.b16 %v3805
    %v4886 = vunpack.c.h.b16 %v3805
    %v4887 = vunpack.c.l.b16 %v3806
    %v4888 = vunpack.c.h.b16 %v3806
    %v4889 = vunpack.c.l.b16 %v3807
    %v4890 = vunpack.c.h.b16 %v3807
    %v4891 = vunpack.c.l.b16 %v3808
    %v4892 = vunpack.c.h.b16 %v3808
    %v4893 = vunpack.c.l.b16 %v3809
    %v4894 = vunpack.c.h.b16 %v3809
    %v4895 = vunpack.c.l.b16 %v3810
    %v4896 = vunpack.c.h.b16 %v3810
    %v4897 = vunpack.c.l.b16 %v3811
    %v4898 = vunpack.c.h.b16 %v3811
    %v4899 = vunpack.c.l.b16 %v3812
    %v4900 = vunpack.c.h.b16 %v3812
    %v4901 = vunpack.c.l.b16 %v3813
    %v4902 = vunpack.c.h.b16 %v3813
    %v4903 = vunpack.c.l.b16 %v3814
    %v4904 = vunpack.c.h.b16 %v3814
    %v4905 = vunpack.c.l.b16 %v3815
    %v4906 = vunpack.c.h.b16 %v3815
    %v4907 = vunpack.c.l.b16 %v3816
    %v4908 = vunpack.c.h.b16 %v3816
    %v4909 = vunpack.c.l.b16 %v3817
    %v4910 = vunpack.c.h.b16 %v3817
    %v4911 = vunpack.c.l.b16 %v3818
    %v4912 = vunpack.c.h.b16 %v3818
    %v4913 = vunpack.c.l.b16 %v3819
    %v4914 = vunpack.c.h.b16 %v3819
    %v4915 = vunpack.c.l.b16 %v3820
    %v4916 = vunpack.c.h.b16 %v3820
    %v4917 = vunpack.c.l.b16 %v3821
    %v4918 = vunpack.c.h.b16 %v3821
    %v4919 = vunpack.c.l.b16 %v3822
    %v4920 = vunpack.c.h.b16 %v3822
    %v4921 = vunpack.c.l.b16 %v3823
    %v4922 = vunpack.c.h.b16 %v3823
    %v4923 = vunpack.c.l.b16 %v3824
    %v4924 = vunpack.c.h.b16 %v3824
    %v4925 = vunpack.c.l.b16 %v3825
    %v4926 = vunpack.c.h.b16 %v3825
    %v4927 = vunpack.c.l.b16 %v3826
    %v4928 = vunpack.c.h.b16 %v3826
    %v4929 = vunpack.c.l.b16 %v3827
    %v4930 = vunpack.c.h.b16 %v3827
    %v4931 = vunpack.c.l.b16 %v3828
    %v4932 = vunpack.c.h.b16 %v3828
    %v4933 = vunpack.c.l.b16 %v3829
    %v4934 = vunpack.c.h.b16 %v3829
    %v4935 = vunpack.c.l.b16 %v3830
    %v4936 = vunpack.c.h.b16 %v3830
    %v4937 = vunpack.c.l.b16 %v3831
    %v4938 = vunpack.c.h.b16 %v3831
    %v4939 = vunpack.c.l.b16 %v3832
    %v4940 = vunpack.c.h.b16 %v3832
    %v4941 = vunpack.c.l.b16 %v3833
    %v4942 = vunpack.c.h.b16 %v3833
    %v4943 = vunpack.c.l.b16 %v3834
    %v4944 = vunpack.c.h.b16 %v3834
    %v4945 = vunpack.c.l.b16 %v3835
    %v4946 = vunpack.c.h.b16 %v3835
    %v4947 = vunpack.c.l.b16 %v3836
    %v4948 = vunpack.c.h.b16 %v3836
    %v4949 = vunpack.c.l.b16 %v3837
    %v4950 = vunpack.c.h.b16 %v3837
    %v4951 = vunpack.c.l.b16 %v3838
    %v4952 = vunpack.c.h.b16 %v3838
    %v4953 = vunpack.c.l.b16 %v3839
    %v4954 = vunpack.c.h.b16 %v3839
    %v4955 = vunpack.c.l.b16 %v3840
    %v4956 = vunpack.c.h.b16 %v3840
    %v4957 = vunpack.c.l.b16 %v3841
    %v4958 = vunpack.c.h.b16 %v3841
    %v4959 = vunpack.c.l.b16 %v3842
    %v4960 = vunpack.c.h.b16 %v3842
    %v4961 = vunpack.c.l.b16 %v3843
    %v4962 = vunpack.c.h.b16 %v3843
    %v4963 = vunpack.c.l.b16 %v3844
    %v4964 = vunpack.c.h.b16 %v3844
    %v4965 = vunpack.c.l.b16 %v3845
    %v4966 = vunpack.c.h.b16 %v3845
    %v4967 = vunpack.c.l.b16 %v3846
    %v4968 = vunpack.c.h.b16 %v3846
    %v4969 = vunpack.c.l.b16 %v3847
    %v4970 = vunpack.c.h.b16 %v3847
    %v4971 = vunpack.c.l.b16 %v3848
    %v4972 = vunpack.c.h.b16 %v3848
    %v4973 = vunpack.c.l.b16 %v3849
    %v4974 = vunpack.c.h.b16 %v3849
    %v4975 = vunpack.c.l.b16 %v3850
    %v4976 = vunpack.c.h.b16 %v3850
    %v4977 = vunpack.c.l.b16 %v3851
    %v4978 = vunpack.c.h.b16 %v3851
    %v4979 = vunpack.c.l.b16 %v3852
    %v4980 = vunpack.c.h.b16 %v3852
    %v4981 = vunpack.c.l.b16 %v3853
    %v4982 = vunpack.c.h.b16 %v3853
    %v4983 = vunpack.c.l.b16 %v3854
    %v4984 = vunpack.c.h.b16 %v3854
    %v4985 = vunpack.c.l.b16 %v3855
    %v4986 = vunpack.c.h.b16 %v3855
    %v4987 = vunpack.c.l.b16 %v3856
    %v4988 = vunpack.c.h.b16 %v3856
    %v4989 = vunpack.c.l.b16 %v3857
    %v4990 = vunpack.c.h.b16 %v3857
    %v4991 = vunpack.c.l.b16 %v3858
    %v4992 = vunpack.c.h.b16 %v3858
    %v4993 = vunpack.c.l.b16 %v3859
    %v4994 = vunpack.c.h.b16 %v3859
    %v4995 = vunpack.c.l.b16 %v3860
    %v4996 = vunpack.c.h.b16 %v3860
    %v4997 = vunpack.c.l.b16 %v3861
    %v4998 = vunpack.c.h.b16 %v3861
    %v4999 = vunpack.c.l.b16 %v3862
    %v5000 = vunpack.c.h.b16 %v3862
    %v5001 = vunpack.c.l.b16 %v3863
    %v5002 = vunpack.c.h.b16 %v3863
    %v5003 = vunpack.c.l.b16 %v3864
    %v5004 = vunpack.c.h.b16 %v3864
    %v5005 = vunpack.c.l.b16 %v3865
    %v5006 = vunpack.c.h.b16 %v3865
    %v5007 = vunpack.c.l.b16 %v3866
    %v5008 = vunpack.c.h.b16 %v3866
    %v5009 = vunpack.c.l.b16 %v3867
    %v5010 = vunpack.c.h.b16 %v3867
    %v5011 = vunpack.c.l.b16 %v3868
    %v5012 = vunpack.c.h.b16 %v3868
    %v5013 = vpack.c.b16 %v4825, %v4821
    %v5014 = vpack.c.b16 %v4826, %v4822
    %v5015 = vpack.c.b16 %v4827, %v4823
    %v5016 = vpack.c.b16 %v4828, %v4824
    %v5017 = vpack.c.b16 %v4833, %v4829
    %v5018 = vpack.c.b16 %v4834, %v4830
    %v5019 = vpack.c.b16 %v4835, %v4831
    %v5020 = vpack.c.b16 %v4836, %v4832
    %v5021 = vpack.c.b16 %v4841, %v4837
    %v5022 = vpack.c.b16 %v4842, %v4838
    %v5023 = vpack.c.b16 %v4843, %v4839
    %v5024 = vpack.c.b16 %v4844, %v4840
    %v5025 = vpack.c.b16 %v4849, %v4845
    %v5026 = vpack.c.b16 %v4850, %v4846
    %v5027 = vpack.c.b16 %v4851, %v4847
    %v5028 = vpack.c.b16 %v4852, %v4848
    %v5029 = vpack.c.b16 %v4857, %v4853
    %v5030 = vpack.c.b16 %v4858, %v4854
    %v5031 = vpack.c.b16 %v4859, %v4855
    %v5032 = vpack.c.b16 %v4860, %v4856
    %v5033 = vpack.c.b16 %v4865, %v4861
    %v5034 = vpack.c.b16 %v4866, %v4862
    %v5035 = vpack.c.b16 %v4867, %v4863
    %v5036 = vpack.c.b16 %v4868, %v4864
    %v5037 = vpack.c.b16 %v4873, %v4869
    %v5038 = vpack.c.b16 %v4874, %v4870
    %v5039 = vpack.c.b16 %v4875, %v4871
    %v5040 = vpack.c.b16 %v4876, %v4872
    %v5041 = vpack.c.b16 %v4881, %v4877
    %v5042 = vpack.c.b16 %v4882, %v4878
    %v5043 = vpack.c.b16 %v4883, %v4879
    %v5044 = vpack.c.b16 %v4884, %v4880
    %v5045 = vpack.c.b16 %v4889, %v4885
    %v5046 = vpack.c.b16 %v4890, %v4886
    %v5047 = vpack.c.b16 %v4891, %v4887
    %v5048 = vpack.c.b16 %v4892, %v4888
    %v5049 = vpack.c.b16 %v4897, %v4893
    %v5050 = vpack.c.b16 %v4898, %v4894
    %v5051 = vpack.c.b16 %v4899, %v4895
    %v5052 = vpack.c.b16 %v4900, %v4896
    %v5053 = vpack.c.b16 %v4905, %v4901
    %v5054 = vpack.c.b16 %v4906, %v4902
    %v5055 = vpack.c.b16 %v4907, %v4903
    %v5056 = vpack.c.b16 %v4908, %v4904
    %v5057 = vpack.c.b16 %v4913, %v4909
    %v5058 = vpack.c.b16 %v4914, %v4910
    %v5059 = vpack.c.b16 %v4915, %v4911
    %v5060 = vpack.c.b16 %v4916, %v4912
    %v5061 = vpack.c.b16 %v4921, %v4917
    %v5062 = vpack.c.b16 %v4922, %v4918
    %v5063 = vpack.c.b16 %v4923, %v4919
    %v5064 = vpack.c.b16 %v4924, %v4920
    %v5065 = vpack.c.b16 %v4929, %v4925
    %v5066 = vpack.c.b16 %v4930, %v4926
    %v5067 = vpack.c.b16 %v4931, %v4927
    %v5068 = vpack.c.b16 %v4932, %v4928
    %v5069 = vpack.c.b16 %v4937, %v4933
    %v5070 = vpack.c.b16 %v4938, %v4934
    %v5071 = vpack.c.b16 %v4939, %v4935
    %v5072 = vpack.c.b16 %v4940, %v4936
    %v5073 = vpack.c.b16 %v4945, %v4941
    %v5074 = vpack.c.b16 %v4946, %v4942
    %v5075 = vpack.c.b16 %v4947, %v4943
    %v5076 = vpack.c.b16 %v4948, %v4944
    %v5077 = vpack.c.b16 %v4953, %v4949
    %v5078 = vpack.c.b16 %v4954, %v4950
    %v5079 = vpack.c.b16 %v4955, %v4951
    %v5080 = vpack.c.b16 %v4956, %v4952
    %v5081 = vpack.c.b16 %v4961, %v4957
    %v5082 = vpack.c.b16 %v4962, %v4958
    %v5083 = vpack.c.b16 %v4963, %v4959
    %v5084 = vpack.c.b16 %v4964, %v4960
    %v5085 = vpack.c.b16 %v4969, %v4965
    %v5086 = vpack.c.b16 %v4970, %v4966
    %v5087 = vpack.c.b16 %v4971, %v4967
    %v5088 = vpack.c.b16 %v4972, %v4968
    %v5089 = vpack.c.b16 %v4977, %v4973
    %v5090 = vpack.c.b16 %v4978, %v4974
    %v5091 = vpack.c.b16 %v4979, %v4975
    %v5092 = vpack.c.b16 %v4980, %v4976
    %v5093 = vpack.c.b16 %v4985, %v4981
    %v5094 = vpack.c.b16 %v4986, %v4982
    %v5095 = vpack.c.b16 %v4987, %v4983
    %v5096 = vpack.c.b16 %v4988, %v4984
    %v5097 = vpack.c.b16 %v4993, %v4989
    %v5098 = vpack.c.b16 %v4994, %v4990
    %v5099 = vpack.c.b16 %v4995, %v4991
    %v5100 = vpack.c.b16 %v4996, %v4992
    %v5101 = vpack.c.b16 %v5001, %v4997
    %v5102 = vpack.c.b16 %v5002, %v4998
    %v5103 = vpack.c.b16 %v5003, %v4999
    %v5104 = vpack.c.b16 %v5004, %v5000
    %v5105 = vpack.c.b16 %v5009, %v5005
    %v5106 = vpack.c.b16 %v5010, %v5006
    %v5107 = vpack.c.b16 %v5011, %v5007
    %v5108 = vpack.c.b16 %v5012, %v5008
    %5205 = vmatprep.subr.bf16.mxu0 %v5014
    %5206 = vmatpush1.bf16.msra.mxu0 %v5013
    %5207 = vmatprep.subr.bf16.mxu0 %v5018
    %5208 = vmatpush1.bf16.msra.mxu0 %v5017
    %5209 = vmatprep.subr.bf16.mxu0 %v5022
    %5210 = vmatpush1.bf16.msra.mxu0 %v5021
    %5211 = vmatprep.subr.bf16.mxu0 %v5026
    %5212 = vmatpush1.bf16.msra.mxu0 %v5025
    %5213 = vmatprep.subr.bf16.mxu0 %v5030
    %5214 = vmatpush1.bf16.msra.mxu0 %v5029
    %5215 = vmatprep.subr.bf16.mxu0 %v5034
    %5216 = vmatpush1.bf16.msra.mxu0 %v5033
    %5217 = vmatprep.subr.bf16.mxu0 %v5038
    %5218 = vmatpush1.bf16.msra.mxu0 %v5037
    %5219 = vmatprep.subr.bf16.mxu0 %v5042
    %5220 = vmatpush1.bf16.msra.mxu0 %v5041
    %5221 = vmatprep.subr.bf16.mxu0 %v5046
    %5222 = vmatpush1.bf16.msra.mxu0 %v5045
    %5223 = vmatprep.subr.bf16.mxu0 %v5050
    %5224 = vmatpush1.bf16.msra.mxu0 %v5049
    %5225 = vmatprep.subr.bf16.mxu0 %v5054
    %5226 = vmatpush1.bf16.msra.mxu0 %v5053
    %5227 = vmatprep.subr.bf16.mxu0 %v5058
    %5228 = vmatpush1.bf16.msra.mxu0 %v5057
    %5229 = vmatprep.subr.bf16.mxu0 %v5062
    %5230 = vmatpush1.bf16.msra.mxu0 %v5061
    %5231 = vmatprep.subr.bf16.mxu0 %v5066
    %5232 = vmatpush1.bf16.msra.mxu0 %v5065
    %5233 = vmatprep.subr.bf16.mxu0 %v5070
    %5234 = vmatpush1.bf16.msra.mxu0 %v5069
    %5235 = vmatprep.subr.bf16.mxu0 %v5074
    %5236 = vmatpush1.bf16.msra.mxu0 %v5073
    %5237 = vmatprep.mubr.bf16.mxu0 %v4721
    %5238 = vmatmul.mubr.bf16.gmra.mrb[0].mxu0 %v4713
    %v5239 = vpop.f32.mrb[0].mxu0
    %v5240 = vadd.f32 %v4617, %v5239
    %v5241 = vpop.f32.mrb[0].mxu0
    %v5242 = vadd.f32 %v4619, %v5241
    %v5243 = vpop.f32.mrb[0].mxu0
    %v5244 = vpop.f32.mrb[0].mxu0
    %5245 = vdwg.mxu0
    %5246 = vmatprep.subr.bf16.mxu0 %v5078
    %5247 = vmatpush1.bf16.msra.mxu0 %v5077
    %5248 = vmatprep.subr.bf16.mxu0 %v5082
    %5249 = vmatpush1.bf16.msra.mxu0 %v5081
    %5250 = vmatprep.subr.bf16.mxu0 %v5086
    %5251 = vmatpush1.bf16.msra.mxu0 %v5085
    %5252 = vmatprep.subr.bf16.mxu0 %v5090
    %5253 = vmatpush1.bf16.msra.mxu0 %v5089
    %5254 = vmatprep.subr.bf16.mxu0 %v5094
    %5255 = vmatpush1.bf16.msra.mxu0 %v5093
    %5256 = vmatprep.subr.bf16.mxu0 %v5098
    %5257 = vmatpush1.bf16.msra.mxu0 %v5097
    %5258 = vmatprep.subr.bf16.mxu0 %v5102
    %5259 = vmatpush1.bf16.msra.mxu0 %v5101
    %5260 = vmatprep.subr.bf16.mxu0 %v5106
    %5261 = vmatpush1.bf16.msra.mxu0 %v5105
    %5262 = vmatprep.subr.bf16.mxu0 0
    %5263 = vmatpush1.bf16.msra.mxu0 0
    %5264 = vmatprep.subr.bf16.mxu0 0
    %5265 = vmatpush1.bf16.msra.mxu0 0
    %5266 = vmatprep.subr.bf16.mxu0 0
    %5267 = vmatpush1.bf16.msra.mxu0 0
    %5268 = vmatprep.subr.bf16.mxu0 0
    %5269 = vmatpush1.bf16.msra.mxu0 0
    %5270 = vmatprep.subr.bf16.mxu0 0
    %5271 = vmatpush1.bf16.msra.mxu0 0
    %5272 = vmatprep.subr.bf16.mxu0 0
    %5273 = vmatpush1.bf16.msra.mxu0 0
    %5274 = vmatprep.subr.bf16.mxu0 0
    %5275 = vmatpush1.bf16.msra.mxu0 0
    %5276 = vmatprep.subr.bf16.mxu0 0
    %5277 = vmatpush1.bf16.msra.mxu0 0
    %5278 = vmatprep.mubr.bf16.mxu0 0
    %5279 = vmatmul.mubr.bf16.gmra.mrb[0].mxu0 %v4720
    %v5280 = vpop.f32.mrb[0].mxu0
    %v5281 = vadd.f32 %v5240, %v5280
    %v5282 = vpop.f32.mrb[0].mxu0
    %v5283 = vadd.f32 %v5242, %v5282
    %v5284 = vpop.f32.mrb[0].mxu0
    %v5285 = vpop.f32.mrb[0].mxu0
    %5286 = vdwg.mxu0
    %5287 = vmatprep.subr.bf16.mxu0 %v5016
    %5288 = vmatpush1.bf16.msra.mxu0 %v5015
    %5289 = vmatprep.subr.bf16.mxu0 %v5020
    %5290 = vmatpush1.bf16.msra.mxu0 %v5019
    %5291 = vmatprep.subr.bf16.mxu0 %v5024
    %5292 = vmatpush1.bf16.msra.mxu0 %v5023
    %5293 = vmatprep.subr.bf16.mxu0 %v5028
    %5294 = vmatpush1.bf16.msra.mxu0 %v5027
    %5295 = vmatprep.subr.bf16.mxu0 %v5032
    %5296 = vmatpush1.bf16.msra.mxu0 %v5031
    %5297 = vmatprep.subr.bf16.mxu0 %v5036
    %5298 = vmatpush1.bf16.msra.mxu0 %v5035
    %5299 = vmatprep.subr.bf16.mxu0 %v5040
    %5300 = vmatpush1.bf16.msra.mxu0 %v5039
    %5301 = vmatprep.subr.bf16.mxu0 %v5044
    %5302 = vmatpush1.bf16.msra.mxu0 %v5043
    %5303 = vmatprep.subr.bf16.mxu0 %v5048
    %5304 = vmatpush1.bf16.msra.mxu0 %v5047
    %5305 = vmatprep.subr.bf16.mxu0 %v5052
    %5306 = vmatpush1.bf16.msra.mxu0 %v5051
    %5307 = vmatprep.subr.bf16.mxu0 %v5056
    %5308 = vmatpush1.bf16.msra.mxu0 %v5055
    %5309 = vmatprep.subr.bf16.mxu0 %v5060
    %5310 = vmatpush1.bf16.msra.mxu0 %v5059
    %5311 = vmatprep.subr.bf16.mxu0 %v5064
    %5312 = vmatpush1.bf16.msra.mxu0 %v5063
    %5313 = vmatprep.subr.bf16.mxu0 %v5068
    %5314 = vmatpush1.bf16.msra.mxu0 %v5067
    %5315 = vmatprep.subr.bf16.mxu0 %v5072
    %5316 = vmatpush1.bf16.msra.mxu0 %v5071
    %5317 = vmatprep.subr.bf16.mxu0 %v5076
    %5318 = vmatpush1.bf16.msra.mxu0 %v5075
    %5319 = vmatprep.mubr.bf16.mxu0 %v4721
    %5320 = vmatmul.mubr.bf16.gmra.mrb[0].mxu0 %v4713
    %v5321 = vpop.f32.mrb[0].mxu0
    %v5322 = vadd.f32 %v4699, %v5321
    %v5323 = vpop.f32.mrb[0].mxu0
    %v5324 = vadd.f32 %v4701, %v5323
    %v5325 = vpop.f32.mrb[0].mxu0
    %v5326 = vpop.f32.mrb[0].mxu0
    %5327 = vdwg.mxu0
    %5328 = vmatprep.subr.bf16.mxu0 %v5080
    %5329 = vmatpush1.bf16.msra.mxu0 %v5079
    %5330 = vmatprep.subr.bf16.mxu0 %v5084
    %5331 = vmatpush1.bf16.msra.mxu0 %v5083
    %5332 = vmatprep.subr.bf16.mxu0 %v5088
    %5333 = vmatpush1.bf16.msra.mxu0 %v5087
    %5334 = vmatprep.subr.bf16.mxu0 %v5092
    %5335 = vmatpush1.bf16.msra.mxu0 %v5091
    %5336 = vmatprep.subr.bf16.mxu0 %v5096
    %5337 = vmatpush1.bf16.msra.mxu0 %v5095
    %5338 = vmatprep.subr.bf16.mxu0 %v5100
    %5339 = vmatpush1.bf16.msra.mxu0 %v5099
    %5340 = vmatprep.subr.bf16.mxu0 %v5104
    %5341 = vmatpush1.bf16.msra.mxu0 %v5103
    %5342 = vmatprep.subr.bf16.mxu0 %v5108
    %5343 = vmatpush1.bf16.msra.mxu0 %v5107
    %5344 = vmatprep.subr.bf16.mxu0 0
    %5345 = vmatpush1.bf16.msra.mxu0 0
    %5346 = vmatprep.subr.bf16.mxu0 0
    %5347 = vmatpush1.bf16.msra.mxu0 0
    %5348 = vmatprep.subr.bf16.mxu0 0
    %5349 = vmatpush1.bf16.msra.mxu0 0
    %5350 = vmatprep.subr.bf16.mxu0 0
    %5351 = vmatpush1.bf16.msra.mxu0 0
    %5352 = vmatprep.subr.bf16.mxu0 0
    %5353 = vmatpush1.bf16.msra.mxu0 0
    %5354 = vmatprep.subr.bf16.mxu0 0
    %5355 = vmatpush1.bf16.msra.mxu0 0
    %5356 = vmatprep.subr.bf16.mxu0 0
    %5357 = vmatpush1.bf16.msra.mxu0 0
    %5358 = vmatprep.subr.bf16.mxu0 0
    %5359 = vmatpush1.bf16.msra.mxu0 0
    %5360 = vmatprep.mubr.bf16.mxu0 0
    %5361 = vmatmul.mubr.bf16.gmra.mrb[0].mxu0 %v4720
    %v5362 = vpop.f32.mrb[0].mxu0
    %v5363 = vadd.f32 %v5322, %v5362
    %v5364 = vpop.f32.mrb[0].mxu0
    %v5365 = vadd.f32 %v5324, %v5364
    %v5366 = vpop.f32.mrb[0].mxu0
    %v5367 = vpop.f32.mrb[0].mxu0
    %5368 = vdwg.mxu0
    %v5369 = vld [vmem:[#allocation5] sm:$0x66]
    %v5370 = vld [vmem:[#allocation5 + $0x8] sm:$0x6]
    %v5371 = vld [vmem:[#allocation5 + $0xc] sm:$0x66]
    %v5372 = vld [vmem:[#allocation5 + $0x14] sm:$0x6]
    %v5378 = vunpack.c.l.s4 1983009808
    %v5379 = vunpack.c.0.s8 %v5378
    %v5380 = vlaneseq
    %v5381 = vshrl.u32 %v5380, 7
    %v5382 = vsub.s32 %v5379, %v5381
    %v5383 = vrot.slane %v5369, %v5382
    %v5385 = vunpack.c.l.s4 1983009808
    %v5386 = vunpack.c.0.s8 %v5385
    %v5387 = vlaneseq
    %v5388 = vshrl.u32 %v5387, 7
    %v5389 = vsub.s32 %v5386, %v5388
    %v5390 = vrot.slane %v5370, %v5389
    %v5391 = vcombine.low %v5383, %v5390
    %v5392 = vcombine.high %v5383, %v5390
    %v5394 = vunpack.c.l.s4 1983009808
    %v5395 = vunpack.c.0.s8 %v5394
    %v5396 = vlaneseq
    %v5397 = vshrl.u32 %v5396, 7
    %v5398 = vsub.s32 %v5395, %v5397
    %v5399 = vrot.slane %v5371, %v5398
    %v5401 = vunpack.c.l.s4 1983009808
    %v5402 = vunpack.c.0.s8 %v5401
    %v5403 = vlaneseq
    %v5404 = vshrl.u32 %v5403, 7
    %v5405 = vsub.s32 %v5402, %v5404
    %v5406 = vrot.slane %v5372, %v5405
    %v5407 = vcombine.low %v5399, %v5406
    %v5408 = vcombine.high %v5399, %v5406
    %vm5409 = vcmask 1040384
    %vm5410 = vcmask 1042434
    %vm5411 = vmor %vm5409, %vm5410
    %vm5412 = vmor %vm5411, %vm1254
    %vm5413 = vcmask 1046534
    %vm5414 = vmor %vm5412, %vm5413
    %v5415 = vrot.slane %v5391, 7
    %v5416 = vrot.slane %v5415, 2
    %v5417 = vrot.slane %v5392, 7
    %v5418 = vsel %vm5414, %v5416, %v5417
    %v5419 = vrot.slane %v5407, 7
    %v5420 = vrot.slane %v5419, 2
    %v5421 = vrot.slane %v5408, 7
    %v5422 = vsel %vm5414, %v5420, %v5421
    %s5423 = scalar_lea.vmem [#allocation15], 1536
    %v5424 = vld [vmem:[%s5423] sm:$0xff]
    %v5425 = vld [vmem:[%s5423 + $0x8] sm:$0xff]
    %v5426 = vld [vmem:[%s5423 + $0x10] sm:$0xff]
    %v5427 = vld [vmem:[%s5423 + $0x18] sm:$0xff]
    %v5428 = vld [vmem:[%s5423 + $0x20] sm:$0xff]
    %v5429 = vld [vmem:[%s5423 + $0x28] sm:$0xff]
    %v5430 = vld [vmem:[%s5423 + $0x30] sm:$0xff]
    %v5431 = vld [vmem:[%s5423 + $0x38] sm:$0xff]
    %v5432 = vld [vmem:[%s5423 + $0x40] sm:$0xff]
    %v5433 = vld [vmem:[%s5423 + $0x48] sm:$0xff]
    %v5434 = vld [vmem:[%s5423 + $0x50] sm:$0xff]
    %v5435 = vld [vmem:[%s5423 + $0x58] sm:$0xff]
    %v5436 = vld [vmem:[%s5423 + $0x60] sm:$0xff]
    %v5437 = vld [vmem:[%s5423 + $0x68] sm:$0xff]
    %v5438 = vld [vmem:[%s5423 + $0x70] sm:$0xff]
    %v5439 = vld [vmem:[%s5423 + $0x78] sm:$0xff]
    %v5440 = vld [vmem:[%s5423 + $0x80] sm:$0xff]
    %v5441 = vld [vmem:[%s5423 + $0x88] sm:$0xff]
    %v5442 = vld [vmem:[%s5423 + $0x90] sm:$0xff]
    %v5443 = vld [vmem:[%s5423 + $0x98] sm:$0xff]
    %v5444 = vld [vmem:[%s5423 + $0xa0] sm:$0xff]
    %v5445 = vld [vmem:[%s5423 + $0xa8] sm:$0xff]
    %v5446 = vld [vmem:[%s5423 + $0xb0] sm:$0xff]
    %v5447 = vld [vmem:[%s5423 + $0xb8] sm:$0xff]
    %v5448 = vld [vmem:[%s5423 + $0xc0] sm:$0xff]
    %v5449 = vld [vmem:[%s5423 + $0xc8] sm:$0xff]
    %v5450 = vld [vmem:[%s5423 + $0xd0] sm:$0xff]
    %v5451 = vld [vmem:[%s5423 + $0xd8] sm:$0xff]
    %v5452 = vld [vmem:[%s5423 + $0xe0] sm:$0xff]
    %v5453 = vld [vmem:[%s5423 + $0xe8] sm:$0xff]
    %v5454 = vld [vmem:[%s5423 + $0xf0] sm:$0xff]
    %v5455 = vld [vmem:[%s5423 + $0xf8] sm:$0xff]
    %v5456 = vld [vmem:[%s5423 + $0x100] sm:$0xff]
    %v5457 = vld [vmem:[%s5423 + $0x108] sm:$0xff]
    %v5458 = vld [vmem:[%s5423 + $0x110] sm:$0xff]
    %v5459 = vld [vmem:[%s5423 + $0x118] sm:$0xff]
    %v5460 = vld [vmem:[%s5423 + $0x120] sm:$0xff]
    %v5461 = vld [vmem:[%s5423 + $0x128] sm:$0xff]
    %v5462 = vld [vmem:[%s5423 + $0x130] sm:$0xff]
    %v5463 = vld [vmem:[%s5423 + $0x138] sm:$0xff]
    %v5464 = vld [vmem:[%s5423 + $0x140] sm:$0xff]
    %v5465 = vld [vmem:[%s5423 + $0x148] sm:$0xff]
    %v5466 = vld [vmem:[%s5423 + $0x150] sm:$0xff]
    %v5467 = vld [vmem:[%s5423 + $0x158] sm:$0xff]
    %v5468 = vld [vmem:[%s5423 + $0x160] sm:$0xff]
    %v5469 = vld [vmem:[%s5423 + $0x168] sm:$0xff]
    %v5470 = vld [vmem:[%s5423 + $0x170] sm:$0xff]
    %v5471 = vld [vmem:[%s5423 + $0x178] sm:$0xff]
    %v5472 = vld [vmem:[%s5423 + $0x180] sm:$0xff]
    %v5473 = vld [vmem:[%s5423 + $0x188] sm:$0xff]
    %v5474 = vld [vmem:[%s5423 + $0x190] sm:$0xff]
    %v5475 = vld [vmem:[%s5423 + $0x198] sm:$0xff]
    %v5476 = vld [vmem:[%s5423 + $0x1a0] sm:$0xff]
    %v5477 = vld [vmem:[%s5423 + $0x1a8] sm:$0xff]
    %v5478 = vld [vmem:[%s5423 + $0x1b0] sm:$0xff]
    %v5479 = vld [vmem:[%s5423 + $0x1b8] sm:$0xff]
    %v5480 = vld [vmem:[%s5423 + $0x1c0] sm:$0xff]
    %v5481 = vld [vmem:[%s5423 + $0x1c8] sm:$0xff]
    %v5482 = vld [vmem:[%s5423 + $0x1d0] sm:$0xff]
    %v5483 = vld [vmem:[%s5423 + $0x1d8] sm:$0xff]
    %v5484 = vld [vmem:[%s5423 + $0x1e0] sm:$0xff]
    %v5485 = vld [vmem:[%s5423 + $0x1e8] sm:$0xff]
    %v5486 = vld [vmem:[%s5423 + $0x1f0] sm:$0xff]
    %v5487 = vld [vmem:[%s5423 + $0x1f8] sm:$0xff]
    %v5488 = vld [vmem:[%s5423 + $0x200] sm:$0xff]
    %v5489 = vld [vmem:[%s5423 + $0x208] sm:$0xff]
    %v5490 = vld [vmem:[%s5423 + $0x210] sm:$0xff]
    %v5491 = vld [vmem:[%s5423 + $0x218] sm:$0xff]
    %v5492 = vld [vmem:[%s5423 + $0x220] sm:$0xff]
    %v5493 = vld [vmem:[%s5423 + $0x228] sm:$0xff]
    %v5494 = vld [vmem:[%s5423 + $0x230] sm:$0xff]
    %v5495 = vld [vmem:[%s5423 + $0x238] sm:$0xff]
    %v5496 = vld [vmem:[%s5423 + $0x240] sm:$0xff]
    %v5497 = vld [vmem:[%s5423 + $0x248] sm:$0xff]
    %v5498 = vld [vmem:[%s5423 + $0x250] sm:$0xff]
    %v5499 = vld [vmem:[%s5423 + $0x258] sm:$0xff]
    %v5500 = vld [vmem:[%s5423 + $0x260] sm:$0xff]
    %v5501 = vld [vmem:[%s5423 + $0x268] sm:$0xff]
    %v5502 = vld [vmem:[%s5423 + $0x270] sm:$0xff]
    %v5503 = vld [vmem:[%s5423 + $0x278] sm:$0xff]
    %v5504 = vld [vmem:[%s5423 + $0x280] sm:$0xff]
    %v5505 = vld [vmem:[%s5423 + $0x288] sm:$0xff]
    %v5506 = vld [vmem:[%s5423 + $0x290] sm:$0xff]
    %v5507 = vld [vmem:[%s5423 + $0x298] sm:$0xff]
    %v5508 = vld [vmem:[%s5423 + $0x2a0] sm:$0xff]
    %v5509 = vld [vmem:[%s5423 + $0x2a8] sm:$0xff]
    %v5510 = vld [vmem:[%s5423 + $0x2b0] sm:$0xff]
    %v5511 = vld [vmem:[%s5423 + $0x2b8] sm:$0xff]
    %v5512 = vld [vmem:[%s5423 + $0x2c0] sm:$0xff]
    %v5513 = vld [vmem:[%s5423 + $0x2c8] sm:$0xff]
    %v5514 = vld [vmem:[%s5423 + $0x2d0] sm:$0xff]
    %v5515 = vld [vmem:[%s5423 + $0x2d8] sm:$0xff]
    %v5516 = vld [vmem:[%s5423 + $0x2e0] sm:$0xff]
    %v5517 = vld [vmem:[%s5423 + $0x2e8] sm:$0xff]
    %v5518 = vld [vmem:[%s5423 + $0x2f0] sm:$0xff]
    %v5519 = vld [vmem:[%s5423 + $0x2f8] sm:$0xff]
    %v5520 = vcombine.low %v5418, %v5422
    %v5521 = vcombine.high %v5418, %v5422
    %v5523 = vunpack.c.l.s4 1983009808
    %v5524 = vunpack.c.0.s8 %v5523
    %v5525 = vlaneseq
    %v5526 = vshrl.u32 %v5525, 7
    %v5527 = vsub.s32 %v5524, %v5526
    %v5528 = vrot.slane %v5520, %v5527
    %v5530 = vunpack.c.l.s4 1983009808
    %v5531 = vunpack.c.0.s8 %v5530
    %v5532 = vlaneseq
    %v5533 = vshrl.u32 %v5532, 7
    %v5534 = vsub.s32 %v5531, %v5533
    %v5535 = vrot.slane %v5521, %v5534
    %v5536 = vcombine.high %v5528, %v5528
    %v5636 = vunpack.c.l.b16 %v5424
    %v5637 = vunpack.c.h.b16 %v5424
    %v5638 = vunpack.c.l.b16 %v5425
    %v5639 = vunpack.c.h.b16 %v5425
    %v5640 = vunpack.c.l.b16 %v5426
    %v5641 = vunpack.c.h.b16 %v5426
    %v5642 = vunpack.c.l.b16 %v5427
    %v5643 = vunpack.c.h.b16 %v5427
    %v5644 = vunpack.c.l.b16 %v5428
    %v5645 = vunpack.c.h.b16 %v5428
    %v5646 = vunpack.c.l.b16 %v5429
    %v5647 = vunpack.c.h.b16 %v5429
    %v5648 = vunpack.c.l.b16 %v5430
    %v5649 = vunpack.c.h.b16 %v5430
    %v5650 = vunpack.c.l.b16 %v5431
    %v5651 = vunpack.c.h.b16 %v5431
    %v5652 = vunpack.c.l.b16 %v5432
    %v5653 = vunpack.c.h.b16 %v5432
    %v5654 = vunpack.c.l.b16 %v5433
    %v5655 = vunpack.c.h.b16 %v5433
    %v5656 = vunpack.c.l.b16 %v5434
    %v5657 = vunpack.c.h.b16 %v5434
    %v5658 = vunpack.c.l.b16 %v5435
    %v5659 = vunpack.c.h.b16 %v5435
    %v5660 = vunpack.c.l.b16 %v5436
    %v5661 = vunpack.c.h.b16 %v5436
    %v5662 = vunpack.c.l.b16 %v5437
    %v5663 = vunpack.c.h.b16 %v5437
    %v5664 = vunpack.c.l.b16 %v5438
    %v5665 = vunpack.c.h.b16 %v5438
    %v5666 = vunpack.c.l.b16 %v5439
    %v5667 = vunpack.c.h.b16 %v5439
    %v5668 = vunpack.c.l.b16 %v5440
    %v5669 = vunpack.c.h.b16 %v5440
    %v5670 = vunpack.c.l.b16 %v5441
    %v5671 = vunpack.c.h.b16 %v5441
    %v5672 = vunpack.c.l.b16 %v5442
    %v5673 = vunpack.c.h.b16 %v5442
    %v5674 = vunpack.c.l.b16 %v5443
    %v5675 = vunpack.c.h.b16 %v5443
    %v5676 = vunpack.c.l.b16 %v5444
    %v5677 = vunpack.c.h.b16 %v5444
    %v5678 = vunpack.c.l.b16 %v5445
    %v5679 = vunpack.c.h.b16 %v5445
    %v5680 = vunpack.c.l.b16 %v5446
    %v5681 = vunpack.c.h.b16 %v5446
    %v5682 = vunpack.c.l.b16 %v5447
    %v5683 = vunpack.c.h.b16 %v5447
    %v5684 = vunpack.c.l.b16 %v5448
    %v5685 = vunpack.c.h.b16 %v5448
    %v5686 = vunpack.c.l.b16 %v5449
    %v5687 = vunpack.c.h.b16 %v5449
    %v5688 = vunpack.c.l.b16 %v5450
    %v5689 = vunpack.c.h.b16 %v5450
    %v5690 = vunpack.c.l.b16 %v5451
    %v5691 = vunpack.c.h.b16 %v5451
    %v5692 = vunpack.c.l.b16 %v5452
    %v5693 = vunpack.c.h.b16 %v5452
    %v5694 = vunpack.c.l.b16 %v5453
    %v5695 = vunpack.c.h.b16 %v5453
    %v5696 = vunpack.c.l.b16 %v5454
    %v5697 = vunpack.c.h.b16 %v5454
    %v5698 = vunpack.c.l.b16 %v5455
    %v5699 = vunpack.c.h.b16 %v5455
    %v5700 = vunpack.c.l.b16 %v5456
    %v5701 = vunpack.c.h.b16 %v5456
    %v5702 = vunpack.c.l.b16 %v5457
    %v5703 = vunpack.c.h.b16 %v5457
    %v5704 = vunpack.c.l.b16 %v5458
    %v5705 = vunpack.c.h.b16 %v5458
    %v5706 = vunpack.c.l.b16 %v5459
    %v5707 = vunpack.c.h.b16 %v5459
    %v5708 = vunpack.c.l.b16 %v5460
    %v5709 = vunpack.c.h.b16 %v5460
    %v5710 = vunpack.c.l.b16 %v5461
    %v5711 = vunpack.c.h.b16 %v5461
    %v5712 = vunpack.c.l.b16 %v5462
    %v5713 = vunpack.c.h.b16 %v5462
    %v5714 = vunpack.c.l.b16 %v5463
    %v5715 = vunpack.c.h.b16 %v5463
    %v5716 = vunpack.c.l.b16 %v5464
    %v5717 = vunpack.c.h.b16 %v5464
    %v5718 = vunpack.c.l.b16 %v5465
    %v5719 = vunpack.c.h.b16 %v5465
    %v5720 = vunpack.c.l.b16 %v5466
    %v5721 = vunpack.c.h.b16 %v5466
    %v5722 = vunpack.c.l.b16 %v5467
    %v5723 = vunpack.c.h.b16 %v5467
    %v5724 = vunpack.c.l.b16 %v5468
    %v5725 = vunpack.c.h.b16 %v5468
    %v5726 = vunpack.c.l.b16 %v5469
    %v5727 = vunpack.c.h.b16 %v5469
    %v5728 = vunpack.c.l.b16 %v5470
    %v5729 = vunpack.c.h.b16 %v5470
    %v5730 = vunpack.c.l.b16 %v5471
    %v5731 = vunpack.c.h.b16 %v5471
    %v5732 = vunpack.c.l.b16 %v5472
    %v5733 = vunpack.c.h.b16 %v5472
    %v5734 = vunpack.c.l.b16 %v5473
    %v5735 = vunpack.c.h.b16 %v5473
    %v5736 = vunpack.c.l.b16 %v5474
    %v5737 = vunpack.c.h.b16 %v5474
    %v5738 = vunpack.c.l.b16 %v5475
    %v5739 = vunpack.c.h.b16 %v5475
    %v5740 = vunpack.c.l.b16 %v5476
    %v5741 = vunpack.c.h.b16 %v5476
    %v5742 = vunpack.c.l.b16 %v5477
    %v5743 = vunpack.c.h.b16 %v5477
    %v5744 = vunpack.c.l.b16 %v5478
    %v5745 = vunpack.c.h.b16 %v5478
    %v5746 = vunpack.c.l.b16 %v5479
    %v5747 = vunpack.c.h.b16 %v5479
    %v5748 = vunpack.c.l.b16 %v5480
    %v5749 = vunpack.c.h.b16 %v5480
    %v5750 = vunpack.c.l.b16 %v5481
    %v5751 = vunpack.c.h.b16 %v5481
    %v5752 = vunpack.c.l.b16 %v5482
    %v5753 = vunpack.c.h.b16 %v5482
    %v5754 = vunpack.c.l.b16 %v5483
    %v5755 = vunpack.c.h.b16 %v5483
    %v5756 = vunpack.c.l.b16 %v5484
    %v5757 = vunpack.c.h.b16 %v5484
    %v5758 = vunpack.c.l.b16 %v5485
    %v5759 = vunpack.c.h.b16 %v5485
    %v5760 = vunpack.c.l.b16 %v5486
    %v5761 = vunpack.c.h.b16 %v5486
    %v5762 = vunpack.c.l.b16 %v5487
    %v5763 = vunpack.c.h.b16 %v5487
    %v5764 = vunpack.c.l.b16 %v5488
    %v5765 = vunpack.c.h.b16 %v5488
    %v5766 = vunpack.c.l.b16 %v5489
    %v5767 = vunpack.c.h.b16 %v5489
    %v5768 = vunpack.c.l.b16 %v5490
    %v5769 = vunpack.c.h.b16 %v5490
    %v5770 = vunpack.c.l.b16 %v5491
    %v5771 = vunpack.c.h.b16 %v5491
    %v5772 = vunpack.c.l.b16 %v5492
    %v5773 = vunpack.c.h.b16 %v5492
    %v5774 = vunpack.c.l.b16 %v5493
    %v5775 = vunpack.c.h.b16 %v5493
    %v5776 = vunpack.c.l.b16 %v5494
    %v5777 = vunpack.c.h.b16 %v5494
    %v5778 = vunpack.c.l.b16 %v5495
    %v5779 = vunpack.c.h.b16 %v5495
    %v5780 = vunpack.c.l.b16 %v5496
    %v5781 = vunpack.c.h.b16 %v5496
    %v5782 = vunpack.c.l.b16 %v5497
    %v5783 = vunpack.c.h.b16 %v5497
    %v5784 = vunpack.c.l.b16 %v5498
    %v5785 = vunpack.c.h.b16 %v5498
    %v5786 = vunpack.c.l.b16 %v5499
    %v5787 = vunpack.c.h.b16 %v5499
    %v5788 = vunpack.c.l.b16 %v5500
    %v5789 = vunpack.c.h.b16 %v5500
    %v5790 = vunpack.c.l.b16 %v5501
    %v5791 = vunpack.c.h.b16 %v5501
    %v5792 = vunpack.c.l.b16 %v5502
    %v5793 = vunpack.c.h.b16 %v5502
    %v5794 = vunpack.c.l.b16 %v5503
    %v5795 = vunpack.c.h.b16 %v5503
    %v5796 = vunpack.c.l.b16 %v5504
    %v5797 = vunpack.c.h.b16 %v5504
    %v5798 = vunpack.c.l.b16 %v5505
    %v5799 = vunpack.c.h.b16 %v5505
    %v5800 = vunpack.c.l.b16 %v5506
    %v5801 = vunpack.c.h.b16 %v5506
    %v5802 = vunpack.c.l.b16 %v5507
    %v5803 = vunpack.c.h.b16 %v5507
    %v5804 = vunpack.c.l.b16 %v5508
    %v5805 = vunpack.c.h.b16 %v5508
    %v5806 = vunpack.c.l.b16 %v5509
    %v5807 = vunpack.c.h.b16 %v5509
    %v5808 = vunpack.c.l.b16 %v5510
    %v5809 = vunpack.c.h.b16 %v5510
    %v5810 = vunpack.c.l.b16 %v5511
    %v5811 = vunpack.c.h.b16 %v5511
    %v5812 = vunpack.c.l.b16 %v5512
    %v5813 = vunpack.c.h.b16 %v5512
    %v5814 = vunpack.c.l.b16 %v5513
    %v5815 = vunpack.c.h.b16 %v5513
    %v5816 = vunpack.c.l.b16 %v5514
    %v5817 = vunpack.c.h.b16 %v5514
    %v5818 = vunpack.c.l.b16 %v5515
    %v5819 = vunpack.c.h.b16 %v5515
    %v5820 = vunpack.c.l.b16 %v5516
    %v5821 = vunpack.c.h.b16 %v5516
    %v5822 = vunpack.c.l.b16 %v5517
    %v5823 = vunpack.c.h.b16 %v5517
    %v5824 = vunpack.c.l.b16 %v5518
    %v5825 = vunpack.c.h.b16 %v5518
    %v5826 = vunpack.c.l.b16 %v5519
    %v5827 = vunpack.c.h.b16 %v5519
    %v5828 = vpack.c.b16 %v5640, %v5636
    %v5829 = vpack.c.b16 %v5641, %v5637
    %v5830 = vpack.c.b16 %v5642, %v5638
    %v5831 = vpack.c.b16 %v5643, %v5639
    %v5832 = vpack.c.b16 %v5648, %v5644
    %v5833 = vpack.c.b16 %v5649, %v5645
    %v5834 = vpack.c.b16 %v5650, %v5646
    %v5835 = vpack.c.b16 %v5651, %v5647
    %v5836 = vpack.c.b16 %v5656, %v5652
    %v5837 = vpack.c.b16 %v5657, %v5653
    %v5838 = vpack.c.b16 %v5658, %v5654
    %v5839 = vpack.c.b16 %v5659, %v5655
    %v5840 = vpack.c.b16 %v5664, %v5660
    %v5841 = vpack.c.b16 %v5665, %v5661
    %v5842 = vpack.c.b16 %v5666, %v5662
    %v5843 = vpack.c.b16 %v5667, %v5663
    %v5844 = vpack.c.b16 %v5672, %v5668
    %v5845 = vpack.c.b16 %v5673, %v5669
    %v5846 = vpack.c.b16 %v5674, %v5670
    %v5847 = vpack.c.b16 %v5675, %v5671
    %v5848 = vpack.c.b16 %v5680, %v5676
    %v5849 = vpack.c.b16 %v5681, %v5677
    %v5850 = vpack.c.b16 %v5682, %v5678
    %v5851 = vpack.c.b16 %v5683, %v5679
    %v5852 = vpack.c.b16 %v5688, %v5684
    %v5853 = vpack.c.b16 %v5689, %v5685
    %v5854 = vpack.c.b16 %v5690, %v5686
    %v5855 = vpack.c.b16 %v5691, %v5687
    %v5856 = vpack.c.b16 %v5696, %v5692
    %v5857 = vpack.c.b16 %v5697, %v5693
    %v5858 = vpack.c.b16 %v5698, %v5694
    %v5859 = vpack.c.b16 %v5699, %v5695
    %v5860 = vpack.c.b16 %v5704, %v5700
    %v5861 = vpack.c.b16 %v5705, %v5701
    %v5862 = vpack.c.b16 %v5706, %v5702
    %v5863 = vpack.c.b16 %v5707, %v5703
    %v5864 = vpack.c.b16 %v5712, %v5708
    %v5865 = vpack.c.b16 %v5713, %v5709
    %v5866 = vpack.c.b16 %v5714, %v5710
    %v5867 = vpack.c.b16 %v5715, %v5711
    %v5868 = vpack.c.b16 %v5720, %v5716
    %v5869 = vpack.c.b16 %v5721, %v5717
    %v5870 = vpack.c.b16 %v5722, %v5718
    %v5871 = vpack.c.b16 %v5723, %v5719
    %v5872 = vpack.c.b16 %v5728, %v5724
    %v5873 = vpack.c.b16 %v5729, %v5725
    %v5874 = vpack.c.b16 %v5730, %v5726
    %v5875 = vpack.c.b16 %v5731, %v5727
    %v5876 = vpack.c.b16 %v5736, %v5732
    %v5877 = vpack.c.b16 %v5737, %v5733
    %v5878 = vpack.c.b16 %v5738, %v5734
    %v5879 = vpack.c.b16 %v5739, %v5735
    %v5880 = vpack.c.b16 %v5744, %v5740
    %v5881 = vpack.c.b16 %v5745, %v5741
    %v5882 = vpack.c.b16 %v5746, %v5742
    %v5883 = vpack.c.b16 %v5747, %v5743
    %v5884 = vpack.c.b16 %v5752, %v5748
    %v5885 = vpack.c.b16 %v5753, %v5749
    %v5886 = vpack.c.b16 %v5754, %v5750
    %v5887 = vpack.c.b16 %v5755, %v5751
    %v5888 = vpack.c.b16 %v5760, %v5756
    %v5889 = vpack.c.b16 %v5761, %v5757
    %v5890 = vpack.c.b16 %v5762, %v5758
    %v5891 = vpack.c.b16 %v5763, %v5759
    %v5892 = vpack.c.b16 %v5768, %v5764
    %v5893 = vpack.c.b16 %v5769, %v5765
    %v5894 = vpack.c.b16 %v5770, %v5766
    %v5895 = vpack.c.b16 %v5771, %v5767
    %v5896 = vpack.c.b16 %v5776, %v5772
    %v5897 = vpack.c.b16 %v5777, %v5773
    %v5898 = vpack.c.b16 %v5778, %v5774
    %v5899 = vpack.c.b16 %v5779, %v5775
    %v5900 = vpack.c.b16 %v5784, %v5780
    %v5901 = vpack.c.b16 %v5785, %v5781
    %v5902 = vpack.c.b16 %v5786, %v5782
    %v5903 = vpack.c.b16 %v5787, %v5783
    %v5904 = vpack.c.b16 %v5792, %v5788
    %v5905 = vpack.c.b16 %v5793, %v5789
    %v5906 = vpack.c.b16 %v5794, %v5790
    %v5907 = vpack.c.b16 %v5795, %v5791
    %v5908 = vpack.c.b16 %v5800, %v5796
    %v5909 = vpack.c.b16 %v5801, %v5797
    %v5910 = vpack.c.b16 %v5802, %v5798
    %v5911 = vpack.c.b16 %v5803, %v5799
    %v5912 = vpack.c.b16 %v5808, %v5804
    %v5913 = vpack.c.b16 %v5809, %v5805
    %v5914 = vpack.c.b16 %v5810, %v5806
    %v5915 = vpack.c.b16 %v5811, %v5807
    %v5916 = vpack.c.b16 %v5816, %v5812
    %v5917 = vpack.c.b16 %v5817, %v5813
    %v5918 = vpack.c.b16 %v5818, %v5814
    %v5919 = vpack.c.b16 %v5819, %v5815
    %v5920 = vpack.c.b16 %v5824, %v5820
    %v5921 = vpack.c.b16 %v5825, %v5821
    %v5922 = vpack.c.b16 %v5826, %v5822
    %v5923 = vpack.c.b16 %v5827, %v5823
    %6020 = vmatprep.subr.bf16.mxu0 %v5829
    %6021 = vmatpush1.bf16.msra.mxu0 %v5828
    %6022 = vmatprep.subr.bf16.mxu0 %v5833
    %6023 = vmatpush1.bf16.msra.mxu0 %v5832
    %6024 = vmatprep.subr.bf16.mxu0 %v5837
    %6025 = vmatpush1.bf16.msra.mxu0 %v5836
    %6026 = vmatprep.subr.bf16.mxu0 %v5841
    %6027 = vmatpush1.bf16.msra.mxu0 %v5840
    %6028 = vmatprep.subr.bf16.mxu0 %v5845
    %6029 = vmatpush1.bf16.msra.mxu0 %v5844
    %6030 = vmatprep.subr.bf16.mxu0 %v5849
    %6031 = vmatpush1.bf16.msra.mxu0 %v5848
    %6032 = vmatprep.subr.bf16.mxu0 %v5853
    %6033 = vmatpush1.bf16.msra.mxu0 %v5852
    %6034 = vmatprep.subr.bf16.mxu0 %v5857
    %6035 = vmatpush1.bf16.msra.mxu0 %v5856
    %6036 = vmatprep.subr.bf16.mxu0 %v5861
    %6037 = vmatpush1.bf16.msra.mxu0 %v5860
    %6038 = vmatprep.subr.bf16.mxu0 %v5865
    %6039 = vmatpush1.bf16.msra.mxu0 %v5864
    %6040 = vmatprep.subr.bf16.mxu0 %v5869
    %6041 = vmatpush1.bf16.msra.mxu0 %v5868
    %6042 = vmatprep.subr.bf16.mxu0 %v5873
    %6043 = vmatpush1.bf16.msra.mxu0 %v5872
    %6044 = vmatprep.subr.bf16.mxu0 %v5877
    %6045 = vmatpush1.bf16.msra.mxu0 %v5876
    %6046 = vmatprep.subr.bf16.mxu0 %v5881
    %6047 = vmatpush1.bf16.msra.mxu0 %v5880
    %6048 = vmatprep.subr.bf16.mxu0 %v5885
    %6049 = vmatpush1.bf16.msra.mxu0 %v5884
    %6050 = vmatprep.subr.bf16.mxu0 %v5889
    %6051 = vmatpush1.bf16.msra.mxu0 %v5888
    %6052 = vmatprep.mubr.bf16.mxu0 %v5536
    %6053 = vmatmul.mubr.bf16.gmra.mrb[0].mxu0 %v5528
    %v6054 = vpop.f32.mrb[0].mxu0
    %v6055 = vadd.f32 0.0, %v6054
    %v6056 = vpop.f32.mrb[0].mxu0
    %v6057 = vadd.f32 0.0, %v6056
    %v6058 = vpop.f32.mrb[0].mxu0
    %v6059 = vpop.f32.mrb[0].mxu0
    %6060 = vdwg.mxu0
    %6061 = vmatprep.subr.bf16.mxu0 %v5893
    %6062 = vmatpush1.bf16.msra.mxu0 %v5892
    %6063 = vmatprep.subr.bf16.mxu0 %v5897
    %6064 = vmatpush1.bf16.msra.mxu0 %v5896
    %6065 = vmatprep.subr.bf16.mxu0 %v5901
    %6066 = vmatpush1.bf16.msra.mxu0 %v5900
    %6067 = vmatprep.subr.bf16.mxu0 %v5905
    %6068 = vmatpush1.bf16.msra.mxu0 %v5904
    %6069 = vmatprep.subr.bf16.mxu0 %v5909
    %6070 = vmatpush1.bf16.msra.mxu0 %v5908
    %6071 = vmatprep.subr.bf16.mxu0 %v5913
    %6072 = vmatpush1.bf16.msra.mxu0 %v5912
    %6073 = vmatprep.subr.bf16.mxu0 %v5917
    %6074 = vmatpush1.bf16.msra.mxu0 %v5916
    %6075 = vmatprep.subr.bf16.mxu0 %v5921
    %6076 = vmatpush1.bf16.msra.mxu0 %v5920
    %6077 = vmatprep.subr.bf16.mxu0 0
    %6078 = vmatpush1.bf16.msra.mxu0 0
    %6079 = vmatprep.subr.bf16.mxu0 0
    %6080 = vmatpush1.bf16.msra.mxu0 0
    %6081 = vmatprep.subr.bf16.mxu0 0
    %6082 = vmatpush1.bf16.msra.mxu0 0
    %6083 = vmatprep.subr.bf16.mxu0 0
    %6084 = vmatpush1.bf16.msra.mxu0 0
    %6085 = vmatprep.subr.bf16.mxu0 0
    %6086 = vmatpush1.bf16.msra.mxu0 0
    %6087 = vmatprep.subr.bf16.mxu0 0
    %6088 = vmatpush1.bf16.msra.mxu0 0
    %6089 = vmatprep.subr.bf16.mxu0 0
    %6090 = vmatpush1.bf16.msra.mxu0 0
    %6091 = vmatprep.subr.bf16.mxu0 0
    %6092 = vmatpush1.bf16.msra.mxu0 0
    %6093 = vmatprep.mubr.bf16.mxu0 0
    %6094 = vmatmul.mubr.bf16.gmra.mrb[0].mxu0 %v5535
    %v6095 = vpop.f32.mrb[0].mxu0
    %v6096 = vadd.f32 %v6055, %v6095
    %v6097 = vpop.f32.mrb[0].mxu0
    %v6098 = vadd.f32 %v6057, %v6097
    %v6099 = vpop.f32.mrb[0].mxu0
    %v6100 = vpop.f32.mrb[0].mxu0
    %6101 = vdwg.mxu0
    %6102 = vmatprep.subr.bf16.mxu0 %v5831
    %6103 = vmatpush1.bf16.msra.mxu0 %v5830
    %6104 = vmatprep.subr.bf16.mxu0 %v5835
    %6105 = vmatpush1.bf16.msra.mxu0 %v5834
    %6106 = vmatprep.subr.bf16.mxu0 %v5839
    %6107 = vmatpush1.bf16.msra.mxu0 %v5838
    %6108 = vmatprep.subr.bf16.mxu0 %v5843
    %6109 = vmatpush1.bf16.msra.mxu0 %v5842
    %6110 = vmatprep.subr.bf16.mxu0 %v5847
    %6111 = vmatpush1.bf16.msra.mxu0 %v5846
    %6112 = vmatprep.subr.bf16.mxu0 %v5851
    %6113 = vmatpush1.bf16.msra.mxu0 %v5850
    %6114 = vmatprep.subr.bf16.mxu0 %v5855
    %6115 = vmatpush1.bf16.msra.mxu0 %v5854
    %6116 = vmatprep.subr.bf16.mxu0 %v5859
    %6117 = vmatpush1.bf16.msra.mxu0 %v5858
    %6118 = vmatprep.subr.bf16.mxu0 %v5863
    %6119 = vmatpush1.bf16.msra.mxu0 %v5862
    %6120 = vmatprep.subr.bf16.mxu0 %v5867
    %6121 = vmatpush1.bf16.msra.mxu0 %v5866
    %6122 = vmatprep.subr.bf16.mxu0 %v5871
    %6123 = vmatpush1.bf16.msra.mxu0 %v5870
    %6124 = vmatprep.subr.bf16.mxu0 %v5875
    %6125 = vmatpush1.bf16.msra.mxu0 %v5874
    %6126 = vmatprep.subr.bf16.mxu0 %v5879
    %6127 = vmatpush1.bf16.msra.mxu0 %v5878
    %6128 = vmatprep.subr.bf16.mxu0 %v5883
    %6129 = vmatpush1.bf16.msra.mxu0 %v5882
    %6130 = vmatprep.subr.bf16.mxu0 %v5887
    %6131 = vmatpush1.bf16.msra.mxu0 %v5886
    %6132 = vmatprep.subr.bf16.mxu0 %v5891
    %6133 = vmatpush1.bf16.msra.mxu0 %v5890
    %6134 = vmatprep.mubr.bf16.mxu0 %v5536
    %6135 = vmatmul.mubr.bf16.gmra.mrb[0].mxu0 %v5528
    %v6136 = vpop.f32.mrb[0].mxu0
    %v6137 = vadd.f32 0.0, %v6136
    %v6138 = vpop.f32.mrb[0].mxu0
    %v6139 = vadd.f32 0.0, %v6138
    %v6140 = vpop.f32.mrb[0].mxu0
    %v6141 = vpop.f32.mrb[0].mxu0
    %6142 = vdwg.mxu0
    %6143 = vmatprep.subr.bf16.mxu0 %v5895
    %6144 = vmatpush1.bf16.msra.mxu0 %v5894
    %6145 = vmatprep.subr.bf16.mxu0 %v5899
    %6146 = vmatpush1.bf16.msra.mxu0 %v5898
    %6147 = vmatprep.subr.bf16.mxu0 %v5903
    %6148 = vmatpush1.bf16.msra.mxu0 %v5902
    %6149 = vmatprep.subr.bf16.mxu0 %v5907
    %6150 = vmatpush1.bf16.msra.mxu0 %v5906
    %6151 = vmatprep.subr.bf16.mxu0 %v5911
    %6152 = vmatpush1.bf16.msra.mxu0 %v5910
    %6153 = vmatprep.subr.bf16.mxu0 %v5915
    %6154 = vmatpush1.bf16.msra.mxu0 %v5914
    %6155 = vmatprep.subr.bf16.mxu0 %v5919
    %6156 = vmatpush1.bf16.msra.mxu0 %v5918
    %6157 = vmatprep.subr.bf16.mxu0 %v5923
    %6158 = vmatpush1.bf16.msra.mxu0 %v5922
    %6159 = vmatprep.subr.bf16.mxu0 0
    %6160 = vmatpush1.bf16.msra.mxu0 0
    %6161 = vmatprep.subr.bf16.mxu0 0
    %6162 = vmatpush1.bf16.msra.mxu0 0
    %6163 = vmatprep.subr.bf16.mxu0 0
    %6164 = vmatpush1.bf16.msra.mxu0 0
    %6165 = vmatprep.subr.bf16.mxu0 0
    %6166 = vmatpush1.bf16.msra.mxu0 0
    %6167 = vmatprep.subr.bf16.mxu0 0
    %6168 = vmatpush1.bf16.msra.mxu0 0
    %6169 = vmatprep.subr.bf16.mxu0 0
    %6170 = vmatpush1.bf16.msra.mxu0 0
    %6171 = vmatprep.subr.bf16.mxu0 0
    %6172 = vmatpush1.bf16.msra.mxu0 0
    %6173 = vmatprep.subr.bf16.mxu0 0
    %6174 = vmatpush1.bf16.msra.mxu0 0
    %6175 = vmatprep.mubr.bf16.mxu0 0
    %6176 = vmatmul.mubr.bf16.gmra.mrb[0].mxu0 %v5535
    %v6177 = vpop.f32.mrb[0].mxu0
    %v6178 = vadd.f32 %v6137, %v6177
    %v6179 = vpop.f32.mrb[0].mxu0
    %v6180 = vadd.f32 %v6139, %v6179
    %v6181 = vpop.f32.mrb[0].mxu0
    %v6182 = vpop.f32.mrb[0].mxu0
    %6183 = vdwg.mxu0
    %v6184 = vadd.f32 %v5281, %v6096
    %v6185 = vadd.f32 %v5283, %v6098
    %v6186 = vadd.f32 %v5363, %v6178
    %v6187 = vadd.f32 %v5365, %v6180
    %v6189 = vlaneseq
    %v6190 = vshrl.u32 %v6189, 7
    %v6191 = vsub.s32 0, %v6190
    %v6192 = vrot.slane %v3734, %v6191
    %v6193 = vlaneseq
    %v6194 = vshrl.u32 %v6193, 7
    %v6195 = vsub.s32 1, %v6194
    %v6196 = vrot.slane %v3734, %v6195
    %v6197 = vlaneseq
    %v6198 = vshrl.u32 %v6197, 7
    %v6199 = vsub.s32 2, %v6198
    %v6200 = vrot.slane %v3734, %v6199
    %v6201 = vlaneseq
    %v6202 = vshrl.u32 %v6201, 7
    %v6203 = vsub.s32 3, %v6202
    %v6204 = vrot.slane %v3734, %v6203
    %v6209 = vadd.f32 %v6184, %v6192
    %v6210 = vadd.f32 %v6185, %v6196
    %v6211 = vadd.f32 %v6186, %v6200
    %v6212 = vadd.f32 %v6187, %v6204
    %v6213 = vmax.f32 %v6209, 0.0
    %v6214 = vmax.f32 %v6210, 0.0
    %v6215 = vmax.f32 %v6211, 0.0
    %v6216 = vmax.f32 %v6212, 0.0
    %v6217 = vmax.f32 %v6213, %v6215
    %v6218 = vmax.f32 %v6214, %v6216
    %v6221 = vcombine.low %v6217, %v6218
    %v6222 = vcombine.high %v6217, %v6218
    %v6224 = vunpack.c.l.s4 1983009808
    %v6225 = vunpack.c.0.s8 %v6224
    %v6226 = vlaneseq
    %v6227 = vshrl.u32 %v6226, 7
    %v6228 = vsub.s32 %v6225, %v6227
    %v6229 = vrot.slane %v6221, %v6228
    %v6231 = vunpack.c.l.s4 1983009808
    %v6232 = vunpack.c.0.s8 %v6231
    %v6233 = vlaneseq
    %v6234 = vshrl.u32 %v6233, 7
    %v6235 = vsub.s32 %v6232, %v6234
    %v6236 = vrot.slane %v6222, %v6235
    %v6237 = vcombine.high %v6229, %v6229
    %v6238 = vcombine.high %v6236, %v6236
    %v6243 = vrot.slane %v6229, 7
    %v6244 = vrot.slane %v6243, 2
    %v6245 = vrot.slane %v6237, 7
    %v6246 = vrot.slane %v6245, 2
    %v6247 = vrot.slane %v6236, 7
    %v6248 = vrot.slane %v6247, 2
    %v6249 = vrot.slane %v6238, 7
    %v6250 = vrot.slane %v6249, 2
    %v6255 = vmax.f32 %v6229, %v6244
    %v6256 = vmax.f32 %v6237, %v6246
    %v6257 = vmax.f32 %v6236, %v6248
    %v6258 = vmax.f32 %v6238, %v6250
    %v6263 = vlaneseq
    %v6264 = vshrl.u32 %v6263, 7
    %v6265 = vsub.s32 0, %v6264
    %v6266 = vrot.slane %v6255, %v6265
    %v6267 = vlaneseq
    %v6268 = vshrl.u32 %v6267, 7
    %v6269 = vsub.s32 2, %v6268
    %v6270 = vrot.slane %v6255, %v6269
    %v6271 = vlaneseq
    %v6272 = vshrl.u32 %v6271, 7
    %v6273 = vsub.s32 0, %v6272
    %v6274 = vrot.slane %v6256, %v6273
    %v6275 = vlaneseq
    %v6276 = vshrl.u32 %v6275, 7
    %v6277 = vsub.s32 2, %v6276
    %v6278 = vrot.slane %v6256, %v6277
    %v6279 = vlaneseq
    %v6280 = vshrl.u32 %v6279, 7
    %v6281 = vsub.s32 0, %v6280
    %v6282 = vrot.slane %v6257, %v6281
    %v6283 = vlaneseq
    %v6284 = vshrl.u32 %v6283, 7
    %v6285 = vsub.s32 2, %v6284
    %v6286 = vrot.slane %v6257, %v6285
    %v6287 = vlaneseq
    %v6288 = vshrl.u32 %v6287, 7
    %v6289 = vsub.s32 0, %v6288
    %v6290 = vrot.slane %v6258, %v6289
    %v6291 = vlaneseq
    %v6292 = vshrl.u32 %v6291, 7
    %v6293 = vsub.s32 2, %v6292
    %v6294 = vrot.slane %v6258, %v6293
    %v6303 = vpack.c.bf16 %v6266, %v6266
    %v6304 = vpack.c.bf16 %v6270, %v6270
    %v6305 = vpack.c.bf16 %v6274, %v6274
    %v6306 = vpack.c.bf16 %v6278, %v6278
    %v6307 = vpack.c.bf16 %v6282, %v6282
    %v6308 = vpack.c.bf16 %v6286, %v6286
    %v6309 = vpack.c.bf16 %v6290, %v6290
    %v6310 = vpack.c.bf16 %v6294, %v6294
    %v6319 = vcombine.low %v6303, %v6304
    %v6321 = vunpack.c.l.s4 1983009808
    %v6322 = vunpack.c.0.s8 %v6321
    %v6323 = vlaneseq
    %v6324 = vshrl.u32 %v6323, 7
    %v6325 = vsub.s32 %v6322, %v6324
    %v6326 = vrot.slane %v6319, %v6325
    %v6327 = vcombine.low %v6305, %v6306
    %v6329 = vunpack.c.l.s4 1983009808
    %v6330 = vunpack.c.0.s8 %v6329
    %v6331 = vlaneseq
    %v6332 = vshrl.u32 %v6331, 7
    %v6333 = vsub.s32 %v6330, %v6332
    %v6334 = vrot.slane %v6327, %v6333
    %v6335 = vcombine.low %v6307, %v6308
    %v6337 = vunpack.c.l.s4 1983009808
    %v6338 = vunpack.c.0.s8 %v6337
    %v6339 = vlaneseq
    %v6340 = vshrl.u32 %v6339, 7
    %v6341 = vsub.s32 %v6338, %v6340
    %v6342 = vrot.slane %v6335, %v6341
    %v6343 = vcombine.low %v6309, %v6310
    %v6345 = vunpack.c.l.s4 1983009808
    %v6346 = vunpack.c.0.s8 %v6345
    %v6347 = vlaneseq
    %v6348 = vshrl.u32 %v6347, 7
    %v6349 = vsub.s32 %v6346, %v6348
    %v6350 = vrot.slane %v6343, %v6349
    %v6352 = vunpack.c.l.s4 1983009808
    %v6353 = vunpack.c.0.s8 %v6352
    %v6354 = vlaneseq
    %v6355 = vshrl.u32 %v6354, 7
    %v6356 = vsub.s32 %v6353, %v6355
    %v6357 = vrot.slane %v6326, %v6356
    %v6359 = vunpack.c.l.s4 1983009808
    %v6360 = vunpack.c.0.s8 %v6359
    %v6361 = vlaneseq
    %v6362 = vshrl.u32 %v6361, 7
    %v6363 = vsub.s32 %v6360, %v6362
    %v6364 = vrot.slane %v6334, %v6363
    %v6366 = vunpack.c.l.s4 1983009808
    %v6367 = vunpack.c.0.s8 %v6366
    %v6368 = vlaneseq
    %v6369 = vshrl.u32 %v6368, 7
    %v6370 = vsub.s32 %v6367, %v6369
    %v6371 = vrot.slane %v6342, %v6370
    %v6373 = vunpack.c.l.s4 1983009808
    %v6374 = vunpack.c.0.s8 %v6373
    %v6375 = vlaneseq
    %v6376 = vshrl.u32 %v6375, 7
    %v6377 = vsub.s32 %v6374, %v6376
    %v6378 = vrot.slane %v6350, %v6377
    %v6379 = vunpack.c.l.b16 %v6357
    %v6380 = vunpack.c.h.b16 %v6357
    %v6381 = vunpack.c.l.b16 %v6364
    %v6382 = vunpack.c.h.b16 %v6364
    %v6383 = vunpack.c.l.b16 %v6371
    %v6384 = vunpack.c.h.b16 %v6371
    %v6385 = vunpack.c.l.b16 %v6378
    %v6386 = vunpack.c.h.b16 %v6378
    %v6387 = vrot.slane %v6379, 7
    %v6388 = vrot.slane %v6381, 6
    %v6389 = vsel %vm1153, %v6388, %v6387
    %v6390 = vrot.slane %v6380, 7
    %v6391 = vrot.slane %v6382, 6
    %v6392 = vsel %vm1153, %v6391, %v6390
    %v6393 = vrot.slane %v6383, 7
    %v6394 = vrot.slane %v6385, 6
    %v6395 = vsel %vm1153, %v6394, %v6393
    %v6396 = vrot.slane %v6384, 7
    %v6397 = vrot.slane %v6386, 6
    %v6398 = vsel %vm1153, %v6397, %v6396
    %v6399 = vpack.c.b16 %v6392, %v6389
    %v6400 = vpack.c.b16 %v6398, %v6395
    %v6402 = vunpack.c.l.s4 1983009808
    %v6403 = vunpack.c.0.s8 %v6402
    %v6404 = vlaneseq
    %v6405 = vshrl.u32 %v6404, 7
    %v6406 = vsub.s32 %v6403, %v6405
    %v6407 = vrot.slane %v6399, %v6406
    %v6409 = vunpack.c.l.s4 1983009808
    %v6410 = vunpack.c.0.s8 %v6409
    %v6411 = vlaneseq
    %v6412 = vshrl.u32 %v6411, 7
    %v6413 = vsub.s32 %v6410, %v6412
    %v6414 = vrot.slane %v6400, %v6413
    %vm6417 = vcmask 1041408
    %vm6418 = vsmask.f32 1282
    %vm6419 = vmand %vm6417, %vm6418
    %vm6420 = vcmask 1043458
    %vm6421 = vsmask.f32 3338
    %vm6422 = vmand %vm6420, %vm6421
    %vm6423 = vmor %vm6422, %vm6419
    %v6424 = vld [vmem:[#allocation6 + $0x2] sm:$0xf]
    %v6425 = vsel %vm6423, %v6407, %v6424
    %6426 = vst [vmem:[#allocation6 + $0x2] sm:$0xf] %v6425
    %v6427 = vld [vmem:[#allocation6 + $0xa] sm:$0xf]
    %v6428 = vsel %vm6423, %v6414, %v6427
    %6429 = vst [vmem:[#allocation6 + $0xa] sm:$0xf] %v6428
    %v6430 = vld [vmem:[#allocation19] sm:$0xf]
    %v6431 = vld [vmem:[#allocation6] sm:$0x55]
    %v6432 = vld [vmem:[#allocation6 + $0x8] sm:$0x55]
    %v6436 = vunpack.c.l.s4 1966171168
    %v6437 = vunpack.c.0.s8 %v6436
    %v6438 = vlaneseq
    %v6439 = vshrl.u32 %v6438, 7
    %v6440 = vsub.s32 %v6437, %v6439
    %v6441 = vrot.slane %v6431, %v6440
    %v6443 = vunpack.c.l.s4 1966171168
    %v6444 = vunpack.c.0.s8 %v6443
    %v6445 = vlaneseq
    %v6446 = vshrl.u32 %v6445, 7
    %v6447 = vsub.s32 %v6444, %v6446
    %v6448 = vrot.slane %v6432, %v6447
    %v6449 = vld [vmem:[#allocation18] sm:$0xff]
    %v6450 = vld [vmem:[#allocation18 + $0x8] sm:$0xff]
    %v6451 = vld [vmem:[#allocation18 + $0x10] sm:$0xff]
    %v6452 = vld [vmem:[#allocation18 + $0x18] sm:$0xff]
    %v6453 = vld [vmem:[#allocation18 + $0x20] sm:$0xff]
    %v6454 = vld [vmem:[#allocation18 + $0x28] sm:$0xff]
    %v6455 = vld [vmem:[#allocation18 + $0x30] sm:$0xff]
    %v6456 = vld [vmem:[#allocation18 + $0x38] sm:$0xff]
    %v6457 = vld [vmem:[#allocation18 + $0x40] sm:$0xff]
    %v6458 = vld [vmem:[#allocation18 + $0x48] sm:$0xff]
    %v6459 = vld [vmem:[#allocation18 + $0x50] sm:$0xff]
    %v6460 = vld [vmem:[#allocation18 + $0x58] sm:$0xff]
    %v6461 = vld [vmem:[#allocation18 + $0x60] sm:$0xff]
    %v6462 = vld [vmem:[#allocation18 + $0x68] sm:$0xff]
    %v6463 = vld [vmem:[#allocation18 + $0x70] sm:$0xff]
    %v6464 = vld [vmem:[#allocation18 + $0x78] sm:$0xff]
    %v6465 = vld [vmem:[#allocation18 + $0x80] sm:$0xff]
    %v6466 = vld [vmem:[#allocation18 + $0x88] sm:$0xff]
    %v6467 = vld [vmem:[#allocation18 + $0x90] sm:$0xff]
    %v6468 = vld [vmem:[#allocation18 + $0x98] sm:$0xff]
    %v6469 = vld [vmem:[#allocation18 + $0xa0] sm:$0xff]
    %v6470 = vld [vmem:[#allocation18 + $0xa8] sm:$0xff]
    %v6471 = vld [vmem:[#allocation18 + $0xb0] sm:$0xff]
    %v6472 = vld [vmem:[#allocation18 + $0xb8] sm:$0xff]
    %v6473 = vld [vmem:[#allocation18 + $0xc0] sm:$0xff]
    %v6474 = vld [vmem:[#allocation18 + $0xc8] sm:$0xff]
    %v6475 = vld [vmem:[#allocation18 + $0xd0] sm:$0xff]
    %v6476 = vld [vmem:[#allocation18 + $0xd8] sm:$0xff]
    %v6477 = vld [vmem:[#allocation18 + $0xe0] sm:$0xff]
    %v6478 = vld [vmem:[#allocation18 + $0xe8] sm:$0xff]
    %v6479 = vld [vmem:[#allocation18 + $0xf0] sm:$0xff]
    %v6480 = vld [vmem:[#allocation18 + $0xf8] sm:$0xff]
    %v6481 = vld [vmem:[#allocation18 + $0x100] sm:$0xff]
    %v6482 = vld [vmem:[#allocation18 + $0x108] sm:$0xff]
    %v6483 = vld [vmem:[#allocation18 + $0x110] sm:$0xff]
    %v6484 = vld [vmem:[#allocation18 + $0x118] sm:$0xff]
    %v6485 = vld [vmem:[#allocation18 + $0x120] sm:$0xff]
    %v6486 = vld [vmem:[#allocation18 + $0x128] sm:$0xff]
    %v6487 = vld [vmem:[#allocation18 + $0x130] sm:$0xff]
    %v6488 = vld [vmem:[#allocation18 + $0x138] sm:$0xff]
    %v6489 = vld [vmem:[#allocation18 + $0x140] sm:$0xff]
    %v6490 = vld [vmem:[#allocation18 + $0x148] sm:$0xff]
    %v6491 = vld [vmem:[#allocation18 + $0x150] sm:$0xff]
    %v6492 = vld [vmem:[#allocation18 + $0x158] sm:$0xff]
    %v6493 = vld [vmem:[#allocation18 + $0x160] sm:$0xff]
    %v6494 = vld [vmem:[#allocation18 + $0x168] sm:$0xff]
    %v6495 = vld [vmem:[#allocation18 + $0x170] sm:$0xff]
    %v6496 = vld [vmem:[#allocation18 + $0x178] sm:$0xff]
    %v6497 = vld [vmem:[#allocation18 + $0x180] sm:$0xff]
    %v6498 = vld [vmem:[#allocation18 + $0x188] sm:$0xff]
    %v6499 = vld [vmem:[#allocation18 + $0x190] sm:$0xff]
    %v6500 = vld [vmem:[#allocation18 + $0x198] sm:$0xff]
    %v6501 = vld [vmem:[#allocation18 + $0x1a0] sm:$0xff]
    %v6502 = vld [vmem:[#allocation18 + $0x1a8] sm:$0xff]
    %v6503 = vld [vmem:[#allocation18 + $0x1b0] sm:$0xff]
    %v6504 = vld [vmem:[#allocation18 + $0x1b8] sm:$0xff]
    %v6505 = vld [vmem:[#allocation18 + $0x1c0] sm:$0xff]
    %v6506 = vld [vmem:[#allocation18 + $0x1c8] sm:$0xff]
    %v6507 = vld [vmem:[#allocation18 + $0x1d0] sm:$0xff]
    %v6508 = vld [vmem:[#allocation18 + $0x1d8] sm:$0xff]
    %v6509 = vld [vmem:[#allocation18 + $0x1e0] sm:$0xff]
    %v6510 = vld [vmem:[#allocation18 + $0x1e8] sm:$0xff]
    %v6511 = vld [vmem:[#allocation18 + $0x1f0] sm:$0xff]
    %v6512 = vld [vmem:[#allocation18 + $0x1f8] sm:$0xff]
    %v6513 = vld [vmem:[#allocation18 + $0x200] sm:$0xff]
    %v6514 = vld [vmem:[#allocation18 + $0x208] sm:$0xff]
    %v6515 = vld [vmem:[#allocation18 + $0x210] sm:$0xff]
    %v6516 = vld [vmem:[#allocation18 + $0x218] sm:$0xff]
    %v6517 = vld [vmem:[#allocation18 + $0x220] sm:$0xff]
    %v6518 = vld [vmem:[#allocation18 + $0x228] sm:$0xff]
    %v6519 = vld [vmem:[#allocation18 + $0x230] sm:$0xff]
    %v6520 = vld [vmem:[#allocation18 + $0x238] sm:$0xff]
    %v6521 = vld [vmem:[#allocation18 + $0x240] sm:$0xff]
    %v6522 = vld [vmem:[#allocation18 + $0x248] sm:$0xff]
    %v6523 = vld [vmem:[#allocation18 + $0x250] sm:$0xff]
    %v6524 = vld [vmem:[#allocation18 + $0x258] sm:$0xff]
    %v6525 = vld [vmem:[#allocation18 + $0x260] sm:$0xff]
    %v6526 = vld [vmem:[#allocation18 + $0x268] sm:$0xff]
    %v6527 = vld [vmem:[#allocation18 + $0x270] sm:$0xff]
    %v6528 = vld [vmem:[#allocation18 + $0x278] sm:$0xff]
    %v6529 = vld [vmem:[#allocation18 + $0x280] sm:$0xff]
    %v6530 = vld [vmem:[#allocation18 + $0x288] sm:$0xff]
    %v6531 = vld [vmem:[#allocation18 + $0x290] sm:$0xff]
    %v6532 = vld [vmem:[#allocation18 + $0x298] sm:$0xff]
    %v6533 = vld [vmem:[#allocation18 + $0x2a0] sm:$0xff]
    %v6534 = vld [vmem:[#allocation18 + $0x2a8] sm:$0xff]
    %v6535 = vld [vmem:[#allocation18 + $0x2b0] sm:$0xff]
    %v6536 = vld [vmem:[#allocation18 + $0x2b8] sm:$0xff]
    %v6537 = vld [vmem:[#allocation18 + $0x2c0] sm:$0xff]
    %v6538 = vld [vmem:[#allocation18 + $0x2c8] sm:$0xff]
    %v6539 = vld [vmem:[#allocation18 + $0x2d0] sm:$0xff]
    %v6540 = vld [vmem:[#allocation18 + $0x2d8] sm:$0xff]
    %v6541 = vld [vmem:[#allocation18 + $0x2e0] sm:$0xff]
    %v6542 = vld [vmem:[#allocation18 + $0x2e8] sm:$0xff]
    %v6543 = vld [vmem:[#allocation18 + $0x2f0] sm:$0xff]
    %v6544 = vld [vmem:[#allocation18 + $0x2f8] sm:$0xff]
    %v6545 = vld [vmem:[#allocation18 + $0x300] sm:$0xff]
    %v6546 = vld [vmem:[#allocation18 + $0x308] sm:$0xff]
    %v6547 = vld [vmem:[#allocation18 + $0x310] sm:$0xff]
    %v6548 = vld [vmem:[#allocation18 + $0x318] sm:$0xff]
    %v6549 = vld [vmem:[#allocation18 + $0x320] sm:$0xff]
    %v6550 = vld [vmem:[#allocation18 + $0x328] sm:$0xff]
    %v6551 = vld [vmem:[#allocation18 + $0x330] sm:$0xff]
    %v6552 = vld [vmem:[#allocation18 + $0x338] sm:$0xff]
    %v6553 = vld [vmem:[#allocation18 + $0x340] sm:$0xff]
    %v6554 = vld [vmem:[#allocation18 + $0x348] sm:$0xff]
    %v6555 = vld [vmem:[#allocation18 + $0x350] sm:$0xff]
    %v6556 = vld [vmem:[#allocation18 + $0x358] sm:$0xff]
    %v6557 = vld [vmem:[#allocation18 + $0x360] sm:$0xff]
    %v6558 = vld [vmem:[#allocation18 + $0x368] sm:$0xff]
    %v6559 = vld [vmem:[#allocation18 + $0x370] sm:$0xff]
    %v6560 = vld [vmem:[#allocation18 + $0x378] sm:$0xff]
    %v6561 = vld [vmem:[#allocation18 + $0x380] sm:$0xff]
    %v6562 = vld [vmem:[#allocation18 + $0x388] sm:$0xff]
    %v6563 = vld [vmem:[#allocation18 + $0x390] sm:$0xff]
    %v6564 = vld [vmem:[#allocation18 + $0x398] sm:$0xff]
    %v6565 = vld [vmem:[#allocation18 + $0x3a0] sm:$0xff]
    %v6566 = vld [vmem:[#allocation18 + $0x3a8] sm:$0xff]
    %v6567 = vld [vmem:[#allocation18 + $0x3b0] sm:$0xff]
    %v6568 = vld [vmem:[#allocation18 + $0x3b8] sm:$0xff]
    %v6569 = vld [vmem:[#allocation18 + $0x3c0] sm:$0xff]
    %v6570 = vld [vmem:[#allocation18 + $0x3c8] sm:$0xff]
    %v6571 = vld [vmem:[#allocation18 + $0x3d0] sm:$0xff]
    %v6572 = vld [vmem:[#allocation18 + $0x3d8] sm:$0xff]
    %v6573 = vld [vmem:[#allocation18 + $0x3e0] sm:$0xff]
    %v6574 = vld [vmem:[#allocation18 + $0x3e8] sm:$0xff]
    %v6575 = vld [vmem:[#allocation18 + $0x3f0] sm:$0xff]
    %v6576 = vld [vmem:[#allocation18 + $0x3f8] sm:$0xff]
    %v6577 = vld [vmem:[#allocation6] sm:$0xff]
    %v6578 = vld [vmem:[#allocation6 + $0x8] sm:$0xff]
    %v6582 = vunpack.c.l.s4 1966171168
    %v6583 = vunpack.c.0.s8 %v6582
    %v6584 = vlaneseq
    %v6585 = vshrl.u32 %v6584, 7
    %v6586 = vsub.s32 %v6583, %v6585
    %v6587 = vrot.slane %v6577, %v6586
    %v6588 = vcombine.high %v6587, %v6587
    %v6590 = vunpack.c.l.s4 1966171168
    %v6591 = vunpack.c.0.s8 %v6590
    %v6592 = vlaneseq
    %v6593 = vshrl.u32 %v6592, 7
    %v6594 = vsub.s32 %v6591, %v6593
    %v6595 = vrot.slane %v6578, %v6594
    %v6596 = vcombine.high %v6595, %v6595
    %vm6597 = vsmask.f32 1284
    %vm6598 = vmor %vm225, %vm6597
    %vm6599 = vsmask.f32 2312
    %vm6600 = vmor %vm6598, %vm6599
    %vm6601 = vsmask.f32 3340
    %vm6602 = vmor %vm6600, %vm6601
    %vm6603 = vmor %vm6602, %vm226
    %vm6604 = vsmask.f32 5396
    %vm6605 = vmor %vm6603, %vm6604
    %vm6606 = vsmask.f32 6424
    %vm6607 = vmor %vm6605, %vm6606
    %vm6608 = vsmask.f32 7452
    %vm6609 = vmor %vm6607, %vm6608
    %v6611 = vshrl.u32 %v6587, 16
    %v6613 = vrot.slane %v6611, 7
    %v6614 = vrot.slane %v6613, 1
    %v6616 = vshll.u32 %v6588, 16
    %v6618 = vsel %vm6609, %v6614, %v6616
    %v6620 = vshrl.u32 %v6595, 16
    %v6622 = vrot.slane %v6620, 7
    %v6623 = vrot.slane %v6622, 1
    %v6625 = vshll.u32 %v6596, 16
    %v6627 = vsel %vm6609, %v6623, %v6625
    %s6628 = scalar_lea.vmem [#allocation18], 1024
    %v6629 = vld [vmem:[%s6628] sm:$0xff]
    %v6630 = vld [vmem:[%s6628 + $0x8] sm:$0xff]
    %v6631 = vld [vmem:[%s6628 + $0x10] sm:$0xff]
    %v6632 = vld [vmem:[%s6628 + $0x18] sm:$0xff]
    %v6633 = vld [vmem:[%s6628 + $0x20] sm:$0xff]
    %v6634 = vld [vmem:[%s6628 + $0x28] sm:$0xff]
    %v6635 = vld [vmem:[%s6628 + $0x30] sm:$0xff]
    %v6636 = vld [vmem:[%s6628 + $0x38] sm:$0xff]
    %v6637 = vld [vmem:[%s6628 + $0x40] sm:$0xff]
    %v6638 = vld [vmem:[%s6628 + $0x48] sm:$0xff]
    %v6639 = vld [vmem:[%s6628 + $0x50] sm:$0xff]
    %v6640 = vld [vmem:[%s6628 + $0x58] sm:$0xff]
    %v6641 = vld [vmem:[%s6628 + $0x60] sm:$0xff]
    %v6642 = vld [vmem:[%s6628 + $0x68] sm:$0xff]
    %v6643 = vld [vmem:[%s6628 + $0x70] sm:$0xff]
    %v6644 = vld [vmem:[%s6628 + $0x78] sm:$0xff]
    %v6645 = vld [vmem:[%s6628 + $0x80] sm:$0xff]
    %v6646 = vld [vmem:[%s6628 + $0x88] sm:$0xff]
    %v6647 = vld [vmem:[%s6628 + $0x90] sm:$0xff]
    %v6648 = vld [vmem:[%s6628 + $0x98] sm:$0xff]
    %v6649 = vld [vmem:[%s6628 + $0xa0] sm:$0xff]
    %v6650 = vld [vmem:[%s6628 + $0xa8] sm:$0xff]
    %v6651 = vld [vmem:[%s6628 + $0xb0] sm:$0xff]
    %v6652 = vld [vmem:[%s6628 + $0xb8] sm:$0xff]
    %v6653 = vld [vmem:[%s6628 + $0xc0] sm:$0xff]
    %v6654 = vld [vmem:[%s6628 + $0xc8] sm:$0xff]
    %v6655 = vld [vmem:[%s6628 + $0xd0] sm:$0xff]
    %v6656 = vld [vmem:[%s6628 + $0xd8] sm:$0xff]
    %v6657 = vld [vmem:[%s6628 + $0xe0] sm:$0xff]
    %v6658 = vld [vmem:[%s6628 + $0xe8] sm:$0xff]
    %v6659 = vld [vmem:[%s6628 + $0xf0] sm:$0xff]
    %v6660 = vld [vmem:[%s6628 + $0xf8] sm:$0xff]
    %v6661 = vld [vmem:[%s6628 + $0x100] sm:$0xff]
    %v6662 = vld [vmem:[%s6628 + $0x108] sm:$0xff]
    %v6663 = vld [vmem:[%s6628 + $0x110] sm:$0xff]
    %v6664 = vld [vmem:[%s6628 + $0x118] sm:$0xff]
    %v6665 = vld [vmem:[%s6628 + $0x120] sm:$0xff]
    %v6666 = vld [vmem:[%s6628 + $0x128] sm:$0xff]
    %v6667 = vld [vmem:[%s6628 + $0x130] sm:$0xff]
    %v6668 = vld [vmem:[%s6628 + $0x138] sm:$0xff]
    %v6669 = vld [vmem:[%s6628 + $0x140] sm:$0xff]
    %v6670 = vld [vmem:[%s6628 + $0x148] sm:$0xff]
    %v6671 = vld [vmem:[%s6628 + $0x150] sm:$0xff]
    %v6672 = vld [vmem:[%s6628 + $0x158] sm:$0xff]
    %v6673 = vld [vmem:[%s6628 + $0x160] sm:$0xff]
    %v6674 = vld [vmem:[%s6628 + $0x168] sm:$0xff]
    %v6675 = vld [vmem:[%s6628 + $0x170] sm:$0xff]
    %v6676 = vld [vmem:[%s6628 + $0x178] sm:$0xff]
    %v6677 = vld [vmem:[%s6628 + $0x180] sm:$0xff]
    %v6678 = vld [vmem:[%s6628 + $0x188] sm:$0xff]
    %v6679 = vld [vmem:[%s6628 + $0x190] sm:$0xff]
    %v6680 = vld [vmem:[%s6628 + $0x198] sm:$0xff]
    %v6681 = vld [vmem:[%s6628 + $0x1a0] sm:$0xff]
    %v6682 = vld [vmem:[%s6628 + $0x1a8] sm:$0xff]
    %v6683 = vld [vmem:[%s6628 + $0x1b0] sm:$0xff]
    %v6684 = vld [vmem:[%s6628 + $0x1b8] sm:$0xff]
    %v6685 = vld [vmem:[%s6628 + $0x1c0] sm:$0xff]
    %v6686 = vld [vmem:[%s6628 + $0x1c8] sm:$0xff]
    %v6687 = vld [vmem:[%s6628 + $0x1d0] sm:$0xff]
    %v6688 = vld [vmem:[%s6628 + $0x1d8] sm:$0xff]
    %v6689 = vld [vmem:[%s6628 + $0x1e0] sm:$0xff]
    %v6690 = vld [vmem:[%s6628 + $0x1e8] sm:$0xff]
    %v6691 = vld [vmem:[%s6628 + $0x1f0] sm:$0xff]
    %v6692 = vld [vmem:[%s6628 + $0x1f8] sm:$0xff]
    %v6693 = vld [vmem:[%s6628 + $0x200] sm:$0xff]
    %v6694 = vld [vmem:[%s6628 + $0x208] sm:$0xff]
    %v6695 = vld [vmem:[%s6628 + $0x210] sm:$0xff]
    %v6696 = vld [vmem:[%s6628 + $0x218] sm:$0xff]
    %v6697 = vld [vmem:[%s6628 + $0x220] sm:$0xff]
    %v6698 = vld [vmem:[%s6628 + $0x228] sm:$0xff]
    %v6699 = vld [vmem:[%s6628 + $0x230] sm:$0xff]
    %v6700 = vld [vmem:[%s6628 + $0x238] sm:$0xff]
    %v6701 = vld [vmem:[%s6628 + $0x240] sm:$0xff]
    %v6702 = vld [vmem:[%s6628 + $0x248] sm:$0xff]
    %v6703 = vld [vmem:[%s6628 + $0x250] sm:$0xff]
    %v6704 = vld [vmem:[%s6628 + $0x258] sm:$0xff]
    %v6705 = vld [vmem:[%s6628 + $0x260] sm:$0xff]
    %v6706 = vld [vmem:[%s6628 + $0x268] sm:$0xff]
    %v6707 = vld [vmem:[%s6628 + $0x270] sm:$0xff]
    %v6708 = vld [vmem:[%s6628 + $0x278] sm:$0xff]
    %v6709 = vld [vmem:[%s6628 + $0x280] sm:$0xff]
    %v6710 = vld [vmem:[%s6628 + $0x288] sm:$0xff]
    %v6711 = vld [vmem:[%s6628 + $0x290] sm:$0xff]
    %v6712 = vld [vmem:[%s6628 + $0x298] sm:$0xff]
    %v6713 = vld [vmem:[%s6628 + $0x2a0] sm:$0xff]
    %v6714 = vld [vmem:[%s6628 + $0x2a8] sm:$0xff]
    %v6715 = vld [vmem:[%s6628 + $0x2b0] sm:$0xff]
    %v6716 = vld [vmem:[%s6628 + $0x2b8] sm:$0xff]
    %v6717 = vld [vmem:[%s6628 + $0x2c0] sm:$0xff]
    %v6718 = vld [vmem:[%s6628 + $0x2c8] sm:$0xff]
    %v6719 = vld [vmem:[%s6628 + $0x2d0] sm:$0xff]
    %v6720 = vld [vmem:[%s6628 + $0x2d8] sm:$0xff]
    %v6721 = vld [vmem:[%s6628 + $0x2e0] sm:$0xff]
    %v6722 = vld [vmem:[%s6628 + $0x2e8] sm:$0xff]
    %v6723 = vld [vmem:[%s6628 + $0x2f0] sm:$0xff]
    %v6724 = vld [vmem:[%s6628 + $0x2f8] sm:$0xff]
    %v6725 = vld [vmem:[%s6628 + $0x300] sm:$0xff]
    %v6726 = vld [vmem:[%s6628 + $0x308] sm:$0xff]
    %v6727 = vld [vmem:[%s6628 + $0x310] sm:$0xff]
    %v6728 = vld [vmem:[%s6628 + $0x318] sm:$0xff]
    %v6729 = vld [vmem:[%s6628 + $0x320] sm:$0xff]
    %v6730 = vld [vmem:[%s6628 + $0x328] sm:$0xff]
    %v6731 = vld [vmem:[%s6628 + $0x330] sm:$0xff]
    %v6732 = vld [vmem:[%s6628 + $0x338] sm:$0xff]
    %v6733 = vld [vmem:[%s6628 + $0x340] sm:$0xff]
    %v6734 = vld [vmem:[%s6628 + $0x348] sm:$0xff]
    %v6735 = vld [vmem:[%s6628 + $0x350] sm:$0xff]
    %v6736 = vld [vmem:[%s6628 + $0x358] sm:$0xff]
    %v6737 = vld [vmem:[%s6628 + $0x360] sm:$0xff]
    %v6738 = vld [vmem:[%s6628 + $0x368] sm:$0xff]
    %v6739 = vld [vmem:[%s6628 + $0x370] sm:$0xff]
    %v6740 = vld [vmem:[%s6628 + $0x378] sm:$0xff]
    %v6741 = vld [vmem:[%s6628 + $0x380] sm:$0xff]
    %v6742 = vld [vmem:[%s6628 + $0x388] sm:$0xff]
    %v6743 = vld [vmem:[%s6628 + $0x390] sm:$0xff]
    %v6744 = vld [vmem:[%s6628 + $0x398] sm:$0xff]
    %v6745 = vld [vmem:[%s6628 + $0x3a0] sm:$0xff]
    %v6746 = vld [vmem:[%s6628 + $0x3a8] sm:$0xff]
    %v6747 = vld [vmem:[%s6628 + $0x3b0] sm:$0xff]
    %v6748 = vld [vmem:[%s6628 + $0x3b8] sm:$0xff]
    %v6749 = vld [vmem:[%s6628 + $0x3c0] sm:$0xff]
    %v6750 = vld [vmem:[%s6628 + $0x3c8] sm:$0xff]
    %v6751 = vld [vmem:[%s6628 + $0x3d0] sm:$0xff]
    %v6752 = vld [vmem:[%s6628 + $0x3d8] sm:$0xff]
    %v6753 = vld [vmem:[%s6628 + $0x3e0] sm:$0xff]
    %v6754 = vld [vmem:[%s6628 + $0x3e8] sm:$0xff]
    %v6755 = vld [vmem:[%s6628 + $0x3f0] sm:$0xff]
    %v6756 = vld [vmem:[%s6628 + $0x3f8] sm:$0xff]
    %v6757 = vcombine.low %v6618, %v6627
    %v6759 = vunpack.c.l.s4 1966171168
    %v6760 = vunpack.c.0.s8 %v6759
    %v6761 = vlaneseq
    %v6762 = vshrl.u32 %v6761, 7
    %v6763 = vsub.s32 %v6760, %v6762
    %v6764 = vrot.slane %v6757, %v6763
    %v6765 = vcombine.high %v6764, %v6764
    %v6767 = vunpack.c.l.s4 1966171168
    %v6768 = vunpack.c.0.s8 %v6767
    %v6769 = vlaneseq
    %v6770 = vshrl.u32 %v6769, 7
    %v6771 = vsub.s32 %v6768, %v6770
    %v6772 = vrot.slane %v6764, %v6771
    %v6774 = vunpack.c.l.s4 1966171168
    %v6775 = vunpack.c.0.s8 %v6774
    %v6776 = vlaneseq
    %v6777 = vshrl.u32 %v6776, 7
    %v6778 = vsub.s32 %v6775, %v6777
    %v6779 = vrot.slane %v6765, %v6778
    %v6780 = vcombine.high %v6772, %v6772
    %v6781 = vcombine.high %v6779, %v6779
    %v6914 = vunpack.c.l.b16 %v6629
    %v6915 = vunpack.c.h.b16 %v6629
    %v6916 = vunpack.c.l.b16 %v6630
    %v6917 = vunpack.c.h.b16 %v6630
    %v6918 = vunpack.c.l.b16 %v6631
    %v6919 = vunpack.c.h.b16 %v6631
    %v6920 = vunpack.c.l.b16 %v6632
    %v6921 = vunpack.c.h.b16 %v6632
    %v6922 = vunpack.c.l.b16 %v6633
    %v6923 = vunpack.c.h.b16 %v6633
    %v6924 = vunpack.c.l.b16 %v6634
    %v6925 = vunpack.c.h.b16 %v6634
    %v6926 = vunpack.c.l.b16 %v6635
    %v6927 = vunpack.c.h.b16 %v6635
    %v6928 = vunpack.c.l.b16 %v6636
    %v6929 = vunpack.c.h.b16 %v6636
    %v6930 = vunpack.c.l.b16 %v6637
    %v6931 = vunpack.c.h.b16 %v6637
    %v6932 = vunpack.c.l.b16 %v6638
    %v6933 = vunpack.c.h.b16 %v6638
    %v6934 = vunpack.c.l.b16 %v6639
    %v6935 = vunpack.c.h.b16 %v6639
    %v6936 = vunpack.c.l.b16 %v6640
    %v6937 = vunpack.c.h.b16 %v6640
    %v6938 = vunpack.c.l.b16 %v6641
    %v6939 = vunpack.c.h.b16 %v6641
    %v6940 = vunpack.c.l.b16 %v6642
    %v6941 = vunpack.c.h.b16 %v6642
    %v6942 = vunpack.c.l.b16 %v6643
    %v6943 = vunpack.c.h.b16 %v6643
    %v6944 = vunpack.c.l.b16 %v6644
    %v6945 = vunpack.c.h.b16 %v6644
    %v6946 = vunpack.c.l.b16 %v6645
    %v6947 = vunpack.c.h.b16 %v6645
    %v6948 = vunpack.c.l.b16 %v6646
    %v6949 = vunpack.c.h.b16 %v6646
    %v6950 = vunpack.c.l.b16 %v6647
    %v6951 = vunpack.c.h.b16 %v6647
    %v6952 = vunpack.c.l.b16 %v6648
    %v6953 = vunpack.c.h.b16 %v6648
    %v6954 = vunpack.c.l.b16 %v6649
    %v6955 = vunpack.c.h.b16 %v6649
    %v6956 = vunpack.c.l.b16 %v6650
    %v6957 = vunpack.c.h.b16 %v6650
    %v6958 = vunpack.c.l.b16 %v6651
    %v6959 = vunpack.c.h.b16 %v6651
    %v6960 = vunpack.c.l.b16 %v6652
    %v6961 = vunpack.c.h.b16 %v6652
    %v6962 = vunpack.c.l.b16 %v6653
    %v6963 = vunpack.c.h.b16 %v6653
    %v6964 = vunpack.c.l.b16 %v6654
    %v6965 = vunpack.c.h.b16 %v6654
    %v6966 = vunpack.c.l.b16 %v6655
    %v6967 = vunpack.c.h.b16 %v6655
    %v6968 = vunpack.c.l.b16 %v6656
    %v6969 = vunpack.c.h.b16 %v6656
    %v6970 = vunpack.c.l.b16 %v6657
    %v6971 = vunpack.c.h.b16 %v6657
    %v6972 = vunpack.c.l.b16 %v6658
    %v6973 = vunpack.c.h.b16 %v6658
    %v6974 = vunpack.c.l.b16 %v6659
    %v6975 = vunpack.c.h.b16 %v6659
    %v6976 = vunpack.c.l.b16 %v6660
    %v6977 = vunpack.c.h.b16 %v6660
    %v6978 = vunpack.c.l.b16 %v6661
    %v6979 = vunpack.c.h.b16 %v6661
    %v6980 = vunpack.c.l.b16 %v6662
    %v6981 = vunpack.c.h.b16 %v6662
    %v6982 = vunpack.c.l.b16 %v6663
    %v6983 = vunpack.c.h.b16 %v6663
    %v6984 = vunpack.c.l.b16 %v6664
    %v6985 = vunpack.c.h.b16 %v6664
    %v6986 = vunpack.c.l.b16 %v6665
    %v6987 = vunpack.c.h.b16 %v6665
    %v6988 = vunpack.c.l.b16 %v6666
    %v6989 = vunpack.c.h.b16 %v6666
    %v6990 = vunpack.c.l.b16 %v6667
    %v6991 = vunpack.c.h.b16 %v6667
    %v6992 = vunpack.c.l.b16 %v6668
    %v6993 = vunpack.c.h.b16 %v6668
    %v6994 = vunpack.c.l.b16 %v6669
    %v6995 = vunpack.c.h.b16 %v6669
    %v6996 = vunpack.c.l.b16 %v6670
    %v6997 = vunpack.c.h.b16 %v6670
    %v6998 = vunpack.c.l.b16 %v6671
    %v6999 = vunpack.c.h.b16 %v6671
    %v7000 = vunpack.c.l.b16 %v6672
    %v7001 = vunpack.c.h.b16 %v6672
    %v7002 = vunpack.c.l.b16 %v6673
    %v7003 = vunpack.c.h.b16 %v6673
    %v7004 = vunpack.c.l.b16 %v6674
    %v7005 = vunpack.c.h.b16 %v6674
    %v7006 = vunpack.c.l.b16 %v6675
    %v7007 = vunpack.c.h.b16 %v6675
    %v7008 = vunpack.c.l.b16 %v6676
    %v7009 = vunpack.c.h.b16 %v6676
    %v7010 = vunpack.c.l.b16 %v6677
    %v7011 = vunpack.c.h.b16 %v6677
    %v7012 = vunpack.c.l.b16 %v6678
    %v7013 = vunpack.c.h.b16 %v6678
    %v7014 = vunpack.c.l.b16 %v6679
    %v7015 = vunpack.c.h.b16 %v6679
    %v7016 = vunpack.c.l.b16 %v6680
    %v7017 = vunpack.c.h.b16 %v6680
    %v7018 = vunpack.c.l.b16 %v6681
    %v7019 = vunpack.c.h.b16 %v6681
    %v7020 = vunpack.c.l.b16 %v6682
    %v7021 = vunpack.c.h.b16 %v6682
    %v7022 = vunpack.c.l.b16 %v6683
    %v7023 = vunpack.c.h.b16 %v6683
    %v7024 = vunpack.c.l.b16 %v6684
    %v7025 = vunpack.c.h.b16 %v6684
    %v7026 = vunpack.c.l.b16 %v6685
    %v7027 = vunpack.c.h.b16 %v6685
    %v7028 = vunpack.c.l.b16 %v6686
    %v7029 = vunpack.c.h.b16 %v6686
    %v7030 = vunpack.c.l.b16 %v6687
    %v7031 = vunpack.c.h.b16 %v6687
    %v7032 = vunpack.c.l.b16 %v6688
    %v7033 = vunpack.c.h.b16 %v6688
    %v7034 = vunpack.c.l.b16 %v6689
    %v7035 = vunpack.c.h.b16 %v6689
    %v7036 = vunpack.c.l.b16 %v6690
    %v7037 = vunpack.c.h.b16 %v6690
    %v7038 = vunpack.c.l.b16 %v6691
    %v7039 = vunpack.c.h.b16 %v6691
    %v7040 = vunpack.c.l.b16 %v6692
    %v7041 = vunpack.c.h.b16 %v6692
    %v7042 = vunpack.c.l.b16 %v6693
    %v7043 = vunpack.c.h.b16 %v6693
    %v7044 = vunpack.c.l.b16 %v6694
    %v7045 = vunpack.c.h.b16 %v6694
    %v7046 = vunpack.c.l.b16 %v6695
    %v7047 = vunpack.c.h.b16 %v6695
    %v7048 = vunpack.c.l.b16 %v6696
    %v7049 = vunpack.c.h.b16 %v6696
    %v7050 = vunpack.c.l.b16 %v6697
    %v7051 = vunpack.c.h.b16 %v6697
    %v7052 = vunpack.c.l.b16 %v6698
    %v7053 = vunpack.c.h.b16 %v6698
    %v7054 = vunpack.c.l.b16 %v6699
    %v7055 = vunpack.c.h.b16 %v6699
    %v7056 = vunpack.c.l.b16 %v6700
    %v7057 = vunpack.c.h.b16 %v6700
    %v7058 = vunpack.c.l.b16 %v6701
    %v7059 = vunpack.c.h.b16 %v6701
    %v7060 = vunpack.c.l.b16 %v6702
    %v7061 = vunpack.c.h.b16 %v6702
    %v7062 = vunpack.c.l.b16 %v6703
    %v7063 = vunpack.c.h.b16 %v6703
    %v7064 = vunpack.c.l.b16 %v6704
    %v7065 = vunpack.c.h.b16 %v6704
    %v7066 = vunpack.c.l.b16 %v6705
    %v7067 = vunpack.c.h.b16 %v6705
    %v7068 = vunpack.c.l.b16 %v6706
    %v7069 = vunpack.c.h.b16 %v6706
    %v7070 = vunpack.c.l.b16 %v6707
    %v7071 = vunpack.c.h.b16 %v6707
    %v7072 = vunpack.c.l.b16 %v6708
    %v7073 = vunpack.c.h.b16 %v6708
    %v7074 = vunpack.c.l.b16 %v6709
    %v7075 = vunpack.c.h.b16 %v6709
    %v7076 = vunpack.c.l.b16 %v6710
    %v7077 = vunpack.c.h.b16 %v6710
    %v7078 = vunpack.c.l.b16 %v6711
    %v7079 = vunpack.c.h.b16 %v6711
    %v7080 = vunpack.c.l.b16 %v6712
    %v7081 = vunpack.c.h.b16 %v6712
    %v7082 = vunpack.c.l.b16 %v6713
    %v7083 = vunpack.c.h.b16 %v6713
    %v7084 = vunpack.c.l.b16 %v6714
    %v7085 = vunpack.c.h.b16 %v6714
    %v7086 = vunpack.c.l.b16 %v6715
    %v7087 = vunpack.c.h.b16 %v6715
    %v7088 = vunpack.c.l.b16 %v6716
    %v7089 = vunpack.c.h.b16 %v6716
    %v7090 = vunpack.c.l.b16 %v6717
    %v7091 = vunpack.c.h.b16 %v6717
    %v7092 = vunpack.c.l.b16 %v6718
    %v7093 = vunpack.c.h.b16 %v6718
    %v7094 = vunpack.c.l.b16 %v6719
    %v7095 = vunpack.c.h.b16 %v6719
    %v7096 = vunpack.c.l.b16 %v6720
    %v7097 = vunpack.c.h.b16 %v6720
    %v7098 = vunpack.c.l.b16 %v6721
    %v7099 = vunpack.c.h.b16 %v6721
    %v7100 = vunpack.c.l.b16 %v6722
    %v7101 = vunpack.c.h.b16 %v6722
    %v7102 = vunpack.c.l.b16 %v6723
    %v7103 = vunpack.c.h.b16 %v6723
    %v7104 = vunpack.c.l.b16 %v6724
    %v7105 = vunpack.c.h.b16 %v6724
    %v7106 = vunpack.c.l.b16 %v6725
    %v7107 = vunpack.c.h.b16 %v6725
    %v7108 = vunpack.c.l.b16 %v6726
    %v7109 = vunpack.c.h.b16 %v6726
    %v7110 = vunpack.c.l.b16 %v6727
    %v7111 = vunpack.c.h.b16 %v6727
    %v7112 = vunpack.c.l.b16 %v6728
    %v7113 = vunpack.c.h.b16 %v6728
    %v7114 = vunpack.c.l.b16 %v6729
    %v7115 = vunpack.c.h.b16 %v6729
    %v7116 = vunpack.c.l.b16 %v6730
    %v7117 = vunpack.c.h.b16 %v6730
    %v7118 = vunpack.c.l.b16 %v6731
    %v7119 = vunpack.c.h.b16 %v6731
    %v7120 = vunpack.c.l.b16 %v6732
    %v7121 = vunpack.c.h.b16 %v6732
    %v7122 = vunpack.c.l.b16 %v6733
    %v7123 = vunpack.c.h.b16 %v6733
    %v7124 = vunpack.c.l.b16 %v6734
    %v7125 = vunpack.c.h.b16 %v6734
    %v7126 = vunpack.c.l.b16 %v6735
    %v7127 = vunpack.c.h.b16 %v6735
    %v7128 = vunpack.c.l.b16 %v6736
    %v7129 = vunpack.c.h.b16 %v6736
    %v7130 = vunpack.c.l.b16 %v6737
    %v7131 = vunpack.c.h.b16 %v6737
    %v7132 = vunpack.c.l.b16 %v6738
    %v7133 = vunpack.c.h.b16 %v6738
    %v7134 = vunpack.c.l.b16 %v6739
    %v7135 = vunpack.c.h.b16 %v6739
    %v7136 = vunpack.c.l.b16 %v6740
    %v7137 = vunpack.c.h.b16 %v6740
    %v7138 = vunpack.c.l.b16 %v6741
    %v7139 = vunpack.c.h.b16 %v6741
    %v7140 = vunpack.c.l.b16 %v6742
    %v7141 = vunpack.c.h.b16 %v6742
    %v7142 = vunpack.c.l.b16 %v6743
    %v7143 = vunpack.c.h.b16 %v6743
    %v7144 = vunpack.c.l.b16 %v6744
    %v7145 = vunpack.c.h.b16 %v6744
    %v7146 = vunpack.c.l.b16 %v6745
    %v7147 = vunpack.c.h.b16 %v6745
    %v7148 = vunpack.c.l.b16 %v6746
    %v7149 = vunpack.c.h.b16 %v6746
    %v7150 = vunpack.c.l.b16 %v6747
    %v7151 = vunpack.c.h.b16 %v6747
    %v7152 = vunpack.c.l.b16 %v6748
    %v7153 = vunpack.c.h.b16 %v6748
    %v7154 = vunpack.c.l.b16 %v6749
    %v7155 = vunpack.c.h.b16 %v6749
    %v7156 = vunpack.c.l.b16 %v6750
    %v7157 = vunpack.c.h.b16 %v6750
    %v7158 = vunpack.c.l.b16 %v6751
    %v7159 = vunpack.c.h.b16 %v6751
    %v7160 = vunpack.c.l.b16 %v6752
    %v7161 = vunpack.c.h.b16 %v6752
    %v7162 = vunpack.c.l.b16 %v6753
    %v7163 = vunpack.c.h.b16 %v6753
    %v7164 = vunpack.c.l.b16 %v6754
    %v7165 = vunpack.c.h.b16 %v6754
    %v7166 = vunpack.c.l.b16 %v6755
    %v7167 = vunpack.c.h.b16 %v6755
    %v7168 = vunpack.c.l.b16 %v6756
    %v7169 = vunpack.c.h.b16 %v6756
    %v7170 = vpack.c.b16 %v6918, %v6914
    %v7171 = vpack.c.b16 %v6919, %v6915
    %v7172 = vpack.c.b16 %v6920, %v6916
    %v7173 = vpack.c.b16 %v6921, %v6917
    %v7174 = vpack.c.b16 %v6926, %v6922
    %v7175 = vpack.c.b16 %v6927, %v6923
    %v7176 = vpack.c.b16 %v6928, %v6924
    %v7177 = vpack.c.b16 %v6929, %v6925
    %v7178 = vpack.c.b16 %v6934, %v6930
    %v7179 = vpack.c.b16 %v6935, %v6931
    %v7180 = vpack.c.b16 %v6936, %v6932
    %v7181 = vpack.c.b16 %v6937, %v6933
    %v7182 = vpack.c.b16 %v6942, %v6938
    %v7183 = vpack.c.b16 %v6943, %v6939
    %v7184 = vpack.c.b16 %v6944, %v6940
    %v7185 = vpack.c.b16 %v6945, %v6941
    %v7186 = vpack.c.b16 %v6950, %v6946
    %v7187 = vpack.c.b16 %v6951, %v6947
    %v7188 = vpack.c.b16 %v6952, %v6948
    %v7189 = vpack.c.b16 %v6953, %v6949
    %v7190 = vpack.c.b16 %v6958, %v6954
    %v7191 = vpack.c.b16 %v6959, %v6955
    %v7192 = vpack.c.b16 %v6960, %v6956
    %v7193 = vpack.c.b16 %v6961, %v6957
    %v7194 = vpack.c.b16 %v6966, %v6962
    %v7195 = vpack.c.b16 %v6967, %v6963
    %v7196 = vpack.c.b16 %v6968, %v6964
    %v7197 = vpack.c.b16 %v6969, %v6965
    %v7198 = vpack.c.b16 %v6974, %v6970
    %v7199 = vpack.c.b16 %v6975, %v6971
    %v7200 = vpack.c.b16 %v6976, %v6972
    %v7201 = vpack.c.b16 %v6977, %v6973
    %v7202 = vpack.c.b16 %v6982, %v6978
    %v7203 = vpack.c.b16 %v6983, %v6979
    %v7204 = vpack.c.b16 %v6984, %v6980
    %v7205 = vpack.c.b16 %v6985, %v6981
    %v7206 = vpack.c.b16 %v6990, %v6986
    %v7207 = vpack.c.b16 %v6991, %v6987
    %v7208 = vpack.c.b16 %v6992, %v6988
    %v7209 = vpack.c.b16 %v6993, %v6989
    %v7210 = vpack.c.b16 %v6998, %v6994
    %v7211 = vpack.c.b16 %v6999, %v6995
    %v7212 = vpack.c.b16 %v7000, %v6996
    %v7213 = vpack.c.b16 %v7001, %v6997
    %v7214 = vpack.c.b16 %v7006, %v7002
    %v7215 = vpack.c.b16 %v7007, %v7003
    %v7216 = vpack.c.b16 %v7008, %v7004
    %v7217 = vpack.c.b16 %v7009, %v7005
    %v7218 = vpack.c.b16 %v7014, %v7010
    %v7219 = vpack.c.b16 %v7015, %v7011
    %v7220 = vpack.c.b16 %v7016, %v7012
    %v7221 = vpack.c.b16 %v7017, %v7013
    %v7222 = vpack.c.b16 %v7022, %v7018
    %v7223 = vpack.c.b16 %v7023, %v7019
    %v7224 = vpack.c.b16 %v7024, %v7020
    %v7225 = vpack.c.b16 %v7025, %v7021
    %v7226 = vpack.c.b16 %v7030, %v7026
    %v7227 = vpack.c.b16 %v7031, %v7027
    %v7228 = vpack.c.b16 %v7032, %v7028
    %v7229 = vpack.c.b16 %v7033, %v7029
    %v7230 = vpack.c.b16 %v7038, %v7034
    %v7231 = vpack.c.b16 %v7039, %v7035
    %v7232 = vpack.c.b16 %v7040, %v7036
    %v7233 = vpack.c.b16 %v7041, %v7037
    %v7234 = vpack.c.b16 %v7046, %v7042
    %v7235 = vpack.c.b16 %v7047, %v7043
    %v7236 = vpack.c.b16 %v7048, %v7044
    %v7237 = vpack.c.b16 %v7049, %v7045
    %v7238 = vpack.c.b16 %v7054, %v7050
    %v7239 = vpack.c.b16 %v7055, %v7051
    %v7240 = vpack.c.b16 %v7056, %v7052
    %v7241 = vpack.c.b16 %v7057, %v7053
    %v7242 = vpack.c.b16 %v7062, %v7058
    %v7243 = vpack.c.b16 %v7063, %v7059
    %v7244 = vpack.c.b16 %v7064, %v7060
    %v7245 = vpack.c.b16 %v7065, %v7061
    %v7246 = vpack.c.b16 %v7070, %v7066
    %v7247 = vpack.c.b16 %v7071, %v7067
    %v7248 = vpack.c.b16 %v7072, %v7068
    %v7249 = vpack.c.b16 %v7073, %v7069
    %v7250 = vpack.c.b16 %v7078, %v7074
    %v7251 = vpack.c.b16 %v7079, %v7075
    %v7252 = vpack.c.b16 %v7080, %v7076
    %v7253 = vpack.c.b16 %v7081, %v7077
    %v7254 = vpack.c.b16 %v7086, %v7082
    %v7255 = vpack.c.b16 %v7087, %v7083
    %v7256 = vpack.c.b16 %v7088, %v7084
    %v7257 = vpack.c.b16 %v7089, %v7085
    %v7258 = vpack.c.b16 %v7094, %v7090
    %v7259 = vpack.c.b16 %v7095, %v7091
    %v7260 = vpack.c.b16 %v7096, %v7092
    %v7261 = vpack.c.b16 %v7097, %v7093
    %v7262 = vpack.c.b16 %v7102, %v7098
    %v7263 = vpack.c.b16 %v7103, %v7099
    %v7264 = vpack.c.b16 %v7104, %v7100
    %v7265 = vpack.c.b16 %v7105, %v7101
    %v7266 = vpack.c.b16 %v7110, %v7106
    %v7267 = vpack.c.b16 %v7111, %v7107
    %v7268 = vpack.c.b16 %v7112, %v7108
    %v7269 = vpack.c.b16 %v7113, %v7109
    %v7270 = vpack.c.b16 %v7118, %v7114
    %v7271 = vpack.c.b16 %v7119, %v7115
    %v7272 = vpack.c.b16 %v7120, %v7116
    %v7273 = vpack.c.b16 %v7121, %v7117
    %v7274 = vpack.c.b16 %v7126, %v7122
    %v7275 = vpack.c.b16 %v7127, %v7123
    %v7276 = vpack.c.b16 %v7128, %v7124
    %v7277 = vpack.c.b16 %v7129, %v7125
    %v7278 = vpack.c.b16 %v7134, %v7130
    %v7279 = vpack.c.b16 %v7135, %v7131
    %v7280 = vpack.c.b16 %v7136, %v7132
    %v7281 = vpack.c.b16 %v7137, %v7133
    %v7282 = vpack.c.b16 %v7142, %v7138
    %v7283 = vpack.c.b16 %v7143, %v7139
    %v7284 = vpack.c.b16 %v7144, %v7140
    %v7285 = vpack.c.b16 %v7145, %v7141
    %v7286 = vpack.c.b16 %v7150, %v7146
    %v7287 = vpack.c.b16 %v7151, %v7147
    %v7288 = vpack.c.b16 %v7152, %v7148
    %v7289 = vpack.c.b16 %v7153, %v7149
    %v7290 = vpack.c.b16 %v7158, %v7154
    %v7291 = vpack.c.b16 %v7159, %v7155
    %v7292 = vpack.c.b16 %v7160, %v7156
    %v7293 = vpack.c.b16 %v7161, %v7157
    %v7294 = vpack.c.b16 %v7166, %v7162
    %v7295 = vpack.c.b16 %v7167, %v7163
    %v7296 = vpack.c.b16 %v7168, %v7164
    %v7297 = vpack.c.b16 %v7169, %v7165
    %7426 = vmatprep.subr.bf16.mxu0 %v7171
    %7427 = vmatpush1.bf16.msra.mxu0 %v7170
    %7428 = vmatprep.subr.bf16.mxu0 %v7175
    %7429 = vmatpush1.bf16.msra.mxu0 %v7174
    %7430 = vmatprep.subr.bf16.mxu0 %v7179
    %7431 = vmatpush1.bf16.msra.mxu0 %v7178
    %7432 = vmatprep.subr.bf16.mxu0 %v7183
    %7433 = vmatpush1.bf16.msra.mxu0 %v7182
    %7434 = vmatprep.subr.bf16.mxu0 %v7187
    %7435 = vmatpush1.bf16.msra.mxu0 %v7186
    %7436 = vmatprep.subr.bf16.mxu0 %v7191
    %7437 = vmatpush1.bf16.msra.mxu0 %v7190
    %7438 = vmatprep.subr.bf16.mxu0 %v7195
    %7439 = vmatpush1.bf16.msra.mxu0 %v7194
    %7440 = vmatprep.subr.bf16.mxu0 %v7199
    %7441 = vmatpush1.bf16.msra.mxu0 %v7198
    %7442 = vmatprep.subr.bf16.mxu0 %v7203
    %7443 = vmatpush1.bf16.msra.mxu0 %v7202
    %7444 = vmatprep.subr.bf16.mxu0 %v7207
    %7445 = vmatpush1.bf16.msra.mxu0 %v7206
    %7446 = vmatprep.subr.bf16.mxu0 %v7211
    %7447 = vmatpush1.bf16.msra.mxu0 %v7210
    %7448 = vmatprep.subr.bf16.mxu0 %v7215
    %7449 = vmatpush1.bf16.msra.mxu0 %v7214
    %7450 = vmatprep.subr.bf16.mxu0 %v7219
    %7451 = vmatpush1.bf16.msra.mxu0 %v7218
    %7452 = vmatprep.subr.bf16.mxu0 %v7223
    %7453 = vmatpush1.bf16.msra.mxu0 %v7222
    %7454 = vmatprep.subr.bf16.mxu0 %v7227
    %7455 = vmatpush1.bf16.msra.mxu0 %v7226
    %7456 = vmatprep.subr.bf16.mxu0 %v7231
    %7457 = vmatpush1.bf16.msra.mxu0 %v7230
    %7458 = vmatprep.mubr.bf16.mxu0 %v6779
    %7459 = vmatmul.mubr.bf16.gmra.mrb[0].mxu0 %v6772
    %v7460 = vpop.f32.mrb[0].mxu0
    %v7461 = vadd.f32 0.0, %v7460
    %v7462 = vpop.f32.mrb[0].mxu0
    %v7463 = vadd.f32 0.0, %v7462
    %v7464 = vpop.f32.mrb[0].mxu0
    %v7465 = vpop.f32.mrb[0].mxu0
    %7466 = vdwg.mxu0
    %7467 = vmatprep.subr.bf16.mxu0 %v7235
    %7468 = vmatpush1.bf16.msra.mxu0 %v7234
    %7469 = vmatprep.subr.bf16.mxu0 %v7239
    %7470 = vmatpush1.bf16.msra.mxu0 %v7238
    %7471 = vmatprep.subr.bf16.mxu0 %v7243
    %7472 = vmatpush1.bf16.msra.mxu0 %v7242
    %7473 = vmatprep.subr.bf16.mxu0 %v7247
    %7474 = vmatpush1.bf16.msra.mxu0 %v7246
    %7475 = vmatprep.subr.bf16.mxu0 %v7251
    %7476 = vmatpush1.bf16.msra.mxu0 %v7250
    %7477 = vmatprep.subr.bf16.mxu0 %v7255
    %7478 = vmatpush1.bf16.msra.mxu0 %v7254
    %7479 = vmatprep.subr.bf16.mxu0 %v7259
    %7480 = vmatpush1.bf16.msra.mxu0 %v7258
    %7481 = vmatprep.subr.bf16.mxu0 %v7263
    %7482 = vmatpush1.bf16.msra.mxu0 %v7262
    %7483 = vmatprep.subr.bf16.mxu0 %v7267
    %7484 = vmatpush1.bf16.msra.mxu0 %v7266
    %7485 = vmatprep.subr.bf16.mxu0 %v7271
    %7486 = vmatpush1.bf16.msra.mxu0 %v7270
    %7487 = vmatprep.subr.bf16.mxu0 %v7275
    %7488 = vmatpush1.bf16.msra.mxu0 %v7274
    %7489 = vmatprep.subr.bf16.mxu0 %v7279
    %7490 = vmatpush1.bf16.msra.mxu0 %v7278
    %7491 = vmatprep.subr.bf16.mxu0 %v7283
    %7492 = vmatpush1.bf16.msra.mxu0 %v7282
    %7493 = vmatprep.subr.bf16.mxu0 %v7287
    %7494 = vmatpush1.bf16.msra.mxu0 %v7286
    %7495 = vmatprep.subr.bf16.mxu0 %v7291
    %7496 = vmatpush1.bf16.msra.mxu0 %v7290
    %7497 = vmatprep.subr.bf16.mxu0 %v7295
    %7498 = vmatpush1.bf16.msra.mxu0 %v7294
    %7499 = vmatprep.mubr.bf16.mxu0 %v6781
    %7500 = vmatmul.mubr.bf16.gmra.mrb[0].mxu0 %v6780
    %v7501 = vpop.f32.mrb[0].mxu0
    %v7502 = vadd.f32 %v7461, %v7501
    %v7503 = vpop.f32.mrb[0].mxu0
    %v7504 = vadd.f32 %v7463, %v7503
    %v7505 = vpop.f32.mrb[0].mxu0
    %v7506 = vpop.f32.mrb[0].mxu0
    %7507 = vdwg.mxu0
    %7508 = vmatprep.subr.bf16.mxu0 %v7173
    %7509 = vmatpush1.bf16.msra.mxu0 %v7172
    %7510 = vmatprep.subr.bf16.mxu0 %v7177
    %7511 = vmatpush1.bf16.msra.mxu0 %v7176
    %7512 = vmatprep.subr.bf16.mxu0 %v7181
    %7513 = vmatpush1.bf16.msra.mxu0 %v7180
    %7514 = vmatprep.subr.bf16.mxu0 %v7185
    %7515 = vmatpush1.bf16.msra.mxu0 %v7184
    %7516 = vmatprep.subr.bf16.mxu0 %v7189
    %7517 = vmatpush1.bf16.msra.mxu0 %v7188
    %7518 = vmatprep.subr.bf16.mxu0 %v7193
    %7519 = vmatpush1.bf16.msra.mxu0 %v7192
    %7520 = vmatprep.subr.bf16.mxu0 %v7197
    %7521 = vmatpush1.bf16.msra.mxu0 %v7196
    %7522 = vmatprep.subr.bf16.mxu0 %v7201
    %7523 = vmatpush1.bf16.msra.mxu0 %v7200
    %7524 = vmatprep.subr.bf16.mxu0 %v7205
    %7525 = vmatpush1.bf16.msra.mxu0 %v7204
    %7526 = vmatprep.subr.bf16.mxu0 %v7209
    %7527 = vmatpush1.bf16.msra.mxu0 %v7208
    %7528 = vmatprep.subr.bf16.mxu0 %v7213
    %7529 = vmatpush1.bf16.msra.mxu0 %v7212
    %7530 = vmatprep.subr.bf16.mxu0 %v7217
    %7531 = vmatpush1.bf16.msra.mxu0 %v7216
    %7532 = vmatprep.subr.bf16.mxu0 %v7221
    %7533 = vmatpush1.bf16.msra.mxu0 %v7220
    %7534 = vmatprep.subr.bf16.mxu0 %v7225
    %7535 = vmatpush1.bf16.msra.mxu0 %v7224
    %7536 = vmatprep.subr.bf16.mxu0 %v7229
    %7537 = vmatpush1.bf16.msra.mxu0 %v7228
    %7538 = vmatprep.subr.bf16.mxu0 %v7233
    %7539 = vmatpush1.bf16.msra.mxu0 %v7232
    %7540 = vmatprep.mubr.bf16.mxu0 %v6779
    %7541 = vmatmul.mubr.bf16.gmra.mrb[0].mxu0 %v6772
    %v7542 = vpop.f32.mrb[0].mxu0
    %v7543 = vadd.f32 0.0, %v7542
    %v7544 = vpop.f32.mrb[0].mxu0
    %v7545 = vadd.f32 0.0, %v7544
    %v7546 = vpop.f32.mrb[0].mxu0
    %v7547 = vpop.f32.mrb[0].mxu0
    %7548 = vdwg.mxu0
    %7549 = vmatprep.subr.bf16.mxu0 %v7237
    %7550 = vmatpush1.bf16.msra.mxu0 %v7236
    %7551 = vmatprep.subr.bf16.mxu0 %v7241
    %7552 = vmatpush1.bf16.msra.mxu0 %v7240
    %7553 = vmatprep.subr.bf16.mxu0 %v7245
    %7554 = vmatpush1.bf16.msra.mxu0 %v7244
    %7555 = vmatprep.subr.bf16.mxu0 %v7249
    %7556 = vmatpush1.bf16.msra.mxu0 %v7248
    %7557 = vmatprep.subr.bf16.mxu0 %v7253
    %7558 = vmatpush1.bf16.msra.mxu0 %v7252
    %7559 = vmatprep.subr.bf16.mxu0 %v7257
    %7560 = vmatpush1.bf16.msra.mxu0 %v7256
    %7561 = vmatprep.subr.bf16.mxu0 %v7261
    %7562 = vmatpush1.bf16.msra.mxu0 %v7260
    %7563 = vmatprep.subr.bf16.mxu0 %v7265
    %7564 = vmatpush1.bf16.msra.mxu0 %v7264
    %7565 = vmatprep.subr.bf16.mxu0 %v7269
    %7566 = vmatpush1.bf16.msra.mxu0 %v7268
    %7567 = vmatprep.subr.bf16.mxu0 %v7273
    %7568 = vmatpush1.bf16.msra.mxu0 %v7272
    %7569 = vmatprep.subr.bf16.mxu0 %v7277
    %7570 = vmatpush1.bf16.msra.mxu0 %v7276
    %7571 = vmatprep.subr.bf16.mxu0 %v7281
    %7572 = vmatpush1.bf16.msra.mxu0 %v7280
    %7573 = vmatprep.subr.bf16.mxu0 %v7285
    %7574 = vmatpush1.bf16.msra.mxu0 %v7284
    %7575 = vmatprep.subr.bf16.mxu0 %v7289
    %7576 = vmatpush1.bf16.msra.mxu0 %v7288
    %7577 = vmatprep.subr.bf16.mxu0 %v7293
    %7578 = vmatpush1.bf16.msra.mxu0 %v7292
    %7579 = vmatprep.subr.bf16.mxu0 %v7297
    %7580 = vmatpush1.bf16.msra.mxu0 %v7296
    %7581 = vmatprep.mubr.bf16.mxu0 %v6781
    %7582 = vmatmul.mubr.bf16.gmra.mrb[0].mxu0 %v6780
    %v7583 = vpop.f32.mrb[0].mxu0
    %v7584 = vadd.f32 %v7543, %v7583
    %v7585 = vpop.f32.mrb[0].mxu0
    %v7586 = vadd.f32 %v7545, %v7585
    %v7587 = vpop.f32.mrb[0].mxu0
    %v7588 = vpop.f32.mrb[0].mxu0
    %7589 = vdwg.mxu0
    %v7590 = vcombine.low %v6441, %v6448
    %v7592 = vunpack.c.l.s4 1966171168
    %v7593 = vunpack.c.0.s8 %v7592
    %v7594 = vlaneseq
    %v7595 = vshrl.u32 %v7594, 7
    %v7596 = vsub.s32 %v7593, %v7595
    %v7597 = vrot.slane %v7590, %v7596
    %v7598 = vcombine.high %v7597, %v7597
    %v7600 = vunpack.c.l.s4 1966171168
    %v7601 = vunpack.c.0.s8 %v7600
    %v7602 = vlaneseq
    %v7603 = vshrl.u32 %v7602, 7
    %v7604 = vsub.s32 %v7601, %v7603
    %v7605 = vrot.slane %v7597, %v7604
    %v7607 = vunpack.c.l.s4 1966171168
    %v7608 = vunpack.c.0.s8 %v7607
    %v7609 = vlaneseq
    %v7610 = vshrl.u32 %v7609, 7
    %v7611 = vsub.s32 %v7608, %v7610
    %v7612 = vrot.slane %v7598, %v7611
    %v7613 = vcombine.high %v7605, %v7605
    %v7614 = vcombine.high %v7612, %v7612
    %v7747 = vunpack.c.l.b16 %v6449
    %v7748 = vunpack.c.h.b16 %v6449
    %v7749 = vunpack.c.l.b16 %v6450
    %v7750 = vunpack.c.h.b16 %v6450
    %v7751 = vunpack.c.l.b16 %v6451
    %v7752 = vunpack.c.h.b16 %v6451
    %v7753 = vunpack.c.l.b16 %v6452
    %v7754 = vunpack.c.h.b16 %v6452
    %v7755 = vunpack.c.l.b16 %v6453
    %v7756 = vunpack.c.h.b16 %v6453
    %v7757 = vunpack.c.l.b16 %v6454
    %v7758 = vunpack.c.h.b16 %v6454
    %v7759 = vunpack.c.l.b16 %v6455
    %v7760 = vunpack.c.h.b16 %v6455
    %v7761 = vunpack.c.l.b16 %v6456
    %v7762 = vunpack.c.h.b16 %v6456
    %v7763 = vunpack.c.l.b16 %v6457
    %v7764 = vunpack.c.h.b16 %v6457
    %v7765 = vunpack.c.l.b16 %v6458
    %v7766 = vunpack.c.h.b16 %v6458
    %v7767 = vunpack.c.l.b16 %v6459
    %v7768 = vunpack.c.h.b16 %v6459
    %v7769 = vunpack.c.l.b16 %v6460
    %v7770 = vunpack.c.h.b16 %v6460
    %v7771 = vunpack.c.l.b16 %v6461
    %v7772 = vunpack.c.h.b16 %v6461
    %v7773 = vunpack.c.l.b16 %v6462
    %v7774 = vunpack.c.h.b16 %v6462
    %v7775 = vunpack.c.l.b16 %v6463
    %v7776 = vunpack.c.h.b16 %v6463
    %v7777 = vunpack.c.l.b16 %v6464
    %v7778 = vunpack.c.h.b16 %v6464
    %v7779 = vunpack.c.l.b16 %v6465
    %v7780 = vunpack.c.h.b16 %v6465
    %v7781 = vunpack.c.l.b16 %v6466
    %v7782 = vunpack.c.h.b16 %v6466
    %v7783 = vunpack.c.l.b16 %v6467
    %v7784 = vunpack.c.h.b16 %v6467
    %v7785 = vunpack.c.l.b16 %v6468
    %v7786 = vunpack.c.h.b16 %v6468
    %v7787 = vunpack.c.l.b16 %v6469
    %v7788 = vunpack.c.h.b16 %v6469
    %v7789 = vunpack.c.l.b16 %v6470
    %v7790 = vunpack.c.h.b16 %v6470
    %v7791 = vunpack.c.l.b16 %v6471
    %v7792 = vunpack.c.h.b16 %v6471
    %v7793 = vunpack.c.l.b16 %v6472
    %v7794 = vunpack.c.h.b16 %v6472
    %v7795 = vunpack.c.l.b16 %v6473
    %v7796 = vunpack.c.h.b16 %v6473
    %v7797 = vunpack.c.l.b16 %v6474
    %v7798 = vunpack.c.h.b16 %v6474
    %v7799 = vunpack.c.l.b16 %v6475
    %v7800 = vunpack.c.h.b16 %v6475
    %v7801 = vunpack.c.l.b16 %v6476
    %v7802 = vunpack.c.h.b16 %v6476
    %v7803 = vunpack.c.l.b16 %v6477
    %v7804 = vunpack.c.h.b16 %v6477
    %v7805 = vunpack.c.l.b16 %v6478
    %v7806 = vunpack.c.h.b16 %v6478
    %v7807 = vunpack.c.l.b16 %v6479
    %v7808 = vunpack.c.h.b16 %v6479
    %v7809 = vunpack.c.l.b16 %v6480
    %v7810 = vunpack.c.h.b16 %v6480
    %v7811 = vunpack.c.l.b16 %v6481
    %v7812 = vunpack.c.h.b16 %v6481
    %v7813 = vunpack.c.l.b16 %v6482
    %v7814 = vunpack.c.h.b16 %v6482
    %v7815 = vunpack.c.l.b16 %v6483
    %v7816 = vunpack.c.h.b16 %v6483
    %v7817 = vunpack.c.l.b16 %v6484
    %v7818 = vunpack.c.h.b16 %v6484
    %v7819 = vunpack.c.l.b16 %v6485
    %v7820 = vunpack.c.h.b16 %v6485
    %v7821 = vunpack.c.l.b16 %v6486
    %v7822 = vunpack.c.h.b16 %v6486
    %v7823 = vunpack.c.l.b16 %v6487
    %v7824 = vunpack.c.h.b16 %v6487
    %v7825 = vunpack.c.l.b16 %v6488
    %v7826 = vunpack.c.h.b16 %v6488
    %v7827 = vunpack.c.l.b16 %v6489
    %v7828 = vunpack.c.h.b16 %v6489
    %v7829 = vunpack.c.l.b16 %v6490
    %v7830 = vunpack.c.h.b16 %v6490
    %v7831 = vunpack.c.l.b16 %v6491
    %v7832 = vunpack.c.h.b16 %v6491
    %v7833 = vunpack.c.l.b16 %v6492
    %v7834 = vunpack.c.h.b16 %v6492
    %v7835 = vunpack.c.l.b16 %v6493
    %v7836 = vunpack.c.h.b16 %v6493
    %v7837 = vunpack.c.l.b16 %v6494
    %v7838 = vunpack.c.h.b16 %v6494
    %v7839 = vunpack.c.l.b16 %v6495
    %v7840 = vunpack.c.h.b16 %v6495
    %v7841 = vunpack.c.l.b16 %v6496
    %v7842 = vunpack.c.h.b16 %v6496
    %v7843 = vunpack.c.l.b16 %v6497
    %v7844 = vunpack.c.h.b16 %v6497
    %v7845 = vunpack.c.l.b16 %v6498
    %v7846 = vunpack.c.h.b16 %v6498
    %v7847 = vunpack.c.l.b16 %v6499
    %v7848 = vunpack.c.h.b16 %v6499
    %v7849 = vunpack.c.l.b16 %v6500
    %v7850 = vunpack.c.h.b16 %v6500
    %v7851 = vunpack.c.l.b16 %v6501
    %v7852 = vunpack.c.h.b16 %v6501
    %v7853 = vunpack.c.l.b16 %v6502
    %v7854 = vunpack.c.h.b16 %v6502
    %v7855 = vunpack.c.l.b16 %v6503
    %v7856 = vunpack.c.h.b16 %v6503
    %v7857 = vunpack.c.l.b16 %v6504
    %v7858 = vunpack.c.h.b16 %v6504
    %v7859 = vunpack.c.l.b16 %v6505
    %v7860 = vunpack.c.h.b16 %v6505
    %v7861 = vunpack.c.l.b16 %v6506
    %v7862 = vunpack.c.h.b16 %v6506
    %v7863 = vunpack.c.l.b16 %v6507
    %v7864 = vunpack.c.h.b16 %v6507
    %v7865 = vunpack.c.l.b16 %v6508
    %v7866 = vunpack.c.h.b16 %v6508
    %v7867 = vunpack.c.l.b16 %v6509
    %v7868 = vunpack.c.h.b16 %v6509
    %v7869 = vunpack.c.l.b16 %v6510
    %v7870 = vunpack.c.h.b16 %v6510
    %v7871 = vunpack.c.l.b16 %v6511
    %v7872 = vunpack.c.h.b16 %v6511
    %v7873 = vunpack.c.l.b16 %v6512
    %v7874 = vunpack.c.h.b16 %v6512
    %v7875 = vunpack.c.l.b16 %v6513
    %v7876 = vunpack.c.h.b16 %v6513
    %v7877 = vunpack.c.l.b16 %v6514
    %v7878 = vunpack.c.h.b16 %v6514
    %v7879 = vunpack.c.l.b16 %v6515
    %v7880 = vunpack.c.h.b16 %v6515
    %v7881 = vunpack.c.l.b16 %v6516
    %v7882 = vunpack.c.h.b16 %v6516
    %v7883 = vunpack.c.l.b16 %v6517
    %v7884 = vunpack.c.h.b16 %v6517
    %v7885 = vunpack.c.l.b16 %v6518
    %v7886 = vunpack.c.h.b16 %v6518
    %v7887 = vunpack.c.l.b16 %v6519
    %v7888 = vunpack.c.h.b16 %v6519
    %v7889 = vunpack.c.l.b16 %v6520
    %v7890 = vunpack.c.h.b16 %v6520
    %v7891 = vunpack.c.l.b16 %v6521
    %v7892 = vunpack.c.h.b16 %v6521
    %v7893 = vunpack.c.l.b16 %v6522
    %v7894 = vunpack.c.h.b16 %v6522
    %v7895 = vunpack.c.l.b16 %v6523
    %v7896 = vunpack.c.h.b16 %v6523
    %v7897 = vunpack.c.l.b16 %v6524
    %v7898 = vunpack.c.h.b16 %v6524
    %v7899 = vunpack.c.l.b16 %v6525
    %v7900 = vunpack.c.h.b16 %v6525
    %v7901 = vunpack.c.l.b16 %v6526
    %v7902 = vunpack.c.h.b16 %v6526
    %v7903 = vunpack.c.l.b16 %v6527
    %v7904 = vunpack.c.h.b16 %v6527
    %v7905 = vunpack.c.l.b16 %v6528
    %v7906 = vunpack.c.h.b16 %v6528
    %v7907 = vunpack.c.l.b16 %v6529
    %v7908 = vunpack.c.h.b16 %v6529
    %v7909 = vunpack.c.l.b16 %v6530
    %v7910 = vunpack.c.h.b16 %v6530
    %v7911 = vunpack.c.l.b16 %v6531
    %v7912 = vunpack.c.h.b16 %v6531
    %v7913 = vunpack.c.l.b16 %v6532
    %v7914 = vunpack.c.h.b16 %v6532
    %v7915 = vunpack.c.l.b16 %v6533
    %v7916 = vunpack.c.h.b16 %v6533
    %v7917 = vunpack.c.l.b16 %v6534
    %v7918 = vunpack.c.h.b16 %v6534
    %v7919 = vunpack.c.l.b16 %v6535
    %v7920 = vunpack.c.h.b16 %v6535
    %v7921 = vunpack.c.l.b16 %v6536
    %v7922 = vunpack.c.h.b16 %v6536
    %v7923 = vunpack.c.l.b16 %v6537
    %v7924 = vunpack.c.h.b16 %v6537
    %v7925 = vunpack.c.l.b16 %v6538
    %v7926 = vunpack.c.h.b16 %v6538
    %v7927 = vunpack.c.l.b16 %v6539
    %v7928 = vunpack.c.h.b16 %v6539
    %v7929 = vunpack.c.l.b16 %v6540
    %v7930 = vunpack.c.h.b16 %v6540
    %v7931 = vunpack.c.l.b16 %v6541
    %v7932 = vunpack.c.h.b16 %v6541
    %v7933 = vunpack.c.l.b16 %v6542
    %v7934 = vunpack.c.h.b16 %v6542
    %v7935 = vunpack.c.l.b16 %v6543
    %v7936 = vunpack.c.h.b16 %v6543
    %v7937 = vunpack.c.l.b16 %v6544
    %v7938 = vunpack.c.h.b16 %v6544
    %v7939 = vunpack.c.l.b16 %v6545
    %v7940 = vunpack.c.h.b16 %v6545
    %v7941 = vunpack.c.l.b16 %v6546
    %v7942 = vunpack.c.h.b16 %v6546
    %v7943 = vunpack.c.l.b16 %v6547
    %v7944 = vunpack.c.h.b16 %v6547
    %v7945 = vunpack.c.l.b16 %v6548
    %v7946 = vunpack.c.h.b16 %v6548
    %v7947 = vunpack.c.l.b16 %v6549
    %v7948 = vunpack.c.h.b16 %v6549
    %v7949 = vunpack.c.l.b16 %v6550
    %v7950 = vunpack.c.h.b16 %v6550
    %v7951 = vunpack.c.l.b16 %v6551
    %v7952 = vunpack.c.h.b16 %v6551
    %v7953 = vunpack.c.l.b16 %v6552
    %v7954 = vunpack.c.h.b16 %v6552
    %v7955 = vunpack.c.l.b16 %v6553
    %v7956 = vunpack.c.h.b16 %v6553
    %v7957 = vunpack.c.l.b16 %v6554
    %v7958 = vunpack.c.h.b16 %v6554
    %v7959 = vunpack.c.l.b16 %v6555
    %v7960 = vunpack.c.h.b16 %v6555
    %v7961 = vunpack.c.l.b16 %v6556
    %v7962 = vunpack.c.h.b16 %v6556
    %v7963 = vunpack.c.l.b16 %v6557
    %v7964 = vunpack.c.h.b16 %v6557
    %v7965 = vunpack.c.l.b16 %v6558
    %v7966 = vunpack.c.h.b16 %v6558
    %v7967 = vunpack.c.l.b16 %v6559
    %v7968 = vunpack.c.h.b16 %v6559
    %v7969 = vunpack.c.l.b16 %v6560
    %v7970 = vunpack.c.h.b16 %v6560
    %v7971 = vunpack.c.l.b16 %v6561
    %v7972 = vunpack.c.h.b16 %v6561
    %v7973 = vunpack.c.l.b16 %v6562
    %v7974 = vunpack.c.h.b16 %v6562
    %v7975 = vunpack.c.l.b16 %v6563
    %v7976 = vunpack.c.h.b16 %v6563
    %v7977 = vunpack.c.l.b16 %v6564
    %v7978 = vunpack.c.h.b16 %v6564
    %v7979 = vunpack.c.l.b16 %v6565
    %v7980 = vunpack.c.h.b16 %v6565
    %v7981 = vunpack.c.l.b16 %v6566
    %v7982 = vunpack.c.h.b16 %v6566
    %v7983 = vunpack.c.l.b16 %v6567
    %v7984 = vunpack.c.h.b16 %v6567
    %v7985 = vunpack.c.l.b16 %v6568
    %v7986 = vunpack.c.h.b16 %v6568
    %v7987 = vunpack.c.l.b16 %v6569
    %v7988 = vunpack.c.h.b16 %v6569
    %v7989 = vunpack.c.l.b16 %v6570
    %v7990 = vunpack.c.h.b16 %v6570
    %v7991 = vunpack.c.l.b16 %v6571
    %v7992 = vunpack.c.h.b16 %v6571
    %v7993 = vunpack.c.l.b16 %v6572
    %v7994 = vunpack.c.h.b16 %v6572
    %v7995 = vunpack.c.l.b16 %v6573
    %v7996 = vunpack.c.h.b16 %v6573
    %v7997 = vunpack.c.l.b16 %v6574
    %v7998 = vunpack.c.h.b16 %v6574
    %v7999 = vunpack.c.l.b16 %v6575
    %v8000 = vunpack.c.h.b16 %v6575
    %v8001 = vunpack.c.l.b16 %v6576
    %v8002 = vunpack.c.h.b16 %v6576
    %v8003 = vpack.c.b16 %v7751, %v7747
    %v8004 = vpack.c.b16 %v7752, %v7748
    %v8005 = vpack.c.b16 %v7753, %v7749
    %v8006 = vpack.c.b16 %v7754, %v7750
    %v8007 = vpack.c.b16 %v7759, %v7755
    %v8008 = vpack.c.b16 %v7760, %v7756
    %v8009 = vpack.c.b16 %v7761, %v7757
    %v8010 = vpack.c.b16 %v7762, %v7758
    %v8011 = vpack.c.b16 %v7767, %v7763
    %v8012 = vpack.c.b16 %v7768, %v7764
    %v8013 = vpack.c.b16 %v7769, %v7765
    %v8014 = vpack.c.b16 %v7770, %v7766
    %v8015 = vpack.c.b16 %v7775, %v7771
    %v8016 = vpack.c.b16 %v7776, %v7772
    %v8017 = vpack.c.b16 %v7777, %v7773
    %v8018 = vpack.c.b16 %v7778, %v7774
    %v8019 = vpack.c.b16 %v7783, %v7779
    %v8020 = vpack.c.b16 %v7784, %v7780
    %v8021 = vpack.c.b16 %v7785, %v7781
    %v8022 = vpack.c.b16 %v7786, %v7782
    %v8023 = vpack.c.b16 %v7791, %v7787
    %v8024 = vpack.c.b16 %v7792, %v7788
    %v8025 = vpack.c.b16 %v7793, %v7789
    %v8026 = vpack.c.b16 %v7794, %v7790
    %v8027 = vpack.c.b16 %v7799, %v7795
    %v8028 = vpack.c.b16 %v7800, %v7796
    %v8029 = vpack.c.b16 %v7801, %v7797
    %v8030 = vpack.c.b16 %v7802, %v7798
    %v8031 = vpack.c.b16 %v7807, %v7803
    %v8032 = vpack.c.b16 %v7808, %v7804
    %v8033 = vpack.c.b16 %v7809, %v7805
    %v8034 = vpack.c.b16 %v7810, %v7806
    %v8035 = vpack.c.b16 %v7815, %v7811
    %v8036 = vpack.c.b16 %v7816, %v7812
    %v8037 = vpack.c.b16 %v7817, %v7813
    %v8038 = vpack.c.b16 %v7818, %v7814
    %v8039 = vpack.c.b16 %v7823, %v7819
    %v8040 = vpack.c.b16 %v7824, %v7820
    %v8041 = vpack.c.b16 %v7825, %v7821
    %v8042 = vpack.c.b16 %v7826, %v7822
    %v8043 = vpack.c.b16 %v7831, %v7827
    %v8044 = vpack.c.b16 %v7832, %v7828
    %v8045 = vpack.c.b16 %v7833, %v7829
    %v8046 = vpack.c.b16 %v7834, %v7830
    %v8047 = vpack.c.b16 %v7839, %v7835
    %v8048 = vpack.c.b16 %v7840, %v7836
    %v8049 = vpack.c.b16 %v7841, %v7837
    %v8050 = vpack.c.b16 %v7842, %v7838
    %v8051 = vpack.c.b16 %v7847, %v7843
    %v8052 = vpack.c.b16 %v7848, %v7844
    %v8053 = vpack.c.b16 %v7849, %v7845
    %v8054 = vpack.c.b16 %v7850, %v7846
    %v8055 = vpack.c.b16 %v7855, %v7851
    %v8056 = vpack.c.b16 %v7856, %v7852
    %v8057 = vpack.c.b16 %v7857, %v7853
    %v8058 = vpack.c.b16 %v7858, %v7854
    %v8059 = vpack.c.b16 %v7863, %v7859
    %v8060 = vpack.c.b16 %v7864, %v7860
    %v8061 = vpack.c.b16 %v7865, %v7861
    %v8062 = vpack.c.b16 %v7866, %v7862
    %v8063 = vpack.c.b16 %v7871, %v7867
    %v8064 = vpack.c.b16 %v7872, %v7868
    %v8065 = vpack.c.b16 %v7873, %v7869
    %v8066 = vpack.c.b16 %v7874, %v7870
    %v8067 = vpack.c.b16 %v7879, %v7875
    %v8068 = vpack.c.b16 %v7880, %v7876
    %v8069 = vpack.c.b16 %v7881, %v7877
    %v8070 = vpack.c.b16 %v7882, %v7878
    %v8071 = vpack.c.b16 %v7887, %v7883
    %v8072 = vpack.c.b16 %v7888, %v7884
    %v8073 = vpack.c.b16 %v7889, %v7885
    %v8074 = vpack.c.b16 %v7890, %v7886
    %v8075 = vpack.c.b16 %v7895, %v7891
    %v8076 = vpack.c.b16 %v7896, %v7892
    %v8077 = vpack.c.b16 %v7897, %v7893
    %v8078 = vpack.c.b16 %v7898, %v7894
    %v8079 = vpack.c.b16 %v7903, %v7899
    %v8080 = vpack.c.b16 %v7904, %v7900
    %v8081 = vpack.c.b16 %v7905, %v7901
    %v8082 = vpack.c.b16 %v7906, %v7902
    %v8083 = vpack.c.b16 %v7911, %v7907
    %v8084 = vpack.c.b16 %v7912, %v7908
    %v8085 = vpack.c.b16 %v7913, %v7909
    %v8086 = vpack.c.b16 %v7914, %v7910
    %v8087 = vpack.c.b16 %v7919, %v7915
    %v8088 = vpack.c.b16 %v7920, %v7916
    %v8089 = vpack.c.b16 %v7921, %v7917
    %v8090 = vpack.c.b16 %v7922, %v7918
    %v8091 = vpack.c.b16 %v7927, %v7923
    %v8092 = vpack.c.b16 %v7928, %v7924
    %v8093 = vpack.c.b16 %v7929, %v7925
    %v8094 = vpack.c.b16 %v7930, %v7926
    %v8095 = vpack.c.b16 %v7935, %v7931
    %v8096 = vpack.c.b16 %v7936, %v7932
    %v8097 = vpack.c.b16 %v7937, %v7933
    %v8098 = vpack.c.b16 %v7938, %v7934
    %v8099 = vpack.c.b16 %v7943, %v7939
    %v8100 = vpack.c.b16 %v7944, %v7940
    %v8101 = vpack.c.b16 %v7945, %v7941
    %v8102 = vpack.c.b16 %v7946, %v7942
    %v8103 = vpack.c.b16 %v7951, %v7947
    %v8104 = vpack.c.b16 %v7952, %v7948
    %v8105 = vpack.c.b16 %v7953, %v7949
    %v8106 = vpack.c.b16 %v7954, %v7950
    %v8107 = vpack.c.b16 %v7959, %v7955
    %v8108 = vpack.c.b16 %v7960, %v7956
    %v8109 = vpack.c.b16 %v7961, %v7957
    %v8110 = vpack.c.b16 %v7962, %v7958
    %v8111 = vpack.c.b16 %v7967, %v7963
    %v8112 = vpack.c.b16 %v7968, %v7964
    %v8113 = vpack.c.b16 %v7969, %v7965
    %v8114 = vpack.c.b16 %v7970, %v7966
    %v8115 = vpack.c.b16 %v7975, %v7971
    %v8116 = vpack.c.b16 %v7976, %v7972
    %v8117 = vpack.c.b16 %v7977, %v7973
    %v8118 = vpack.c.b16 %v7978, %v7974
    %v8119 = vpack.c.b16 %v7983, %v7979
    %v8120 = vpack.c.b16 %v7984, %v7980
    %v8121 = vpack.c.b16 %v7985, %v7981
    %v8122 = vpack.c.b16 %v7986, %v7982
    %v8123 = vpack.c.b16 %v7991, %v7987
    %v8124 = vpack.c.b16 %v7992, %v7988
    %v8125 = vpack.c.b16 %v7993, %v7989
    %v8126 = vpack.c.b16 %v7994, %v7990
    %v8127 = vpack.c.b16 %v7999, %v7995
    %v8128 = vpack.c.b16 %v8000, %v7996
    %v8129 = vpack.c.b16 %v8001, %v7997
    %v8130 = vpack.c.b16 %v8002, %v7998
    %8259 = vmatprep.subr.bf16.mxu0 %v8004
    %8260 = vmatpush1.bf16.msra.mxu0 %v8003
    %8261 = vmatprep.subr.bf16.mxu0 %v8008
    %8262 = vmatpush1.bf16.msra.mxu0 %v8007
    %8263 = vmatprep.subr.bf16.mxu0 %v8012
    %8264 = vmatpush1.bf16.msra.mxu0 %v8011
    %8265 = vmatprep.subr.bf16.mxu0 %v8016
    %8266 = vmatpush1.bf16.msra.mxu0 %v8015
    %8267 = vmatprep.subr.bf16.mxu0 %v8020
    %8268 = vmatpush1.bf16.msra.mxu0 %v8019
    %8269 = vmatprep.subr.bf16.mxu0 %v8024
    %8270 = vmatpush1.bf16.msra.mxu0 %v8023
    %8271 = vmatprep.subr.bf16.mxu0 %v8028
    %8272 = vmatpush1.bf16.msra.mxu0 %v8027
    %8273 = vmatprep.subr.bf16.mxu0 %v8032
    %8274 = vmatpush1.bf16.msra.mxu0 %v8031
    %8275 = vmatprep.subr.bf16.mxu0 %v8036
    %8276 = vmatpush1.bf16.msra.mxu0 %v8035
    %8277 = vmatprep.subr.bf16.mxu0 %v8040
    %8278 = vmatpush1.bf16.msra.mxu0 %v8039
    %8279 = vmatprep.subr.bf16.mxu0 %v8044
    %8280 = vmatpush1.bf16.msra.mxu0 %v8043
    %8281 = vmatprep.subr.bf16.mxu0 %v8048
    %8282 = vmatpush1.bf16.msra.mxu0 %v8047
    %8283 = vmatprep.subr.bf16.mxu0 %v8052
    %8284 = vmatpush1.bf16.msra.mxu0 %v8051
    %8285 = vmatprep.subr.bf16.mxu0 %v8056
    %8286 = vmatpush1.bf16.msra.mxu0 %v8055
    %8287 = vmatprep.subr.bf16.mxu0 %v8060
    %8288 = vmatpush1.bf16.msra.mxu0 %v8059
    %8289 = vmatprep.subr.bf16.mxu0 %v8064
    %8290 = vmatpush1.bf16.msra.mxu0 %v8063
    %8291 = vmatprep.mubr.bf16.mxu0 %v7612
    %8292 = vmatmul.mubr.bf16.gmra.mrb[0].mxu0 %v7605
    %v8293 = vpop.f32.mrb[0].mxu0
    %v8294 = vadd.f32 %v7502, %v8293
    %v8295 = vpop.f32.mrb[0].mxu0
    %v8296 = vadd.f32 %v7504, %v8295
    %v8297 = vpop.f32.mrb[0].mxu0
    %v8298 = vpop.f32.mrb[0].mxu0
    %8299 = vdwg.mxu0
    %8300 = vmatprep.subr.bf16.mxu0 %v8068
    %8301 = vmatpush1.bf16.msra.mxu0 %v8067
    %8302 = vmatprep.subr.bf16.mxu0 %v8072
    %8303 = vmatpush1.bf16.msra.mxu0 %v8071
    %8304 = vmatprep.subr.bf16.mxu0 %v8076
    %8305 = vmatpush1.bf16.msra.mxu0 %v8075
    %8306 = vmatprep.subr.bf16.mxu0 %v8080
    %8307 = vmatpush1.bf16.msra.mxu0 %v8079
    %8308 = vmatprep.subr.bf16.mxu0 %v8084
    %8309 = vmatpush1.bf16.msra.mxu0 %v8083
    %8310 = vmatprep.subr.bf16.mxu0 %v8088
    %8311 = vmatpush1.bf16.msra.mxu0 %v8087
    %8312 = vmatprep.subr.bf16.mxu0 %v8092
    %8313 = vmatpush1.bf16.msra.mxu0 %v8091
    %8314 = vmatprep.subr.bf16.mxu0 %v8096
    %8315 = vmatpush1.bf16.msra.mxu0 %v8095
    %8316 = vmatprep.subr.bf16.mxu0 %v8100
    %8317 = vmatpush1.bf16.msra.mxu0 %v8099
    %8318 = vmatprep.subr.bf16.mxu0 %v8104
    %8319 = vmatpush1.bf16.msra.mxu0 %v8103
    %8320 = vmatprep.subr.bf16.mxu0 %v8108
    %8321 = vmatpush1.bf16.msra.mxu0 %v8107
    %8322 = vmatprep.subr.bf16.mxu0 %v8112
    %8323 = vmatpush1.bf16.msra.mxu0 %v8111
    %8324 = vmatprep.subr.bf16.mxu0 %v8116
    %8325 = vmatpush1.bf16.msra.mxu0 %v8115
    %8326 = vmatprep.subr.bf16.mxu0 %v8120
    %8327 = vmatpush1.bf16.msra.mxu0 %v8119
    %8328 = vmatprep.subr.bf16.mxu0 %v8124
    %8329 = vmatpush1.bf16.msra.mxu0 %v8123
    %8330 = vmatprep.subr.bf16.mxu0 %v8128
    %8331 = vmatpush1.bf16.msra.mxu0 %v8127
    %8332 = vmatprep.mubr.bf16.mxu0 %v7614
    %8333 = vmatmul.mubr.bf16.gmra.mrb[0].mxu0 %v7613
    %v8334 = vpop.f32.mrb[0].mxu0
    %v8335 = vadd.f32 %v8294, %v8334
    %v8336 = vpop.f32.mrb[0].mxu0
    %v8337 = vadd.f32 %v8296, %v8336
    %v8338 = vpop.f32.mrb[0].mxu0
    %v8339 = vpop.f32.mrb[0].mxu0
    %8340 = vdwg.mxu0
    %8341 = vmatprep.subr.bf16.mxu0 %v8006
    %8342 = vmatpush1.bf16.msra.mxu0 %v8005
    %8343 = vmatprep.subr.bf16.mxu0 %v8010
    %8344 = vmatpush1.bf16.msra.mxu0 %v8009
    %8345 = vmatprep.subr.bf16.mxu0 %v8014
    %8346 = vmatpush1.bf16.msra.mxu0 %v8013
    %8347 = vmatprep.subr.bf16.mxu0 %v8018
    %8348 = vmatpush1.bf16.msra.mxu0 %v8017
    %8349 = vmatprep.subr.bf16.mxu0 %v8022
    %8350 = vmatpush1.bf16.msra.mxu0 %v8021
    %8351 = vmatprep.subr.bf16.mxu0 %v8026
    %8352 = vmatpush1.bf16.msra.mxu0 %v8025
    %8353 = vmatprep.subr.bf16.mxu0 %v8030
    %8354 = vmatpush1.bf16.msra.mxu0 %v8029
    %8355 = vmatprep.subr.bf16.mxu0 %v8034
    %8356 = vmatpush1.bf16.msra.mxu0 %v8033
    %8357 = vmatprep.subr.bf16.mxu0 %v8038
    %8358 = vmatpush1.bf16.msra.mxu0 %v8037
    %8359 = vmatprep.subr.bf16.mxu0 %v8042
    %8360 = vmatpush1.bf16.msra.mxu0 %v8041
    %8361 = vmatprep.subr.bf16.mxu0 %v8046
    %8362 = vmatpush1.bf16.msra.mxu0 %v8045
    %8363 = vmatprep.subr.bf16.mxu0 %v8050
    %8364 = vmatpush1.bf16.msra.mxu0 %v8049
    %8365 = vmatprep.subr.bf16.mxu0 %v8054
    %8366 = vmatpush1.bf16.msra.mxu0 %v8053
    %8367 = vmatprep.subr.bf16.mxu0 %v8058
    %8368 = vmatpush1.bf16.msra.mxu0 %v8057
    %8369 = vmatprep.subr.bf16.mxu0 %v8062
    %8370 = vmatpush1.bf16.msra.mxu0 %v8061
    %8371 = vmatprep.subr.bf16.mxu0 %v8066
    %8372 = vmatpush1.bf16.msra.mxu0 %v8065
    %8373 = vmatprep.mubr.bf16.mxu0 %v7612
    %8374 = vmatmul.mubr.bf16.gmra.mrb[0].mxu0 %v7605
    %v8375 = vpop.f32.mrb[0].mxu0
    %v8376 = vadd.f32 %v7584, %v8375
    %v8377 = vpop.f32.mrb[0].mxu0
    %v8378 = vadd.f32 %v7586, %v8377
    %v8379 = vpop.f32.mrb[0].mxu0
    %v8380 = vpop.f32.mrb[0].mxu0
    %8381 = vdwg.mxu0
    %8382 = vmatprep.subr.bf16.mxu0 %v8070
    %8383 = vmatpush1.bf16.msra.mxu0 %v8069
    %8384 = vmatprep.subr.bf16.mxu0 %v8074
    %8385 = vmatpush1.bf16.msra.mxu0 %v8073
    %8386 = vmatprep.subr.bf16.mxu0 %v8078
    %8387 = vmatpush1.bf16.msra.mxu0 %v8077
    %8388 = vmatprep.subr.bf16.mxu0 %v8082
    %8389 = vmatpush1.bf16.msra.mxu0 %v8081
    %8390 = vmatprep.subr.bf16.mxu0 %v8086
    %8391 = vmatpush1.bf16.msra.mxu0 %v8085
    %8392 = vmatprep.subr.bf16.mxu0 %v8090
    %8393 = vmatpush1.bf16.msra.mxu0 %v8089
    %8394 = vmatprep.subr.bf16.mxu0 %v8094
    %8395 = vmatpush1.bf16.msra.mxu0 %v8093
    %8396 = vmatprep.subr.bf16.mxu0 %v8098
    %8397 = vmatpush1.bf16.msra.mxu0 %v8097
    %8398 = vmatprep.subr.bf16.mxu0 %v8102
    %8399 = vmatpush1.bf16.msra.mxu0 %v8101
    %8400 = vmatprep.subr.bf16.mxu0 %v8106
    %8401 = vmatpush1.bf16.msra.mxu0 %v8105
    %8402 = vmatprep.subr.bf16.mxu0 %v8110
    %8403 = vmatpush1.bf16.msra.mxu0 %v8109
    %8404 = vmatprep.subr.bf16.mxu0 %v8114
    %8405 = vmatpush1.bf16.msra.mxu0 %v8113
    %8406 = vmatprep.subr.bf16.mxu0 %v8118
    %8407 = vmatpush1.bf16.msra.mxu0 %v8117
    %8408 = vmatprep.subr.bf16.mxu0 %v8122
    %8409 = vmatpush1.bf16.msra.mxu0 %v8121
    %8410 = vmatprep.subr.bf16.mxu0 %v8126
    %8411 = vmatpush1.bf16.msra.mxu0 %v8125
    %8412 = vmatprep.subr.bf16.mxu0 %v8130
    %8413 = vmatpush1.bf16.msra.mxu0 %v8129
    %8414 = vmatprep.mubr.bf16.mxu0 %v7614
    %8415 = vmatmul.mubr.bf16.gmra.mrb[0].mxu0 %v7613
    %v8416 = vpop.f32.mrb[0].mxu0
    %v8417 = vadd.f32 %v8376, %v8416
    %v8418 = vpop.f32.mrb[0].mxu0
    %v8419 = vadd.f32 %v8378, %v8418
    %v8420 = vpop.f32.mrb[0].mxu0
    %v8421 = vpop.f32.mrb[0].mxu0
    %8422 = vdwg.mxu0
    %v8423 = vld [vmem:[#allocation6] sm:$0xaa]
    %v8424 = vld [vmem:[#allocation6 + $0x8] sm:$0xaa]
    %v8428 = vunpack.c.l.s4 1966171168
    %v8429 = vunpack.c.0.s8 %v8428
    %v8430 = vlaneseq
    %v8431 = vshrl.u32 %v8430, 7
    %v8432 = vsub.s32 %v8429, %v8431
    %v8433 = vrot.slane %v8423, %v8432
    %v8434 = vcombine.high %v8433, %v8433
    %v8436 = vunpack.c.l.s4 1966171168
    %v8437 = vunpack.c.0.s8 %v8436
    %v8438 = vlaneseq
    %v8439 = vshrl.u32 %v8438, 7
    %v8440 = vsub.s32 %v8437, %v8439
    %v8441 = vrot.slane %v8424, %v8440
    %v8442 = vcombine.high %v8441, %v8441
    %s8443 = scalar_lea.vmem [#allocation18], 2048
    %v8444 = vld [vmem:[%s8443] sm:$0xff]
    %v8445 = vld [vmem:[%s8443 + $0x8] sm:$0xff]
    %v8446 = vld [vmem:[%s8443 + $0x10] sm:$0xff]
    %v8447 = vld [vmem:[%s8443 + $0x18] sm:$0xff]
    %v8448 = vld [vmem:[%s8443 + $0x20] sm:$0xff]
    %v8449 = vld [vmem:[%s8443 + $0x28] sm:$0xff]
    %v8450 = vld [vmem:[%s8443 + $0x30] sm:$0xff]
    %v8451 = vld [vmem:[%s8443 + $0x38] sm:$0xff]
    %v8452 = vld [vmem:[%s8443 + $0x40] sm:$0xff]
    %v8453 = vld [vmem:[%s8443 + $0x48] sm:$0xff]
    %v8454 = vld [vmem:[%s8443 + $0x50] sm:$0xff]
    %v8455 = vld [vmem:[%s8443 + $0x58] sm:$0xff]
    %v8456 = vld [vmem:[%s8443 + $0x60] sm:$0xff]
    %v8457 = vld [vmem:[%s8443 + $0x68] sm:$0xff]
    %v8458 = vld [vmem:[%s8443 + $0x70] sm:$0xff]
    %v8459 = vld [vmem:[%s8443 + $0x78] sm:$0xff]
    %v8460 = vld [vmem:[%s8443 + $0x80] sm:$0xff]
    %v8461 = vld [vmem:[%s8443 + $0x88] sm:$0xff]
    %v8462 = vld [vmem:[%s8443 + $0x90] sm:$0xff]
    %v8463 = vld [vmem:[%s8443 + $0x98] sm:$0xff]
    %v8464 = vld [vmem:[%s8443 + $0xa0] sm:$0xff]
    %v8465 = vld [vmem:[%s8443 + $0xa8] sm:$0xff]
    %v8466 = vld [vmem:[%s8443 + $0xb0] sm:$0xff]
    %v8467 = vld [vmem:[%s8443 + $0xb8] sm:$0xff]
    %v8468 = vld [vmem:[%s8443 + $0xc0] sm:$0xff]
    %v8469 = vld [vmem:[%s8443 + $0xc8] sm:$0xff]
    %v8470 = vld [vmem:[%s8443 + $0xd0] sm:$0xff]
    %v8471 = vld [vmem:[%s8443 + $0xd8] sm:$0xff]
    %v8472 = vld [vmem:[%s8443 + $0xe0] sm:$0xff]
    %v8473 = vld [vmem:[%s8443 + $0xe8] sm:$0xff]
    %v8474 = vld [vmem:[%s8443 + $0xf0] sm:$0xff]
    %v8475 = vld [vmem:[%s8443 + $0xf8] sm:$0xff]
    %v8476 = vld [vmem:[%s8443 + $0x100] sm:$0xff]
    %v8477 = vld [vmem:[%s8443 + $0x108] sm:$0xff]
    %v8478 = vld [vmem:[%s8443 + $0x110] sm:$0xff]
    %v8479 = vld [vmem:[%s8443 + $0x118] sm:$0xff]
    %v8480 = vld [vmem:[%s8443 + $0x120] sm:$0xff]
    %v8481 = vld [vmem:[%s8443 + $0x128] sm:$0xff]
    %v8482 = vld [vmem:[%s8443 + $0x130] sm:$0xff]
    %v8483 = vld [vmem:[%s8443 + $0x138] sm:$0xff]
    %v8484 = vld [vmem:[%s8443 + $0x140] sm:$0xff]
    %v8485 = vld [vmem:[%s8443 + $0x148] sm:$0xff]
    %v8486 = vld [vmem:[%s8443 + $0x150] sm:$0xff]
    %v8487 = vld [vmem:[%s8443 + $0x158] sm:$0xff]
    %v8488 = vld [vmem:[%s8443 + $0x160] sm:$0xff]
    %v8489 = vld [vmem:[%s8443 + $0x168] sm:$0xff]
    %v8490 = vld [vmem:[%s8443 + $0x170] sm:$0xff]
    %v8491 = vld [vmem:[%s8443 + $0x178] sm:$0xff]
    %v8492 = vld [vmem:[%s8443 + $0x180] sm:$0xff]
    %v8493 = vld [vmem:[%s8443 + $0x188] sm:$0xff]
    %v8494 = vld [vmem:[%s8443 + $0x190] sm:$0xff]
    %v8495 = vld [vmem:[%s8443 + $0x198] sm:$0xff]
    %v8496 = vld [vmem:[%s8443 + $0x1a0] sm:$0xff]
    %v8497 = vld [vmem:[%s8443 + $0x1a8] sm:$0xff]
    %v8498 = vld [vmem:[%s8443 + $0x1b0] sm:$0xff]
    %v8499 = vld [vmem:[%s8443 + $0x1b8] sm:$0xff]
    %v8500 = vld [vmem:[%s8443 + $0x1c0] sm:$0xff]
    %v8501 = vld [vmem:[%s8443 + $0x1c8] sm:$0xff]
    %v8502 = vld [vmem:[%s8443 + $0x1d0] sm:$0xff]
    %v8503 = vld [vmem:[%s8443 + $0x1d8] sm:$0xff]
    %v8504 = vld [vmem:[%s8443 + $0x1e0] sm:$0xff]
    %v8505 = vld [vmem:[%s8443 + $0x1e8] sm:$0xff]
    %v8506 = vld [vmem:[%s8443 + $0x1f0] sm:$0xff]
    %v8507 = vld [vmem:[%s8443 + $0x1f8] sm:$0xff]
    %v8508 = vld [vmem:[%s8443 + $0x200] sm:$0xff]
    %v8509 = vld [vmem:[%s8443 + $0x208] sm:$0xff]
    %v8510 = vld [vmem:[%s8443 + $0x210] sm:$0xff]
    %v8511 = vld [vmem:[%s8443 + $0x218] sm:$0xff]
    %v8512 = vld [vmem:[%s8443 + $0x220] sm:$0xff]
    %v8513 = vld [vmem:[%s8443 + $0x228] sm:$0xff]
    %v8514 = vld [vmem:[%s8443 + $0x230] sm:$0xff]
    %v8515 = vld [vmem:[%s8443 + $0x238] sm:$0xff]
    %v8516 = vld [vmem:[%s8443 + $0x240] sm:$0xff]
    %v8517 = vld [vmem:[%s8443 + $0x248] sm:$0xff]
    %v8518 = vld [vmem:[%s8443 + $0x250] sm:$0xff]
    %v8519 = vld [vmem:[%s8443 + $0x258] sm:$0xff]
    %v8520 = vld [vmem:[%s8443 + $0x260] sm:$0xff]
    %v8521 = vld [vmem:[%s8443 + $0x268] sm:$0xff]
    %v8522 = vld [vmem:[%s8443 + $0x270] sm:$0xff]
    %v8523 = vld [vmem:[%s8443 + $0x278] sm:$0xff]
    %v8524 = vld [vmem:[%s8443 + $0x280] sm:$0xff]
    %v8525 = vld [vmem:[%s8443 + $0x288] sm:$0xff]
    %v8526 = vld [vmem:[%s8443 + $0x290] sm:$0xff]
    %v8527 = vld [vmem:[%s8443 + $0x298] sm:$0xff]
    %v8528 = vld [vmem:[%s8443 + $0x2a0] sm:$0xff]
    %v8529 = vld [vmem:[%s8443 + $0x2a8] sm:$0xff]
    %v8530 = vld [vmem:[%s8443 + $0x2b0] sm:$0xff]
    %v8531 = vld [vmem:[%s8443 + $0x2b8] sm:$0xff]
    %v8532 = vld [vmem:[%s8443 + $0x2c0] sm:$0xff]
    %v8533 = vld [vmem:[%s8443 + $0x2c8] sm:$0xff]
    %v8534 = vld [vmem:[%s8443 + $0x2d0] sm:$0xff]
    %v8535 = vld [vmem:[%s8443 + $0x2d8] sm:$0xff]
    %v8536 = vld [vmem:[%s8443 + $0x2e0] sm:$0xff]
    %v8537 = vld [vmem:[%s8443 + $0x2e8] sm:$0xff]
    %v8538 = vld [vmem:[%s8443 + $0x2f0] sm:$0xff]
    %v8539 = vld [vmem:[%s8443 + $0x2f8] sm:$0xff]
    %v8540 = vld [vmem:[%s8443 + $0x300] sm:$0xff]
    %v8541 = vld [vmem:[%s8443 + $0x308] sm:$0xff]
    %v8542 = vld [vmem:[%s8443 + $0x310] sm:$0xff]
    %v8543 = vld [vmem:[%s8443 + $0x318] sm:$0xff]
    %v8544 = vld [vmem:[%s8443 + $0x320] sm:$0xff]
    %v8545 = vld [vmem:[%s8443 + $0x328] sm:$0xff]
    %v8546 = vld [vmem:[%s8443 + $0x330] sm:$0xff]
    %v8547 = vld [vmem:[%s8443 + $0x338] sm:$0xff]
    %v8548 = vld [vmem:[%s8443 + $0x340] sm:$0xff]
    %v8549 = vld [vmem:[%s8443 + $0x348] sm:$0xff]
    %v8550 = vld [vmem:[%s8443 + $0x350] sm:$0xff]
    %v8551 = vld [vmem:[%s8443 + $0x358] sm:$0xff]
    %v8552 = vld [vmem:[%s8443 + $0x360] sm:$0xff]
    %v8553 = vld [vmem:[%s8443 + $0x368] sm:$0xff]
    %v8554 = vld [vmem:[%s8443 + $0x370] sm:$0xff]
    %v8555 = vld [vmem:[%s8443 + $0x378] sm:$0xff]
    %v8556 = vld [vmem:[%s8443 + $0x380] sm:$0xff]
    %v8557 = vld [vmem:[%s8443 + $0x388] sm:$0xff]
    %v8558 = vld [vmem:[%s8443 + $0x390] sm:$0xff]
    %v8559 = vld [vmem:[%s8443 + $0x398] sm:$0xff]
    %v8560 = vld [vmem:[%s8443 + $0x3a0] sm:$0xff]
    %v8561 = vld [vmem:[%s8443 + $0x3a8] sm:$0xff]
    %v8562 = vld [vmem:[%s8443 + $0x3b0] sm:$0xff]
    %v8563 = vld [vmem:[%s8443 + $0x3b8] sm:$0xff]
    %v8564 = vld [vmem:[%s8443 + $0x3c0] sm:$0xff]
    %v8565 = vld [vmem:[%s8443 + $0x3c8] sm:$0xff]
    %v8566 = vld [vmem:[%s8443 + $0x3d0] sm:$0xff]
    %v8567 = vld [vmem:[%s8443 + $0x3d8] sm:$0xff]
    %v8568 = vld [vmem:[%s8443 + $0x3e0] sm:$0xff]
    %v8569 = vld [vmem:[%s8443 + $0x3e8] sm:$0xff]
    %v8570 = vld [vmem:[%s8443 + $0x3f0] sm:$0xff]
    %v8571 = vld [vmem:[%s8443 + $0x3f8] sm:$0xff]
    %v8572 = vcombine.low %v8434, %v8442
    %v8574 = vunpack.c.l.s4 1966171168
    %v8575 = vunpack.c.0.s8 %v8574
    %v8576 = vlaneseq
    %v8577 = vshrl.u32 %v8576, 7
    %v8578 = vsub.s32 %v8575, %v8577
    %v8579 = vrot.slane %v8572, %v8578
    %v8580 = vcombine.high %v8579, %v8579
    %v8582 = vunpack.c.l.s4 1966171168
    %v8583 = vunpack.c.0.s8 %v8582
    %v8584 = vlaneseq
    %v8585 = vshrl.u32 %v8584, 7
    %v8586 = vsub.s32 %v8583, %v8585
    %v8587 = vrot.slane %v8579, %v8586
    %v8589 = vunpack.c.l.s4 1966171168
    %v8590 = vunpack.c.0.s8 %v8589
    %v8591 = vlaneseq
    %v8592 = vshrl.u32 %v8591, 7
    %v8593 = vsub.s32 %v8590, %v8592
    %v8594 = vrot.slane %v8580, %v8593
    %v8595 = vcombine.high %v8587, %v8587
    %v8596 = vcombine.high %v8594, %v8594
    %v8729 = vunpack.c.l.b16 %v8444
    %v8730 = vunpack.c.h.b16 %v8444
    %v8731 = vunpack.c.l.b16 %v8445
    %v8732 = vunpack.c.h.b16 %v8445
    %v8733 = vunpack.c.l.b16 %v8446
    %v8734 = vunpack.c.h.b16 %v8446
    %v8735 = vunpack.c.l.b16 %v8447
    %v8736 = vunpack.c.h.b16 %v8447
    %v8737 = vunpack.c.l.b16 %v8448
    %v8738 = vunpack.c.h.b16 %v8448
    %v8739 = vunpack.c.l.b16 %v8449
    %v8740 = vunpack.c.h.b16 %v8449
    %v8741 = vunpack.c.l.b16 %v8450
    %v8742 = vunpack.c.h.b16 %v8450
    %v8743 = vunpack.c.l.b16 %v8451
    %v8744 = vunpack.c.h.b16 %v8451
    %v8745 = vunpack.c.l.b16 %v8452
    %v8746 = vunpack.c.h.b16 %v8452
    %v8747 = vunpack.c.l.b16 %v8453
    %v8748 = vunpack.c.h.b16 %v8453
    %v8749 = vunpack.c.l.b16 %v8454
    %v8750 = vunpack.c.h.b16 %v8454
    %v8751 = vunpack.c.l.b16 %v8455
    %v8752 = vunpack.c.h.b16 %v8455
    %v8753 = vunpack.c.l.b16 %v8456
    %v8754 = vunpack.c.h.b16 %v8456
    %v8755 = vunpack.c.l.b16 %v8457
    %v8756 = vunpack.c.h.b16 %v8457
    %v8757 = vunpack.c.l.b16 %v8458
    %v8758 = vunpack.c.h.b16 %v8458
    %v8759 = vunpack.c.l.b16 %v8459
    %v8760 = vunpack.c.h.b16 %v8459
    %v8761 = vunpack.c.l.b16 %v8460
    %v8762 = vunpack.c.h.b16 %v8460
    %v8763 = vunpack.c.l.b16 %v8461
    %v8764 = vunpack.c.h.b16 %v8461
    %v8765 = vunpack.c.l.b16 %v8462
    %v8766 = vunpack.c.h.b16 %v8462
    %v8767 = vunpack.c.l.b16 %v8463
    %v8768 = vunpack.c.h.b16 %v8463
    %v8769 = vunpack.c.l.b16 %v8464
    %v8770 = vunpack.c.h.b16 %v8464
    %v8771 = vunpack.c.l.b16 %v8465
    %v8772 = vunpack.c.h.b16 %v8465
    %v8773 = vunpack.c.l.b16 %v8466
    %v8774 = vunpack.c.h.b16 %v8466
    %v8775 = vunpack.c.l.b16 %v8467
    %v8776 = vunpack.c.h.b16 %v8467
    %v8777 = vunpack.c.l.b16 %v8468
    %v8778 = vunpack.c.h.b16 %v8468
    %v8779 = vunpack.c.l.b16 %v8469
    %v8780 = vunpack.c.h.b16 %v8469
    %v8781 = vunpack.c.l.b16 %v8470
    %v8782 = vunpack.c.h.b16 %v8470
    %v8783 = vunpack.c.l.b16 %v8471
    %v8784 = vunpack.c.h.b16 %v8471
    %v8785 = vunpack.c.l.b16 %v8472
    %v8786 = vunpack.c.h.b16 %v8472
    %v8787 = vunpack.c.l.b16 %v8473
    %v8788 = vunpack.c.h.b16 %v8473
    %v8789 = vunpack.c.l.b16 %v8474
    %v8790 = vunpack.c.h.b16 %v8474
    %v8791 = vunpack.c.l.b16 %v8475
    %v8792 = vunpack.c.h.b16 %v8475
    %v8793 = vunpack.c.l.b16 %v8476
    %v8794 = vunpack.c.h.b16 %v8476
    %v8795 = vunpack.c.l.b16 %v8477
    %v8796 = vunpack.c.h.b16 %v8477
    %v8797 = vunpack.c.l.b16 %v8478
    %v8798 = vunpack.c.h.b16 %v8478
    %v8799 = vunpack.c.l.b16 %v8479
    %v8800 = vunpack.c.h.b16 %v8479
    %v8801 = vunpack.c.l.b16 %v8480
    %v8802 = vunpack.c.h.b16 %v8480
    %v8803 = vunpack.c.l.b16 %v8481
    %v8804 = vunpack.c.h.b16 %v8481
    %v8805 = vunpack.c.l.b16 %v8482
    %v8806 = vunpack.c.h.b16 %v8482
    %v8807 = vunpack.c.l.b16 %v8483
    %v8808 = vunpack.c.h.b16 %v8483
    %v8809 = vunpack.c.l.b16 %v8484
    %v8810 = vunpack.c.h.b16 %v8484
    %v8811 = vunpack.c.l.b16 %v8485
    %v8812 = vunpack.c.h.b16 %v8485
    %v8813 = vunpack.c.l.b16 %v8486
    %v8814 = vunpack.c.h.b16 %v8486
    %v8815 = vunpack.c.l.b16 %v8487
    %v8816 = vunpack.c.h.b16 %v8487
    %v8817 = vunpack.c.l.b16 %v8488
    %v8818 = vunpack.c.h.b16 %v8488
    %v8819 = vunpack.c.l.b16 %v8489
    %v8820 = vunpack.c.h.b16 %v8489
    %v8821 = vunpack.c.l.b16 %v8490
    %v8822 = vunpack.c.h.b16 %v8490
    %v8823 = vunpack.c.l.b16 %v8491
    %v8824 = vunpack.c.h.b16 %v8491
    %v8825 = vunpack.c.l.b16 %v8492
    %v8826 = vunpack.c.h.b16 %v8492
    %v8827 = vunpack.c.l.b16 %v8493
    %v8828 = vunpack.c.h.b16 %v8493
    %v8829 = vunpack.c.l.b16 %v8494
    %v8830 = vunpack.c.h.b16 %v8494
    %v8831 = vunpack.c.l.b16 %v8495
    %v8832 = vunpack.c.h.b16 %v8495
    %v8833 = vunpack.c.l.b16 %v8496
    %v8834 = vunpack.c.h.b16 %v8496
    %v8835 = vunpack.c.l.b16 %v8497
    %v8836 = vunpack.c.h.b16 %v8497
    %v8837 = vunpack.c.l.b16 %v8498
    %v8838 = vunpack.c.h.b16 %v8498
    %v8839 = vunpack.c.l.b16 %v8499
    %v8840 = vunpack.c.h.b16 %v8499
    %v8841 = vunpack.c.l.b16 %v8500
    %v8842 = vunpack.c.h.b16 %v8500
    %v8843 = vunpack.c.l.b16 %v8501
    %v8844 = vunpack.c.h.b16 %v8501
    %v8845 = vunpack.c.l.b16 %v8502
    %v8846 = vunpack.c.h.b16 %v8502
    %v8847 = vunpack.c.l.b16 %v8503
    %v8848 = vunpack.c.h.b16 %v8503
    %v8849 = vunpack.c.l.b16 %v8504
    %v8850 = vunpack.c.h.b16 %v8504
    %v8851 = vunpack.c.l.b16 %v8505
    %v8852 = vunpack.c.h.b16 %v8505
    %v8853 = vunpack.c.l.b16 %v8506
    %v8854 = vunpack.c.h.b16 %v8506
    %v8855 = vunpack.c.l.b16 %v8507
    %v8856 = vunpack.c.h.b16 %v8507
    %v8857 = vunpack.c.l.b16 %v8508
    %v8858 = vunpack.c.h.b16 %v8508
    %v8859 = vunpack.c.l.b16 %v8509
    %v8860 = vunpack.c.h.b16 %v8509
    %v8861 = vunpack.c.l.b16 %v8510
    %v8862 = vunpack.c.h.b16 %v8510
    %v8863 = vunpack.c.l.b16 %v8511
    %v8864 = vunpack.c.h.b16 %v8511
    %v8865 = vunpack.c.l.b16 %v8512
    %v8866 = vunpack.c.h.b16 %v8512
    %v8867 = vunpack.c.l.b16 %v8513
    %v8868 = vunpack.c.h.b16 %v8513
    %v8869 = vunpack.c.l.b16 %v8514
    %v8870 = vunpack.c.h.b16 %v8514
    %v8871 = vunpack.c.l.b16 %v8515
    %v8872 = vunpack.c.h.b16 %v8515
    %v8873 = vunpack.c.l.b16 %v8516
    %v8874 = vunpack.c.h.b16 %v8516
    %v8875 = vunpack.c.l.b16 %v8517
    %v8876 = vunpack.c.h.b16 %v8517
    %v8877 = vunpack.c.l.b16 %v8518
    %v8878 = vunpack.c.h.b16 %v8518
    %v8879 = vunpack.c.l.b16 %v8519
    %v8880 = vunpack.c.h.b16 %v8519
    %v8881 = vunpack.c.l.b16 %v8520
    %v8882 = vunpack.c.h.b16 %v8520
    %v8883 = vunpack.c.l.b16 %v8521
    %v8884 = vunpack.c.h.b16 %v8521
    %v8885 = vunpack.c.l.b16 %v8522
    %v8886 = vunpack.c.h.b16 %v8522
    %v8887 = vunpack.c.l.b16 %v8523
    %v8888 = vunpack.c.h.b16 %v8523
    %v8889 = vunpack.c.l.b16 %v8524
    %v8890 = vunpack.c.h.b16 %v8524
    %v8891 = vunpack.c.l.b16 %v8525
    %v8892 = vunpack.c.h.b16 %v8525
    %v8893 = vunpack.c.l.b16 %v8526
    %v8894 = vunpack.c.h.b16 %v8526
    %v8895 = vunpack.c.l.b16 %v8527
    %v8896 = vunpack.c.h.b16 %v8527
    %v8897 = vunpack.c.l.b16 %v8528
    %v8898 = vunpack.c.h.b16 %v8528
    %v8899 = vunpack.c.l.b16 %v8529
    %v8900 = vunpack.c.h.b16 %v8529
    %v8901 = vunpack.c.l.b16 %v8530
    %v8902 = vunpack.c.h.b16 %v8530
    %v8903 = vunpack.c.l.b16 %v8531
    %v8904 = vunpack.c.h.b16 %v8531
    %v8905 = vunpack.c.l.b16 %v8532
    %v8906 = vunpack.c.h.b16 %v8532
    %v8907 = vunpack.c.l.b16 %v8533
    %v8908 = vunpack.c.h.b16 %v8533
    %v8909 = vunpack.c.l.b16 %v8534
    %v8910 = vunpack.c.h.b16 %v8534
    %v8911 = vunpack.c.l.b16 %v8535
    %v8912 = vunpack.c.h.b16 %v8535
    %v8913 = vunpack.c.l.b16 %v8536
    %v8914 = vunpack.c.h.b16 %v8536
    %v8915 = vunpack.c.l.b16 %v8537
    %v8916 = vunpack.c.h.b16 %v8537
    %v8917 = vunpack.c.l.b16 %v8538
    %v8918 = vunpack.c.h.b16 %v8538
    %v8919 = vunpack.c.l.b16 %v8539
    %v8920 = vunpack.c.h.b16 %v8539
    %v8921 = vunpack.c.l.b16 %v8540
    %v8922 = vunpack.c.h.b16 %v8540
    %v8923 = vunpack.c.l.b16 %v8541
    %v8924 = vunpack.c.h.b16 %v8541
    %v8925 = vunpack.c.l.b16 %v8542
    %v8926 = vunpack.c.h.b16 %v8542
    %v8927 = vunpack.c.l.b16 %v8543
    %v8928 = vunpack.c.h.b16 %v8543
    %v8929 = vunpack.c.l.b16 %v8544
    %v8930 = vunpack.c.h.b16 %v8544
    %v8931 = vunpack.c.l.b16 %v8545
    %v8932 = vunpack.c.h.b16 %v8545
    %v8933 = vunpack.c.l.b16 %v8546
    %v8934 = vunpack.c.h.b16 %v8546
    %v8935 = vunpack.c.l.b16 %v8547
    %v8936 = vunpack.c.h.b16 %v8547
    %v8937 = vunpack.c.l.b16 %v8548
    %v8938 = vunpack.c.h.b16 %v8548
    %v8939 = vunpack.c.l.b16 %v8549
    %v8940 = vunpack.c.h.b16 %v8549
    %v8941 = vunpack.c.l.b16 %v8550
    %v8942 = vunpack.c.h.b16 %v8550
    %v8943 = vunpack.c.l.b16 %v8551
    %v8944 = vunpack.c.h.b16 %v8551
    %v8945 = vunpack.c.l.b16 %v8552
    %v8946 = vunpack.c.h.b16 %v8552
    %v8947 = vunpack.c.l.b16 %v8553
    %v8948 = vunpack.c.h.b16 %v8553
    %v8949 = vunpack.c.l.b16 %v8554
    %v8950 = vunpack.c.h.b16 %v8554
    %v8951 = vunpack.c.l.b16 %v8555
    %v8952 = vunpack.c.h.b16 %v8555
    %v8953 = vunpack.c.l.b16 %v8556
    %v8954 = vunpack.c.h.b16 %v8556
    %v8955 = vunpack.c.l.b16 %v8557
    %v8956 = vunpack.c.h.b16 %v8557
    %v8957 = vunpack.c.l.b16 %v8558
    %v8958 = vunpack.c.h.b16 %v8558
    %v8959 = vunpack.c.l.b16 %v8559
    %v8960 = vunpack.c.h.b16 %v8559
    %v8961 = vunpack.c.l.b16 %v8560
    %v8962 = vunpack.c.h.b16 %v8560
    %v8963 = vunpack.c.l.b16 %v8561
    %v8964 = vunpack.c.h.b16 %v8561
    %v8965 = vunpack.c.l.b16 %v8562
    %v8966 = vunpack.c.h.b16 %v8562
    %v8967 = vunpack.c.l.b16 %v8563
    %v8968 = vunpack.c.h.b16 %v8563
    %v8969 = vunpack.c.l.b16 %v8564
    %v8970 = vunpack.c.h.b16 %v8564
    %v8971 = vunpack.c.l.b16 %v8565
    %v8972 = vunpack.c.h.b16 %v8565
    %v8973 = vunpack.c.l.b16 %v8566
    %v8974 = vunpack.c.h.b16 %v8566
    %v8975 = vunpack.c.l.b16 %v8567
    %v8976 = vunpack.c.h.b16 %v8567
    %v8977 = vunpack.c.l.b16 %v8568
    %v8978 = vunpack.c.h.b16 %v8568
    %v8979 = vunpack.c.l.b16 %v8569
    %v8980 = vunpack.c.h.b16 %v8569
    %v8981 = vunpack.c.l.b16 %v8570
    %v8982 = vunpack.c.h.b16 %v8570
    %v8983 = vunpack.c.l.b16 %v8571
    %v8984 = vunpack.c.h.b16 %v8571
    %v8985 = vpack.c.b16 %v8733, %v8729
    %v8986 = vpack.c.b16 %v8734, %v8730
    %v8987 = vpack.c.b16 %v8735, %v8731
    %v8988 = vpack.c.b16 %v8736, %v8732
    %v8989 = vpack.c.b16 %v8741, %v8737
    %v8990 = vpack.c.b16 %v8742, %v8738
    %v8991 = vpack.c.b16 %v8743, %v8739
    %v8992 = vpack.c.b16 %v8744, %v8740
    %v8993 = vpack.c.b16 %v8749, %v8745
    %v8994 = vpack.c.b16 %v8750, %v8746
    %v8995 = vpack.c.b16 %v8751, %v8747
    %v8996 = vpack.c.b16 %v8752, %v8748
    %v8997 = vpack.c.b16 %v8757, %v8753
    %v8998 = vpack.c.b16 %v8758, %v8754
    %v8999 = vpack.c.b16 %v8759, %v8755
    %v9000 = vpack.c.b16 %v8760, %v8756
    %v9001 = vpack.c.b16 %v8765, %v8761
    %v9002 = vpack.c.b16 %v8766, %v8762
    %v9003 = vpack.c.b16 %v8767, %v8763
    %v9004 = vpack.c.b16 %v8768, %v8764
    %v9005 = vpack.c.b16 %v8773, %v8769
    %v9006 = vpack.c.b16 %v8774, %v8770
    %v9007 = vpack.c.b16 %v8775, %v8771
    %v9008 = vpack.c.b16 %v8776, %v8772
    %v9009 = vpack.c.b16 %v8781, %v8777
    %v9010 = vpack.c.b16 %v8782, %v8778
    %v9011 = vpack.c.b16 %v8783, %v8779
    %v9012 = vpack.c.b16 %v8784, %v8780
    %v9013 = vpack.c.b16 %v8789, %v8785
    %v9014 = vpack.c.b16 %v8790, %v8786
    %v9015 = vpack.c.b16 %v8791, %v8787
    %v9016 = vpack.c.b16 %v8792, %v8788
    %v9017 = vpack.c.b16 %v8797, %v8793
    %v9018 = vpack.c.b16 %v8798, %v8794
    %v9019 = vpack.c.b16 %v8799, %v8795
    %v9020 = vpack.c.b16 %v8800, %v8796
    %v9021 = vpack.c.b16 %v8805, %v8801
    %v9022 = vpack.c.b16 %v8806, %v8802
    %v9023 = vpack.c.b16 %v8807, %v8803
    %v9024 = vpack.c.b16 %v8808, %v8804
    %v9025 = vpack.c.b16 %v8813, %v8809
    %v9026 = vpack.c.b16 %v8814, %v8810
    %v9027 = vpack.c.b16 %v8815, %v8811
    %v9028 = vpack.c.b16 %v8816, %v8812
    %v9029 = vpack.c.b16 %v8821, %v8817
    %v9030 = vpack.c.b16 %v8822, %v8818
    %v9031 = vpack.c.b16 %v8823, %v8819
    %v9032 = vpack.c.b16 %v8824, %v8820
    %v9033 = vpack.c.b16 %v8829, %v8825
    %v9034 = vpack.c.b16 %v8830, %v8826
    %v9035 = vpack.c.b16 %v8831, %v8827
    %v9036 = vpack.c.b16 %v8832, %v8828
    %v9037 = vpack.c.b16 %v8837, %v8833
    %v9038 = vpack.c.b16 %v8838, %v8834
    %v9039 = vpack.c.b16 %v8839, %v8835
    %v9040 = vpack.c.b16 %v8840, %v8836
    %v9041 = vpack.c.b16 %v8845, %v8841
    %v9042 = vpack.c.b16 %v8846, %v8842
    %v9043 = vpack.c.b16 %v8847, %v8843
    %v9044 = vpack.c.b16 %v8848, %v8844
    %v9045 = vpack.c.b16 %v8853, %v8849
    %v9046 = vpack.c.b16 %v8854, %v8850
    %v9047 = vpack.c.b16 %v8855, %v8851
    %v9048 = vpack.c.b16 %v8856, %v8852
    %v9049 = vpack.c.b16 %v8861, %v8857
    %v9050 = vpack.c.b16 %v8862, %v8858
    %v9051 = vpack.c.b16 %v8863, %v8859
    %v9052 = vpack.c.b16 %v8864, %v8860
    %v9053 = vpack.c.b16 %v8869, %v8865
    %v9054 = vpack.c.b16 %v8870, %v8866
    %v9055 = vpack.c.b16 %v8871, %v8867
    %v9056 = vpack.c.b16 %v8872, %v8868
    %v9057 = vpack.c.b16 %v8877, %v8873
    %v9058 = vpack.c.b16 %v8878, %v8874
    %v9059 = vpack.c.b16 %v8879, %v8875
    %v9060 = vpack.c.b16 %v8880, %v8876
    %v9061 = vpack.c.b16 %v8885, %v8881
    %v9062 = vpack.c.b16 %v8886, %v8882
    %v9063 = vpack.c.b16 %v8887, %v8883
    %v9064 = vpack.c.b16 %v8888, %v8884
    %v9065 = vpack.c.b16 %v8893, %v8889
    %v9066 = vpack.c.b16 %v8894, %v8890
    %v9067 = vpack.c.b16 %v8895, %v8891
    %v9068 = vpack.c.b16 %v8896, %v8892
    %v9069 = vpack.c.b16 %v8901, %v8897
    %v9070 = vpack.c.b16 %v8902, %v8898
    %v9071 = vpack.c.b16 %v8903, %v8899
    %v9072 = vpack.c.b16 %v8904, %v8900
    %v9073 = vpack.c.b16 %v8909, %v8905
    %v9074 = vpack.c.b16 %v8910, %v8906
    %v9075 = vpack.c.b16 %v8911, %v8907
    %v9076 = vpack.c.b16 %v8912, %v8908
    %v9077 = vpack.c.b16 %v8917, %v8913
    %v9078 = vpack.c.b16 %v8918, %v8914
    %v9079 = vpack.c.b16 %v8919, %v8915
    %v9080 = vpack.c.b16 %v8920, %v8916
    %v9081 = vpack.c.b16 %v8925, %v8921
    %v9082 = vpack.c.b16 %v8926, %v8922
    %v9083 = vpack.c.b16 %v8927, %v8923
    %v9084 = vpack.c.b16 %v8928, %v8924
    %v9085 = vpack.c.b16 %v8933, %v8929
    %v9086 = vpack.c.b16 %v8934, %v8930
    %v9087 = vpack.c.b16 %v8935, %v8931
    %v9088 = vpack.c.b16 %v8936, %v8932
    %v9089 = vpack.c.b16 %v8941, %v8937
    %v9090 = vpack.c.b16 %v8942, %v8938
    %v9091 = vpack.c.b16 %v8943, %v8939
    %v9092 = vpack.c.b16 %v8944, %v8940
    %v9093 = vpack.c.b16 %v8949, %v8945
    %v9094 = vpack.c.b16 %v8950, %v8946
    %v9095 = vpack.c.b16 %v8951, %v8947
    %v9096 = vpack.c.b16 %v8952, %v8948
    %v9097 = vpack.c.b16 %v8957, %v8953
    %v9098 = vpack.c.b16 %v8958, %v8954
    %v9099 = vpack.c.b16 %v8959, %v8955
    %v9100 = vpack.c.b16 %v8960, %v8956
    %v9101 = vpack.c.b16 %v8965, %v8961
    %v9102 = vpack.c.b16 %v8966, %v8962
    %v9103 = vpack.c.b16 %v8967, %v8963
    %v9104 = vpack.c.b16 %v8968, %v8964
    %v9105 = vpack.c.b16 %v8973, %v8969
    %v9106 = vpack.c.b16 %v8974, %v8970
    %v9107 = vpack.c.b16 %v8975, %v8971
    %v9108 = vpack.c.b16 %v8976, %v8972
    %v9109 = vpack.c.b16 %v8981, %v8977
    %v9110 = vpack.c.b16 %v8982, %v8978
    %v9111 = vpack.c.b16 %v8983, %v8979
    %v9112 = vpack.c.b16 %v8984, %v8980
    %9241 = vmatprep.subr.bf16.mxu0 %v8986
    %9242 = vmatpush1.bf16.msra.mxu0 %v8985
    %9243 = vmatprep.subr.bf16.mxu0 %v8990
    %9244 = vmatpush1.bf16.msra.mxu0 %v8989
    %9245 = vmatprep.subr.bf16.mxu0 %v8994
    %9246 = vmatpush1.bf16.msra.mxu0 %v8993
    %9247 = vmatprep.subr.bf16.mxu0 %v8998
    %9248 = vmatpush1.bf16.msra.mxu0 %v8997
    %9249 = vmatprep.subr.bf16.mxu0 %v9002
    %9250 = vmatpush1.bf16.msra.mxu0 %v9001
    %9251 = vmatprep.subr.bf16.mxu0 %v9006
    %9252 = vmatpush1.bf16.msra.mxu0 %v9005
    %9253 = vmatprep.subr.bf16.mxu0 %v9010
    %9254 = vmatpush1.bf16.msra.mxu0 %v9009
    %9255 = vmatprep.subr.bf16.mxu0 %v9014
    %9256 = vmatpush1.bf16.msra.mxu0 %v9013
    %9257 = vmatprep.subr.bf16.mxu0 %v9018
    %9258 = vmatpush1.bf16.msra.mxu0 %v9017
    %9259 = vmatprep.subr.bf16.mxu0 %v9022
    %9260 = vmatpush1.bf16.msra.mxu0 %v9021
    %9261 = vmatprep.subr.bf16.mxu0 %v9026
    %9262 = vmatpush1.bf16.msra.mxu0 %v9025
    %9263 = vmatprep.subr.bf16.mxu0 %v9030
    %9264 = vmatpush1.bf16.msra.mxu0 %v9029
    %9265 = vmatprep.subr.bf16.mxu0 %v9034
    %9266 = vmatpush1.bf16.msra.mxu0 %v9033
    %9267 = vmatprep.subr.bf16.mxu0 %v9038
    %9268 = vmatpush1.bf16.msra.mxu0 %v9037
    %9269 = vmatprep.subr.bf16.mxu0 %v9042
    %9270 = vmatpush1.bf16.msra.mxu0 %v9041
    %9271 = vmatprep.subr.bf16.mxu0 %v9046
    %9272 = vmatpush1.bf16.msra.mxu0 %v9045
    %9273 = vmatprep.mubr.bf16.mxu0 %v8594
    %9274 = vmatmul.mubr.bf16.gmra.mrb[0].mxu0 %v8587
    %v9275 = vpop.f32.mrb[0].mxu0
    %v9276 = vadd.f32 0.0, %v9275
    %v9277 = vpop.f32.mrb[0].mxu0
    %v9278 = vadd.f32 0.0, %v9277
    %v9279 = vpop.f32.mrb[0].mxu0
    %v9280 = vpop.f32.mrb[0].mxu0
    %9281 = vdwg.mxu0
    %9282 = vmatprep.subr.bf16.mxu0 %v9050
    %9283 = vmatpush1.bf16.msra.mxu0 %v9049
    %9284 = vmatprep.subr.bf16.mxu0 %v9054
    %9285 = vmatpush1.bf16.msra.mxu0 %v9053
    %9286 = vmatprep.subr.bf16.mxu0 %v9058
    %9287 = vmatpush1.bf16.msra.mxu0 %v9057
    %9288 = vmatprep.subr.bf16.mxu0 %v9062
    %9289 = vmatpush1.bf16.msra.mxu0 %v9061
    %9290 = vmatprep.subr.bf16.mxu0 %v9066
    %9291 = vmatpush1.bf16.msra.mxu0 %v9065
    %9292 = vmatprep.subr.bf16.mxu0 %v9070
    %9293 = vmatpush1.bf16.msra.mxu0 %v9069
    %9294 = vmatprep.subr.bf16.mxu0 %v9074
    %9295 = vmatpush1.bf16.msra.mxu0 %v9073
    %9296 = vmatprep.subr.bf16.mxu0 %v9078
    %9297 = vmatpush1.bf16.msra.mxu0 %v9077
    %9298 = vmatprep.subr.bf16.mxu0 %v9082
    %9299 = vmatpush1.bf16.msra.mxu0 %v9081
    %9300 = vmatprep.subr.bf16.mxu0 %v9086
    %9301 = vmatpush1.bf16.msra.mxu0 %v9085
    %9302 = vmatprep.subr.bf16.mxu0 %v9090
    %9303 = vmatpush1.bf16.msra.mxu0 %v9089
    %9304 = vmatprep.subr.bf16.mxu0 %v9094
    %9305 = vmatpush1.bf16.msra.mxu0 %v9093
    %9306 = vmatprep.subr.bf16.mxu0 %v9098
    %9307 = vmatpush1.bf16.msra.mxu0 %v9097
    %9308 = vmatprep.subr.bf16.mxu0 %v9102
    %9309 = vmatpush1.bf16.msra.mxu0 %v9101
    %9310 = vmatprep.subr.bf16.mxu0 %v9106
    %9311 = vmatpush1.bf16.msra.mxu0 %v9105
    %9312 = vmatprep.subr.bf16.mxu0 %v9110
    %9313 = vmatpush1.bf16.msra.mxu0 %v9109
    %9314 = vmatprep.mubr.bf16.mxu0 %v8596
    %9315 = vmatmul.mubr.bf16.gmra.mrb[0].mxu0 %v8595
    %v9316 = vpop.f32.mrb[0].mxu0
    %v9317 = vadd.f32 %v9276, %v9316
    %v9318 = vpop.f32.mrb[0].mxu0
    %v9319 = vadd.f32 %v9278, %v9318
    %v9320 = vpop.f32.mrb[0].mxu0
    %v9321 = vpop.f32.mrb[0].mxu0
    %9322 = vdwg.mxu0
    %9323 = vmatprep.subr.bf16.mxu0 %v8988
    %9324 = vmatpush1.bf16.msra.mxu0 %v8987
    %9325 = vmatprep.subr.bf16.mxu0 %v8992
    %9326 = vmatpush1.bf16.msra.mxu0 %v8991
    %9327 = vmatprep.subr.bf16.mxu0 %v8996
    %9328 = vmatpush1.bf16.msra.mxu0 %v8995
    %9329 = vmatprep.subr.bf16.mxu0 %v9000
    %9330 = vmatpush1.bf16.msra.mxu0 %v8999
    %9331 = vmatprep.subr.bf16.mxu0 %v9004
    %9332 = vmatpush1.bf16.msra.mxu0 %v9003
    %9333 = vmatprep.subr.bf16.mxu0 %v9008
    %9334 = vmatpush1.bf16.msra.mxu0 %v9007
    %9335 = vmatprep.subr.bf16.mxu0 %v9012
    %9336 = vmatpush1.bf16.msra.mxu0 %v9011
    %9337 = vmatprep.subr.bf16.mxu0 %v9016
    %9338 = vmatpush1.bf16.msra.mxu0 %v9015
    %9339 = vmatprep.subr.bf16.mxu0 %v9020
    %9340 = vmatpush1.bf16.msra.mxu0 %v9019
    %9341 = vmatprep.subr.bf16.mxu0 %v9024
    %9342 = vmatpush1.bf16.msra.mxu0 %v9023
    %9343 = vmatprep.subr.bf16.mxu0 %v9028
    %9344 = vmatpush1.bf16.msra.mxu0 %v9027
    %9345 = vmatprep.subr.bf16.mxu0 %v9032
    %9346 = vmatpush1.bf16.msra.mxu0 %v9031
    %9347 = vmatprep.subr.bf16.mxu0 %v9036
    %9348 = vmatpush1.bf16.msra.mxu0 %v9035
    %9349 = vmatprep.subr.bf16.mxu0 %v9040
    %9350 = vmatpush1.bf16.msra.mxu0 %v9039
    %9351 = vmatprep.subr.bf16.mxu0 %v9044
    %9352 = vmatpush1.bf16.msra.mxu0 %v9043
    %9353 = vmatprep.subr.bf16.mxu0 %v9048
    %9354 = vmatpush1.bf16.msra.mxu0 %v9047
    %9355 = vmatprep.mubr.bf16.mxu0 %v8594
    %9356 = vmatmul.mubr.bf16.gmra.mrb[0].mxu0 %v8587
    %v9357 = vpop.f32.mrb[0].mxu0
    %v9358 = vadd.f32 0.0, %v9357
    %v9359 = vpop.f32.mrb[0].mxu0
    %v9360 = vadd.f32 0.0, %v9359
    %v9361 = vpop.f32.mrb[0].mxu0
    %v9362 = vpop.f32.mrb[0].mxu0
    %9363 = vdwg.mxu0
    %9364 = vmatprep.subr.bf16.mxu0 %v9052
    %9365 = vmatpush1.bf16.msra.mxu0 %v9051
    %9366 = vmatprep.subr.bf16.mxu0 %v9056
    %9367 = vmatpush1.bf16.msra.mxu0 %v9055
    %9368 = vmatprep.subr.bf16.mxu0 %v9060
    %9369 = vmatpush1.bf16.msra.mxu0 %v9059
    %9370 = vmatprep.subr.bf16.mxu0 %v9064
    %9371 = vmatpush1.bf16.msra.mxu0 %v9063
    %9372 = vmatprep.subr.bf16.mxu0 %v9068
    %9373 = vmatpush1.bf16.msra.mxu0 %v9067
    %9374 = vmatprep.subr.bf16.mxu0 %v9072
    %9375 = vmatpush1.bf16.msra.mxu0 %v9071
    %9376 = vmatprep.subr.bf16.mxu0 %v9076
    %9377 = vmatpush1.bf16.msra.mxu0 %v9075
    %9378 = vmatprep.subr.bf16.mxu0 %v9080
    %9379 = vmatpush1.bf16.msra.mxu0 %v9079
    %9380 = vmatprep.subr.bf16.mxu0 %v9084
    %9381 = vmatpush1.bf16.msra.mxu0 %v9083
    %9382 = vmatprep.subr.bf16.mxu0 %v9088
    %9383 = vmatpush1.bf16.msra.mxu0 %v9087
    %9384 = vmatprep.subr.bf16.mxu0 %v9092
    %9385 = vmatpush1.bf16.msra.mxu0 %v9091
    %9386 = vmatprep.subr.bf16.mxu0 %v9096
    %9387 = vmatpush1.bf16.msra.mxu0 %v9095
    %9388 = vmatprep.subr.bf16.mxu0 %v9100
    %9389 = vmatpush1.bf16.msra.mxu0 %v9099
    %9390 = vmatprep.subr.bf16.mxu0 %v9104
    %9391 = vmatpush1.bf16.msra.mxu0 %v9103
    %9392 = vmatprep.subr.bf16.mxu0 %v9108
    %9393 = vmatpush1.bf16.msra.mxu0 %v9107
    %9394 = vmatprep.subr.bf16.mxu0 %v9112
    %9395 = vmatpush1.bf16.msra.mxu0 %v9111
    %9396 = vmatprep.mubr.bf16.mxu0 %v8596
    %9397 = vmatmul.mubr.bf16.gmra.mrb[0].mxu0 %v8595
    %v9398 = vpop.f32.mrb[0].mxu0
    %v9399 = vadd.f32 %v9358, %v9398
    %v9400 = vpop.f32.mrb[0].mxu0
    %v9401 = vadd.f32 %v9360, %v9400
    %v9402 = vpop.f32.mrb[0].mxu0
    %v9403 = vpop.f32.mrb[0].mxu0
    %9404 = vdwg.mxu0
    %v9405 = vadd.f32 %v8335, %v9317
    %v9406 = vadd.f32 %v8337, %v9319
    %v9407 = vadd.f32 %v8417, %v9399
    %v9408 = vadd.f32 %v8419, %v9401
    %v9410 = vlaneseq
    %v9411 = vshrl.u32 %v9410, 7
    %v9412 = vsub.s32 0, %v9411
    %v9413 = vrot.slane %v6430, %v9412
    %v9414 = vlaneseq
    %v9415 = vshrl.u32 %v9414, 7
    %v9416 = vsub.s32 1, %v9415
    %v9417 = vrot.slane %v6430, %v9416
    %v9418 = vlaneseq
    %v9419 = vshrl.u32 %v9418, 7
    %v9420 = vsub.s32 2, %v9419
    %v9421 = vrot.slane %v6430, %v9420
    %v9422 = vlaneseq
    %v9423 = vshrl.u32 %v9422, 7
    %v9424 = vsub.s32 3, %v9423
    %v9425 = vrot.slane %v6430, %v9424
    %v9430 = vadd.f32 %v9405, %v9413
    %v9431 = vadd.f32 %v9406, %v9417
    %v9432 = vadd.f32 %v9407, %v9421
    %v9433 = vadd.f32 %v9408, %v9425
    %v9434 = vmax.f32 %v9430, 0.0
    %v9435 = vmax.f32 %v9431, 0.0
    %v9436 = vmax.f32 %v9432, 0.0
    %v9437 = vmax.f32 %v9433, 0.0
    %v9438 = vmax.f32 %v9434, %v9436
    %v9439 = vmax.f32 %v9435, %v9437
    %v9442 = vcombine.low %v9438, %v9439
    %v9444 = vunpack.c.l.s4 1983009808
    %v9445 = vunpack.c.0.s8 %v9444
    %v9446 = vlaneseq
    %v9447 = vshrl.u32 %v9446, 7
    %v9448 = vsub.s32 %v9445, %v9447
    %v9449 = vrot.slane %v9442, %v9448
    %v9450 = vcombine.high %v9449, %v9449
    %v9453 = vrot.slane %v9449, 7
    %v9454 = vrot.slane %v9453, 2
    %v9455 = vrot.slane %v9450, 7
    %v9456 = vrot.slane %v9455, 2
    %v9459 = vmax.f32 %v9449, %v9454
    %v9460 = vmax.f32 %v9450, %v9456
    %v9463 = vlaneseq
    %v9464 = vshrl.u32 %v9463, 7
    %v9465 = vsub.s32 0, %v9464
    %v9466 = vrot.slane %v9459, %v9465
    %v9467 = vlaneseq
    %v9468 = vshrl.u32 %v9467, 7
    %v9469 = vsub.s32 2, %v9468
    %v9470 = vrot.slane %v9459, %v9469
    %v9471 = vlaneseq
    %v9472 = vshrl.u32 %v9471, 7
    %v9473 = vsub.s32 0, %v9472
    %v9474 = vrot.slane %v9460, %v9473
    %v9475 = vlaneseq
    %v9476 = vshrl.u32 %v9475, 7
    %v9477 = vsub.s32 2, %v9476
    %v9478 = vrot.slane %v9460, %v9477
    %v9483 = vpack.c.bf16 %v9466, %v9466
    %v9484 = vpack.c.bf16 %v9470, %v9470
    %v9485 = vpack.c.bf16 %v9474, %v9474
    %v9486 = vpack.c.bf16 %v9478, %v9478
    %v9487 = vld [vmem:[#allocation21] sm:$0xff]
    %v9488 = vld [vmem:[#allocation21 + $0x8] sm:$0xff]
    %v9489 = vld [vmem:[#allocation21 + $0x10] sm:$0xff]
    %v9490 = vld [vmem:[#allocation21 + $0x18] sm:$0xff]
    %v9491 = vld [vmem:[#allocation21 + $0x20] sm:$0xff]
    %v9492 = vld [vmem:[#allocation21 + $0x28] sm:$0xff]
    %v9493 = vld [vmem:[#allocation21 + $0x30] sm:$0xff]
    %v9494 = vld [vmem:[#allocation21 + $0x38] sm:$0xff]
    %v9495 = vld [vmem:[#allocation21 + $0x40] sm:$0xff]
    %v9496 = vld [vmem:[#allocation21 + $0x48] sm:$0xff]
    %v9497 = vld [vmem:[#allocation21 + $0x50] sm:$0xff]
    %v9498 = vld [vmem:[#allocation21 + $0x58] sm:$0xff]
    %v9499 = vld [vmem:[#allocation21 + $0x60] sm:$0xff]
    %v9500 = vld [vmem:[#allocation21 + $0x68] sm:$0xff]
    %v9501 = vld [vmem:[#allocation21 + $0x70] sm:$0xff]
    %v9502 = vld [vmem:[#allocation21 + $0x78] sm:$0xff]
    %v9503 = vld [vmem:[#allocation21 + $0x80] sm:$0xff]
    %v9504 = vld [vmem:[#allocation21 + $0x88] sm:$0xff]
    %v9505 = vld [vmem:[#allocation21 + $0x90] sm:$0xff]
    %v9506 = vld [vmem:[#allocation21 + $0x98] sm:$0xff]
    %v9507 = vld [vmem:[#allocation21 + $0xa0] sm:$0xff]
    %v9508 = vld [vmem:[#allocation21 + $0xa8] sm:$0xff]
    %v9509 = vld [vmem:[#allocation21 + $0xb0] sm:$0xff]
    %v9510 = vld [vmem:[#allocation21 + $0xb8] sm:$0xff]
    %v9511 = vld [vmem:[#allocation21 + $0xc0] sm:$0xff]
    %v9512 = vld [vmem:[#allocation21 + $0xc8] sm:$0xff]
    %v9513 = vld [vmem:[#allocation21 + $0xd0] sm:$0xff]
    %v9514 = vld [vmem:[#allocation21 + $0xd8] sm:$0xff]
    %v9515 = vld [vmem:[#allocation21 + $0xe0] sm:$0xff]
    %v9516 = vld [vmem:[#allocation21 + $0xe8] sm:$0xff]
    %v9517 = vld [vmem:[#allocation21 + $0xf0] sm:$0xff]
    %v9518 = vld [vmem:[#allocation21 + $0xf8] sm:$0xff]
    %v9519 = vld [vmem:[#allocation21 + $0x100] sm:$0xff]
    %v9520 = vld [vmem:[#allocation21 + $0x108] sm:$0xff]
    %v9521 = vld [vmem:[#allocation21 + $0x110] sm:$0xff]
    %v9522 = vld [vmem:[#allocation21 + $0x118] sm:$0xff]
    %v9523 = vld [vmem:[#allocation21 + $0x120] sm:$0xff]
    %v9524 = vld [vmem:[#allocation21 + $0x128] sm:$0xff]
    %v9525 = vld [vmem:[#allocation21 + $0x130] sm:$0xff]
    %v9526 = vld [vmem:[#allocation21 + $0x138] sm:$0xff]
    %v9527 = vld [vmem:[#allocation21 + $0x140] sm:$0xff]
    %v9528 = vld [vmem:[#allocation21 + $0x148] sm:$0xff]
    %v9529 = vld [vmem:[#allocation21 + $0x150] sm:$0xff]
    %v9530 = vld [vmem:[#allocation21 + $0x158] sm:$0xff]
    %v9531 = vld [vmem:[#allocation21 + $0x160] sm:$0xff]
    %v9532 = vld [vmem:[#allocation21 + $0x168] sm:$0xff]
    %v9533 = vld [vmem:[#allocation21 + $0x170] sm:$0xff]
    %v9534 = vld [vmem:[#allocation21 + $0x178] sm:$0xff]
    %v9535 = vld [vmem:[#allocation21 + $0x180] sm:$0xff]
    %v9536 = vld [vmem:[#allocation21 + $0x188] sm:$0xff]
    %v9537 = vld [vmem:[#allocation21 + $0x190] sm:$0xff]
    %v9538 = vld [vmem:[#allocation21 + $0x198] sm:$0xff]
    %v9539 = vld [vmem:[#allocation21 + $0x1a0] sm:$0xff]
    %v9540 = vld [vmem:[#allocation21 + $0x1a8] sm:$0xff]
    %v9541 = vld [vmem:[#allocation21 + $0x1b0] sm:$0xff]
    %v9542 = vld [vmem:[#allocation21 + $0x1b8] sm:$0xff]
    %v9543 = vld [vmem:[#allocation21 + $0x1c0] sm:$0xff]
    %v9544 = vld [vmem:[#allocation21 + $0x1c8] sm:$0xff]
    %v9545 = vld [vmem:[#allocation21 + $0x1d0] sm:$0xff]
    %v9546 = vld [vmem:[#allocation21 + $0x1d8] sm:$0xff]
    %v9547 = vld [vmem:[#allocation21 + $0x1e0] sm:$0xff]
    %v9548 = vld [vmem:[#allocation21 + $0x1e8] sm:$0xff]
    %v9549 = vld [vmem:[#allocation21 + $0x1f0] sm:$0xff]
    %v9550 = vld [vmem:[#allocation21 + $0x1f8] sm:$0xff]
    %v9551 = vld [vmem:[#allocation21 + $0x200] sm:$0xff]
    %v9552 = vld [vmem:[#allocation21 + $0x208] sm:$0xff]
    %v9553 = vld [vmem:[#allocation21 + $0x210] sm:$0xff]
    %v9554 = vld [vmem:[#allocation21 + $0x218] sm:$0xff]
    %v9555 = vld [vmem:[#allocation21 + $0x220] sm:$0xff]
    %v9556 = vld [vmem:[#allocation21 + $0x228] sm:$0xff]
    %v9557 = vld [vmem:[#allocation21 + $0x230] sm:$0xff]
    %v9558 = vld [vmem:[#allocation21 + $0x238] sm:$0xff]
    %v9559 = vld [vmem:[#allocation21 + $0x240] sm:$0xff]
    %v9560 = vld [vmem:[#allocation21 + $0x248] sm:$0xff]
    %v9561 = vld [vmem:[#allocation21 + $0x250] sm:$0xff]
    %v9562 = vld [vmem:[#allocation21 + $0x258] sm:$0xff]
    %v9563 = vld [vmem:[#allocation21 + $0x260] sm:$0xff]
    %v9564 = vld [vmem:[#allocation21 + $0x268] sm:$0xff]
    %v9565 = vld [vmem:[#allocation21 + $0x270] sm:$0xff]
    %v9566 = vld [vmem:[#allocation21 + $0x278] sm:$0xff]
    %v9567 = vld [vmem:[#allocation21 + $0x280] sm:$0xff]
    %v9568 = vld [vmem:[#allocation21 + $0x288] sm:$0xff]
    %v9569 = vld [vmem:[#allocation21 + $0x290] sm:$0xff]
    %v9570 = vld [vmem:[#allocation21 + $0x298] sm:$0xff]
    %v9571 = vld [vmem:[#allocation21 + $0x2a0] sm:$0xff]
    %v9572 = vld [vmem:[#allocation21 + $0x2a8] sm:$0xff]
    %v9573 = vld [vmem:[#allocation21 + $0x2b0] sm:$0xff]
    %v9574 = vld [vmem:[#allocation21 + $0x2b8] sm:$0xff]
    %v9575 = vld [vmem:[#allocation21 + $0x2c0] sm:$0xff]
    %v9576 = vld [vmem:[#allocation21 + $0x2c8] sm:$0xff]
    %v9577 = vld [vmem:[#allocation21 + $0x2d0] sm:$0xff]
    %v9578 = vld [vmem:[#allocation21 + $0x2d8] sm:$0xff]
    %v9579 = vld [vmem:[#allocation21 + $0x2e0] sm:$0xff]
    %v9580 = vld [vmem:[#allocation21 + $0x2e8] sm:$0xff]
    %v9581 = vld [vmem:[#allocation21 + $0x2f0] sm:$0xff]
    %v9582 = vld [vmem:[#allocation21 + $0x2f8] sm:$0xff]
    %v9583 = vld [vmem:[#allocation21 + $0x300] sm:$0xff]
    %v9584 = vld [vmem:[#allocation21 + $0x308] sm:$0xff]
    %v9585 = vld [vmem:[#allocation21 + $0x310] sm:$0xff]
    %v9586 = vld [vmem:[#allocation21 + $0x318] sm:$0xff]
    %v9587 = vld [vmem:[#allocation21 + $0x320] sm:$0xff]
    %v9588 = vld [vmem:[#allocation21 + $0x328] sm:$0xff]
    %v9589 = vld [vmem:[#allocation21 + $0x330] sm:$0xff]
    %v9590 = vld [vmem:[#allocation21 + $0x338] sm:$0xff]
    %v9591 = vld [vmem:[#allocation21 + $0x340] sm:$0xff]
    %v9592 = vld [vmem:[#allocation21 + $0x348] sm:$0xff]
    %v9593 = vld [vmem:[#allocation21 + $0x350] sm:$0xff]
    %v9594 = vld [vmem:[#allocation21 + $0x358] sm:$0xff]
    %v9595 = vld [vmem:[#allocation21 + $0x360] sm:$0xff]
    %v9596 = vld [vmem:[#allocation21 + $0x368] sm:$0xff]
    %v9597 = vld [vmem:[#allocation21 + $0x370] sm:$0xff]
    %v9598 = vld [vmem:[#allocation21 + $0x378] sm:$0xff]
    %v9599 = vld [vmem:[#allocation21 + $0x380] sm:$0xff]
    %v9600 = vld [vmem:[#allocation21 + $0x388] sm:$0xff]
    %v9601 = vld [vmem:[#allocation21 + $0x390] sm:$0xff]
    %v9602 = vld [vmem:[#allocation21 + $0x398] sm:$0xff]
    %v9603 = vld [vmem:[#allocation21 + $0x3a0] sm:$0xff]
    %v9604 = vld [vmem:[#allocation21 + $0x3a8] sm:$0xff]
    %v9605 = vld [vmem:[#allocation21 + $0x3b0] sm:$0xff]
    %v9606 = vld [vmem:[#allocation21 + $0x3b8] sm:$0xff]
    %v9607 = vld [vmem:[#allocation21 + $0x3c0] sm:$0xff]
    %v9608 = vld [vmem:[#allocation21 + $0x3c8] sm:$0xff]
    %v9609 = vld [vmem:[#allocation21 + $0x3d0] sm:$0xff]
    %v9610 = vld [vmem:[#allocation21 + $0x3d8] sm:$0xff]
    %v9611 = vld [vmem:[#allocation21 + $0x3e0] sm:$0xff]
    %v9612 = vld [vmem:[#allocation21 + $0x3e8] sm:$0xff]
    %v9613 = vld [vmem:[#allocation21 + $0x3f0] sm:$0xff]
    %v9614 = vld [vmem:[#allocation21 + $0x3f8] sm:$0xff]
    %v9615 = vld [vmem:[#allocation22] sm:$0xff]
    %v9617 = vlaneseq
    %v9618 = vshrl.u32 %v9617, 7
    %v9619 = vsub.s32 0, %v9618
    %v9620 = vrot.slane %v9615, %v9619
    %v9621 = vlaneseq
    %v9622 = vshrl.u32 %v9621, 7
    %v9623 = vsub.s32 1, %v9622
    %v9624 = vrot.slane %v9615, %v9623
    %v9625 = vlaneseq
    %v9626 = vshrl.u32 %v9625, 7
    %v9627 = vsub.s32 2, %v9626
    %v9628 = vrot.slane %v9615, %v9627
    %v9629 = vlaneseq
    %v9630 = vshrl.u32 %v9629, 7
    %v9631 = vsub.s32 3, %v9630
    %v9632 = vrot.slane %v9615, %v9631
    %v9633 = vlaneseq
    %v9634 = vshrl.u32 %v9633, 7
    %v9635 = vsub.s32 4, %v9634
    %v9636 = vrot.slane %v9615, %v9635
    %v9637 = vlaneseq
    %v9638 = vshrl.u32 %v9637, 7
    %v9639 = vsub.s32 5, %v9638
    %v9640 = vrot.slane %v9615, %v9639
    %v9641 = vlaneseq
    %v9642 = vshrl.u32 %v9641, 7
    %v9643 = vsub.s32 6, %v9642
    %v9644 = vrot.slane %v9615, %v9643
    %v9645 = vlaneseq
    %v9646 = vshrl.u32 %v9645, 7
    %v9647 = vsub.s32 7, %v9646
    %v9648 = vrot.slane %v9615, %v9647
    %v9661 = vunpack.c.l.b16 %v9483
    %v9662 = vunpack.c.l.b16 %v9484
    %v9663 = vunpack.c.l.b16 %v9485
    %v9664 = vunpack.c.l.b16 %v9486
    %v9665 = vrot.slane %v9663, 7
    %vm9666 = vcmask 1041409
    %v9667 = vsel %vm9666, %v9665, %v9661
    %v9668 = vrot.slane %v9664, 7
    %v9669 = vsel %vm9666, %v9668, %v9662
    %v9670 = vpack.c.b16 %v9667, %v9667
    %v9671 = vpack.c.b16 %v9669, %v9669
    %v9802 = vunpack.c.l.b16 %v9487
    %v9803 = vunpack.c.h.b16 %v9487
    %v9804 = vunpack.c.l.b16 %v9488
    %v9805 = vunpack.c.h.b16 %v9488
    %v9806 = vunpack.c.l.b16 %v9489
    %v9807 = vunpack.c.h.b16 %v9489
    %v9808 = vunpack.c.l.b16 %v9490
    %v9809 = vunpack.c.h.b16 %v9490
    %v9810 = vunpack.c.l.b16 %v9491
    %v9811 = vunpack.c.h.b16 %v9491
    %v9812 = vunpack.c.l.b16 %v9492
    %v9813 = vunpack.c.h.b16 %v9492
    %v9814 = vunpack.c.l.b16 %v9493
    %v9815 = vunpack.c.h.b16 %v9493
    %v9816 = vunpack.c.l.b16 %v9494
    %v9817 = vunpack.c.h.b16 %v9494
    %v9818 = vunpack.c.l.b16 %v9495
    %v9819 = vunpack.c.h.b16 %v9495
    %v9820 = vunpack.c.l.b16 %v9496
    %v9821 = vunpack.c.h.b16 %v9496
    %v9822 = vunpack.c.l.b16 %v9497
    %v9823 = vunpack.c.h.b16 %v9497
    %v9824 = vunpack.c.l.b16 %v9498
    %v9825 = vunpack.c.h.b16 %v9498
    %v9826 = vunpack.c.l.b16 %v9499
    %v9827 = vunpack.c.h.b16 %v9499
    %v9828 = vunpack.c.l.b16 %v9500
    %v9829 = vunpack.c.h.b16 %v9500
    %v9830 = vunpack.c.l.b16 %v9501
    %v9831 = vunpack.c.h.b16 %v9501
    %v9832 = vunpack.c.l.b16 %v9502
    %v9833 = vunpack.c.h.b16 %v9502
    %v9834 = vunpack.c.l.b16 %v9503
    %v9835 = vunpack.c.h.b16 %v9503
    %v9836 = vunpack.c.l.b16 %v9504
    %v9837 = vunpack.c.h.b16 %v9504
    %v9838 = vunpack.c.l.b16 %v9505
    %v9839 = vunpack.c.h.b16 %v9505
    %v9840 = vunpack.c.l.b16 %v9506
    %v9841 = vunpack.c.h.b16 %v9506
    %v9842 = vunpack.c.l.b16 %v9507
    %v9843 = vunpack.c.h.b16 %v9507
    %v9844 = vunpack.c.l.b16 %v9508
    %v9845 = vunpack.c.h.b16 %v9508
    %v9846 = vunpack.c.l.b16 %v9509
    %v9847 = vunpack.c.h.b16 %v9509
    %v9848 = vunpack.c.l.b16 %v9510
    %v9849 = vunpack.c.h.b16 %v9510
    %v9850 = vunpack.c.l.b16 %v9511
    %v9851 = vunpack.c.h.b16 %v9511
    %v9852 = vunpack.c.l.b16 %v9512
    %v9853 = vunpack.c.h.b16 %v9512
    %v9854 = vunpack.c.l.b16 %v9513
    %v9855 = vunpack.c.h.b16 %v9513
    %v9856 = vunpack.c.l.b16 %v9514
    %v9857 = vunpack.c.h.b16 %v9514
    %v9858 = vunpack.c.l.b16 %v9515
    %v9859 = vunpack.c.h.b16 %v9515
    %v9860 = vunpack.c.l.b16 %v9516
    %v9861 = vunpack.c.h.b16 %v9516
    %v9862 = vunpack.c.l.b16 %v9517
    %v9863 = vunpack.c.h.b16 %v9517
    %v9864 = vunpack.c.l.b16 %v9518
    %v9865 = vunpack.c.h.b16 %v9518
    %v9866 = vunpack.c.l.b16 %v9519
    %v9867 = vunpack.c.h.b16 %v9519
    %v9868 = vunpack.c.l.b16 %v9520
    %v9869 = vunpack.c.h.b16 %v9520
    %v9870 = vunpack.c.l.b16 %v9521
    %v9871 = vunpack.c.h.b16 %v9521
    %v9872 = vunpack.c.l.b16 %v9522
    %v9873 = vunpack.c.h.b16 %v9522
    %v9874 = vunpack.c.l.b16 %v9523
    %v9875 = vunpack.c.h.b16 %v9523
    %v9876 = vunpack.c.l.b16 %v9524
    %v9877 = vunpack.c.h.b16 %v9524
    %v9878 = vunpack.c.l.b16 %v9525
    %v9879 = vunpack.c.h.b16 %v9525
    %v9880 = vunpack.c.l.b16 %v9526
    %v9881 = vunpack.c.h.b16 %v9526
    %v9882 = vunpack.c.l.b16 %v9527
    %v9883 = vunpack.c.h.b16 %v9527
    %v9884 = vunpack.c.l.b16 %v9528
    %v9885 = vunpack.c.h.b16 %v9528
    %v9886 = vunpack.c.l.b16 %v9529
    %v9887 = vunpack.c.h.b16 %v9529
    %v9888 = vunpack.c.l.b16 %v9530
    %v9889 = vunpack.c.h.b16 %v9530
    %v9890 = vunpack.c.l.b16 %v9531
    %v9891 = vunpack.c.h.b16 %v9531
    %v9892 = vunpack.c.l.b16 %v9532
    %v9893 = vunpack.c.h.b16 %v9532
    %v9894 = vunpack.c.l.b16 %v9533
    %v9895 = vunpack.c.h.b16 %v9533
    %v9896 = vunpack.c.l.b16 %v9534
    %v9897 = vunpack.c.h.b16 %v9534
    %v9898 = vunpack.c.l.b16 %v9535
    %v9899 = vunpack.c.h.b16 %v9535
    %v9900 = vunpack.c.l.b16 %v9536
    %v9901 = vunpack.c.h.b16 %v9536
    %v9902 = vunpack.c.l.b16 %v9537
    %v9903 = vunpack.c.h.b16 %v9537
    %v9904 = vunpack.c.l.b16 %v9538
    %v9905 = vunpack.c.h.b16 %v9538
    %v9906 = vunpack.c.l.b16 %v9539
    %v9907 = vunpack.c.h.b16 %v9539
    %v9908 = vunpack.c.l.b16 %v9540
    %v9909 = vunpack.c.h.b16 %v9540
    %v9910 = vunpack.c.l.b16 %v9541
    %v9911 = vunpack.c.h.b16 %v9541
    %v9912 = vunpack.c.l.b16 %v9542
    %v9913 = vunpack.c.h.b16 %v9542
    %v9914 = vunpack.c.l.b16 %v9543
    %v9915 = vunpack.c.h.b16 %v9543
    %v9916 = vunpack.c.l.b16 %v9544
    %v9917 = vunpack.c.h.b16 %v9544
    %v9918 = vunpack.c.l.b16 %v9545
    %v9919 = vunpack.c.h.b16 %v9545
    %v9920 = vunpack.c.l.b16 %v9546
    %v9921 = vunpack.c.h.b16 %v9546
    %v9922 = vunpack.c.l.b16 %v9547
    %v9923 = vunpack.c.h.b16 %v9547
    %v9924 = vunpack.c.l.b16 %v9548
    %v9925 = vunpack.c.h.b16 %v9548
    %v9926 = vunpack.c.l.b16 %v9549
    %v9927 = vunpack.c.h.b16 %v9549
    %v9928 = vunpack.c.l.b16 %v9550
    %v9929 = vunpack.c.h.b16 %v9550
    %v9930 = vunpack.c.l.b16 %v9551
    %v9931 = vunpack.c.h.b16 %v9551
    %v9932 = vunpack.c.l.b16 %v9552
    %v9933 = vunpack.c.h.b16 %v9552
    %v9934 = vunpack.c.l.b16 %v9553
    %v9935 = vunpack.c.h.b16 %v9553
    %v9936 = vunpack.c.l.b16 %v9554
    %v9937 = vunpack.c.h.b16 %v9554
    %v9938 = vunpack.c.l.b16 %v9555
    %v9939 = vunpack.c.h.b16 %v9555
    %v9940 = vunpack.c.l.b16 %v9556
    %v9941 = vunpack.c.h.b16 %v9556
    %v9942 = vunpack.c.l.b16 %v9557
    %v9943 = vunpack.c.h.b16 %v9557
    %v9944 = vunpack.c.l.b16 %v9558
    %v9945 = vunpack.c.h.b16 %v9558
    %v9946 = vunpack.c.l.b16 %v9559
    %v9947 = vunpack.c.h.b16 %v9559
    %v9948 = vunpack.c.l.b16 %v9560
    %v9949 = vunpack.c.h.b16 %v9560
    %v9950 = vunpack.c.l.b16 %v9561
    %v9951 = vunpack.c.h.b16 %v9561
    %v9952 = vunpack.c.l.b16 %v9562
    %v9953 = vunpack.c.h.b16 %v9562
    %v9954 = vunpack.c.l.b16 %v9563
    %v9955 = vunpack.c.h.b16 %v9563
    %v9956 = vunpack.c.l.b16 %v9564
    %v9957 = vunpack.c.h.b16 %v9564
    %v9958 = vunpack.c.l.b16 %v9565
    %v9959 = vunpack.c.h.b16 %v9565
    %v9960 = vunpack.c.l.b16 %v9566
    %v9961 = vunpack.c.h.b16 %v9566
    %v9962 = vunpack.c.l.b16 %v9567
    %v9963 = vunpack.c.h.b16 %v9567
    %v9964 = vunpack.c.l.b16 %v9568
    %v9965 = vunpack.c.h.b16 %v9568
    %v9966 = vunpack.c.l.b16 %v9569
    %v9967 = vunpack.c.h.b16 %v9569
    %v9968 = vunpack.c.l.b16 %v9570
    %v9969 = vunpack.c.h.b16 %v9570
    %v9970 = vunpack.c.l.b16 %v9571
    %v9971 = vunpack.c.h.b16 %v9571
    %v9972 = vunpack.c.l.b16 %v9572
    %v9973 = vunpack.c.h.b16 %v9572
    %v9974 = vunpack.c.l.b16 %v9573
    %v9975 = vunpack.c.h.b16 %v9573
    %v9976 = vunpack.c.l.b16 %v9574
    %v9977 = vunpack.c.h.b16 %v9574
    %v9978 = vunpack.c.l.b16 %v9575
    %v9979 = vunpack.c.h.b16 %v9575
    %v9980 = vunpack.c.l.b16 %v9576
    %v9981 = vunpack.c.h.b16 %v9576
    %v9982 = vunpack.c.l.b16 %v9577
    %v9983 = vunpack.c.h.b16 %v9577
    %v9984 = vunpack.c.l.b16 %v9578
    %v9985 = vunpack.c.h.b16 %v9578
    %v9986 = vunpack.c.l.b16 %v9579
    %v9987 = vunpack.c.h.b16 %v9579
    %v9988 = vunpack.c.l.b16 %v9580
    %v9989 = vunpack.c.h.b16 %v9580
    %v9990 = vunpack.c.l.b16 %v9581
    %v9991 = vunpack.c.h.b16 %v9581
    %v9992 = vunpack.c.l.b16 %v9582
    %v9993 = vunpack.c.h.b16 %v9582
    %v9994 = vunpack.c.l.b16 %v9583
    %v9995 = vunpack.c.h.b16 %v9583
    %v9996 = vunpack.c.l.b16 %v9584
    %v9997 = vunpack.c.h.b16 %v9584
    %v9998 = vunpack.c.l.b16 %v9585
    %v9999 = vunpack.c.h.b16 %v9585
    %v10000 = vunpack.c.l.b16 %v9586
    %v10001 = vunpack.c.h.b16 %v9586
    %v10002 = vunpack.c.l.b16 %v9587
    %v10003 = vunpack.c.h.b16 %v9587
    %v10004 = vunpack.c.l.b16 %v9588
    %v10005 = vunpack.c.h.b16 %v9588
    %v10006 = vunpack.c.l.b16 %v9589
    %v10007 = vunpack.c.h.b16 %v9589
    %v10008 = vunpack.c.l.b16 %v9590
    %v10009 = vunpack.c.h.b16 %v9590
    %v10010 = vunpack.c.l.b16 %v9591
    %v10011 = vunpack.c.h.b16 %v9591
    %v10012 = vunpack.c.l.b16 %v9592
    %v10013 = vunpack.c.h.b16 %v9592
    %v10014 = vunpack.c.l.b16 %v9593
    %v10015 = vunpack.c.h.b16 %v9593
    %v10016 = vunpack.c.l.b16 %v9594
    %v10017 = vunpack.c.h.b16 %v9594
    %v10018 = vunpack.c.l.b16 %v9595
    %v10019 = vunpack.c.h.b16 %v9595
    %v10020 = vunpack.c.l.b16 %v9596
    %v10021 = vunpack.c.h.b16 %v9596
    %v10022 = vunpack.c.l.b16 %v9597
    %v10023 = vunpack.c.h.b16 %v9597
    %v10024 = vunpack.c.l.b16 %v9598
    %v10025 = vunpack.c.h.b16 %v9598
    %v10026 = vunpack.c.l.b16 %v9599
    %v10027 = vunpack.c.h.b16 %v9599
    %v10028 = vunpack.c.l.b16 %v9600
    %v10029 = vunpack.c.h.b16 %v9600
    %v10030 = vunpack.c.l.b16 %v9601
    %v10031 = vunpack.c.h.b16 %v9601
    %v10032 = vunpack.c.l.b16 %v9602
    %v10033 = vunpack.c.h.b16 %v9602
    %v10034 = vunpack.c.l.b16 %v9603
    %v10035 = vunpack.c.h.b16 %v9603
    %v10036 = vunpack.c.l.b16 %v9604
    %v10037 = vunpack.c.h.b16 %v9604
    %v10038 = vunpack.c.l.b16 %v9605
    %v10039 = vunpack.c.h.b16 %v9605
    %v10040 = vunpack.c.l.b16 %v9606
    %v10041 = vunpack.c.h.b16 %v9606
    %v10042 = vunpack.c.l.b16 %v9607
    %v10043 = vunpack.c.h.b16 %v9607
    %v10044 = vunpack.c.l.b16 %v9608
    %v10045 = vunpack.c.h.b16 %v9608
    %v10046 = vunpack.c.l.b16 %v9609
    %v10047 = vunpack.c.h.b16 %v9609
    %v10048 = vunpack.c.l.b16 %v9610
    %v10049 = vunpack.c.h.b16 %v9610
    %v10050 = vunpack.c.l.b16 %v9611
    %v10051 = vunpack.c.h.b16 %v9611
    %v10052 = vunpack.c.l.b16 %v9612
    %v10053 = vunpack.c.h.b16 %v9612
    %v10054 = vunpack.c.l.b16 %v9613
    %v10055 = vunpack.c.h.b16 %v9613
    %v10056 = vunpack.c.l.b16 %v9614
    %v10057 = vunpack.c.h.b16 %v9614
    %v10058 = vpack.c.b16 %v9810, %v9802
    %v10059 = vpack.c.b16 %v9811, %v9803
    %v10060 = vpack.c.b16 %v9812, %v9804
    %v10061 = vpack.c.b16 %v9813, %v9805
    %v10062 = vpack.c.b16 %v9814, %v9806
    %v10063 = vpack.c.b16 %v9815, %v9807
    %v10064 = vpack.c.b16 %v9816, %v9808
    %v10065 = vpack.c.b16 %v9817, %v9809
    %v10066 = vpack.c.b16 %v9826, %v9818
    %v10067 = vpack.c.b16 %v9827, %v9819
    %v10068 = vpack.c.b16 %v9828, %v9820
    %v10069 = vpack.c.b16 %v9829, %v9821
    %v10070 = vpack.c.b16 %v9830, %v9822
    %v10071 = vpack.c.b16 %v9831, %v9823
    %v10072 = vpack.c.b16 %v9832, %v9824
    %v10073 = vpack.c.b16 %v9833, %v9825
    %v10074 = vpack.c.b16 %v9842, %v9834
    %v10075 = vpack.c.b16 %v9843, %v9835
    %v10076 = vpack.c.b16 %v9844, %v9836
    %v10077 = vpack.c.b16 %v9845, %v9837
    %v10078 = vpack.c.b16 %v9846, %v9838
    %v10079 = vpack.c.b16 %v9847, %v9839
    %v10080 = vpack.c.b16 %v9848, %v9840
    %v10081 = vpack.c.b16 %v9849, %v9841
    %v10082 = vpack.c.b16 %v9858, %v9850
    %v10083 = vpack.c.b16 %v9859, %v9851
    %v10084 = vpack.c.b16 %v9860, %v9852
    %v10085 = vpack.c.b16 %v9861, %v9853
    %v10086 = vpack.c.b16 %v9862, %v9854
    %v10087 = vpack.c.b16 %v9863, %v9855
    %v10088 = vpack.c.b16 %v9864, %v9856
    %v10089 = vpack.c.b16 %v9865, %v9857
    %v10090 = vpack.c.b16 %v9874, %v9866
    %v10091 = vpack.c.b16 %v9875, %v9867
    %v10092 = vpack.c.b16 %v9876, %v9868
    %v10093 = vpack.c.b16 %v9877, %v9869
    %v10094 = vpack.c.b16 %v9878, %v9870
    %v10095 = vpack.c.b16 %v9879, %v9871
    %v10096 = vpack.c.b16 %v9880, %v9872
    %v10097 = vpack.c.b16 %v9881, %v9873
    %v10098 = vpack.c.b16 %v9890, %v9882
    %v10099 = vpack.c.b16 %v9891, %v9883
    %v10100 = vpack.c.b16 %v9892, %v9884
    %v10101 = vpack.c.b16 %v9893, %v9885
    %v10102 = vpack.c.b16 %v9894, %v9886
    %v10103 = vpack.c.b16 %v9895, %v9887
    %v10104 = vpack.c.b16 %v9896, %v9888
    %v10105 = vpack.c.b16 %v9897, %v9889
    %v10106 = vpack.c.b16 %v9906, %v9898
    %v10107 = vpack.c.b16 %v9907, %v9899
    %v10108 = vpack.c.b16 %v9908, %v9900
    %v10109 = vpack.c.b16 %v9909, %v9901
    %v10110 = vpack.c.b16 %v9910, %v9902
    %v10111 = vpack.c.b16 %v9911, %v9903
    %v10112 = vpack.c.b16 %v9912, %v9904
    %v10113 = vpack.c.b16 %v9913, %v9905
    %v10114 = vpack.c.b16 %v9922, %v9914
    %v10115 = vpack.c.b16 %v9923, %v9915
    %v10116 = vpack.c.b16 %v9924, %v9916
    %v10117 = vpack.c.b16 %v9925, %v9917
    %v10118 = vpack.c.b16 %v9926, %v9918
    %v10119 = vpack.c.b16 %v9927, %v9919
    %v10120 = vpack.c.b16 %v9928, %v9920
    %v10121 = vpack.c.b16 %v9929, %v9921
    %v10122 = vpack.c.b16 %v9938, %v9930
    %v10123 = vpack.c.b16 %v9939, %v9931
    %v10124 = vpack.c.b16 %v9940, %v9932
    %v10125 = vpack.c.b16 %v9941, %v9933
    %v10126 = vpack.c.b16 %v9942, %v9934
    %v10127 = vpack.c.b16 %v9943, %v9935
    %v10128 = vpack.c.b16 %v9944, %v9936
    %v10129 = vpack.c.b16 %v9945, %v9937
    %v10130 = vpack.c.b16 %v9954, %v9946
    %v10131 = vpack.c.b16 %v9955, %v9947
    %v10132 = vpack.c.b16 %v9956, %v9948
    %v10133 = vpack.c.b16 %v9957, %v9949
    %v10134 = vpack.c.b16 %v9958, %v9950
    %v10135 = vpack.c.b16 %v9959, %v9951
    %v10136 = vpack.c.b16 %v9960, %v9952
    %v10137 = vpack.c.b16 %v9961, %v9953
    %v10138 = vpack.c.b16 %v9970, %v9962
    %v10139 = vpack.c.b16 %v9971, %v9963
    %v10140 = vpack.c.b16 %v9972, %v9964
    %v10141 = vpack.c.b16 %v9973, %v9965
    %v10142 = vpack.c.b16 %v9974, %v9966
    %v10143 = vpack.c.b16 %v9975, %v9967
    %v10144 = vpack.c.b16 %v9976, %v9968
    %v10145 = vpack.c.b16 %v9977, %v9969
    %v10146 = vpack.c.b16 %v9986, %v9978
    %v10147 = vpack.c.b16 %v9987, %v9979
    %v10148 = vpack.c.b16 %v9988, %v9980
    %v10149 = vpack.c.b16 %v9989, %v9981
    %v10150 = vpack.c.b16 %v9990, %v9982
    %v10151 = vpack.c.b16 %v9991, %v9983
    %v10152 = vpack.c.b16 %v9992, %v9984
    %v10153 = vpack.c.b16 %v9993, %v9985
    %v10154 = vpack.c.b16 %v10002, %v9994
    %v10155 = vpack.c.b16 %v10003, %v9995
    %v10156 = vpack.c.b16 %v10004, %v9996
    %v10157 = vpack.c.b16 %v10005, %v9997
    %v10158 = vpack.c.b16 %v10006, %v9998
    %v10159 = vpack.c.b16 %v10007, %v9999
    %v10160 = vpack.c.b16 %v10008, %v10000
    %v10161 = vpack.c.b16 %v10009, %v10001
    %v10162 = vpack.c.b16 %v10018, %v10010
    %v10163 = vpack.c.b16 %v10019, %v10011
    %v10164 = vpack.c.b16 %v10020, %v10012
    %v10165 = vpack.c.b16 %v10021, %v10013
    %v10166 = vpack.c.b16 %v10022, %v10014
    %v10167 = vpack.c.b16 %v10023, %v10015
    %v10168 = vpack.c.b16 %v10024, %v10016
    %v10169 = vpack.c.b16 %v10025, %v10017
    %v10170 = vpack.c.b16 %v10034, %v10026
    %v10171 = vpack.c.b16 %v10035, %v10027
    %v10172 = vpack.c.b16 %v10036, %v10028
    %v10173 = vpack.c.b16 %v10037, %v10029
    %v10174 = vpack.c.b16 %v10038, %v10030
    %v10175 = vpack.c.b16 %v10039, %v10031
    %v10176 = vpack.c.b16 %v10040, %v10032
    %v10177 = vpack.c.b16 %v10041, %v10033
    %v10178 = vpack.c.b16 %v10050, %v10042
    %v10179 = vpack.c.b16 %v10051, %v10043
    %v10180 = vpack.c.b16 %v10052, %v10044
    %v10181 = vpack.c.b16 %v10053, %v10045
    %v10182 = vpack.c.b16 %v10054, %v10046
    %v10183 = vpack.c.b16 %v10055, %v10047
    %v10184 = vpack.c.b16 %v10056, %v10048
    %v10185 = vpack.c.b16 %v10057, %v10049
    %10314 = vmatprep.subr.bf16.mxu0 %v10059
    %10315 = vmatpush1.bf16.msra.mxu0 %v10058
    %10316 = vmatprep.subr.bf16.mxu0 %v10067
    %10317 = vmatpush1.bf16.msra.mxu0 %v10066
    %10318 = vmatprep.subr.bf16.mxu0 %v10075
    %10319 = vmatpush1.bf16.msra.mxu0 %v10074
    %10320 = vmatprep.subr.bf16.mxu0 %v10083
    %10321 = vmatpush1.bf16.msra.mxu0 %v10082
    %10322 = vmatprep.subr.bf16.mxu0 %v10091
    %10323 = vmatpush1.bf16.msra.mxu0 %v10090
    %10324 = vmatprep.subr.bf16.mxu0 %v10099
    %10325 = vmatpush1.bf16.msra.mxu0 %v10098
    %10326 = vmatprep.subr.bf16.mxu0 %v10107
    %10327 = vmatpush1.bf16.msra.mxu0 %v10106
    %10328 = vmatprep.subr.bf16.mxu0 %v10115
    %10329 = vmatpush1.bf16.msra.mxu0 %v10114
    %10330 = vmatprep.subr.bf16.mxu0 %v10123
    %10331 = vmatpush1.bf16.msra.mxu0 %v10122
    %10332 = vmatprep.subr.bf16.mxu0 %v10131
    %10333 = vmatpush1.bf16.msra.mxu0 %v10130
    %10334 = vmatprep.subr.bf16.mxu0 %v10139
    %10335 = vmatpush1.bf16.msra.mxu0 %v10138
    %10336 = vmatprep.subr.bf16.mxu0 %v10147
    %10337 = vmatpush1.bf16.msra.mxu0 %v10146
    %10338 = vmatprep.subr.bf16.mxu0 %v10155
    %10339 = vmatpush1.bf16.msra.mxu0 %v10154
    %10340 = vmatprep.subr.bf16.mxu0 %v10163
    %10341 = vmatpush1.bf16.msra.mxu0 %v10162
    %10342 = vmatprep.subr.bf16.mxu0 %v10171
    %10343 = vmatpush1.bf16.msra.mxu0 %v10170
    %10344 = vmatprep.subr.bf16.mxu0 %v10179
    %10345 = vmatpush1.bf16.msra.mxu0 %v10178
    %10346 = vmatprep.mubr.bf16.mxu0 %v9671
    %10347 = vmatmul.mubr.bf16.gmra.mrb[0].mxu0 %v9670
    %v10348 = vpop.f32.mrb[0].mxu0
    %v10349 = vadd.f32 %v9620, %v10348
    %v10350 = vpop.f32.mrb[0].mxu0
    %v10351 = vadd.f32 %v9624, %v10350
    %v10352 = vpop.f32.mrb[0].mxu0
    %v10353 = vpop.f32.mrb[0].mxu0
    %10354 = vdwg.mxu0
    %10355 = vmatprep.subr.bf16.mxu0 %v10061
    %10356 = vmatpush1.bf16.msra.mxu0 %v10060
    %10357 = vmatprep.subr.bf16.mxu0 %v10069
    %10358 = vmatpush1.bf16.msra.mxu0 %v10068
    %10359 = vmatprep.subr.bf16.mxu0 %v10077
    %10360 = vmatpush1.bf16.msra.mxu0 %v10076
    %10361 = vmatprep.subr.bf16.mxu0 %v10085
    %10362 = vmatpush1.bf16.msra.mxu0 %v10084
    %10363 = vmatprep.subr.bf16.mxu0 %v10093
    %10364 = vmatpush1.bf16.msra.mxu0 %v10092
    %10365 = vmatprep.subr.bf16.mxu0 %v10101
    %10366 = vmatpush1.bf16.msra.mxu0 %v10100
    %10367 = vmatprep.subr.bf16.mxu0 %v10109
    %10368 = vmatpush1.bf16.msra.mxu0 %v10108
    %10369 = vmatprep.subr.bf16.mxu0 %v10117
    %10370 = vmatpush1.bf16.msra.mxu0 %v10116
    %10371 = vmatprep.subr.bf16.mxu0 %v10125
    %10372 = vmatpush1.bf16.msra.mxu0 %v10124
    %10373 = vmatprep.subr.bf16.mxu0 %v10133
    %10374 = vmatpush1.bf16.msra.mxu0 %v10132
    %10375 = vmatprep.subr.bf16.mxu0 %v10141
    %10376 = vmatpush1.bf16.msra.mxu0 %v10140
    %10377 = vmatprep.subr.bf16.mxu0 %v10149
    %10378 = vmatpush1.bf16.msra.mxu0 %v10148
    %10379 = vmatprep.subr.bf16.mxu0 %v10157
    %10380 = vmatpush1.bf16.msra.mxu0 %v10156
    %10381 = vmatprep.subr.bf16.mxu0 %v10165
    %10382 = vmatpush1.bf16.msra.mxu0 %v10164
    %10383 = vmatprep.subr.bf16.mxu0 %v10173
    %10384 = vmatpush1.bf16.msra.mxu0 %v10172
    %10385 = vmatprep.subr.bf16.mxu0 %v10181
    %10386 = vmatpush1.bf16.msra.mxu0 %v10180
    %10387 = vmatprep.mubr.bf16.mxu0 %v9671
    %10388 = vmatmul.mubr.bf16.gmra.mrb[0].mxu0 %v9670
    %v10389 = vpop.f32.mrb[0].mxu0
    %v10390 = vadd.f32 %v9628, %v10389
    %v10391 = vpop.f32.mrb[0].mxu0
    %v10392 = vadd.f32 %v9632, %v10391
    %v10393 = vpop.f32.mrb[0].mxu0
    %v10394 = vpop.f32.mrb[0].mxu0
    %10395 = vdwg.mxu0
    %10396 = vmatprep.subr.bf16.mxu0 %v10063
    %10397 = vmatpush1.bf16.msra.mxu0 %v10062
    %10398 = vmatprep.subr.bf16.mxu0 %v10071
    %10399 = vmatpush1.bf16.msra.mxu0 %v10070
    %10400 = vmatprep.subr.bf16.mxu0 %v10079
    %10401 = vmatpush1.bf16.msra.mxu0 %v10078
    %10402 = vmatprep.subr.bf16.mxu0 %v10087
    %10403 = vmatpush1.bf16.msra.mxu0 %v10086
    %10404 = vmatprep.subr.bf16.mxu0 %v10095
    %10405 = vmatpush1.bf16.msra.mxu0 %v10094
    %10406 = vmatprep.subr.bf16.mxu0 %v10103
    %10407 = vmatpush1.bf16.msra.mxu0 %v10102
    %10408 = vmatprep.subr.bf16.mxu0 %v10111
    %10409 = vmatpush1.bf16.msra.mxu0 %v10110
    %10410 = vmatprep.subr.bf16.mxu0 %v10119
    %10411 = vmatpush1.bf16.msra.mxu0 %v10118
    %10412 = vmatprep.subr.bf16.mxu0 %v10127
    %10413 = vmatpush1.bf16.msra.mxu0 %v10126
    %10414 = vmatprep.subr.bf16.mxu0 %v10135
    %10415 = vmatpush1.bf16.msra.mxu0 %v10134
    %10416 = vmatprep.subr.bf16.mxu0 %v10143
    %10417 = vmatpush1.bf16.msra.mxu0 %v10142
    %10418 = vmatprep.subr.bf16.mxu0 %v10151
    %10419 = vmatpush1.bf16.msra.mxu0 %v10150
    %10420 = vmatprep.subr.bf16.mxu0 %v10159
    %10421 = vmatpush1.bf16.msra.mxu0 %v10158
    %10422 = vmatprep.subr.bf16.mxu0 %v10167
    %10423 = vmatpush1.bf16.msra.mxu0 %v10166
    %10424 = vmatprep.subr.bf16.mxu0 %v10175
    %10425 = vmatpush1.bf16.msra.mxu0 %v10174
    %10426 = vmatprep.subr.bf16.mxu0 %v10183
    %10427 = vmatpush1.bf16.msra.mxu0 %v10182
    %10428 = vmatprep.mubr.bf16.mxu0 %v9671
    %10429 = vmatmul.mubr.bf16.gmra.mrb[0].mxu0 %v9670
    %v10430 = vpop.f32.mrb[0].mxu0
    %v10431 = vadd.f32 %v9636, %v10430
    %v10432 = vpop.f32.mrb[0].mxu0
    %v10433 = vadd.f32 %v9640, %v10432
    %v10434 = vpop.f32.mrb[0].mxu0
    %v10435 = vpop.f32.mrb[0].mxu0
    %10436 = vdwg.mxu0
    %10437 = vmatprep.subr.bf16.mxu0 %v10065
    %10438 = vmatpush1.bf16.msra.mxu0 %v10064
    %10439 = vmatprep.subr.bf16.mxu0 %v10073
    %10440 = vmatpush1.bf16.msra.mxu0 %v10072
    %10441 = vmatprep.subr.bf16.mxu0 %v10081
    %10442 = vmatpush1.bf16.msra.mxu0 %v10080
    %10443 = vmatprep.subr.bf16.mxu0 %v10089
    %10444 = vmatpush1.bf16.msra.mxu0 %v10088
    %10445 = vmatprep.subr.bf16.mxu0 %v10097
    %10446 = vmatpush1.bf16.msra.mxu0 %v10096
    %10447 = vmatprep.subr.bf16.mxu0 %v10105
    %10448 = vmatpush1.bf16.msra.mxu0 %v10104
    %10449 = vmatprep.subr.bf16.mxu0 %v10113
    %10450 = vmatpush1.bf16.msra.mxu0 %v10112
    %10451 = vmatprep.subr.bf16.mxu0 %v10121
    %10452 = vmatpush1.bf16.msra.mxu0 %v10120
    %10453 = vmatprep.subr.bf16.mxu0 %v10129
    %10454 = vmatpush1.bf16.msra.mxu0 %v10128
    %10455 = vmatprep.subr.bf16.mxu0 %v10137
    %10456 = vmatpush1.bf16.msra.mxu0 %v10136
    %10457 = vmatprep.subr.bf16.mxu0 %v10145
    %10458 = vmatpush1.bf16.msra.mxu0 %v10144
    %10459 = vmatprep.subr.bf16.mxu0 %v10153
    %10460 = vmatpush1.bf16.msra.mxu0 %v10152
    %10461 = vmatprep.subr.bf16.mxu0 %v10161
    %10462 = vmatpush1.bf16.msra.mxu0 %v10160
    %10463 = vmatprep.subr.bf16.mxu0 %v10169
    %10464 = vmatpush1.bf16.msra.mxu0 %v10168
    %10465 = vmatprep.subr.bf16.mxu0 %v10177
    %10466 = vmatpush1.bf16.msra.mxu0 %v10176
    %10467 = vmatprep.subr.bf16.mxu0 %v10185
    %10468 = vmatpush1.bf16.msra.mxu0 %v10184
    %10469 = vmatprep.mubr.bf16.mxu0 %v9671
    %10470 = vmatmul.mubr.bf16.gmra.mrb[0].mxu0 %v9670
    %v10471 = vpop.f32.mrb[0].mxu0
    %v10472 = vadd.f32 %v9644, %v10471
    %v10473 = vpop.f32.mrb[0].mxu0
    %v10474 = vadd.f32 %v9648, %v10473
    %v10475 = vpop.f32.mrb[0].mxu0
    %v10476 = vpop.f32.mrb[0].mxu0
    %10477 = vdwg.mxu0
    %v10478 = vmax.f32 %v10349, 0.0
    %v10479 = vmax.f32 %v10351, 0.0
    %v10480 = vmax.f32 %v10390, 0.0
    %v10481 = vmax.f32 %v10392, 0.0
    %v10482 = vmax.f32 %v10431, 0.0
    %v10483 = vmax.f32 %v10433, 0.0
    %v10484 = vmax.f32 %v10472, 0.0
    %v10485 = vmax.f32 %v10474, 0.0
    %v10486 = vpack.c.bf16 %v10478, %v10478
    %v10487 = vpack.c.bf16 %v10479, %v10479
    %v10488 = vpack.c.bf16 %v10480, %v10480
    %v10489 = vpack.c.bf16 %v10481, %v10481
    %v10490 = vpack.c.bf16 %v10482, %v10482
    %v10491 = vpack.c.bf16 %v10483, %v10483
    %v10492 = vpack.c.bf16 %v10484, %v10484
    %v10493 = vpack.c.bf16 %v10485, %v10485
    %v10494 = vld [vmem:[#allocation24] sm:$0xf]
    %v10495 = vld [vmem:[#allocation24 + $0x4] sm:$0xf]
    %v10496 = vld [vmem:[#allocation24 + $0x8] sm:$0xf]
    %v10497 = vld [vmem:[#allocation24 + $0xc] sm:$0xf]
    %v10498 = vld [vmem:[#allocation24 + $0x10] sm:$0xf]
    %v10499 = vld [vmem:[#allocation24 + $0x14] sm:$0xf]
    %v10500 = vld [vmem:[#allocation24 + $0x18] sm:$0xf]
    %v10501 = vld [vmem:[#allocation24 + $0x1c] sm:$0xf]
    %v10502 = vld [vmem:[#allocation24 + $0x20] sm:$0xf]
    %v10503 = vld [vmem:[#allocation24 + $0x24] sm:$0xf]
    %v10504 = vld [vmem:[#allocation24 + $0x28] sm:$0xf]
    %v10505 = vld [vmem:[#allocation24 + $0x2c] sm:$0xf]
    %v10506 = vld [vmem:[#allocation24 + $0x30] sm:$0xf]
    %v10507 = vld [vmem:[#allocation24 + $0x34] sm:$0xf]
    %v10508 = vld [vmem:[#allocation24 + $0x38] sm:$0xf]
    %v10509 = vld [vmem:[#allocation24 + $0x3c] sm:$0xf]
    %v10510 = vld [vmem:[#allocation24 + $0x40] sm:$0xf]
    %v10511 = vld [vmem:[#allocation24 + $0x44] sm:$0xf]
    %v10512 = vld [vmem:[#allocation24 + $0x48] sm:$0xf]
    %v10513 = vld [vmem:[#allocation24 + $0x4c] sm:$0xf]
    %v10514 = vld [vmem:[#allocation24 + $0x50] sm:$0xf]
    %v10515 = vld [vmem:[#allocation24 + $0x54] sm:$0xf]
    %v10516 = vld [vmem:[#allocation24 + $0x58] sm:$0xf]
    %v10517 = vld [vmem:[#allocation24 + $0x5c] sm:$0xf]
    %v10518 = vld [vmem:[#allocation24 + $0x60] sm:$0xf]
    %v10519 = vld [vmem:[#allocation24 + $0x64] sm:$0xf]
    %v10520 = vld [vmem:[#allocation24 + $0x68] sm:$0xf]
    %v10521 = vld [vmem:[#allocation24 + $0x6c] sm:$0xf]
    %v10522 = vld [vmem:[#allocation24 + $0x70] sm:$0xf]
    %v10523 = vld [vmem:[#allocation24 + $0x74] sm:$0xf]
    %v10524 = vld [vmem:[#allocation24 + $0x78] sm:$0xf]
    %v10525 = vld [vmem:[#allocation24 + $0x7c] sm:$0xf]
    %v10526 = vld [vmem:[#allocation24 + $0x80] sm:$0xf]
    %v10527 = vld [vmem:[#allocation24 + $0x84] sm:$0xf]
    %v10528 = vld [vmem:[#allocation24 + $0x88] sm:$0xf]
    %v10529 = vld [vmem:[#allocation24 + $0x8c] sm:$0xf]
    %v10530 = vld [vmem:[#allocation24 + $0x90] sm:$0xf]
    %v10531 = vld [vmem:[#allocation24 + $0x94] sm:$0xf]
    %v10532 = vld [vmem:[#allocation24 + $0x98] sm:$0xf]
    %v10533 = vld [vmem:[#allocation24 + $0x9c] sm:$0xf]
    %v10534 = vld [vmem:[#allocation24 + $0xa0] sm:$0xf]
    %v10535 = vld [vmem:[#allocation24 + $0xa4] sm:$0xf]
    %v10536 = vld [vmem:[#allocation24 + $0xa8] sm:$0xf]
    %v10537 = vld [vmem:[#allocation24 + $0xac] sm:$0xf]
    %v10538 = vld [vmem:[#allocation24 + $0xb0] sm:$0xf]
    %v10539 = vld [vmem:[#allocation24 + $0xb4] sm:$0xf]
    %v10540 = vld [vmem:[#allocation24 + $0xb8] sm:$0xf]
    %v10541 = vld [vmem:[#allocation24 + $0xbc] sm:$0xf]
    %v10542 = vld [vmem:[#allocation24 + $0xc0] sm:$0xf]
    %v10543 = vld [vmem:[#allocation24 + $0xc4] sm:$0xf]
    %v10544 = vld [vmem:[#allocation24 + $0xc8] sm:$0xf]
    %v10545 = vld [vmem:[#allocation24 + $0xcc] sm:$0xf]
    %v10546 = vld [vmem:[#allocation24 + $0xd0] sm:$0xf]
    %v10547 = vld [vmem:[#allocation24 + $0xd4] sm:$0xf]
    %v10548 = vld [vmem:[#allocation24 + $0xd8] sm:$0xf]
    %v10549 = vld [vmem:[#allocation24 + $0xdc] sm:$0xf]
    %v10550 = vld [vmem:[#allocation24 + $0xe0] sm:$0xf]
    %v10551 = vld [vmem:[#allocation24 + $0xe4] sm:$0xf]
    %v10552 = vld [vmem:[#allocation24 + $0xe8] sm:$0xf]
    %v10553 = vld [vmem:[#allocation24 + $0xec] sm:$0xf]
    %v10554 = vld [vmem:[#allocation24 + $0xf0] sm:$0xf]
    %v10555 = vld [vmem:[#allocation24 + $0xf4] sm:$0xf]
    %v10556 = vld [vmem:[#allocation24 + $0xf8] sm:$0xf]
    %v10557 = vld [vmem:[#allocation24 + $0xfc] sm:$0xf]
    %v10558 = vld [vmem:[#allocation24 + $0x100] sm:$0xf]
    %v10559 = vld [vmem:[#allocation24 + $0x104] sm:$0xf]
    %v10560 = vld [vmem:[#allocation24 + $0x108] sm:$0xf]
    %v10561 = vld [vmem:[#allocation24 + $0x10c] sm:$0xf]
    %v10562 = vld [vmem:[#allocation24 + $0x110] sm:$0xf]
    %v10563 = vld [vmem:[#allocation24 + $0x114] sm:$0xf]
    %v10564 = vld [vmem:[#allocation24 + $0x118] sm:$0xf]
    %v10565 = vld [vmem:[#allocation24 + $0x11c] sm:$0xf]
    %v10566 = vld [vmem:[#allocation24 + $0x120] sm:$0xf]
    %v10567 = vld [vmem:[#allocation24 + $0x124] sm:$0xf]
    %v10568 = vld [vmem:[#allocation24 + $0x128] sm:$0xf]
    %v10569 = vld [vmem:[#allocation24 + $0x12c] sm:$0xf]
    %v10570 = vld [vmem:[#allocation24 + $0x130] sm:$0xf]
    %v10571 = vld [vmem:[#allocation24 + $0x134] sm:$0xf]
    %v10572 = vld [vmem:[#allocation24 + $0x138] sm:$0xf]
    %v10573 = vld [vmem:[#allocation24 + $0x13c] sm:$0xf]
    %v10574 = vld [vmem:[#allocation24 + $0x140] sm:$0xf]
    %v10575 = vld [vmem:[#allocation24 + $0x144] sm:$0xf]
    %v10576 = vld [vmem:[#allocation24 + $0x148] sm:$0xf]
    %v10577 = vld [vmem:[#allocation24 + $0x14c] sm:$0xf]
    %v10578 = vld [vmem:[#allocation24 + $0x150] sm:$0xf]
    %v10579 = vld [vmem:[#allocation24 + $0x154] sm:$0xf]
    %v10580 = vld [vmem:[#allocation24 + $0x158] sm:$0xf]
    %v10581 = vld [vmem:[#allocation24 + $0x15c] sm:$0xf]
    %v10582 = vld [vmem:[#allocation24 + $0x160] sm:$0xf]
    %v10583 = vld [vmem:[#allocation24 + $0x164] sm:$0xf]
    %v10584 = vld [vmem:[#allocation24 + $0x168] sm:$0xf]
    %v10585 = vld [vmem:[#allocation24 + $0x16c] sm:$0xf]
    %v10586 = vld [vmem:[#allocation24 + $0x170] sm:$0xf]
    %v10587 = vld [vmem:[#allocation24 + $0x174] sm:$0xf]
    %v10588 = vld [vmem:[#allocation24 + $0x178] sm:$0xf]
    %v10589 = vld [vmem:[#allocation24 + $0x17c] sm:$0xf]
    %v10590 = vld [vmem:[#allocation24 + $0x180] sm:$0xf]
    %v10591 = vld [vmem:[#allocation24 + $0x184] sm:$0xf]
    %v10592 = vld [vmem:[#allocation24 + $0x188] sm:$0xf]
    %v10593 = vld [vmem:[#allocation24 + $0x18c] sm:$0xf]
    %v10594 = vld [vmem:[#allocation24 + $0x190] sm:$0xf]
    %v10595 = vld [vmem:[#allocation24 + $0x194] sm:$0xf]
    %v10596 = vld [vmem:[#allocation24 + $0x198] sm:$0xf]
    %v10597 = vld [vmem:[#allocation24 + $0x19c] sm:$0xf]
    %v10598 = vld [vmem:[#allocation24 + $0x1a0] sm:$0xf]
    %v10599 = vld [vmem:[#allocation24 + $0x1a4] sm:$0xf]
    %v10600 = vld [vmem:[#allocation24 + $0x1a8] sm:$0xf]
    %v10601 = vld [vmem:[#allocation24 + $0x1ac] sm:$0xf]
    %v10602 = vld [vmem:[#allocation24 + $0x1b0] sm:$0xf]
    %v10603 = vld [vmem:[#allocation24 + $0x1b4] sm:$0xf]
    %v10604 = vld [vmem:[#allocation24 + $0x1b8] sm:$0xf]
    %v10605 = vld [vmem:[#allocation24 + $0x1bc] sm:$0xf]
    %v10606 = vld [vmem:[#allocation24 + $0x1c0] sm:$0xf]
    %v10607 = vld [vmem:[#allocation24 + $0x1c4] sm:$0xf]
    %v10608 = vld [vmem:[#allocation24 + $0x1c8] sm:$0xf]
    %v10609 = vld [vmem:[#allocation24 + $0x1cc] sm:$0xf]
    %v10610 = vld [vmem:[#allocation24 + $0x1d0] sm:$0xf]
    %v10611 = vld [vmem:[#allocation24 + $0x1d4] sm:$0xf]
    %v10612 = vld [vmem:[#allocation24 + $0x1d8] sm:$0xf]
    %v10613 = vld [vmem:[#allocation24 + $0x1dc] sm:$0xf]
    %v10614 = vld [vmem:[#allocation24 + $0x1e0] sm:$0xf]
    %v10615 = vld [vmem:[#allocation24 + $0x1e4] sm:$0xf]
    %v10616 = vld [vmem:[#allocation24 + $0x1e8] sm:$0xf]
    %v10617 = vld [vmem:[#allocation24 + $0x1ec] sm:$0xf]
    %v10618 = vld [vmem:[#allocation24 + $0x1f0] sm:$0xf]
    %v10619 = vld [vmem:[#allocation24 + $0x1f4] sm:$0xf]
    %v10620 = vld [vmem:[#allocation24 + $0x1f8] sm:$0xf]
    %v10621 = vld [vmem:[#allocation24 + $0x1fc] sm:$0xf]
    %v10622 = vld [vmem:[#allocation25] sm:$0x1]
    %v10624 = vlaneseq
    %v10625 = vshrl.u32 %v10624, 7
    %v10626 = vsub.s32 0, %v10625
    %v10627 = vrot.slane %v10622, %v10626
    %v10757 = vunpack.c.l.b16 %v10494
    %v10758 = vunpack.c.l.b16 %v10495
    %v10759 = vunpack.c.l.b16 %v10496
    %v10760 = vunpack.c.l.b16 %v10497
    %v10761 = vunpack.c.l.b16 %v10498
    %v10762 = vunpack.c.l.b16 %v10499
    %v10763 = vunpack.c.l.b16 %v10500
    %v10764 = vunpack.c.l.b16 %v10501
    %v10765 = vunpack.c.l.b16 %v10502
    %v10766 = vunpack.c.l.b16 %v10503
    %v10767 = vunpack.c.l.b16 %v10504
    %v10768 = vunpack.c.l.b16 %v10505
    %v10769 = vunpack.c.l.b16 %v10506
    %v10770 = vunpack.c.l.b16 %v10507
    %v10771 = vunpack.c.l.b16 %v10508
    %v10772 = vunpack.c.l.b16 %v10509
    %v10773 = vunpack.c.l.b16 %v10510
    %v10774 = vunpack.c.l.b16 %v10511
    %v10775 = vunpack.c.l.b16 %v10512
    %v10776 = vunpack.c.l.b16 %v10513
    %v10777 = vunpack.c.l.b16 %v10514
    %v10778 = vunpack.c.l.b16 %v10515
    %v10779 = vunpack.c.l.b16 %v10516
    %v10780 = vunpack.c.l.b16 %v10517
    %v10781 = vunpack.c.l.b16 %v10518
    %v10782 = vunpack.c.l.b16 %v10519
    %v10783 = vunpack.c.l.b16 %v10520
    %v10784 = vunpack.c.l.b16 %v10521
    %v10785 = vunpack.c.l.b16 %v10522
    %v10786 = vunpack.c.l.b16 %v10523
    %v10787 = vunpack.c.l.b16 %v10524
    %v10788 = vunpack.c.l.b16 %v10525
    %v10789 = vunpack.c.l.b16 %v10526
    %v10790 = vunpack.c.l.b16 %v10527
    %v10791 = vunpack.c.l.b16 %v10528
    %v10792 = vunpack.c.l.b16 %v10529
    %v10793 = vunpack.c.l.b16 %v10530
    %v10794 = vunpack.c.l.b16 %v10531
    %v10795 = vunpack.c.l.b16 %v10532
    %v10796 = vunpack.c.l.b16 %v10533
    %v10797 = vunpack.c.l.b16 %v10534
    %v10798 = vunpack.c.l.b16 %v10535
    %v10799 = vunpack.c.l.b16 %v10536
    %v10800 = vunpack.c.l.b16 %v10537
    %v10801 = vunpack.c.l.b16 %v10538
    %v10802 = vunpack.c.l.b16 %v10539
    %v10803 = vunpack.c.l.b16 %v10540
    %v10804 = vunpack.c.l.b16 %v10541
    %v10805 = vunpack.c.l.b16 %v10542
    %v10806 = vunpack.c.l.b16 %v10543
    %v10807 = vunpack.c.l.b16 %v10544
    %v10808 = vunpack.c.l.b16 %v10545
    %v10809 = vunpack.c.l.b16 %v10546
    %v10810 = vunpack.c.l.b16 %v10547
    %v10811 = vunpack.c.l.b16 %v10548
    %v10812 = vunpack.c.l.b16 %v10549
    %v10813 = vunpack.c.l.b16 %v10550
    %v10814 = vunpack.c.l.b16 %v10551
    %v10815 = vunpack.c.l.b16 %v10552
    %v10816 = vunpack.c.l.b16 %v10553
    %v10817 = vunpack.c.l.b16 %v10554
    %v10818 = vunpack.c.l.b16 %v10555
    %v10819 = vunpack.c.l.b16 %v10556
    %v10820 = vunpack.c.l.b16 %v10557
    %v10821 = vunpack.c.l.b16 %v10558
    %v10822 = vunpack.c.l.b16 %v10559
    %v10823 = vunpack.c.l.b16 %v10560
    %v10824 = vunpack.c.l.b16 %v10561
    %v10825 = vunpack.c.l.b16 %v10562
    %v10826 = vunpack.c.l.b16 %v10563
    %v10827 = vunpack.c.l.b16 %v10564
    %v10828 = vunpack.c.l.b16 %v10565
    %v10829 = vunpack.c.l.b16 %v10566
    %v10830 = vunpack.c.l.b16 %v10567
    %v10831 = vunpack.c.l.b16 %v10568
    %v10832 = vunpack.c.l.b16 %v10569
    %v10833 = vunpack.c.l.b16 %v10570
    %v10834 = vunpack.c.l.b16 %v10571
    %v10835 = vunpack.c.l.b16 %v10572
    %v10836 = vunpack.c.l.b16 %v10573
    %v10837 = vunpack.c.l.b16 %v10574
    %v10838 = vunpack.c.l.b16 %v10575
    %v10839 = vunpack.c.l.b16 %v10576
    %v10840 = vunpack.c.l.b16 %v10577
    %v10841 = vunpack.c.l.b16 %v10578
    %v10842 = vunpack.c.l.b16 %v10579
    %v10843 = vunpack.c.l.b16 %v10580
    %v10844 = vunpack.c.l.b16 %v10581
    %v10845 = vunpack.c.l.b16 %v10582
    %v10846 = vunpack.c.l.b16 %v10583
    %v10847 = vunpack.c.l.b16 %v10584
    %v10848 = vunpack.c.l.b16 %v10585
    %v10849 = vunpack.c.l.b16 %v10586
    %v10850 = vunpack.c.l.b16 %v10587
    %v10851 = vunpack.c.l.b16 %v10588
    %v10852 = vunpack.c.l.b16 %v10589
    %v10853 = vunpack.c.l.b16 %v10590
    %v10854 = vunpack.c.l.b16 %v10591
    %v10855 = vunpack.c.l.b16 %v10592
    %v10856 = vunpack.c.l.b16 %v10593
    %v10857 = vunpack.c.l.b16 %v10594
    %v10858 = vunpack.c.l.b16 %v10595
    %v10859 = vunpack.c.l.b16 %v10596
    %v10860 = vunpack.c.l.b16 %v10597
    %v10861 = vunpack.c.l.b16 %v10598
    %v10862 = vunpack.c.l.b16 %v10599
    %v10863 = vunpack.c.l.b16 %v10600
    %v10864 = vunpack.c.l.b16 %v10601
    %v10865 = vunpack.c.l.b16 %v10602
    %v10866 = vunpack.c.l.b16 %v10603
    %v10867 = vunpack.c.l.b16 %v10604
    %v10868 = vunpack.c.l.b16 %v10605
    %v10869 = vunpack.c.l.b16 %v10606
    %v10870 = vunpack.c.l.b16 %v10607
    %v10871 = vunpack.c.l.b16 %v10608
    %v10872 = vunpack.c.l.b16 %v10609
    %v10873 = vunpack.c.l.b16 %v10610
    %v10874 = vunpack.c.l.b16 %v10611
    %v10875 = vunpack.c.l.b16 %v10612
    %v10876 = vunpack.c.l.b16 %v10613
    %v10877 = vunpack.c.l.b16 %v10614
    %v10878 = vunpack.c.l.b16 %v10615
    %v10879 = vunpack.c.l.b16 %v10616
    %v10880 = vunpack.c.l.b16 %v10617
    %v10881 = vunpack.c.l.b16 %v10618
    %v10882 = vunpack.c.l.b16 %v10619
    %v10883 = vunpack.c.l.b16 %v10620
    %v10884 = vunpack.c.l.b16 %v10621
    %v10885 = vpack.c.b16 %v10758, %v10757
    %v10886 = vpack.c.b16 %v10760, %v10759
    %v10887 = vpack.c.b16 %v10762, %v10761
    %v10888 = vpack.c.b16 %v10764, %v10763
    %v10889 = vpack.c.b16 %v10766, %v10765
    %v10890 = vpack.c.b16 %v10768, %v10767
    %v10891 = vpack.c.b16 %v10770, %v10769
    %v10892 = vpack.c.b16 %v10772, %v10771
    %v10893 = vpack.c.b16 %v10774, %v10773
    %v10894 = vpack.c.b16 %v10776, %v10775
    %v10895 = vpack.c.b16 %v10778, %v10777
    %v10896 = vpack.c.b16 %v10780, %v10779
    %v10897 = vpack.c.b16 %v10782, %v10781
    %v10898 = vpack.c.b16 %v10784, %v10783
    %v10899 = vpack.c.b16 %v10786, %v10785
    %v10900 = vpack.c.b16 %v10788, %v10787
    %v10901 = vpack.c.b16 %v10790, %v10789
    %v10902 = vpack.c.b16 %v10792, %v10791
    %v10903 = vpack.c.b16 %v10794, %v10793
    %v10904 = vpack.c.b16 %v10796, %v10795
    %v10905 = vpack.c.b16 %v10798, %v10797
    %v10906 = vpack.c.b16 %v10800, %v10799
    %v10907 = vpack.c.b16 %v10802, %v10801
    %v10908 = vpack.c.b16 %v10804, %v10803
    %v10909 = vpack.c.b16 %v10806, %v10805
    %v10910 = vpack.c.b16 %v10808, %v10807
    %v10911 = vpack.c.b16 %v10810, %v10809
    %v10912 = vpack.c.b16 %v10812, %v10811
    %v10913 = vpack.c.b16 %v10814, %v10813
    %v10914 = vpack.c.b16 %v10816, %v10815
    %v10915 = vpack.c.b16 %v10818, %v10817
    %v10916 = vpack.c.b16 %v10820, %v10819
    %v10917 = vpack.c.b16 %v10822, %v10821
    %v10918 = vpack.c.b16 %v10824, %v10823
    %v10919 = vpack.c.b16 %v10826, %v10825
    %v10920 = vpack.c.b16 %v10828, %v10827
    %v10921 = vpack.c.b16 %v10830, %v10829
    %v10922 = vpack.c.b16 %v10832, %v10831
    %v10923 = vpack.c.b16 %v10834, %v10833
    %v10924 = vpack.c.b16 %v10836, %v10835
    %v10925 = vpack.c.b16 %v10838, %v10837
    %v10926 = vpack.c.b16 %v10840, %v10839
    %v10927 = vpack.c.b16 %v10842, %v10841
    %v10928 = vpack.c.b16 %v10844, %v10843
    %v10929 = vpack.c.b16 %v10846, %v10845
    %v10930 = vpack.c.b16 %v10848, %v10847
    %v10931 = vpack.c.b16 %v10850, %v10849
    %v10932 = vpack.c.b16 %v10852, %v10851
    %v10933 = vpack.c.b16 %v10854, %v10853
    %v10934 = vpack.c.b16 %v10856, %v10855
    %v10935 = vpack.c.b16 %v10858, %v10857
    %v10936 = vpack.c.b16 %v10860, %v10859
    %v10937 = vpack.c.b16 %v10862, %v10861
    %v10938 = vpack.c.b16 %v10864, %v10863
    %v10939 = vpack.c.b16 %v10866, %v10865
    %v10940 = vpack.c.b16 %v10868, %v10867
    %v10941 = vpack.c.b16 %v10870, %v10869
    %v10942 = vpack.c.b16 %v10872, %v10871
    %v10943 = vpack.c.b16 %v10874, %v10873
    %v10944 = vpack.c.b16 %v10876, %v10875
    %v10945 = vpack.c.b16 %v10878, %v10877
    %v10946 = vpack.c.b16 %v10880, %v10879
    %v10947 = vpack.c.b16 %v10882, %v10881
    %v10948 = vpack.c.b16 %v10884, %v10883
    %11013 = vmatprep.subr.bf16.mxu0 0
    %11014 = vmatpush1.bf16.msra.mxu0 %v10885
    %11015 = vmatprep.subr.bf16.mxu0 0
    %11016 = vmatpush1.bf16.msra.mxu0 %v10886
    %11017 = vmatprep.subr.bf16.mxu0 0
    %11018 = vmatpush1.bf16.msra.mxu0 %v10887
    %11019 = vmatprep.subr.bf16.mxu0 0
    %11020 = vmatpush1.bf16.msra.mxu0 %v10888
    %11021 = vmatprep.subr.bf16.mxu0 0
    %11022 = vmatpush1.bf16.msra.mxu0 %v10889
    %11023 = vmatprep.subr.bf16.mxu0 0
    %11024 = vmatpush1.bf16.msra.mxu0 %v10890
    %11025 = vmatprep.subr.bf16.mxu0 0
    %11026 = vmatpush1.bf16.msra.mxu0 %v10891
    %11027 = vmatprep.subr.bf16.mxu0 0
    %11028 = vmatpush1.bf16.msra.mxu0 %v10892
    %11029 = vmatprep.subr.bf16.mxu0 0
    %11030 = vmatpush1.bf16.msra.mxu0 %v10893
    %11031 = vmatprep.subr.bf16.mxu0 0
    %11032 = vmatpush1.bf16.msra.mxu0 %v10894
    %11033 = vmatprep.subr.bf16.mxu0 0
    %11034 = vmatpush1.bf16.msra.mxu0 %v10895
    %11035 = vmatprep.subr.bf16.mxu0 0
    %11036 = vmatpush1.bf16.msra.mxu0 %v10896
    %11037 = vmatprep.subr.bf16.mxu0 0
    %11038 = vmatpush1.bf16.msra.mxu0 %v10897
    %11039 = vmatprep.subr.bf16.mxu0 0
    %11040 = vmatpush1.bf16.msra.mxu0 %v10898
    %11041 = vmatprep.subr.bf16.mxu0 0
    %11042 = vmatpush1.bf16.msra.mxu0 %v10899
    %11043 = vmatprep.subr.bf16.mxu0 0
    %11044 = vmatpush1.bf16.msra.mxu0 %v10900
    %11045 = vmatprep.mubr.bf16.mxu0 %v10487
    %11046 = vmatmul.mubr.bf16.gmra.mrb[0].mxu0 %v10486
    %v11047 = vpop.f32.mrb[0].mxu0
    %v11048 = vadd.f32 %v10627, %v11047
    %v11049 = vpop.f32.mrb[0].mxu0
    %v11050 = vpop.f32.mrb[0].mxu0
    %v11051 = vpop.f32.mrb[0].mxu0
    %11052 = vdwg.mxu0
    %11053 = vmatprep.subr.bf16.mxu0 0
    %11054 = vmatpush1.bf16.msra.mxu0 %v10901
    %11055 = vmatprep.subr.bf16.mxu0 0
    %11056 = vmatpush1.bf16.msra.mxu0 %v10902
    %11057 = vmatprep.subr.bf16.mxu0 0
    %11058 = vmatpush1.bf16.msra.mxu0 %v10903
    %11059 = vmatprep.subr.bf16.mxu0 0
    %11060 = vmatpush1.bf16.msra.mxu0 %v10904
    %11061 = vmatprep.subr.bf16.mxu0 0
    %11062 = vmatpush1.bf16.msra.mxu0 %v10905
    %11063 = vmatprep.subr.bf16.mxu0 0
    %11064 = vmatpush1.bf16.msra.mxu0 %v10906
    %11065 = vmatprep.subr.bf16.mxu0 0
    %11066 = vmatpush1.bf16.msra.mxu0 %v10907
    %11067 = vmatprep.subr.bf16.mxu0 0
    %11068 = vmatpush1.bf16.msra.mxu0 %v10908
    %11069 = vmatprep.subr.bf16.mxu0 0
    %11070 = vmatpush1.bf16.msra.mxu0 %v10909
    %11071 = vmatprep.subr.bf16.mxu0 0
    %11072 = vmatpush1.bf16.msra.mxu0 %v10910
    %11073 = vmatprep.subr.bf16.mxu0 0
    %11074 = vmatpush1.bf16.msra.mxu0 %v10911
    %11075 = vmatprep.subr.bf16.mxu0 0
    %11076 = vmatpush1.bf16.msra.mxu0 %v10912
    %11077 = vmatprep.subr.bf16.mxu0 0
    %11078 = vmatpush1.bf16.msra.mxu0 %v10913
    %11079 = vmatprep.subr.bf16.mxu0 0
    %11080 = vmatpush1.bf16.msra.mxu0 %v10914
    %11081 = vmatprep.subr.bf16.mxu0 0
    %11082 = vmatpush1.bf16.msra.mxu0 %v10915
    %11083 = vmatprep.subr.bf16.mxu0 0
    %11084 = vmatpush1.bf16.msra.mxu0 %v10916
    %11085 = vmatprep.mubr.bf16.mxu0 %v10489
    %11086 = vmatmul.mubr.bf16.gmra.mrb[0].mxu0 %v10488
    %v11087 = vpop.f32.mrb[0].mxu0
    %v11088 = vadd.f32 %v11048, %v11087
    %v11089 = vpop.f32.mrb[0].mxu0
    %v11090 = vpop.f32.mrb[0].mxu0
    %v11091 = vpop.f32.mrb[0].mxu0
    %11092 = vdwg.mxu0
    %11093 = vmatprep.subr.bf16.mxu0 0
    %11094 = vmatpush1.bf16.msra.mxu0 %v10917
    %11095 = vmatprep.subr.bf16.mxu0 0
    %11096 = vmatpush1.bf16.msra.mxu0 %v10918
    %11097 = vmatprep.subr.bf16.mxu0 0
    %11098 = vmatpush1.bf16.msra.mxu0 %v10919
    %11099 = vmatprep.subr.bf16.mxu0 0
    %11100 = vmatpush1.bf16.msra.mxu0 %v10920
    %11101 = vmatprep.subr.bf16.mxu0 0
    %11102 = vmatpush1.bf16.msra.mxu0 %v10921
    %11103 = vmatprep.subr.bf16.mxu0 0
    %11104 = vmatpush1.bf16.msra.mxu0 %v10922
    %11105 = vmatprep.subr.bf16.mxu0 0
    %11106 = vmatpush1.bf16.msra.mxu0 %v10923
    %11107 = vmatprep.subr.bf16.mxu0 0
    %11108 = vmatpush1.bf16.msra.mxu0 %v10924
    %11109 = vmatprep.subr.bf16.mxu0 0
    %11110 = vmatpush1.bf16.msra.mxu0 %v10925
    %11111 = vmatprep.subr.bf16.mxu0 0
    %11112 = vmatpush1.bf16.msra.mxu0 %v10926
    %11113 = vmatprep.subr.bf16.mxu0 0
    %11114 = vmatpush1.bf16.msra.mxu0 %v10927
    %11115 = vmatprep.subr.bf16.mxu0 0
    %11116 = vmatpush1.bf16.msra.mxu0 %v10928
    %11117 = vmatprep.subr.bf16.mxu0 0
    %11118 = vmatpush1.bf16.msra.mxu0 %v10929
    %11119 = vmatprep.subr.bf16.mxu0 0
    %11120 = vmatpush1.bf16.msra.mxu0 %v10930
    %11121 = vmatprep.subr.bf16.mxu0 0
    %11122 = vmatpush1.bf16.msra.mxu0 %v10931
    %11123 = vmatprep.subr.bf16.mxu0 0
    %11124 = vmatpush1.bf16.msra.mxu0 %v10932
    %11125 = vmatprep.mubr.bf16.mxu0 %v10491
    %11126 = vmatmul.mubr.bf16.gmra.mrb[0].mxu0 %v10490
    %v11127 = vpop.f32.mrb[0].mxu0
    %v11128 = vadd.f32 %v11088, %v11127
    %v11129 = vpop.f32.mrb[0].mxu0
    %v11130 = vpop.f32.mrb[0].mxu0
    %v11131 = vpop.f32.mrb[0].mxu0
    %11132 = vdwg.mxu0
    %11133 = vmatprep.subr.bf16.mxu0 0
    %11134 = vmatpush1.bf16.msra.mxu0 %v10933
    %11135 = vmatprep.subr.bf16.mxu0 0
    %11136 = vmatpush1.bf16.msra.mxu0 %v10934
    %11137 = vmatprep.subr.bf16.mxu0 0
    %11138 = vmatpush1.bf16.msra.mxu0 %v10935
    %11139 = vmatprep.subr.bf16.mxu0 0
    %11140 = vmatpush1.bf16.msra.mxu0 %v10936
    %11141 = vmatprep.subr.bf16.mxu0 0
    %11142 = vmatpush1.bf16.msra.mxu0 %v10937
    %11143 = vmatprep.subr.bf16.mxu0 0
    %11144 = vmatpush1.bf16.msra.mxu0 %v10938
    %11145 = vmatprep.subr.bf16.mxu0 0
    %11146 = vmatpush1.bf16.msra.mxu0 %v10939
    %11147 = vmatprep.subr.bf16.mxu0 0
    %11148 = vmatpush1.bf16.msra.mxu0 %v10940
    %11149 = vmatprep.subr.bf16.mxu0 0
    %11150 = vmatpush1.bf16.msra.mxu0 %v10941
    %11151 = vmatprep.subr.bf16.mxu0 0
    %11152 = vmatpush1.bf16.msra.mxu0 %v10942
    %11153 = vmatprep.subr.bf16.mxu0 0
    %11154 = vmatpush1.bf16.msra.mxu0 %v10943
    %11155 = vmatprep.subr.bf16.mxu0 0
    %11156 = vmatpush1.bf16.msra.mxu0 %v10944
    %11157 = vmatprep.subr.bf16.mxu0 0
    %11158 = vmatpush1.bf16.msra.mxu0 %v10945
    %11159 = vmatprep.subr.bf16.mxu0 0
    %11160 = vmatpush1.bf16.msra.mxu0 %v10946
    %11161 = vmatprep.subr.bf16.mxu0 0
    %11162 = vmatpush1.bf16.msra.mxu0 %v10947
    %11163 = vmatprep.subr.bf16.mxu0 0
    %11164 = vmatpush1.bf16.msra.mxu0 %v10948
    %11165 = vmatprep.mubr.bf16.mxu0 %v10493
    %11166 = vmatmul.mubr.bf16.gmra.mrb[0].mxu0 %v10492
    %v11167 = vpop.f32.mrb[0].mxu0
    %v11168 = vadd.f32 %v11128, %v11167
    %v11169 = vpop.f32.mrb[0].mxu0
    %v11170 = vpop.f32.mrb[0].mxu0
    %v11171 = vpop.f32.mrb[0].mxu0
    %11172 = vdwg.mxu0
    %11173 = vst [vmem:[#allocation27] sm:$0x3] %v11168
    // Predicated region
    $region102: #{cnn_forward.1} parent=1 // pred_check
      _
    $region103: #{cnn_forward.1} parent=1 // pred_check_branch
      %11175 = sbr.rel (0) target = $region105
    $region104: #{cnn_forward.1} parent=1 // pred_region
      %s11177 = ssub.s32 32, 32
      %11178 = vsyncadd [#allocation9], %s11177
      %s11180 = sshll.u32 [#allocation27], 4
      %s11181 = int_to_ptr.vmem [resolvable:$true] %s11180
      %11183 = dma.vmem_to_hbm [thread:$0]  %s11181, 32, %s13, [#allocation9]
    $region105: #{cnn_forward.1} parent=1 // pred_fallthru
      _
    // Predicated region
    $region106: #{cnn_forward.1} parent=1 // pred_check
      _
    $region107: #{cnn_forward.1} parent=1 // pred_check_branch
      %11185 = sbr.rel (0) target = $region109
    $region108: #{cnn_forward.1} parent=1 // pred_region
      %11186 = dma.done [#allocation9], 32
    $region109: #{cnn_forward.1} parent=1 // pred_fallthru
      _
    %11187 = vsyncpa [#allocation8], 1
    %11188 = vsyncpa [#allocation11], 1
    %11189 = vsyncpa [#allocation14], 1
    %11190 = vsyncpa [#allocation17], 1
    %11191 = vsyncpa [#allocation20], 1
    %11192 = vsyncpa [#allocation23], 1
    %11193 = vsyncpa [#allocation26], 1
    %11194 = vsyncpa [#allocation9], 1

</llo_original>
